<compile_context>
chip_gen: v7x
topology: tpu7x:2x2x1
jax: 0.10.0
libtpu: 0.0.40
codegen_flags: <defaults>
</compile_context>

<pallas_src>
import jax
import jax.numpy as jnp
from jax import lax
from jax.experimental import pallas as pl
from jax.experimental.pallas import tpu as pltpu


# ---------------------------------------------------------------------------
# Kernel 1: fused Linear (int8 weights; bias & per-channel scale dropped --
#           both cancel in BN) + BatchNorm1d(batch stats) + ReLU, bf16 output.
#           Grid = (N_tiles,) only; the full K=4096 reduction is one MXU dot
#           per tile, so no accumulator / no pl.when.  BN is per-feature over
#           the batch axis, fully resident in each (B, tn) output tile.
# ---------------------------------------------------------------------------
def linear_bn_relu_kernel(x_ref, wq_ref, g_ref, beta_ref, o_ref):
    w = wq_ref[...].astype(jnp.bfloat16)   # int8 -> bf16 cast (VPU), halves DMA
    y = jnp.dot(x_ref[...], w, preferred_element_type=jnp.float32)
    mean = jnp.mean(y, axis=0, keepdims=True)                # batch stats
    var = jnp.mean((y - mean) ** 2, axis=0, keepdims=True)   # biased variance
    y_hat = (y - mean) * lax.rsqrt(var + 1e-5)
    out = y_hat * g_ref[...] + beta_ref[...]
    o_ref[...] = jnp.maximum(out, 0.0).astype(o_ref.dtype)


def linear_bn_relu(x_bf16, w_q, gamma, beta, *, tn=1024):
    B, K = x_bf16.shape
    N = w_q.shape[1]
    assert N % tn == 0
    return pl.pallas_call(
        linear_bn_relu_kernel,
        out_shape=jax.ShapeDtypeStruct((B, N), jnp.bfloat16),   # bf16 activations
        grid_spec=pltpu.PrefetchScalarGridSpec(
            num_scalar_prefetch=0,
            grid=(N // tn,),
            in_specs=[
                pl.BlockSpec((B, K), lambda j: (0, 0)),      # full-K activation tile
                pl.BlockSpec((K, tn), lambda j: (0, j)),     # int8 weight column tile
                pl.BlockSpec((1, tn), lambda j: (0, j)),     # gamma
                pl.BlockSpec((1, tn), lambda j: (0, j)),     # beta
            ],
            out_specs=pl.BlockSpec((B, tn), lambda j: (0, j)),
        ),
        compiler_params=pltpu.CompilerParams(
            dimension_semantics=("parallel",),
            vmem_limit_bytes=32 * 1024 * 1024,
        ),
    )(x_bf16, w_q, gamma, beta)


# ---------------------------------------------------------------------------
# Kernel 2: final Linear(4096 -> num_classes).  Everything fits VMEM; single
# grid step, no accumulator.  Weights/bias arrive already padded to 128 lanes
# (hoisted into parameter prep) for a lane-dense store.
# Kept as a separate call (not fused into layer 2) so the layer-2 N axis stays
# "parallel" -- on v7x that is what splits the weight stream across both TCs.
# ---------------------------------------------------------------------------
def linear_kernel(x_ref, w_ref, b_ref, o_ref):
    o_ref[...] = (
        jnp.dot(x_ref[...], w_ref[...], preferred_element_type=jnp.float32)
        + b_ref[...]
    ).astype(o_ref.dtype)


def linear_final(x_bf16, wt_padded, b_padded):
    B, K = x_bf16.shape
    N = wt_padded.shape[1]
    return pl.pallas_call(
        linear_kernel,
        out_shape=jax.ShapeDtypeStruct((B, N), jnp.float32),
        grid_spec=pltpu.PrefetchScalarGridSpec(
            num_scalar_prefetch=0,
            grid=(1,),
            in_specs=[
                pl.BlockSpec((B, K), lambda i: (0, 0)),
                pl.BlockSpec((K, N), lambda i: (0, 0)),
                pl.BlockSpec((1, N), lambda i: (0, 0)),
            ],
            out_specs=pl.BlockSpec((B, N), lambda i: (0, 0)),
        ),
        compiler_params=pltpu.CompilerParams(
            dimension_semantics=("arbitrary",),
        ),
    )(x_bf16, wt_padded, b_padded)


# ---------------------------------------------------------------------------
# Full forward of Normal_test (eval mode: Dropout == identity).
# w1/w2 are pre-quantized int8 (per-output-channel); their scales and biases
# b1/b2 are not used because they cancel exactly in the following BatchNorm.
# w3/b3 are pre-padded to 128 lanes in parameter prep.
# ---------------------------------------------------------------------------
def normal_test_forward(x, params, num_classes):
    xb = x.astype(jnp.bfloat16)
    h = linear_bn_relu(xb, params["w1_q"], params["g1"], params["beta1"])
    h = linear_bn_relu(h, params["w2_q"], params["g2"], params["beta2"])
    out = linear_final(h, params["w3p"], params["b3p"])
    return out[:, :num_classes]


# Reference in matching precision.  It explicitly applies the per-channel
# dequant scale AND the Linear bias before BatchNorm -- the kernel drops both,
# and this reference verifies that the cancellation is exact (up to fp
# rounding and the negligible eps rescaling).
def normal_test_reference(x, params, num_classes):
    def bn_relu(y, g, beta):
        mean = jnp.mean(y, axis=0, keepdims=True)
        var = jnp.mean((y - mean) ** 2, axis=0, keepdims=True)
        return jnp.maximum((y - mean) * lax.rsqrt(var + 1e-5) * g + beta, 0.0)

    xb = x.astype(jnp.bfloat16)
    y1 = (jnp.dot(xb, params["w1_q"].astype(jnp.bfloat16),
                  preferred_element_type=jnp.float32) * params["s1"] + params["b1"])
    h1 = bn_relu(y1, params["g1"], params["beta1"]).astype(jnp.bfloat16)
    y2 = (jnp.dot(h1, params["w2_q"].astype(jnp.bfloat16),
                  preferred_element_type=jnp.float32) * params["s2"] + params["b2"])
    h2 = bn_relu(y2, params["g2"], params["beta2"]).astype(jnp.bfloat16)
    out = (jnp.dot(h2, params["w3p"], preferred_element_type=jnp.float32)
           + params["b3p"])
    return out[:, :num_classes]


def _quantize_per_output_channel(w_f32):
    """Symmetric per-column int8 quantization: w ~= w_q * scale."""
    amax = jnp.max(jnp.abs(w_f32), axis=0, keepdims=True)
    scale = jnp.where(amax > 0, amax / 127.0, 1.0).astype(jnp.float32)
    w_q = jnp.clip(jnp.round(w_f32 / scale), -127, 127).astype(jnp.int8)
    return w_q, scale


if __name__ == "__main__":
    B = 8                      # small batch (BN needs > 1; 8 aligns to a sublane)
    IN = 256 * 4 * 4           # 4096, fixed by the module
    HID = 4096                 # fixed by the module
    NUM_CLASSES = 10
    NPAD = 128                 # final-linear lane padding (hoisted, one-time)

    key = jax.random.PRNGKey(0)
    ks = jax.random.split(key, 11)

    # "Original" f32 model parameters (shapes from the module's __init__).
    w1 = jax.random.normal(ks[0], (IN, HID), jnp.float32) * 0.02
    b1 = jax.random.normal(ks[1], (1, HID), jnp.float32) * 0.02
    g1 = 1.0 + 0.1 * jax.random.normal(ks[2], (1, HID), jnp.float32)
    beta1 = 0.1 * jax.random.normal(ks[3], (1, HID), jnp.float32)
    w2 = jax.random.normal(ks[4], (HID, HID), jnp.float32) * 0.02
    b2 = jax.random.normal(ks[5], (1, HID), jnp.float32) * 0.02
    g2 = 1.0 + 0.1 * jax.random.normal(ks[6], (1, HID), jnp.float32)
    beta2 = 0.1 * jax.random.normal(ks[7], (1, HID), jnp.float32)
    w3 = jax.random.normal(ks[8], (HID, NUM_CLASSES), jnp.float32) * 0.02
    b3 = jax.random.normal(ks[9], (1, NUM_CLASSES), jnp.float32) * 0.02

    # One-time parameter prep (hoisted out of the forward pass):
    #   * int8 per-output-channel quantization of the two big weights
    #   * 128-lane padding + bf16 cast of the final linear weight/bias
    w1_q, s1 = _quantize_per_output_channel(w1)
    w2_q, s2 = _quantize_per_output_channel(w2)
    w3p = jnp.pad(w3, ((0, 0), (0, NPAD - NUM_CLASSES))).astype(jnp.bfloat16)
    b3p = jnp.pad(b3, ((0, 0), (0, NPAD - NUM_CLASSES)))

    params = {
        "w1_q": w1_q, "s1": s1, "b1": b1, "g1": g1, "beta1": beta1,
        "w2_q": w2_q, "s2": s2, "b2": b2, "g2": g2, "beta2": beta2,
        "w3p": w3p, "b3p": b3p,
    }

    x = jax.random.normal(ks[10], (B, IN), jnp.float32)

    out = jax.block_until_ready(normal_test_forward(x, params, NUM_CLASSES))
    ref = jax.block_until_ready(normal_test_reference(x, params, NUM_CLASSES))

    assert out.shape == (B, NUM_CLASSES), out.shape
    assert jnp.allclose(out, ref, atol=1e-2, rtol=1e-2), (
        float(jnp.max(jnp.abs(out - ref)))
    )
    print("KERNEL_OK")
</pallas_src>

<mosaic_0001>
module attributes {stable_mosaic.version = 11 : i64} {
  func.func @linear_bn_relu_kernel(%arg0: i32, %arg1: memref<8x4096xbf16, #tpu.memory_space<vmem>>, %arg2: memref<4096x1024xi8, #tpu.memory_space<vmem>>, %arg3: memref<1x1024xf32, #tpu.memory_space<vmem>>, %arg4: memref<1x1024xf32, #tpu.memory_space<vmem>>, %arg5: memref<8x1024xbf16, #tpu.memory_space<vmem>>) attributes {dimension_semantics = [#tpu.dimension_semantics<parallel>], iteration_bounds = array<i64: 4>, scalar_prefetch = 0 : i64, scratch_operands = 0 : i64, tpu.core_type = #tpu.core_type<tc>, window_params = [{pipeline_mode = #tpu.pipeline_mode<synchronous>, transform_indices = @transform_0, window_bounds = array<i64: 8, 4096>}, {transform_indices = @transform_1, window_bounds = array<i64: 4096, 1024>}, {transform_indices = @transform_2, window_bounds = array<i64: 1, 1024>}, {transform_indices = @transform_3, window_bounds = array<i64: 1, 1024>}, {transform_indices = @transform_4, window_bounds = array<i64: 8, 1024>}]} {
    %c0 = arith.constant 0 : index
    %c0_0 = arith.constant 0 : index
    %0 = vector.load %arg2[%c0, %c0_0] : memref<4096x1024xi8, #tpu.memory_space<vmem>>, vector<4096x1024xi8>
    %1 = arith.sitofp %0 : vector<4096x1024xi8> to vector<4096x1024xbf16>
    %c0_1 = arith.constant 0 : index
    %c0_2 = arith.constant 0 : index
    %2 = vector.load %arg1[%c0_1, %c0_2] : memref<8x4096xbf16, #tpu.memory_space<vmem>>, vector<8x4096xbf16>
    %cst = arith.constant dense<0.000000e+00> : vector<8x1024xf32>
    %3 = tpu.matmul %2, %1, %cst {dimension_numbers = #tpu.dot_dimension_numbers<[1], [0], [0], [1], [0, 0, 1, 1], [], []>} : vector<8x4096xbf16>, vector<4096x1024xbf16>, vector<8x1024xf32> -> vector<8x1024xf32>
    %cst_3 = arith.constant dense<0.000000e+00> : vector<1024xf32>
    %4 = vector.multi_reduction <add>, %3, %cst_3 [0] : vector<8x1024xf32> to vector<1024xf32>
    %5 = vector.shape_cast %4 : vector<1024xf32> to vector<1x1024xf32>
    %cst_4 = arith.constant 8.000000e+00 : f32
    %6 = vector.broadcast %cst_4 : f32 to vector<1x1024xf32>
    %7 = arith.divf %5, %6 : vector<1x1024xf32>
    %8 = vector.broadcast %7 : vector<1x1024xf32> to vector<8x1024xf32>
    %9 = arith.subf %3, %8 : vector<8x1024xf32>
    %10 = arith.mulf %9, %9 : vector<8x1024xf32>
    %cst_5 = arith.constant dense<0.000000e+00> : vector<1024xf32>
    %11 = vector.multi_reduction <add>, %10, %cst_5 [0] : vector<8x1024xf32> to vector<1024xf32>
    %12 = vector.shape_cast %11 : vector<1024xf32> to vector<1x1024xf32>
    %cst_6 = arith.constant 8.000000e+00 : f32
    %13 = vector.broadcast %cst_6 : f32 to vector<1x1024xf32>
    %14 = arith.divf %12, %13 : vector<1x1024xf32>
    %15 = vector.broadcast %7 : vector<1x1024xf32> to vector<8x1024xf32>
    %16 = arith.subf %3, %15 : vector<8x1024xf32>
    %cst_7 = arith.constant 9.99999974E-6 : f32
    %17 = vector.broadcast %cst_7 : f32 to vector<1x1024xf32>
    %18 = arith.addf %14, %17 : vector<1x1024xf32>
    %19 = math.rsqrt %18 : vector<1x1024xf32>
    %20 = vector.broadcast %19 : vector<1x1024xf32> to vector<8x1024xf32>
    %21 = arith.mulf %16, %20 : vector<8x1024xf32>
    %c0_8 = arith.constant 0 : index
    %c0_9 = arith.constant 0 : index
    %22 = vector.load %arg3[%c0_8, %c0_9] : memref<1x1024xf32, #tpu.memory_space<vmem>>, vector<1x1024xf32>
    %23 = vector.broadcast %22 : vector<1x1024xf32> to vector<8x1024xf32>
    %24 = arith.mulf %21, %23 : vector<8x1024xf32>
    %c0_10 = arith.constant 0 : index
    %c0_11 = arith.constant 0 : index
    %25 = vector.load %arg4[%c0_10, %c0_11] : memref<1x1024xf32, #tpu.memory_space<vmem>>, vector<1x1024xf32>
    %26 = vector.broadcast %25 : vector<1x1024xf32> to vector<8x1024xf32>
    %27 = arith.addf %24, %26 : vector<8x1024xf32>
    %cst_12 = arith.constant 0.000000e+00 : f32
    %28 = vector.broadcast %cst_12 : f32 to vector<8x1024xf32>
    %29 = arith.maximumf %27, %28 : vector<8x1024xf32>
    %30 = arith.truncf %29 : vector<8x1024xf32> to vector<8x1024xbf16>
    %c0_13 = arith.constant 0 : index
    %c0_14 = arith.constant 0 : index
    %31 = vector.load %arg5[%c0_13, %c0_14] : memref<8x1024xbf16, #tpu.memory_space<vmem>>, vector<8x1024xbf16>
    tpu.vector_store %arg5[%c0_13, %c0_14], %30 {strides = array<i32>} : memref<8x1024xbf16, #tpu.memory_space<vmem>>, vector<8x1024xbf16>,
    return
  }
  func.func @transform_0(%arg0: i32) -> (i32, i32) {
    %c0_i32 = arith.constant 0 : i32
    %c0_i32_0 = arith.constant 0 : i32
    %c0_i32_1 = arith.constant 0 : i32
    return %c0_i32, %c0_i32_0 : i32, i32
  }
  func.func @transform_1(%arg0: i32) -> (i32, i32) {
    %c0_i32 = arith.constant 0 : i32
    %c0_i32_0 = arith.constant 0 : i32
    return %c0_i32, %arg0 : i32, i32
  }
  func.func @transform_2(%arg0: i32) -> (i32, i32) {
    %c0_i32 = arith.constant 0 : i32
    %c0_i32_0 = arith.constant 0 : i32
    return %c0_i32, %arg0 : i32, i32
  }
  func.func @transform_3(%arg0: i32) -> (i32, i32) {
    %c0_i32 = arith.constant 0 : i32
    %c0_i32_0 = arith.constant 0 : i32
    return %c0_i32, %arg0 : i32, i32
  }
  func.func @transform_4(%arg0: i32) -> (i32, i32) {
    %c0_i32 = arith.constant 0 : i32
    %c0_i32_0 = arith.constant 0 : i32
    return %c0_i32, %arg0 : i32, i32
  }
}

</mosaic_0001>

<llo_original>
// kernel: tpu_custom_call.1
$region0: #{tpu_custom_call.1}
  #allocation0 [shape = 'u32[]', space=smem, size = 0x4, offset = 0x4, fixed_abs, tag = 'smem constant byte address 0x4 - core index']
  #allocation1 [shape = 'u32[144,128]{1,0:T(1,128)}', space=vmem, size = 0x12000, scoped, tag = 'internal scratch']
  %s0 = inlined_call_operand.hbm [shape: bf16[8,4096], index: 0, kind: input, shape index: {}]
  %s1 = inlined_call_operand.hbm [shape: s8[4096,4096], index: 1, kind: input, shape index: {}]
  %s2 = inlined_call_operand.hbm [shape: f32[1,4096], index: 2, kind: input, shape index: {}]
  %s3 = inlined_call_operand.hbm [shape: f32[1,4096], index: 3, kind: input, shape index: {}]
  %s4 = inlined_call_operand.hbm [shape: bf16[8,4096], index: 4, kind: output, shape index: {}]
  %s5 = sld [smem:[#allocation0]]
  $region65: #{tpu_custom_call.1} parent=0
    _
  %s7 = ssub.s32 1, %s5
  %s8 = scalar_select 0, %s7, %s5
  $region1: #{tpu_custom_call.1} parent=0
    #allocation2 [shape = 'u8[65536]{0}', space=vmem, size = 0x10000, scoped, tag = 'input window, operand 0, single buffered']
    #allocation3 [shape = 's32[2]{0}', space=sflag, size = 0x8, scoped, tag = 'scoped memory for tpu_custom_call.1']
    #allocation4 [shape = 's32[2]{0}', space=sflag, size = 0x8, scoped, tag = 'scoped memory for tpu_custom_call.1']
    #allocation5 [shape = 'u8[8388608]{0}', space=vmem, size = 0x800000, scoped, tag = 'input window, operand 1']
    #allocation6 [shape = 's32[2]{0}', space=sflag, size = 0x8, scoped, tag = 'scoped memory for tpu_custom_call.1']
    #allocation7 [shape = 'u8[8192]{0}', space=vmem, size = 0x2000, scoped, tag = 'input window, operand 2']
    #allocation8 [shape = 'u8[8192]{0}', space=vmem, size = 0x2000, scoped, tag = 'input window, operand 3']
    #allocation9 [shape = 's32[2]{0}', space=sflag, size = 0x8, scoped, tag = 'scoped memory for tpu_custom_call.1']
    #allocation10 [shape = 'u8[32768]{0}', space=vmem, size = 0x8000, scoped, tag = 'output window, operand 0']
    %9 = vsyncpa [#allocation3], 0
    %10 = vsyncpa [#allocation6], 0
    %s11 = scalar_lea.sflag [#allocation6], 1
    %12 = vsyncpa %s11, 0
    %13 = vsyncpa [#allocation9], 0
    %s14 = scalar_lea.sflag [#allocation9], 1
    %15 = vsyncpa %s14, 0
    %16 = vsyncpa [#allocation4], 0
    %s17 = scalar_lea.sflag [#allocation4], 1
    %18 = vsyncpa %s17, 0
    loop: start=0, step=1, limit=6
    $region2: #{tpu_custom_call.1} parent=1 // loop_pre_header
      _
    $region3: #{tpu_custom_call.1} parent=1 // loop_header
      %s20 = sphi 0, %s24
      %p21 = scmp.ge.s32.totalorder %s20, 6
      %s28 = sphi 0, %s28
      %s30 = sphi 0, %s28
      %s31 = sphi 0, %s30
      %s45 = sphi 0, %s31
      %s51 = sphi 0, %s53
      %s54 = sphi 0, %s51
      %s55 = sphi 0, %s54
      %s71 = sphi 0, %s55
      %s77 = sphi 0, %s79
      %s80 = sphi 0, %s77
      %s81 = sphi 0, %s80
      %s97 = sphi 0, %s81
      %s103 = sphi 0, %s105
      %s106 = sphi 0, %s103
      %s107 = sphi 0, %s106
      %s123 = sphi 0, %s107
      %s129 = sphi 0, %s131
      %s132 = sphi 0, %s129
      %s133 = sphi 0, %s132
      %s149 = sphi 0, %s133
    $region4: #{tpu_custom_call.1} parent=1 // loop_header_branch
      %23 = sbr.rel (%p21) target = $region8
    $region5: #{tpu_custom_call.1} parent=1 // loop_body
      %s25 = ssub.s32 %s20, 1
      %s26 = ssub.s32 %s20, 2
      %s27 = sadd.s32 %s20, 1
      %s29 = sadd.s32 %s28, 1
      %p32 = scmp.eq.s32.totalorder %s20, 3
      %p33 = scmp.ne.s32.totalorder %s28, %s30
      %p34 = scmp.eq.s32.totalorder %s20, 0
      %p35 = por %p33, %p34
      %p36 = scmp.ne.s32.totalorder %s28, %s30
      %p37 = scmp.eq.s32.totalorder %s25, 3
      %p38 = por %p36, %p37
      %p39 = scmp.ne.s32.totalorder %s30, %s31
      %p40 = scmp.eq.s32.totalorder %s25, 0
      %p41 = por %p39, %p40
      %p42 = scmp.ne.s32.totalorder %s30, %s31
      %p43 = scmp.eq.s32.totalorder %s26, 3
      %p44 = por %p42, %p43
      %p46 = scmp.ne.s32.totalorder %s31, %s45
      %p47 = scmp.eq.s32.totalorder %s26, 0
      %p48 = por %p46, %p47
      %s49 = ssub.s32 %s20, %s27
      %p50 = scmp.eq.s32.totalorder %s49, 0
      %s52 = sadd.s32 %s51, 1
      %s53 = scalar_select %p50, %s51, %s52
      %p56 = pneg %p50
      %p57 = scmp.eq.s32.totalorder %s20, 3
      %p58 = por %p56, %p57
      %p59 = scmp.ne.s32.totalorder %s51, %s54
      %p60 = scmp.eq.s32.totalorder %s20, 0
      %p61 = por %p59, %p60
      %p62 = scmp.ne.s32.totalorder %s51, %s54
      %p63 = scmp.eq.s32.totalorder %s25, 3
      %p64 = por %p62, %p63
      %p65 = scmp.ne.s32.totalorder %s54, %s55
      %p66 = scmp.eq.s32.totalorder %s25, 0
      %p67 = por %p65, %p66
      %p68 = scmp.ne.s32.totalorder %s54, %s55
      %p69 = scmp.eq.s32.totalorder %s26, 3
      %p70 = por %p68, %p69
      %p72 = scmp.ne.s32.totalorder %s55, %s71
      %p73 = scmp.eq.s32.totalorder %s26, 0
      %p74 = por %p72, %p73
      %s75 = ssub.s32 %s20, %s27
      %p76 = scmp.eq.s32.totalorder %s75, 0
      %s78 = sadd.s32 %s77, 1
      %s79 = scalar_select %p76, %s77, %s78
      %p82 = pneg %p76
      %p83 = scmp.eq.s32.totalorder %s20, 3
      %p84 = por %p82, %p83
      %p85 = scmp.ne.s32.totalorder %s77, %s80
      %p86 = scmp.eq.s32.totalorder %s20, 0
      %p87 = por %p85, %p86
      %p88 = scmp.ne.s32.totalorder %s77, %s80
      %p89 = scmp.eq.s32.totalorder %s25, 3
      %p90 = por %p88, %p89
      %p91 = scmp.ne.s32.totalorder %s80, %s81
      %p92 = scmp.eq.s32.totalorder %s25, 0
      %p93 = por %p91, %p92
      %p94 = scmp.ne.s32.totalorder %s80, %s81
      %p95 = scmp.eq.s32.totalorder %s26, 3
      %p96 = por %p94, %p95
      %p98 = scmp.ne.s32.totalorder %s81, %s97
      %p99 = scmp.eq.s32.totalorder %s26, 0
      %p100 = por %p98, %p99
      %s101 = ssub.s32 %s20, %s27
      %p102 = scmp.eq.s32.totalorder %s101, 0
      %s104 = sadd.s32 %s103, 1
      %s105 = scalar_select %p102, %s103, %s104
      %p108 = pneg %p102
      %p109 = scmp.eq.s32.totalorder %s20, 3
      %p110 = por %p108, %p109
      %p111 = scmp.ne.s32.totalorder %s103, %s106
      %p112 = scmp.eq.s32.totalorder %s20, 0
      %p113 = por %p111, %p112
      %p114 = scmp.ne.s32.totalorder %s103, %s106
      %p115 = scmp.eq.s32.totalorder %s25, 3
      %p116 = por %p114, %p115
      %p117 = scmp.ne.s32.totalorder %s106, %s107
      %p118 = scmp.eq.s32.totalorder %s25, 0
      %p119 = por %p117, %p118
      %p120 = scmp.ne.s32.totalorder %s106, %s107
      %p121 = scmp.eq.s32.totalorder %s26, 3
      %p122 = por %p120, %p121
      %p124 = scmp.ne.s32.totalorder %s107, %s123
      %p125 = scmp.eq.s32.totalorder %s26, 0
      %p126 = por %p124, %p125
      %s127 = ssub.s32 %s20, %s27
      %p128 = scmp.eq.s32.totalorder %s127, 0
      %s130 = sadd.s32 %s129, 1
      %s131 = scalar_select %p128, %s129, %s130
      %p134 = pneg %p128
      %p135 = scmp.eq.s32.totalorder %s20, 3
      %p136 = por %p134, %p135
      %p137 = scmp.ne.s32.totalorder %s129, %s132
      %p138 = scmp.eq.s32.totalorder %s20, 0
      %p139 = por %p137, %p138
      %p140 = scmp.ne.s32.totalorder %s129, %s132
      %p141 = scmp.eq.s32.totalorder %s25, 3
      %p142 = por %p140, %p141
      %p143 = scmp.ne.s32.totalorder %s132, %s133
      %p144 = scmp.eq.s32.totalorder %s25, 0
      %p145 = por %p143, %p144
      %p146 = scmp.ne.s32.totalorder %s132, %s133
      %p147 = scmp.eq.s32.totalorder %s26, 3
      %p148 = por %p146, %p147
      %p150 = scmp.ne.s32.totalorder %s133, %s149
      %p151 = scmp.eq.s32.totalorder %s26, 0
      %p152 = por %p150, %p151
      %p153 = scmp.le.s32.totalorder 1, %s20
      %p154 = scmp.lt.s32.totalorder %s20, 5
      %p155 = pnand %p153, %p154
      %p156 = pneg %p155
      // Predicated region
      $region9: #{tpu_custom_call.1} parent=5 // pred_check
        _
      $region10: #{tpu_custom_call.1} parent=5 // pred_check_branch
        %158 = sbr.rel (%p155) target = $region12
      $region11: #{tpu_custom_call.1} parent=5 // pred_region
        %s159 = ssub.s32 %s20, 1
        // Predicated region
        $region13: #{tpu_custom_call.1} parent=11 // pred_check
          %p160 = pneg %p41
        $region14: #{tpu_custom_call.1} parent=11 // pred_check_branch
          %162 = sbr.rel (%p160) target = $region16
        $region15: #{tpu_custom_call.1} parent=11 // pred_region
          %s164 = ssub.s32 2048, 2048
          %165 = vsyncadd [#allocation3], %s164
          %s167 = sshll.u32 [#allocation2], 4
          %s168 = int_to_ptr.vmem [resolvable:$true] %s167
          %170 = dma.hbm_to_vmem [thread:$0]  %s0, 2048, %s168, [#allocation3]
        $region16: #{tpu_custom_call.1} parent=11 // pred_fallthru
          _
      $region12: #{tpu_custom_call.1} parent=5 // pred_fallthru
        _
      %p171 = scmp.lt.s32.totalorder %s20, 4
      // Predicated region
      $region17: #{tpu_custom_call.1} parent=5 // pred_check
        %p172 = pneg %p171
      $region18: #{tpu_custom_call.1} parent=5 // pred_check_branch
        %174 = sbr.rel (%p172) target = $region20
      $region19: #{tpu_custom_call.1} parent=5 // pred_region
        // Predicated region
        $region21: #{tpu_custom_call.1} parent=19 // pred_check
          %p175 = pneg %p61
        $region22: #{tpu_custom_call.1} parent=19 // pred_check_branch
          %177 = sbr.rel (%p175) target = $region24
        $region23: #{tpu_custom_call.1} parent=19 // pred_region
          %s178 = sand.u32 %s20, 1
          %s179 = scalar_lea.sflag [#allocation6], %s178
          %s180 = sand.u32 %s51, 1
          %s181 = smul.addr %s180, 8192
          %s182 = scalar_lea.vmem [#allocation5], %s181
          %s183 = smul.u32 8, %s20
          %s185 = ssub.s32 131072, 131072
          %186 = vsyncadd %s179, %s185
          %s187 = smul.addr %s183, 128
          %s188 = scalar_lea.hbm %s1, %s187
          %s189 = sshll.u32 %s182, 4
          %s190 = int_to_ptr.vmem [resolvable:$true] %s189
          %195 = dma.hbm_to_vmem [thread:$0]  %s188, 131072, %s190, %s179, 4096, 1024, 64
        $region24: #{tpu_custom_call.1} parent=19 // pred_fallthru
          _
        // Predicated region
        $region25: #{tpu_custom_call.1} parent=19 // pred_check
          %p196 = pneg %p87
        $region26: #{tpu_custom_call.1} parent=19 // pred_check_branch
          %198 = sbr.rel (%p196) target = $region28
        $region27: #{tpu_custom_call.1} parent=19 // pred_region
          %s199 = sand.u32 %s20, 1
          %s200 = scalar_lea.sflag [#allocation6], %s199
          %s201 = sand.u32 %s77, 1
          %s202 = smul.addr %s201, 8
          %s203 = scalar_lea.vmem [#allocation7], %s202
          %s204 = smul.u32 8, %s20
          %s206 = ssub.s32 128, 128
          %207 = vsyncadd %s200, %s206
          %s208 = smul.addr %s204, 16
          %s209 = scalar_lea.hbm %s2, %s208
          %s211 = sshll.u32 %s203, 4
          %s212 = int_to_ptr.vmem [resolvable:$true] %s211
          %214 = dma.hbm_to_vmem [thread:$0]  %s209, 128, %s212, %s200
        $region28: #{tpu_custom_call.1} parent=19 // pred_fallthru
          _
        // Predicated region
        $region29: #{tpu_custom_call.1} parent=19 // pred_check
          %p215 = pneg %p113
        $region30: #{tpu_custom_call.1} parent=19 // pred_check_branch
          %217 = sbr.rel (%p215) target = $region32
        $region31: #{tpu_custom_call.1} parent=19 // pred_region
          %s218 = sand.u32 %s103, 1
          %s219 = scalar_lea.sflag [#allocation9], %s218
          %s220 = sand.u32 %s103, 1
          %s221 = smul.addr %s220, 8
          %s222 = scalar_lea.vmem [#allocation8], %s221
          %s223 = smul.u32 8, %s20
          %s225 = ssub.s32 128, 128
          %226 = vsyncadd %s219, %s225
          %s227 = smul.addr %s223, 16
          %s228 = scalar_lea.hbm %s3, %s227
          %s230 = sshll.u32 %s222, 4
          %s231 = int_to_ptr.vmem [resolvable:$true] %s230
          %233 = dma.hbm_to_vmem [thread:$0]  %s228, 128, %s231, %s219
        $region32: #{tpu_custom_call.1} parent=19 // pred_fallthru
          _
      $region20: #{tpu_custom_call.1} parent=5 // pred_fallthru
        _
      %p234 = scmp.le.s32.totalorder 1, %s20
      %p235 = scmp.lt.s32.totalorder %s20, 5
      %p236 = pnand %p234, %p235
      %p237 = pneg %p236
      // Predicated region
      $region33: #{tpu_custom_call.1} parent=5 // pred_check
        _
      $region34: #{tpu_custom_call.1} parent=5 // pred_check_branch
        %239 = sbr.rel (%p236) target = $region36
      $region35: #{tpu_custom_call.1} parent=5 // pred_region
        %s240 = ssub.s32 %s20, 1
        // Predicated region
        $region37: #{tpu_custom_call.1} parent=35 // pred_check
          %p241 = pneg %p41
        $region38: #{tpu_custom_call.1} parent=35 // pred_check_branch
          %243 = sbr.rel (%p241) target = $region40
        $region39: #{tpu_custom_call.1} parent=35 // pred_region
          %244 = dma.done [#allocation3], 2048
        $region40: #{tpu_custom_call.1} parent=35 // pred_fallthru
          _
        %s245 = sand.u32 %s25, 1
        %s246 = scalar_lea.sflag [#allocation6], %s245
        %s247 = sand.u32 %s54, 1
        %s248 = smul.addr %s247, 8192
        %s249 = scalar_lea.vmem [#allocation5], %s248
        // Predicated region
        $region41: #{tpu_custom_call.1} parent=35 // pred_check
          %p250 = pneg %p67
        $region42: #{tpu_custom_call.1} parent=35 // pred_check_branch
          %252 = sbr.rel (%p250) target = $region44
        $region43: #{tpu_custom_call.1} parent=35 // pred_region
          %253 = dma.done %s246, 131072
        $region44: #{tpu_custom_call.1} parent=35 // pred_fallthru
          _
        %s254 = sand.u32 %s25, 1
        %s255 = scalar_lea.sflag [#allocation6], %s254
        %s256 = sand.u32 %s80, 1
        %s257 = smul.addr %s256, 8
        %s258 = scalar_lea.vmem [#allocation7], %s257
        // Predicated region
        $region45: #{tpu_custom_call.1} parent=35 // pred_check
          %p259 = pneg %p93
        $region46: #{tpu_custom_call.1} parent=35 // pred_check_branch
          %261 = sbr.rel (%p259) target = $region48
        $region47: #{tpu_custom_call.1} parent=35 // pred_region
          %262 = dma.done %s255, 128
        $region48: #{tpu_custom_call.1} parent=35 // pred_fallthru
          _
        %s263 = sand.u32 %s106, 1
        %s264 = scalar_lea.sflag [#allocation9], %s263
        %s265 = sand.u32 %s106, 1
        %s266 = smul.addr %s265, 8
        %s267 = scalar_lea.vmem [#allocation8], %s266
        // Predicated region
        $region49: #{tpu_custom_call.1} parent=35 // pred_check
          %p268 = pneg %p119
        $region50: #{tpu_custom_call.1} parent=35 // pred_check_branch
          %270 = sbr.rel (%p268) target = $region52
        $region51: #{tpu_custom_call.1} parent=35 // pred_region
          %271 = dma.done %s264, 128
        $region52: #{tpu_custom_call.1} parent=35 // pred_fallthru
          _
        %p272 = pneg %p41
        %p273 = pneg %p38
        %s274 = sand.u32 %s25, 1
        %s275 = scalar_lea.sflag [#allocation6], %s274
        %s276 = sand.u32 %s54, 1
        %s277 = smul.addr %s276, 8192
        %s278 = scalar_lea.vmem [#allocation5], %s277
        %p279 = pneg %p67
        %p280 = pneg %p64
        %s281 = sand.u32 %s25, 1
        %s282 = scalar_lea.sflag [#allocation6], %s281
        %s283 = sand.u32 %s80, 1
        %s284 = smul.addr %s283, 8
        %s285 = scalar_lea.vmem [#allocation7], %s284
        %p286 = pneg %p93
        %p287 = pneg %p90
        %s288 = sand.u32 %s106, 1
        %s289 = scalar_lea.sflag [#allocation9], %s288
        %s290 = sand.u32 %s106, 1
        %s291 = smul.addr %s290, 8
        %s292 = scalar_lea.vmem [#allocation8], %s291
        %p293 = pneg %p119
        %p294 = pneg %p116
        %p295 = pneg %p145
        %p296 = pneg %p142
        %s297 = sand.u32 %s132, 1
        %s298 = scalar_lea.sflag [#allocation4], %s297
        %s299 = sand.u32 %s132, 1
        %s300 = smul.addr %s299, 32
        %s301 = scalar_lea.vmem [#allocation10], %s300
        %s302 = smul.u32 8, %s25
        %s303 = smul.u32 8, %s25
        %s304 = smul.u32 8, %s25
        %s305 = smul.u32 8, %s25
        %v306 = vld [vmem:[%s249] sm:$0xff]
        %v307 = vld [vmem:[%s249 + $0x8] sm:$0xff]
        %v308 = vld [vmem:[%s249 + $0x10] sm:$0xff]
        %v309 = vld [vmem:[%s249 + $0x18] sm:$0xff]
        %v310 = vld [vmem:[%s249 + $0x20] sm:$0xff]
        %v311 = vld [vmem:[%s249 + $0x28] sm:$0xff]
        %v312 = vld [vmem:[%s249 + $0x30] sm:$0xff]
        %v313 = vld [vmem:[%s249 + $0x38] sm:$0xff]
        %v314 = vld [vmem:[%s249 + $0x40] sm:$0xff]
        %v315 = vld [vmem:[%s249 + $0x48] sm:$0xff]
        %v316 = vld [vmem:[%s249 + $0x50] sm:$0xff]
        %v317 = vld [vmem:[%s249 + $0x58] sm:$0xff]
        %v318 = vld [vmem:[%s249 + $0x60] sm:$0xff]
        %v319 = vld [vmem:[%s249 + $0x68] sm:$0xff]
        %v320 = vld [vmem:[%s249 + $0x70] sm:$0xff]
        %v321 = vld [vmem:[%s249 + $0x78] sm:$0xff]
        %v322 = vld [vmem:[%s249 + $0x80] sm:$0xff]
        %v323 = vld [vmem:[%s249 + $0x88] sm:$0xff]
        %v324 = vld [vmem:[%s249 + $0x90] sm:$0xff]
        %v325 = vld [vmem:[%s249 + $0x98] sm:$0xff]
        %v326 = vld [vmem:[%s249 + $0xa0] sm:$0xff]
        %v327 = vld [vmem:[%s249 + $0xa8] sm:$0xff]
        %v328 = vld [vmem:[%s249 + $0xb0] sm:$0xff]
        %v329 = vld [vmem:[%s249 + $0xb8] sm:$0xff]
        %v330 = vld [vmem:[%s249 + $0xc0] sm:$0xff]
        %v331 = vld [vmem:[%s249 + $0xc8] sm:$0xff]
        %v332 = vld [vmem:[%s249 + $0xd0] sm:$0xff]
        %v333 = vld [vmem:[%s249 + $0xd8] sm:$0xff]
        %v334 = vld [vmem:[%s249 + $0xe0] sm:$0xff]
        %v335 = vld [vmem:[%s249 + $0xe8] sm:$0xff]
        %v336 = vld [vmem:[%s249 + $0xf0] sm:$0xff]
        %v337 = vld [vmem:[%s249 + $0xf8] sm:$0xff]
        %v338 = vld [vmem:[%s249 + $0x100] sm:$0xff]
        %v339 = vld [vmem:[%s249 + $0x108] sm:$0xff]
        %v340 = vld [vmem:[%s249 + $0x110] sm:$0xff]
        %v341 = vld [vmem:[%s249 + $0x118] sm:$0xff]
        %v342 = vld [vmem:[%s249 + $0x120] sm:$0xff]
        %v343 = vld [vmem:[%s249 + $0x128] sm:$0xff]
        %v344 = vld [vmem:[%s249 + $0x130] sm:$0xff]
        %v345 = vld [vmem:[%s249 + $0x138] sm:$0xff]
        %v346 = vld [vmem:[%s249 + $0x140] sm:$0xff]
        %v347 = vld [vmem:[%s249 + $0x148] sm:$0xff]
        %v348 = vld [vmem:[%s249 + $0x150] sm:$0xff]
        %v349 = vld [vmem:[%s249 + $0x158] sm:$0xff]
        %v350 = vld [vmem:[%s249 + $0x160] sm:$0xff]
        %v351 = vld [vmem:[%s249 + $0x168] sm:$0xff]
        %v352 = vld [vmem:[%s249 + $0x170] sm:$0xff]
        %v353 = vld [vmem:[%s249 + $0x178] sm:$0xff]
        %v354 = vld [vmem:[%s249 + $0x180] sm:$0xff]
        %v355 = vld [vmem:[%s249 + $0x188] sm:$0xff]
        %v356 = vld [vmem:[%s249 + $0x190] sm:$0xff]
        %v357 = vld [vmem:[%s249 + $0x198] sm:$0xff]
        %v358 = vld [vmem:[%s249 + $0x1a0] sm:$0xff]
        %v359 = vld [vmem:[%s249 + $0x1a8] sm:$0xff]
        %v360 = vld [vmem:[%s249 + $0x1b0] sm:$0xff]
        %v361 = vld [vmem:[%s249 + $0x1b8] sm:$0xff]
        %v362 = vld [vmem:[%s249 + $0x1c0] sm:$0xff]
        %v363 = vld [vmem:[%s249 + $0x1c8] sm:$0xff]
        %v364 = vld [vmem:[%s249 + $0x1d0] sm:$0xff]
        %v365 = vld [vmem:[%s249 + $0x1d8] sm:$0xff]
        %v366 = vld [vmem:[%s249 + $0x1e0] sm:$0xff]
        %v367 = vld [vmem:[%s249 + $0x1e8] sm:$0xff]
        %v368 = vld [vmem:[%s249 + $0x1f0] sm:$0xff]
        %v369 = vld [vmem:[%s249 + $0x1f8] sm:$0xff]
        %v370 = vld [vmem:[%s249 + $0x200] sm:$0xff]
        %v371 = vld [vmem:[%s249 + $0x208] sm:$0xff]
        %v372 = vld [vmem:[%s249 + $0x210] sm:$0xff]
        %v373 = vld [vmem:[%s249 + $0x218] sm:$0xff]
        %v374 = vld [vmem:[%s249 + $0x220] sm:$0xff]
        %v375 = vld [vmem:[%s249 + $0x228] sm:$0xff]
        %v376 = vld [vmem:[%s249 + $0x230] sm:$0xff]
        %v377 = vld [vmem:[%s249 + $0x238] sm:$0xff]
        %v378 = vld [vmem:[%s249 + $0x240] sm:$0xff]
        %v379 = vld [vmem:[%s249 + $0x248] sm:$0xff]
        %v380 = vld [vmem:[%s249 + $0x250] sm:$0xff]
        %v381 = vld [vmem:[%s249 + $0x258] sm:$0xff]
        %v382 = vld [vmem:[%s249 + $0x260] sm:$0xff]
        %v383 = vld [vmem:[%s249 + $0x268] sm:$0xff]
        %v384 = vld [vmem:[%s249 + $0x270] sm:$0xff]
        %v385 = vld [vmem:[%s249 + $0x278] sm:$0xff]
        %v386 = vld [vmem:[%s249 + $0x280] sm:$0xff]
        %v387 = vld [vmem:[%s249 + $0x288] sm:$0xff]
        %v388 = vld [vmem:[%s249 + $0x290] sm:$0xff]
        %v389 = vld [vmem:[%s249 + $0x298] sm:$0xff]
        %v390 = vld [vmem:[%s249 + $0x2a0] sm:$0xff]
        %v391 = vld [vmem:[%s249 + $0x2a8] sm:$0xff]
        %v392 = vld [vmem:[%s249 + $0x2b0] sm:$0xff]
        %v393 = vld [vmem:[%s249 + $0x2b8] sm:$0xff]
        %v394 = vld [vmem:[%s249 + $0x2c0] sm:$0xff]
        %v395 = vld [vmem:[%s249 + $0x2c8] sm:$0xff]
        %v396 = vld [vmem:[%s249 + $0x2d0] sm:$0xff]
        %v397 = vld [vmem:[%s249 + $0x2d8] sm:$0xff]
        %v398 = vld [vmem:[%s249 + $0x2e0] sm:$0xff]
        %v399 = vld [vmem:[%s249 + $0x2e8] sm:$0xff]
        %v400 = vld [vmem:[%s249 + $0x2f0] sm:$0xff]
        %v401 = vld [vmem:[%s249 + $0x2f8] sm:$0xff]
        %v402 = vld [vmem:[%s249 + $0x300] sm:$0xff]
        %v403 = vld [vmem:[%s249 + $0x308] sm:$0xff]
        %v404 = vld [vmem:[%s249 + $0x310] sm:$0xff]
        %v405 = vld [vmem:[%s249 + $0x318] sm:$0xff]
        %v406 = vld [vmem:[%s249 + $0x320] sm:$0xff]
        %v407 = vld [vmem:[%s249 + $0x328] sm:$0xff]
        %v408 = vld [vmem:[%s249 + $0x330] sm:$0xff]
        %v409 = vld [vmem:[%s249 + $0x338] sm:$0xff]
        %v410 = vld [vmem:[%s249 + $0x340] sm:$0xff]
        %v411 = vld [vmem:[%s249 + $0x348] sm:$0xff]
        %v412 = vld [vmem:[%s249 + $0x350] sm:$0xff]
        %v413 = vld [vmem:[%s249 + $0x358] sm:$0xff]
        %v414 = vld [vmem:[%s249 + $0x360] sm:$0xff]
        %v415 = vld [vmem:[%s249 + $0x368] sm:$0xff]
        %v416 = vld [vmem:[%s249 + $0x370] sm:$0xff]
        %v417 = vld [vmem:[%s249 + $0x378] sm:$0xff]
        %v418 = vld [vmem:[%s249 + $0x380] sm:$0xff]
        %v419 = vld [vmem:[%s249 + $0x388] sm:$0xff]
        %v420 = vld [vmem:[%s249 + $0x390] sm:$0xff]
        %v421 = vld [vmem:[%s249 + $0x398] sm:$0xff]
        %v422 = vld [vmem:[%s249 + $0x3a0] sm:$0xff]
        %v423 = vld [vmem:[%s249 + $0x3a8] sm:$0xff]
        %v424 = vld [vmem:[%s249 + $0x3b0] sm:$0xff]
        %v425 = vld [vmem:[%s249 + $0x3b8] sm:$0xff]
        %v426 = vld [vmem:[%s249 + $0x3c0] sm:$0xff]
        %v427 = vld [vmem:[%s249 + $0x3c8] sm:$0xff]
        %v428 = vld [vmem:[%s249 + $0x3d0] sm:$0xff]
        %v429 = vld [vmem:[%s249 + $0x3d8] sm:$0xff]
        %v430 = vld [vmem:[%s249 + $0x3e0] sm:$0xff]
        %v431 = vld [vmem:[%s249 + $0x3e8] sm:$0xff]
        %v432 = vld [vmem:[%s249 + $0x3f0] sm:$0xff]
        %v433 = vld [vmem:[%s249 + $0x3f8] sm:$0xff]
        %v434 = vld [vmem:[%s249 + $0x400] sm:$0xff]
        %v435 = vld [vmem:[%s249 + $0x408] sm:$0xff]
        %v436 = vld [vmem:[%s249 + $0x410] sm:$0xff]
        %v437 = vld [vmem:[%s249 + $0x418] sm:$0xff]
        %v438 = vld [vmem:[%s249 + $0x420] sm:$0xff]
        %v439 = vld [vmem:[%s249 + $0x428] sm:$0xff]
        %v440 = vld [vmem:[%s249 + $0x430] sm:$0xff]
        %v441 = vld [vmem:[%s249 + $0x438] sm:$0xff]
        %v442 = vld [vmem:[%s249 + $0x440] sm:$0xff]
        %v443 = vld [vmem:[%s249 + $0x448] sm:$0xff]
        %v444 = vld [vmem:[%s249 + $0x450] sm:$0xff]
        %v445 = vld [vmem:[%s249 + $0x458] sm:$0xff]
        %v446 = vld [vmem:[%s249 + $0x460] sm:$0xff]
        %v447 = vld [vmem:[%s249 + $0x468] sm:$0xff]
        %v448 = vld [vmem:[%s249 + $0x470] sm:$0xff]
        %v449 = vld [vmem:[%s249 + $0x478] sm:$0xff]
        %v450 = vld [vmem:[%s249 + $0x480] sm:$0xff]
        %v451 = vld [vmem:[%s249 + $0x488] sm:$0xff]
        %v452 = vld [vmem:[%s249 + $0x490] sm:$0xff]
        %v453 = vld [vmem:[%s249 + $0x498] sm:$0xff]
        %v454 = vld [vmem:[%s249 + $0x4a0] sm:$0xff]
        %v455 = vld [vmem:[%s249 + $0x4a8] sm:$0xff]
        %v456 = vld [vmem:[%s249 + $0x4b0] sm:$0xff]
        %v457 = vld [vmem:[%s249 + $0x4b8] sm:$0xff]
        %v458 = vld [vmem:[%s249 + $0x4c0] sm:$0xff]
        %v459 = vld [vmem:[%s249 + $0x4c8] sm:$0xff]
        %v460 = vld [vmem:[%s249 + $0x4d0] sm:$0xff]
        %v461 = vld [vmem:[%s249 + $0x4d8] sm:$0xff]
        %v462 = vld [vmem:[%s249 + $0x4e0] sm:$0xff]
        %v463 = vld [vmem:[%s249 + $0x4e8] sm:$0xff]
        %v464 = vld [vmem:[%s249 + $0x4f0] sm:$0xff]
        %v465 = vld [vmem:[%s249 + $0x4f8] sm:$0xff]
        %v466 = vld [vmem:[%s249 + $0x500] sm:$0xff]
        %v467 = vld [vmem:[%s249 + $0x508] sm:$0xff]
        %v468 = vld [vmem:[%s249 + $0x510] sm:$0xff]
        %v469 = vld [vmem:[%s249 + $0x518] sm:$0xff]
        %v470 = vld [vmem:[%s249 + $0x520] sm:$0xff]
        %v471 = vld [vmem:[%s249 + $0x528] sm:$0xff]
        %v472 = vld [vmem:[%s249 + $0x530] sm:$0xff]
        %v473 = vld [vmem:[%s249 + $0x538] sm:$0xff]
        %v474 = vld [vmem:[%s249 + $0x540] sm:$0xff]
        %v475 = vld [vmem:[%s249 + $0x548] sm:$0xff]
        %v476 = vld [vmem:[%s249 + $0x550] sm:$0xff]
        %v477 = vld [vmem:[%s249 + $0x558] sm:$0xff]
        %v478 = vld [vmem:[%s249 + $0x560] sm:$0xff]
        %v479 = vld [vmem:[%s249 + $0x568] sm:$0xff]
        %v480 = vld [vmem:[%s249 + $0x570] sm:$0xff]
        %v481 = vld [vmem:[%s249 + $0x578] sm:$0xff]
        %v482 = vld [vmem:[%s249 + $0x580] sm:$0xff]
        %v483 = vld [vmem:[%s249 + $0x588] sm:$0xff]
        %v484 = vld [vmem:[%s249 + $0x590] sm:$0xff]
        %v485 = vld [vmem:[%s249 + $0x598] sm:$0xff]
        %v486 = vld [vmem:[%s249 + $0x5a0] sm:$0xff]
        %v487 = vld [vmem:[%s249 + $0x5a8] sm:$0xff]
        %v488 = vld [vmem:[%s249 + $0x5b0] sm:$0xff]
        %v489 = vld [vmem:[%s249 + $0x5b8] sm:$0xff]
        %v490 = vld [vmem:[%s249 + $0x5c0] sm:$0xff]
        %v491 = vld [vmem:[%s249 + $0x5c8] sm:$0xff]
        %v492 = vld [vmem:[%s249 + $0x5d0] sm:$0xff]
        %v493 = vld [vmem:[%s249 + $0x5d8] sm:$0xff]
        %v494 = vld [vmem:[%s249 + $0x5e0] sm:$0xff]
        %v495 = vld [vmem:[%s249 + $0x5e8] sm:$0xff]
        %v496 = vld [vmem:[%s249 + $0x5f0] sm:$0xff]
        %v497 = vld [vmem:[%s249 + $0x5f8] sm:$0xff]
        %v498 = vld [vmem:[%s249 + $0x600] sm:$0xff]
        %v499 = vld [vmem:[%s249 + $0x608] sm:$0xff]
        %v500 = vld [vmem:[%s249 + $0x610] sm:$0xff]
        %v501 = vld [vmem:[%s249 + $0x618] sm:$0xff]
        %v502 = vld [vmem:[%s249 + $0x620] sm:$0xff]
        %v503 = vld [vmem:[%s249 + $0x628] sm:$0xff]
        %v504 = vld [vmem:[%s249 + $0x630] sm:$0xff]
        %v505 = vld [vmem:[%s249 + $0x638] sm:$0xff]
        %v506 = vld [vmem:[%s249 + $0x640] sm:$0xff]
        %v507 = vld [vmem:[%s249 + $0x648] sm:$0xff]
        %v508 = vld [vmem:[%s249 + $0x650] sm:$0xff]
        %v509 = vld [vmem:[%s249 + $0x658] sm:$0xff]
        %v510 = vld [vmem:[%s249 + $0x660] sm:$0xff]
        %v511 = vld [vmem:[%s249 + $0x668] sm:$0xff]
        %v512 = vld [vmem:[%s249 + $0x670] sm:$0xff]
        %v513 = vld [vmem:[%s249 + $0x678] sm:$0xff]
        %v514 = vld [vmem:[%s249 + $0x680] sm:$0xff]
        %v515 = vld [vmem:[%s249 + $0x688] sm:$0xff]
        %v516 = vld [vmem:[%s249 + $0x690] sm:$0xff]
        %v517 = vld [vmem:[%s249 + $0x698] sm:$0xff]
        %v518 = vld [vmem:[%s249 + $0x6a0] sm:$0xff]
        %v519 = vld [vmem:[%s249 + $0x6a8] sm:$0xff]
        %v520 = vld [vmem:[%s249 + $0x6b0] sm:$0xff]
        %v521 = vld [vmem:[%s249 + $0x6b8] sm:$0xff]
        %v522 = vld [vmem:[%s249 + $0x6c0] sm:$0xff]
        %v523 = vld [vmem:[%s249 + $0x6c8] sm:$0xff]
        %v524 = vld [vmem:[%s249 + $0x6d0] sm:$0xff]
        %v525 = vld [vmem:[%s249 + $0x6d8] sm:$0xff]
        %v526 = vld [vmem:[%s249 + $0x6e0] sm:$0xff]
        %v527 = vld [vmem:[%s249 + $0x6e8] sm:$0xff]
        %v528 = vld [vmem:[%s249 + $0x6f0] sm:$0xff]
        %v529 = vld [vmem:[%s249 + $0x6f8] sm:$0xff]
        %v530 = vld [vmem:[%s249 + $0x700] sm:$0xff]
        %v531 = vld [vmem:[%s249 + $0x708] sm:$0xff]
        %v532 = vld [vmem:[%s249 + $0x710] sm:$0xff]
        %v533 = vld [vmem:[%s249 + $0x718] sm:$0xff]
        %v534 = vld [vmem:[%s249 + $0x720] sm:$0xff]
        %v535 = vld [vmem:[%s249 + $0x728] sm:$0xff]
        %v536 = vld [vmem:[%s249 + $0x730] sm:$0xff]
        %v537 = vld [vmem:[%s249 + $0x738] sm:$0xff]
        %v538 = vld [vmem:[%s249 + $0x740] sm:$0xff]
        %v539 = vld [vmem:[%s249 + $0x748] sm:$0xff]
        %v540 = vld [vmem:[%s249 + $0x750] sm:$0xff]
        %v541 = vld [vmem:[%s249 + $0x758] sm:$0xff]
        %v542 = vld [vmem:[%s249 + $0x760] sm:$0xff]
        %v543 = vld [vmem:[%s249 + $0x768] sm:$0xff]
        %v544 = vld [vmem:[%s249 + $0x770] sm:$0xff]
        %v545 = vld [vmem:[%s249 + $0x778] sm:$0xff]
        %v546 = vld [vmem:[%s249 + $0x780] sm:$0xff]
        %v547 = vld [vmem:[%s249 + $0x788] sm:$0xff]
        %v548 = vld [vmem:[%s249 + $0x790] sm:$0xff]
        %v549 = vld [vmem:[%s249 + $0x798] sm:$0xff]
        %v550 = vld [vmem:[%s249 + $0x7a0] sm:$0xff]
        %v551 = vld [vmem:[%s249 + $0x7a8] sm:$0xff]
        %v552 = vld [vmem:[%s249 + $0x7b0] sm:$0xff]
        %v553 = vld [vmem:[%s249 + $0x7b8] sm:$0xff]
        %v554 = vld [vmem:[%s249 + $0x7c0] sm:$0xff]
        %v555 = vld [vmem:[%s249 + $0x7c8] sm:$0xff]
        %v556 = vld [vmem:[%s249 + $0x7d0] sm:$0xff]
        %v557 = vld [vmem:[%s249 + $0x7d8] sm:$0xff]
        %v558 = vld [vmem:[%s249 + $0x7e0] sm:$0xff]
        %v559 = vld [vmem:[%s249 + $0x7e8] sm:$0xff]
        %v560 = vld [vmem:[%s249 + $0x7f0] sm:$0xff]
        %v561 = vld [vmem:[%s249 + $0x7f8] sm:$0xff]
        %v562 = vld [vmem:[%s249 + $0x800] sm:$0xff]
        %v563 = vld [vmem:[%s249 + $0x808] sm:$0xff]
        %v564 = vld [vmem:[%s249 + $0x810] sm:$0xff]
        %v565 = vld [vmem:[%s249 + $0x818] sm:$0xff]
        %v566 = vld [vmem:[%s249 + $0x820] sm:$0xff]
        %v567 = vld [vmem:[%s249 + $0x828] sm:$0xff]
        %v568 = vld [vmem:[%s249 + $0x830] sm:$0xff]
        %v569 = vld [vmem:[%s249 + $0x838] sm:$0xff]
        %v570 = vld [vmem:[%s249 + $0x840] sm:$0xff]
        %v571 = vld [vmem:[%s249 + $0x848] sm:$0xff]
        %v572 = vld [vmem:[%s249 + $0x850] sm:$0xff]
        %v573 = vld [vmem:[%s249 + $0x858] sm:$0xff]
        %v574 = vld [vmem:[%s249 + $0x860] sm:$0xff]
        %v575 = vld [vmem:[%s249 + $0x868] sm:$0xff]
        %v576 = vld [vmem:[%s249 + $0x870] sm:$0xff]
        %v577 = vld [vmem:[%s249 + $0x878] sm:$0xff]
        %v578 = vld [vmem:[%s249 + $0x880] sm:$0xff]
        %v579 = vld [vmem:[%s249 + $0x888] sm:$0xff]
        %v580 = vld [vmem:[%s249 + $0x890] sm:$0xff]
        %v581 = vld [vmem:[%s249 + $0x898] sm:$0xff]
        %v582 = vld [vmem:[%s249 + $0x8a0] sm:$0xff]
        %v583 = vld [vmem:[%s249 + $0x8a8] sm:$0xff]
        %v584 = vld [vmem:[%s249 + $0x8b0] sm:$0xff]
        %v585 = vld [vmem:[%s249 + $0x8b8] sm:$0xff]
        %v586 = vld [vmem:[%s249 + $0x8c0] sm:$0xff]
        %v587 = vld [vmem:[%s249 + $0x8c8] sm:$0xff]
        %v588 = vld [vmem:[%s249 + $0x8d0] sm:$0xff]
        %v589 = vld [vmem:[%s249 + $0x8d8] sm:$0xff]
        %v590 = vld [vmem:[%s249 + $0x8e0] sm:$0xff]
        %v591 = vld [vmem:[%s249 + $0x8e8] sm:$0xff]
        %v592 = vld [vmem:[%s249 + $0x8f0] sm:$0xff]
        %v593 = vld [vmem:[%s249 + $0x8f8] sm:$0xff]
        %v594 = vld [vmem:[%s249 + $0x900] sm:$0xff]
        %v595 = vld [vmem:[%s249 + $0x908] sm:$0xff]
        %v596 = vld [vmem:[%s249 + $0x910] sm:$0xff]
        %v597 = vld [vmem:[%s249 + $0x918] sm:$0xff]
        %v598 = vld [vmem:[%s249 + $0x920] sm:$0xff]
        %v599 = vld [vmem:[%s249 + $0x928] sm:$0xff]
        %v600 = vld [vmem:[%s249 + $0x930] sm:$0xff]
        %v601 = vld [vmem:[%s249 + $0x938] sm:$0xff]
        %v602 = vld [vmem:[%s249 + $0x940] sm:$0xff]
        %v603 = vld [vmem:[%s249 + $0x948] sm:$0xff]
        %v604 = vld [vmem:[%s249 + $0x950] sm:$0xff]
        %v605 = vld [vmem:[%s249 + $0x958] sm:$0xff]
        %v606 = vld [vmem:[%s249 + $0x960] sm:$0xff]
        %v607 = vld [vmem:[%s249 + $0x968] sm:$0xff]
        %v608 = vld [vmem:[%s249 + $0x970] sm:$0xff]
        %v609 = vld [vmem:[%s249 + $0x978] sm:$0xff]
        %v610 = vld [vmem:[%s249 + $0x980] sm:$0xff]
        %v611 = vld [vmem:[%s249 + $0x988] sm:$0xff]
        %v612 = vld [vmem:[%s249 + $0x990] sm:$0xff]
        %v613 = vld [vmem:[%s249 + $0x998] sm:$0xff]
        %v614 = vld [vmem:[%s249 + $0x9a0] sm:$0xff]
        %v615 = vld [vmem:[%s249 + $0x9a8] sm:$0xff]
        %v616 = vld [vmem:[%s249 + $0x9b0] sm:$0xff]
        %v617 = vld [vmem:[%s249 + $0x9b8] sm:$0xff]
        %v618 = vld [vmem:[%s249 + $0x9c0] sm:$0xff]
        %v619 = vld [vmem:[%s249 + $0x9c8] sm:$0xff]
        %v620 = vld [vmem:[%s249 + $0x9d0] sm:$0xff]
        %v621 = vld [vmem:[%s249 + $0x9d8] sm:$0xff]
        %v622 = vld [vmem:[%s249 + $0x9e0] sm:$0xff]
        %v623 = vld [vmem:[%s249 + $0x9e8] sm:$0xff]
        %v624 = vld [vmem:[%s249 + $0x9f0] sm:$0xff]
        %v625 = vld [vmem:[%s249 + $0x9f8] sm:$0xff]
        %v626 = vld [vmem:[%s249 + $0xa00] sm:$0xff]
        %v627 = vld [vmem:[%s249 + $0xa08] sm:$0xff]
        %v628 = vld [vmem:[%s249 + $0xa10] sm:$0xff]
        %v629 = vld [vmem:[%s249 + $0xa18] sm:$0xff]
        %v630 = vld [vmem:[%s249 + $0xa20] sm:$0xff]
        %v631 = vld [vmem:[%s249 + $0xa28] sm:$0xff]
        %v632 = vld [vmem:[%s249 + $0xa30] sm:$0xff]
        %v633 = vld [vmem:[%s249 + $0xa38] sm:$0xff]
        %v634 = vld [vmem:[%s249 + $0xa40] sm:$0xff]
        %v635 = vld [vmem:[%s249 + $0xa48] sm:$0xff]
        %v636 = vld [vmem:[%s249 + $0xa50] sm:$0xff]
        %v637 = vld [vmem:[%s249 + $0xa58] sm:$0xff]
        %v638 = vld [vmem:[%s249 + $0xa60] sm:$0xff]
        %v639 = vld [vmem:[%s249 + $0xa68] sm:$0xff]
        %v640 = vld [vmem:[%s249 + $0xa70] sm:$0xff]
        %v641 = vld [vmem:[%s249 + $0xa78] sm:$0xff]
        %v642 = vld [vmem:[%s249 + $0xa80] sm:$0xff]
        %v643 = vld [vmem:[%s249 + $0xa88] sm:$0xff]
        %v644 = vld [vmem:[%s249 + $0xa90] sm:$0xff]
        %v645 = vld [vmem:[%s249 + $0xa98] sm:$0xff]
        %v646 = vld [vmem:[%s249 + $0xaa0] sm:$0xff]
        %v647 = vld [vmem:[%s249 + $0xaa8] sm:$0xff]
        %v648 = vld [vmem:[%s249 + $0xab0] sm:$0xff]
        %v649 = vld [vmem:[%s249 + $0xab8] sm:$0xff]
        %v650 = vld [vmem:[%s249 + $0xac0] sm:$0xff]
        %v651 = vld [vmem:[%s249 + $0xac8] sm:$0xff]
        %v652 = vld [vmem:[%s249 + $0xad0] sm:$0xff]
        %v653 = vld [vmem:[%s249 + $0xad8] sm:$0xff]
        %v654 = vld [vmem:[%s249 + $0xae0] sm:$0xff]
        %v655 = vld [vmem:[%s249 + $0xae8] sm:$0xff]
        %v656 = vld [vmem:[%s249 + $0xaf0] sm:$0xff]
        %v657 = vld [vmem:[%s249 + $0xaf8] sm:$0xff]
        %v658 = vld [vmem:[%s249 + $0xb00] sm:$0xff]
        %v659 = vld [vmem:[%s249 + $0xb08] sm:$0xff]
        %v660 = vld [vmem:[%s249 + $0xb10] sm:$0xff]
        %v661 = vld [vmem:[%s249 + $0xb18] sm:$0xff]
        %v662 = vld [vmem:[%s249 + $0xb20] sm:$0xff]
        %v663 = vld [vmem:[%s249 + $0xb28] sm:$0xff]
        %v664 = vld [vmem:[%s249 + $0xb30] sm:$0xff]
        %v665 = vld [vmem:[%s249 + $0xb38] sm:$0xff]
        %v666 = vld [vmem:[%s249 + $0xb40] sm:$0xff]
        %v667 = vld [vmem:[%s249 + $0xb48] sm:$0xff]
        %v668 = vld [vmem:[%s249 + $0xb50] sm:$0xff]
        %v669 = vld [vmem:[%s249 + $0xb58] sm:$0xff]
        %v670 = vld [vmem:[%s249 + $0xb60] sm:$0xff]
        %v671 = vld [vmem:[%s249 + $0xb68] sm:$0xff]
        %v672 = vld [vmem:[%s249 + $0xb70] sm:$0xff]
        %v673 = vld [vmem:[%s249 + $0xb78] sm:$0xff]
        %v674 = vld [vmem:[%s249 + $0xb80] sm:$0xff]
        %v675 = vld [vmem:[%s249 + $0xb88] sm:$0xff]
        %v676 = vld [vmem:[%s249 + $0xb90] sm:$0xff]
        %v677 = vld [vmem:[%s249 + $0xb98] sm:$0xff]
        %v678 = vld [vmem:[%s249 + $0xba0] sm:$0xff]
        %v679 = vld [vmem:[%s249 + $0xba8] sm:$0xff]
        %v680 = vld [vmem:[%s249 + $0xbb0] sm:$0xff]
        %v681 = vld [vmem:[%s249 + $0xbb8] sm:$0xff]
        %v682 = vld [vmem:[%s249 + $0xbc0] sm:$0xff]
        %v683 = vld [vmem:[%s249 + $0xbc8] sm:$0xff]
        %v684 = vld [vmem:[%s249 + $0xbd0] sm:$0xff]
        %v685 = vld [vmem:[%s249 + $0xbd8] sm:$0xff]
        %v686 = vld [vmem:[%s249 + $0xbe0] sm:$0xff]
        %v687 = vld [vmem:[%s249 + $0xbe8] sm:$0xff]
        %v688 = vld [vmem:[%s249 + $0xbf0] sm:$0xff]
        %v689 = vld [vmem:[%s249 + $0xbf8] sm:$0xff]
        %v690 = vld [vmem:[%s249 + $0xc00] sm:$0xff]
        %v691 = vld [vmem:[%s249 + $0xc08] sm:$0xff]
        %v692 = vld [vmem:[%s249 + $0xc10] sm:$0xff]
        %v693 = vld [vmem:[%s249 + $0xc18] sm:$0xff]
        %v694 = vld [vmem:[%s249 + $0xc20] sm:$0xff]
        %v695 = vld [vmem:[%s249 + $0xc28] sm:$0xff]
        %v696 = vld [vmem:[%s249 + $0xc30] sm:$0xff]
        %v697 = vld [vmem:[%s249 + $0xc38] sm:$0xff]
        %v698 = vld [vmem:[%s249 + $0xc40] sm:$0xff]
        %v699 = vld [vmem:[%s249 + $0xc48] sm:$0xff]
        %v700 = vld [vmem:[%s249 + $0xc50] sm:$0xff]
        %v701 = vld [vmem:[%s249 + $0xc58] sm:$0xff]
        %v702 = vld [vmem:[%s249 + $0xc60] sm:$0xff]
        %v703 = vld [vmem:[%s249 + $0xc68] sm:$0xff]
        %v704 = vld [vmem:[%s249 + $0xc70] sm:$0xff]
        %v705 = vld [vmem:[%s249 + $0xc78] sm:$0xff]
        %v706 = vld [vmem:[%s249 + $0xc80] sm:$0xff]
        %v707 = vld [vmem:[%s249 + $0xc88] sm:$0xff]
        %v708 = vld [vmem:[%s249 + $0xc90] sm:$0xff]
        %v709 = vld [vmem:[%s249 + $0xc98] sm:$0xff]
        %v710 = vld [vmem:[%s249 + $0xca0] sm:$0xff]
        %v711 = vld [vmem:[%s249 + $0xca8] sm:$0xff]
        %v712 = vld [vmem:[%s249 + $0xcb0] sm:$0xff]
        %v713 = vld [vmem:[%s249 + $0xcb8] sm:$0xff]
        %v714 = vld [vmem:[%s249 + $0xcc0] sm:$0xff]
        %v715 = vld [vmem:[%s249 + $0xcc8] sm:$0xff]
        %v716 = vld [vmem:[%s249 + $0xcd0] sm:$0xff]
        %v717 = vld [vmem:[%s249 + $0xcd8] sm:$0xff]
        %v718 = vld [vmem:[%s249 + $0xce0] sm:$0xff]
        %v719 = vld [vmem:[%s249 + $0xce8] sm:$0xff]
        %v720 = vld [vmem:[%s249 + $0xcf0] sm:$0xff]
        %v721 = vld [vmem:[%s249 + $0xcf8] sm:$0xff]
        %v722 = vld [vmem:[%s249 + $0xd00] sm:$0xff]
        %v723 = vld [vmem:[%s249 + $0xd08] sm:$0xff]
        %v724 = vld [vmem:[%s249 + $0xd10] sm:$0xff]
        %v725 = vld [vmem:[%s249 + $0xd18] sm:$0xff]
        %v726 = vld [vmem:[%s249 + $0xd20] sm:$0xff]
        %v727 = vld [vmem:[%s249 + $0xd28] sm:$0xff]
        %v728 = vld [vmem:[%s249 + $0xd30] sm:$0xff]
        %v729 = vld [vmem:[%s249 + $0xd38] sm:$0xff]
        %v730 = vld [vmem:[%s249 + $0xd40] sm:$0xff]
        %v731 = vld [vmem:[%s249 + $0xd48] sm:$0xff]
        %v732 = vld [vmem:[%s249 + $0xd50] sm:$0xff]
        %v733 = vld [vmem:[%s249 + $0xd58] sm:$0xff]
        %v734 = vld [vmem:[%s249 + $0xd60] sm:$0xff]
        %v735 = vld [vmem:[%s249 + $0xd68] sm:$0xff]
        %v736 = vld [vmem:[%s249 + $0xd70] sm:$0xff]
        %v737 = vld [vmem:[%s249 + $0xd78] sm:$0xff]
        %v738 = vld [vmem:[%s249 + $0xd80] sm:$0xff]
        %v739 = vld [vmem:[%s249 + $0xd88] sm:$0xff]
        %v740 = vld [vmem:[%s249 + $0xd90] sm:$0xff]
        %v741 = vld [vmem:[%s249 + $0xd98] sm:$0xff]
        %v742 = vld [vmem:[%s249 + $0xda0] sm:$0xff]
        %v743 = vld [vmem:[%s249 + $0xda8] sm:$0xff]
        %v744 = vld [vmem:[%s249 + $0xdb0] sm:$0xff]
        %v745 = vld [vmem:[%s249 + $0xdb8] sm:$0xff]
        %v746 = vld [vmem:[%s249 + $0xdc0] sm:$0xff]
        %v747 = vld [vmem:[%s249 + $0xdc8] sm:$0xff]
        %v748 = vld [vmem:[%s249 + $0xdd0] sm:$0xff]
        %v749 = vld [vmem:[%s249 + $0xdd8] sm:$0xff]
        %v750 = vld [vmem:[%s249 + $0xde0] sm:$0xff]
        %v751 = vld [vmem:[%s249 + $0xde8] sm:$0xff]
        %v752 = vld [vmem:[%s249 + $0xdf0] sm:$0xff]
        %v753 = vld [vmem:[%s249 + $0xdf8] sm:$0xff]
        %v754 = vld [vmem:[%s249 + $0xe00] sm:$0xff]
        %v755 = vld [vmem:[%s249 + $0xe08] sm:$0xff]
        %v756 = vld [vmem:[%s249 + $0xe10] sm:$0xff]
        %v757 = vld [vmem:[%s249 + $0xe18] sm:$0xff]
        %v758 = vld [vmem:[%s249 + $0xe20] sm:$0xff]
        %v759 = vld [vmem:[%s249 + $0xe28] sm:$0xff]
        %v760 = vld [vmem:[%s249 + $0xe30] sm:$0xff]
        %v761 = vld [vmem:[%s249 + $0xe38] sm:$0xff]
        %v762 = vld [vmem:[%s249 + $0xe40] sm:$0xff]
        %v763 = vld [vmem:[%s249 + $0xe48] sm:$0xff]
        %v764 = vld [vmem:[%s249 + $0xe50] sm:$0xff]
        %v765 = vld [vmem:[%s249 + $0xe58] sm:$0xff]
        %v766 = vld [vmem:[%s249 + $0xe60] sm:$0xff]
        %v767 = vld [vmem:[%s249 + $0xe68] sm:$0xff]
        %v768 = vld [vmem:[%s249 + $0xe70] sm:$0xff]
        %v769 = vld [vmem:[%s249 + $0xe78] sm:$0xff]
        %v770 = vld [vmem:[%s249 + $0xe80] sm:$0xff]
        %v771 = vld [vmem:[%s249 + $0xe88] sm:$0xff]
        %v772 = vld [vmem:[%s249 + $0xe90] sm:$0xff]
        %v773 = vld [vmem:[%s249 + $0xe98] sm:$0xff]
        %v774 = vld [vmem:[%s249 + $0xea0] sm:$0xff]
        %v775 = vld [vmem:[%s249 + $0xea8] sm:$0xff]
        %v776 = vld [vmem:[%s249 + $0xeb0] sm:$0xff]
        %v777 = vld [vmem:[%s249 + $0xeb8] sm:$0xff]
        %v778 = vld [vmem:[%s249 + $0xec0] sm:$0xff]
        %v779 = vld [vmem:[%s249 + $0xec8] sm:$0xff]
        %v780 = vld [vmem:[%s249 + $0xed0] sm:$0xff]
        %v781 = vld [vmem:[%s249 + $0xed8] sm:$0xff]
        %v782 = vld [vmem:[%s249 + $0xee0] sm:$0xff]
        %v783 = vld [vmem:[%s249 + $0xee8] sm:$0xff]
        %v784 = vld [vmem:[%s249 + $0xef0] sm:$0xff]
        %v785 = vld [vmem:[%s249 + $0xef8] sm:$0xff]
        %v786 = vld [vmem:[%s249 + $0xf00] sm:$0xff]
        %v787 = vld [vmem:[%s249 + $0xf08] sm:$0xff]
        %v788 = vld [vmem:[%s249 + $0xf10] sm:$0xff]
        %v789 = vld [vmem:[%s249 + $0xf18] sm:$0xff]
        %v790 = vld [vmem:[%s249 + $0xf20] sm:$0xff]
        %v791 = vld [vmem:[%s249 + $0xf28] sm:$0xff]
        %v792 = vld [vmem:[%s249 + $0xf30] sm:$0xff]
        %v793 = vld [vmem:[%s249 + $0xf38] sm:$0xff]
        %v794 = vld [vmem:[%s249 + $0xf40] sm:$0xff]
        %v795 = vld [vmem:[%s249 + $0xf48] sm:$0xff]
        %v796 = vld [vmem:[%s249 + $0xf50] sm:$0xff]
        %v797 = vld [vmem:[%s249 + $0xf58] sm:$0xff]
        %v798 = vld [vmem:[%s249 + $0xf60] sm:$0xff]
        %v799 = vld [vmem:[%s249 + $0xf68] sm:$0xff]
        %v800 = vld [vmem:[%s249 + $0xf70] sm:$0xff]
        %v801 = vld [vmem:[%s249 + $0xf78] sm:$0xff]
        %v802 = vld [vmem:[%s249 + $0xf80] sm:$0xff]
        %v803 = vld [vmem:[%s249 + $0xf88] sm:$0xff]
        %v804 = vld [vmem:[%s249 + $0xf90] sm:$0xff]
        %v805 = vld [vmem:[%s249 + $0xf98] sm:$0xff]
        %v806 = vld [vmem:[%s249 + $0xfa0] sm:$0xff]
        %v807 = vld [vmem:[%s249 + $0xfa8] sm:$0xff]
        %v808 = vld [vmem:[%s249 + $0xfb0] sm:$0xff]
        %v809 = vld [vmem:[%s249 + $0xfb8] sm:$0xff]
        %v810 = vld [vmem:[%s249 + $0xfc0] sm:$0xff]
        %v811 = vld [vmem:[%s249 + $0xfc8] sm:$0xff]
        %v812 = vld [vmem:[%s249 + $0xfd0] sm:$0xff]
        %v813 = vld [vmem:[%s249 + $0xfd8] sm:$0xff]
        %v814 = vld [vmem:[%s249 + $0xfe0] sm:$0xff]
        %v815 = vld [vmem:[%s249 + $0xfe8] sm:$0xff]
        %v816 = vld [vmem:[%s249 + $0xff0] sm:$0xff]
        %v817 = vld [vmem:[%s249 + $0xff8] sm:$0xff]
        %v818 = vld [vmem:[%s249 + $0x1000] sm:$0xff]
        %v819 = vld [vmem:[%s249 + $0x1008] sm:$0xff]
        %v820 = vld [vmem:[%s249 + $0x1010] sm:$0xff]
        %v821 = vld [vmem:[%s249 + $0x1018] sm:$0xff]
        %v822 = vld [vmem:[%s249 + $0x1020] sm:$0xff]
        %v823 = vld [vmem:[%s249 + $0x1028] sm:$0xff]
        %v824 = vld [vmem:[%s249 + $0x1030] sm:$0xff]
        %v825 = vld [vmem:[%s249 + $0x1038] sm:$0xff]
        %v826 = vld [vmem:[%s249 + $0x1040] sm:$0xff]
        %v827 = vld [vmem:[%s249 + $0x1048] sm:$0xff]
        %v828 = vld [vmem:[%s249 + $0x1050] sm:$0xff]
        %v829 = vld [vmem:[%s249 + $0x1058] sm:$0xff]
        %v830 = vld [vmem:[%s249 + $0x1060] sm:$0xff]
        %v831 = vld [vmem:[%s249 + $0x1068] sm:$0xff]
        %v832 = vld [vmem:[%s249 + $0x1070] sm:$0xff]
        %v833 = vld [vmem:[%s249 + $0x1078] sm:$0xff]
        %v834 = vld [vmem:[%s249 + $0x1080] sm:$0xff]
        %v835 = vld [vmem:[%s249 + $0x1088] sm:$0xff]
        %v836 = vld [vmem:[%s249 + $0x1090] sm:$0xff]
        %v837 = vld [vmem:[%s249 + $0x1098] sm:$0xff]
        %v838 = vld [vmem:[%s249 + $0x10a0] sm:$0xff]
        %v839 = vld [vmem:[%s249 + $0x10a8] sm:$0xff]
        %v840 = vld [vmem:[%s249 + $0x10b0] sm:$0xff]
        %v841 = vld [vmem:[%s249 + $0x10b8] sm:$0xff]
        %v842 = vld [vmem:[%s249 + $0x10c0] sm:$0xff]
        %v843 = vld [vmem:[%s249 + $0x10c8] sm:$0xff]
        %v844 = vld [vmem:[%s249 + $0x10d0] sm:$0xff]
        %v845 = vld [vmem:[%s249 + $0x10d8] sm:$0xff]
        %v846 = vld [vmem:[%s249 + $0x10e0] sm:$0xff]
        %v847 = vld [vmem:[%s249 + $0x10e8] sm:$0xff]
        %v848 = vld [vmem:[%s249 + $0x10f0] sm:$0xff]
        %v849 = vld [vmem:[%s249 + $0x10f8] sm:$0xff]
        %v850 = vld [vmem:[%s249 + $0x1100] sm:$0xff]
        %v851 = vld [vmem:[%s249 + $0x1108] sm:$0xff]
        %v852 = vld [vmem:[%s249 + $0x1110] sm:$0xff]
        %v853 = vld [vmem:[%s249 + $0x1118] sm:$0xff]
        %v854 = vld [vmem:[%s249 + $0x1120] sm:$0xff]
        %v855 = vld [vmem:[%s249 + $0x1128] sm:$0xff]
        %v856 = vld [vmem:[%s249 + $0x1130] sm:$0xff]
        %v857 = vld [vmem:[%s249 + $0x1138] sm:$0xff]
        %v858 = vld [vmem:[%s249 + $0x1140] sm:$0xff]
        %v859 = vld [vmem:[%s249 + $0x1148] sm:$0xff]
        %v860 = vld [vmem:[%s249 + $0x1150] sm:$0xff]
        %v861 = vld [vmem:[%s249 + $0x1158] sm:$0xff]
        %v862 = vld [vmem:[%s249 + $0x1160] sm:$0xff]
        %v863 = vld [vmem:[%s249 + $0x1168] sm:$0xff]
        %v864 = vld [vmem:[%s249 + $0x1170] sm:$0xff]
        %v865 = vld [vmem:[%s249 + $0x1178] sm:$0xff]
        %v866 = vld [vmem:[%s249 + $0x1180] sm:$0xff]
        %v867 = vld [vmem:[%s249 + $0x1188] sm:$0xff]
        %v868 = vld [vmem:[%s249 + $0x1190] sm:$0xff]
        %v869 = vld [vmem:[%s249 + $0x1198] sm:$0xff]
        %v870 = vld [vmem:[%s249 + $0x11a0] sm:$0xff]
        %v871 = vld [vmem:[%s249 + $0x11a8] sm:$0xff]
        %v872 = vld [vmem:[%s249 + $0x11b0] sm:$0xff]
        %v873 = vld [vmem:[%s249 + $0x11b8] sm:$0xff]
        %v874 = vld [vmem:[%s249 + $0x11c0] sm:$0xff]
        %v875 = vld [vmem:[%s249 + $0x11c8] sm:$0xff]
        %v876 = vld [vmem:[%s249 + $0x11d0] sm:$0xff]
        %v877 = vld [vmem:[%s249 + $0x11d8] sm:$0xff]
        %v878 = vld [vmem:[%s249 + $0x11e0] sm:$0xff]
        %v879 = vld [vmem:[%s249 + $0x11e8] sm:$0xff]
        %v880 = vld [vmem:[%s249 + $0x11f0] sm:$0xff]
        %v881 = vld [vmem:[%s249 + $0x11f8] sm:$0xff]
        %v882 = vld [vmem:[%s249 + $0x1200] sm:$0xff]
        %v883 = vld [vmem:[%s249 + $0x1208] sm:$0xff]
        %v884 = vld [vmem:[%s249 + $0x1210] sm:$0xff]
        %v885 = vld [vmem:[%s249 + $0x1218] sm:$0xff]
        %v886 = vld [vmem:[%s249 + $0x1220] sm:$0xff]
        %v887 = vld [vmem:[%s249 + $0x1228] sm:$0xff]
        %v888 = vld [vmem:[%s249 + $0x1230] sm:$0xff]
        %v889 = vld [vmem:[%s249 + $0x1238] sm:$0xff]
        %v890 = vld [vmem:[%s249 + $0x1240] sm:$0xff]
        %v891 = vld [vmem:[%s249 + $0x1248] sm:$0xff]
        %v892 = vld [vmem:[%s249 + $0x1250] sm:$0xff]
        %v893 = vld [vmem:[%s249 + $0x1258] sm:$0xff]
        %v894 = vld [vmem:[%s249 + $0x1260] sm:$0xff]
        %v895 = vld [vmem:[%s249 + $0x1268] sm:$0xff]
        %v896 = vld [vmem:[%s249 + $0x1270] sm:$0xff]
        %v897 = vld [vmem:[%s249 + $0x1278] sm:$0xff]
        %v898 = vld [vmem:[%s249 + $0x1280] sm:$0xff]
        %v899 = vld [vmem:[%s249 + $0x1288] sm:$0xff]
        %v900 = vld [vmem:[%s249 + $0x1290] sm:$0xff]
        %v901 = vld [vmem:[%s249 + $0x1298] sm:$0xff]
        %v902 = vld [vmem:[%s249 + $0x12a0] sm:$0xff]
        %v903 = vld [vmem:[%s249 + $0x12a8] sm:$0xff]
        %v904 = vld [vmem:[%s249 + $0x12b0] sm:$0xff]
        %v905 = vld [vmem:[%s249 + $0x12b8] sm:$0xff]
        %v906 = vld [vmem:[%s249 + $0x12c0] sm:$0xff]
        %v907 = vld [vmem:[%s249 + $0x12c8] sm:$0xff]
        %v908 = vld [vmem:[%s249 + $0x12d0] sm:$0xff]
        %v909 = vld [vmem:[%s249 + $0x12d8] sm:$0xff]
        %v910 = vld [vmem:[%s249 + $0x12e0] sm:$0xff]
        %v911 = vld [vmem:[%s249 + $0x12e8] sm:$0xff]
        %v912 = vld [vmem:[%s249 + $0x12f0] sm:$0xff]
        %v913 = vld [vmem:[%s249 + $0x12f8] sm:$0xff]
        %v914 = vld [vmem:[%s249 + $0x1300] sm:$0xff]
        %v915 = vld [vmem:[%s249 + $0x1308] sm:$0xff]
        %v916 = vld [vmem:[%s249 + $0x1310] sm:$0xff]
        %v917 = vld [vmem:[%s249 + $0x1318] sm:$0xff]
        %v918 = vld [vmem:[%s249 + $0x1320] sm:$0xff]
        %v919 = vld [vmem:[%s249 + $0x1328] sm:$0xff]
        %v920 = vld [vmem:[%s249 + $0x1330] sm:$0xff]
        %v921 = vld [vmem:[%s249 + $0x1338] sm:$0xff]
        %v922 = vld [vmem:[%s249 + $0x1340] sm:$0xff]
        %v923 = vld [vmem:[%s249 + $0x1348] sm:$0xff]
        %v924 = vld [vmem:[%s249 + $0x1350] sm:$0xff]
        %v925 = vld [vmem:[%s249 + $0x1358] sm:$0xff]
        %v926 = vld [vmem:[%s249 + $0x1360] sm:$0xff]
        %v927 = vld [vmem:[%s249 + $0x1368] sm:$0xff]
        %v928 = vld [vmem:[%s249 + $0x1370] sm:$0xff]
        %v929 = vld [vmem:[%s249 + $0x1378] sm:$0xff]
        %v930 = vld [vmem:[%s249 + $0x1380] sm:$0xff]
        %v931 = vld [vmem:[%s249 + $0x1388] sm:$0xff]
        %v932 = vld [vmem:[%s249 + $0x1390] sm:$0xff]
        %v933 = vld [vmem:[%s249 + $0x1398] sm:$0xff]
        %v934 = vld [vmem:[%s249 + $0x13a0] sm:$0xff]
        %v935 = vld [vmem:[%s249 + $0x13a8] sm:$0xff]
        %v936 = vld [vmem:[%s249 + $0x13b0] sm:$0xff]
        %v937 = vld [vmem:[%s249 + $0x13b8] sm:$0xff]
        %v938 = vld [vmem:[%s249 + $0x13c0] sm:$0xff]
        %v939 = vld [vmem:[%s249 + $0x13c8] sm:$0xff]
        %v940 = vld [vmem:[%s249 + $0x13d0] sm:$0xff]
        %v941 = vld [vmem:[%s249 + $0x13d8] sm:$0xff]
        %v942 = vld [vmem:[%s249 + $0x13e0] sm:$0xff]
        %v943 = vld [vmem:[%s249 + $0x13e8] sm:$0xff]
        %v944 = vld [vmem:[%s249 + $0x13f0] sm:$0xff]
        %v945 = vld [vmem:[%s249 + $0x13f8] sm:$0xff]
        %v946 = vld [vmem:[%s249 + $0x1400] sm:$0xff]
        %v947 = vld [vmem:[%s249 + $0x1408] sm:$0xff]
        %v948 = vld [vmem:[%s249 + $0x1410] sm:$0xff]
        %v949 = vld [vmem:[%s249 + $0x1418] sm:$0xff]
        %v950 = vld [vmem:[%s249 + $0x1420] sm:$0xff]
        %v951 = vld [vmem:[%s249 + $0x1428] sm:$0xff]
        %v952 = vld [vmem:[%s249 + $0x1430] sm:$0xff]
        %v953 = vld [vmem:[%s249 + $0x1438] sm:$0xff]
        %v954 = vld [vmem:[%s249 + $0x1440] sm:$0xff]
        %v955 = vld [vmem:[%s249 + $0x1448] sm:$0xff]
        %v956 = vld [vmem:[%s249 + $0x1450] sm:$0xff]
        %v957 = vld [vmem:[%s249 + $0x1458] sm:$0xff]
        %v958 = vld [vmem:[%s249 + $0x1460] sm:$0xff]
        %v959 = vld [vmem:[%s249 + $0x1468] sm:$0xff]
        %v960 = vld [vmem:[%s249 + $0x1470] sm:$0xff]
        %v961 = vld [vmem:[%s249 + $0x1478] sm:$0xff]
        %v962 = vld [vmem:[%s249 + $0x1480] sm:$0xff]
        %v963 = vld [vmem:[%s249 + $0x1488] sm:$0xff]
        %v964 = vld [vmem:[%s249 + $0x1490] sm:$0xff]
        %v965 = vld [vmem:[%s249 + $0x1498] sm:$0xff]
        %v966 = vld [vmem:[%s249 + $0x14a0] sm:$0xff]
        %v967 = vld [vmem:[%s249 + $0x14a8] sm:$0xff]
        %v968 = vld [vmem:[%s249 + $0x14b0] sm:$0xff]
        %v969 = vld [vmem:[%s249 + $0x14b8] sm:$0xff]
        %v970 = vld [vmem:[%s249 + $0x14c0] sm:$0xff]
        %v971 = vld [vmem:[%s249 + $0x14c8] sm:$0xff]
        %v972 = vld [vmem:[%s249 + $0x14d0] sm:$0xff]
        %v973 = vld [vmem:[%s249 + $0x14d8] sm:$0xff]
        %v974 = vld [vmem:[%s249 + $0x14e0] sm:$0xff]
        %v975 = vld [vmem:[%s249 + $0x14e8] sm:$0xff]
        %v976 = vld [vmem:[%s249 + $0x14f0] sm:$0xff]
        %v977 = vld [vmem:[%s249 + $0x14f8] sm:$0xff]
        %v978 = vld [vmem:[%s249 + $0x1500] sm:$0xff]
        %v979 = vld [vmem:[%s249 + $0x1508] sm:$0xff]
        %v980 = vld [vmem:[%s249 + $0x1510] sm:$0xff]
        %v981 = vld [vmem:[%s249 + $0x1518] sm:$0xff]
        %v982 = vld [vmem:[%s249 + $0x1520] sm:$0xff]
        %v983 = vld [vmem:[%s249 + $0x1528] sm:$0xff]
        %v984 = vld [vmem:[%s249 + $0x1530] sm:$0xff]
        %v985 = vld [vmem:[%s249 + $0x1538] sm:$0xff]
        %v986 = vld [vmem:[%s249 + $0x1540] sm:$0xff]
        %v987 = vld [vmem:[%s249 + $0x1548] sm:$0xff]
        %v988 = vld [vmem:[%s249 + $0x1550] sm:$0xff]
        %v989 = vld [vmem:[%s249 + $0x1558] sm:$0xff]
        %v990 = vld [vmem:[%s249 + $0x1560] sm:$0xff]
        %v991 = vld [vmem:[%s249 + $0x1568] sm:$0xff]
        %v992 = vld [vmem:[%s249 + $0x1570] sm:$0xff]
        %v993 = vld [vmem:[%s249 + $0x1578] sm:$0xff]
        %v994 = vld [vmem:[%s249 + $0x1580] sm:$0xff]
        %v995 = vld [vmem:[%s249 + $0x1588] sm:$0xff]
        %v996 = vld [vmem:[%s249 + $0x1590] sm:$0xff]
        %v997 = vld [vmem:[%s249 + $0x1598] sm:$0xff]
        %v998 = vld [vmem:[%s249 + $0x15a0] sm:$0xff]
        %v999 = vld [vmem:[%s249 + $0x15a8] sm:$0xff]
        %v1000 = vld [vmem:[%s249 + $0x15b0] sm:$0xff]
        %v1001 = vld [vmem:[%s249 + $0x15b8] sm:$0xff]
        %v1002 = vld [vmem:[%s249 + $0x15c0] sm:$0xff]
        %v1003 = vld [vmem:[%s249 + $0x15c8] sm:$0xff]
        %v1004 = vld [vmem:[%s249 + $0x15d0] sm:$0xff]
        %v1005 = vld [vmem:[%s249 + $0x15d8] sm:$0xff]
        %v1006 = vld [vmem:[%s249 + $0x15e0] sm:$0xff]
        %v1007 = vld [vmem:[%s249 + $0x15e8] sm:$0xff]
        %v1008 = vld [vmem:[%s249 + $0x15f0] sm:$0xff]
        %v1009 = vld [vmem:[%s249 + $0x15f8] sm:$0xff]
        %v1010 = vld [vmem:[%s249 + $0x1600] sm:$0xff]
        %v1011 = vld [vmem:[%s249 + $0x1608] sm:$0xff]
        %v1012 = vld [vmem:[%s249 + $0x1610] sm:$0xff]
        %v1013 = vld [vmem:[%s249 + $0x1618] sm:$0xff]
        %v1014 = vld [vmem:[%s249 + $0x1620] sm:$0xff]
        %v1015 = vld [vmem:[%s249 + $0x1628] sm:$0xff]
        %v1016 = vld [vmem:[%s249 + $0x1630] sm:$0xff]
        %v1017 = vld [vmem:[%s249 + $0x1638] sm:$0xff]
        %v1018 = vld [vmem:[%s249 + $0x1640] sm:$0xff]
        %v1019 = vld [vmem:[%s249 + $0x1648] sm:$0xff]
        %v1020 = vld [vmem:[%s249 + $0x1650] sm:$0xff]
        %v1021 = vld [vmem:[%s249 + $0x1658] sm:$0xff]
        %v1022 = vld [vmem:[%s249 + $0x1660] sm:$0xff]
        %v1023 = vld [vmem:[%s249 + $0x1668] sm:$0xff]
        %v1024 = vld [vmem:[%s249 + $0x1670] sm:$0xff]
        %v1025 = vld [vmem:[%s249 + $0x1678] sm:$0xff]
        %v1026 = vld [vmem:[%s249 + $0x1680] sm:$0xff]
        %v1027 = vld [vmem:[%s249 + $0x1688] sm:$0xff]
        %v1028 = vld [vmem:[%s249 + $0x1690] sm:$0xff]
        %v1029 = vld [vmem:[%s249 + $0x1698] sm:$0xff]
        %v1030 = vld [vmem:[%s249 + $0x16a0] sm:$0xff]
        %v1031 = vld [vmem:[%s249 + $0x16a8] sm:$0xff]
        %v1032 = vld [vmem:[%s249 + $0x16b0] sm:$0xff]
        %v1033 = vld [vmem:[%s249 + $0x16b8] sm:$0xff]
        %v1034 = vld [vmem:[%s249 + $0x16c0] sm:$0xff]
        %v1035 = vld [vmem:[%s249 + $0x16c8] sm:$0xff]
        %v1036 = vld [vmem:[%s249 + $0x16d0] sm:$0xff]
        %v1037 = vld [vmem:[%s249 + $0x16d8] sm:$0xff]
        %v1038 = vld [vmem:[%s249 + $0x16e0] sm:$0xff]
        %v1039 = vld [vmem:[%s249 + $0x16e8] sm:$0xff]
        %v1040 = vld [vmem:[%s249 + $0x16f0] sm:$0xff]
        %v1041 = vld [vmem:[%s249 + $0x16f8] sm:$0xff]
        %v1042 = vld [vmem:[%s249 + $0x1700] sm:$0xff]
        %v1043 = vld [vmem:[%s249 + $0x1708] sm:$0xff]
        %v1044 = vld [vmem:[%s249 + $0x1710] sm:$0xff]
        %v1045 = vld [vmem:[%s249 + $0x1718] sm:$0xff]
        %v1046 = vld [vmem:[%s249 + $0x1720] sm:$0xff]
        %v1047 = vld [vmem:[%s249 + $0x1728] sm:$0xff]
        %v1048 = vld [vmem:[%s249 + $0x1730] sm:$0xff]
        %v1049 = vld [vmem:[%s249 + $0x1738] sm:$0xff]
        %v1050 = vld [vmem:[%s249 + $0x1740] sm:$0xff]
        %v1051 = vld [vmem:[%s249 + $0x1748] sm:$0xff]
        %v1052 = vld [vmem:[%s249 + $0x1750] sm:$0xff]
        %v1053 = vld [vmem:[%s249 + $0x1758] sm:$0xff]
        %v1054 = vld [vmem:[%s249 + $0x1760] sm:$0xff]
        %v1055 = vld [vmem:[%s249 + $0x1768] sm:$0xff]
        %v1056 = vld [vmem:[%s249 + $0x1770] sm:$0xff]
        %v1057 = vld [vmem:[%s249 + $0x1778] sm:$0xff]
        %v1058 = vld [vmem:[%s249 + $0x1780] sm:$0xff]
        %v1059 = vld [vmem:[%s249 + $0x1788] sm:$0xff]
        %v1060 = vld [vmem:[%s249 + $0x1790] sm:$0xff]
        %v1061 = vld [vmem:[%s249 + $0x1798] sm:$0xff]
        %v1062 = vld [vmem:[%s249 + $0x17a0] sm:$0xff]
        %v1063 = vld [vmem:[%s249 + $0x17a8] sm:$0xff]
        %v1064 = vld [vmem:[%s249 + $0x17b0] sm:$0xff]
        %v1065 = vld [vmem:[%s249 + $0x17b8] sm:$0xff]
        %v1066 = vld [vmem:[%s249 + $0x17c0] sm:$0xff]
        %v1067 = vld [vmem:[%s249 + $0x17c8] sm:$0xff]
        %v1068 = vld [vmem:[%s249 + $0x17d0] sm:$0xff]
        %v1069 = vld [vmem:[%s249 + $0x17d8] sm:$0xff]
        %v1070 = vld [vmem:[%s249 + $0x17e0] sm:$0xff]
        %v1071 = vld [vmem:[%s249 + $0x17e8] sm:$0xff]
        %v1072 = vld [vmem:[%s249 + $0x17f0] sm:$0xff]
        %v1073 = vld [vmem:[%s249 + $0x17f8] sm:$0xff]
        %v1074 = vld [vmem:[%s249 + $0x1800] sm:$0xff]
        %v1075 = vld [vmem:[%s249 + $0x1808] sm:$0xff]
        %v1076 = vld [vmem:[%s249 + $0x1810] sm:$0xff]
        %v1077 = vld [vmem:[%s249 + $0x1818] sm:$0xff]
        %v1078 = vld [vmem:[%s249 + $0x1820] sm:$0xff]
        %v1079 = vld [vmem:[%s249 + $0x1828] sm:$0xff]
        %v1080 = vld [vmem:[%s249 + $0x1830] sm:$0xff]
        %v1081 = vld [vmem:[%s249 + $0x1838] sm:$0xff]
        %v1082 = vld [vmem:[%s249 + $0x1840] sm:$0xff]
        %v1083 = vld [vmem:[%s249 + $0x1848] sm:$0xff]
        %v1084 = vld [vmem:[%s249 + $0x1850] sm:$0xff]
        %v1085 = vld [vmem:[%s249 + $0x1858] sm:$0xff]
        %v1086 = vld [vmem:[%s249 + $0x1860] sm:$0xff]
        %v1087 = vld [vmem:[%s249 + $0x1868] sm:$0xff]
        %v1088 = vld [vmem:[%s249 + $0x1870] sm:$0xff]
        %v1089 = vld [vmem:[%s249 + $0x1878] sm:$0xff]
        %v1090 = vld [vmem:[%s249 + $0x1880] sm:$0xff]
        %v1091 = vld [vmem:[%s249 + $0x1888] sm:$0xff]
        %v1092 = vld [vmem:[%s249 + $0x1890] sm:$0xff]
        %v1093 = vld [vmem:[%s249 + $0x1898] sm:$0xff]
        %v1094 = vld [vmem:[%s249 + $0x18a0] sm:$0xff]
        %v1095 = vld [vmem:[%s249 + $0x18a8] sm:$0xff]
        %v1096 = vld [vmem:[%s249 + $0x18b0] sm:$0xff]
        %v1097 = vld [vmem:[%s249 + $0x18b8] sm:$0xff]
        %v1098 = vld [vmem:[%s249 + $0x18c0] sm:$0xff]
        %v1099 = vld [vmem:[%s249 + $0x18c8] sm:$0xff]
        %v1100 = vld [vmem:[%s249 + $0x18d0] sm:$0xff]
        %v1101 = vld [vmem:[%s249 + $0x18d8] sm:$0xff]
        %v1102 = vld [vmem:[%s249 + $0x18e0] sm:$0xff]
        %v1103 = vld [vmem:[%s249 + $0x18e8] sm:$0xff]
        %v1104 = vld [vmem:[%s249 + $0x18f0] sm:$0xff]
        %v1105 = vld [vmem:[%s249 + $0x18f8] sm:$0xff]
        %v1106 = vld [vmem:[%s249 + $0x1900] sm:$0xff]
        %v1107 = vld [vmem:[%s249 + $0x1908] sm:$0xff]
        %v1108 = vld [vmem:[%s249 + $0x1910] sm:$0xff]
        %v1109 = vld [vmem:[%s249 + $0x1918] sm:$0xff]
        %v1110 = vld [vmem:[%s249 + $0x1920] sm:$0xff]
        %v1111 = vld [vmem:[%s249 + $0x1928] sm:$0xff]
        %v1112 = vld [vmem:[%s249 + $0x1930] sm:$0xff]
        %v1113 = vld [vmem:[%s249 + $0x1938] sm:$0xff]
        %v1114 = vld [vmem:[%s249 + $0x1940] sm:$0xff]
        %v1115 = vld [vmem:[%s249 + $0x1948] sm:$0xff]
        %v1116 = vld [vmem:[%s249 + $0x1950] sm:$0xff]
        %v1117 = vld [vmem:[%s249 + $0x1958] sm:$0xff]
        %v1118 = vld [vmem:[%s249 + $0x1960] sm:$0xff]
        %v1119 = vld [vmem:[%s249 + $0x1968] sm:$0xff]
        %v1120 = vld [vmem:[%s249 + $0x1970] sm:$0xff]
        %v1121 = vld [vmem:[%s249 + $0x1978] sm:$0xff]
        %v1122 = vld [vmem:[%s249 + $0x1980] sm:$0xff]
        %v1123 = vld [vmem:[%s249 + $0x1988] sm:$0xff]
        %v1124 = vld [vmem:[%s249 + $0x1990] sm:$0xff]
        %v1125 = vld [vmem:[%s249 + $0x1998] sm:$0xff]
        %v1126 = vld [vmem:[%s249 + $0x19a0] sm:$0xff]
        %v1127 = vld [vmem:[%s249 + $0x19a8] sm:$0xff]
        %v1128 = vld [vmem:[%s249 + $0x19b0] sm:$0xff]
        %v1129 = vld [vmem:[%s249 + $0x19b8] sm:$0xff]
        %v1130 = vld [vmem:[%s249 + $0x19c0] sm:$0xff]
        %v1131 = vld [vmem:[%s249 + $0x19c8] sm:$0xff]
        %v1132 = vld [vmem:[%s249 + $0x19d0] sm:$0xff]
        %v1133 = vld [vmem:[%s249 + $0x19d8] sm:$0xff]
        %v1134 = vld [vmem:[%s249 + $0x19e0] sm:$0xff]
        %v1135 = vld [vmem:[%s249 + $0x19e8] sm:$0xff]
        %v1136 = vld [vmem:[%s249 + $0x19f0] sm:$0xff]
        %v1137 = vld [vmem:[%s249 + $0x19f8] sm:$0xff]
        %v1138 = vld [vmem:[%s249 + $0x1a00] sm:$0xff]
        %v1139 = vld [vmem:[%s249 + $0x1a08] sm:$0xff]
        %v1140 = vld [vmem:[%s249 + $0x1a10] sm:$0xff]
        %v1141 = vld [vmem:[%s249 + $0x1a18] sm:$0xff]
        %v1142 = vld [vmem:[%s249 + $0x1a20] sm:$0xff]
        %v1143 = vld [vmem:[%s249 + $0x1a28] sm:$0xff]
        %v1144 = vld [vmem:[%s249 + $0x1a30] sm:$0xff]
        %v1145 = vld [vmem:[%s249 + $0x1a38] sm:$0xff]
        %v1146 = vld [vmem:[%s249 + $0x1a40] sm:$0xff]
        %v1147 = vld [vmem:[%s249 + $0x1a48] sm:$0xff]
        %v1148 = vld [vmem:[%s249 + $0x1a50] sm:$0xff]
        %v1149 = vld [vmem:[%s249 + $0x1a58] sm:$0xff]
        %v1150 = vld [vmem:[%s249 + $0x1a60] sm:$0xff]
        %v1151 = vld [vmem:[%s249 + $0x1a68] sm:$0xff]
        %v1152 = vld [vmem:[%s249 + $0x1a70] sm:$0xff]
        %v1153 = vld [vmem:[%s249 + $0x1a78] sm:$0xff]
        %v1154 = vld [vmem:[%s249 + $0x1a80] sm:$0xff]
        %v1155 = vld [vmem:[%s249 + $0x1a88] sm:$0xff]
        %v1156 = vld [vmem:[%s249 + $0x1a90] sm:$0xff]
        %v1157 = vld [vmem:[%s249 + $0x1a98] sm:$0xff]
        %v1158 = vld [vmem:[%s249 + $0x1aa0] sm:$0xff]
        %v1159 = vld [vmem:[%s249 + $0x1aa8] sm:$0xff]
        %v1160 = vld [vmem:[%s249 + $0x1ab0] sm:$0xff]
        %v1161 = vld [vmem:[%s249 + $0x1ab8] sm:$0xff]
        %v1162 = vld [vmem:[%s249 + $0x1ac0] sm:$0xff]
        %v1163 = vld [vmem:[%s249 + $0x1ac8] sm:$0xff]
        %v1164 = vld [vmem:[%s249 + $0x1ad0] sm:$0xff]
        %v1165 = vld [vmem:[%s249 + $0x1ad8] sm:$0xff]
        %v1166 = vld [vmem:[%s249 + $0x1ae0] sm:$0xff]
        %v1167 = vld [vmem:[%s249 + $0x1ae8] sm:$0xff]
        %v1168 = vld [vmem:[%s249 + $0x1af0] sm:$0xff]
        %v1169 = vld [vmem:[%s249 + $0x1af8] sm:$0xff]
        %v1170 = vld [vmem:[%s249 + $0x1b00] sm:$0xff]
        %v1171 = vld [vmem:[%s249 + $0x1b08] sm:$0xff]
        %v1172 = vld [vmem:[%s249 + $0x1b10] sm:$0xff]
        %v1173 = vld [vmem:[%s249 + $0x1b18] sm:$0xff]
        %v1174 = vld [vmem:[%s249 + $0x1b20] sm:$0xff]
        %v1175 = vld [vmem:[%s249 + $0x1b28] sm:$0xff]
        %v1176 = vld [vmem:[%s249 + $0x1b30] sm:$0xff]
        %v1177 = vld [vmem:[%s249 + $0x1b38] sm:$0xff]
        %v1178 = vld [vmem:[%s249 + $0x1b40] sm:$0xff]
        %v1179 = vld [vmem:[%s249 + $0x1b48] sm:$0xff]
        %v1180 = vld [vmem:[%s249 + $0x1b50] sm:$0xff]
        %v1181 = vld [vmem:[%s249 + $0x1b58] sm:$0xff]
        %v1182 = vld [vmem:[%s249 + $0x1b60] sm:$0xff]
        %v1183 = vld [vmem:[%s249 + $0x1b68] sm:$0xff]
        %v1184 = vld [vmem:[%s249 + $0x1b70] sm:$0xff]
        %v1185 = vld [vmem:[%s249 + $0x1b78] sm:$0xff]
        %v1186 = vld [vmem:[%s249 + $0x1b80] sm:$0xff]
        %v1187 = vld [vmem:[%s249 + $0x1b88] sm:$0xff]
        %v1188 = vld [vmem:[%s249 + $0x1b90] sm:$0xff]
        %v1189 = vld [vmem:[%s249 + $0x1b98] sm:$0xff]
        %v1190 = vld [vmem:[%s249 + $0x1ba0] sm:$0xff]
        %v1191 = vld [vmem:[%s249 + $0x1ba8] sm:$0xff]
        %v1192 = vld [vmem:[%s249 + $0x1bb0] sm:$0xff]
        %v1193 = vld [vmem:[%s249 + $0x1bb8] sm:$0xff]
        %v1194 = vld [vmem:[%s249 + $0x1bc0] sm:$0xff]
        %v1195 = vld [vmem:[%s249 + $0x1bc8] sm:$0xff]
        %v1196 = vld [vmem:[%s249 + $0x1bd0] sm:$0xff]
        %v1197 = vld [vmem:[%s249 + $0x1bd8] sm:$0xff]
        %v1198 = vld [vmem:[%s249 + $0x1be0] sm:$0xff]
        %v1199 = vld [vmem:[%s249 + $0x1be8] sm:$0xff]
        %v1200 = vld [vmem:[%s249 + $0x1bf0] sm:$0xff]
        %v1201 = vld [vmem:[%s249 + $0x1bf8] sm:$0xff]
        %v1202 = vld [vmem:[%s249 + $0x1c00] sm:$0xff]
        %v1203 = vld [vmem:[%s249 + $0x1c08] sm:$0xff]
        %v1204 = vld [vmem:[%s249 + $0x1c10] sm:$0xff]
        %v1205 = vld [vmem:[%s249 + $0x1c18] sm:$0xff]
        %v1206 = vld [vmem:[%s249 + $0x1c20] sm:$0xff]
        %v1207 = vld [vmem:[%s249 + $0x1c28] sm:$0xff]
        %v1208 = vld [vmem:[%s249 + $0x1c30] sm:$0xff]
        %v1209 = vld [vmem:[%s249 + $0x1c38] sm:$0xff]
        %v1210 = vld [vmem:[%s249 + $0x1c40] sm:$0xff]
        %v1211 = vld [vmem:[%s249 + $0x1c48] sm:$0xff]
        %v1212 = vld [vmem:[%s249 + $0x1c50] sm:$0xff]
        %v1213 = vld [vmem:[%s249 + $0x1c58] sm:$0xff]
        %v1214 = vld [vmem:[%s249 + $0x1c60] sm:$0xff]
        %v1215 = vld [vmem:[%s249 + $0x1c68] sm:$0xff]
        %v1216 = vld [vmem:[%s249 + $0x1c70] sm:$0xff]
        %v1217 = vld [vmem:[%s249 + $0x1c78] sm:$0xff]
        %v1218 = vld [vmem:[%s249 + $0x1c80] sm:$0xff]
        %v1219 = vld [vmem:[%s249 + $0x1c88] sm:$0xff]
        %v1220 = vld [vmem:[%s249 + $0x1c90] sm:$0xff]
        %v1221 = vld [vmem:[%s249 + $0x1c98] sm:$0xff]
        %v1222 = vld [vmem:[%s249 + $0x1ca0] sm:$0xff]
        %v1223 = vld [vmem:[%s249 + $0x1ca8] sm:$0xff]
        %v1224 = vld [vmem:[%s249 + $0x1cb0] sm:$0xff]
        %v1225 = vld [vmem:[%s249 + $0x1cb8] sm:$0xff]
        %v1226 = vld [vmem:[%s249 + $0x1cc0] sm:$0xff]
        %v1227 = vld [vmem:[%s249 + $0x1cc8] sm:$0xff]
        %v1228 = vld [vmem:[%s249 + $0x1cd0] sm:$0xff]
        %v1229 = vld [vmem:[%s249 + $0x1cd8] sm:$0xff]
        %v1230 = vld [vmem:[%s249 + $0x1ce0] sm:$0xff]
        %v1231 = vld [vmem:[%s249 + $0x1ce8] sm:$0xff]
        %v1232 = vld [vmem:[%s249 + $0x1cf0] sm:$0xff]
        %v1233 = vld [vmem:[%s249 + $0x1cf8] sm:$0xff]
        %v1234 = vld [vmem:[%s249 + $0x1d00] sm:$0xff]
        %v1235 = vld [vmem:[%s249 + $0x1d08] sm:$0xff]
        %v1236 = vld [vmem:[%s249 + $0x1d10] sm:$0xff]
        %v1237 = vld [vmem:[%s249 + $0x1d18] sm:$0xff]
        %v1238 = vld [vmem:[%s249 + $0x1d20] sm:$0xff]
        %v1239 = vld [vmem:[%s249 + $0x1d28] sm:$0xff]
        %v1240 = vld [vmem:[%s249 + $0x1d30] sm:$0xff]
        %v1241 = vld [vmem:[%s249 + $0x1d38] sm:$0xff]
        %v1242 = vld [vmem:[%s249 + $0x1d40] sm:$0xff]
        %v1243 = vld [vmem:[%s249 + $0x1d48] sm:$0xff]
        %v1244 = vld [vmem:[%s249 + $0x1d50] sm:$0xff]
        %v1245 = vld [vmem:[%s249 + $0x1d58] sm:$0xff]
        %v1246 = vld [vmem:[%s249 + $0x1d60] sm:$0xff]
        %v1247 = vld [vmem:[%s249 + $0x1d68] sm:$0xff]
        %v1248 = vld [vmem:[%s249 + $0x1d70] sm:$0xff]
        %v1249 = vld [vmem:[%s249 + $0x1d78] sm:$0xff]
        %v1250 = vld [vmem:[%s249 + $0x1d80] sm:$0xff]
        %v1251 = vld [vmem:[%s249 + $0x1d88] sm:$0xff]
        %v1252 = vld [vmem:[%s249 + $0x1d90] sm:$0xff]
        %v1253 = vld [vmem:[%s249 + $0x1d98] sm:$0xff]
        %v1254 = vld [vmem:[%s249 + $0x1da0] sm:$0xff]
        %v1255 = vld [vmem:[%s249 + $0x1da8] sm:$0xff]
        %v1256 = vld [vmem:[%s249 + $0x1db0] sm:$0xff]
        %v1257 = vld [vmem:[%s249 + $0x1db8] sm:$0xff]
        %v1258 = vld [vmem:[%s249 + $0x1dc0] sm:$0xff]
        %v1259 = vld [vmem:[%s249 + $0x1dc8] sm:$0xff]
        %v1260 = vld [vmem:[%s249 + $0x1dd0] sm:$0xff]
        %v1261 = vld [vmem:[%s249 + $0x1dd8] sm:$0xff]
        %v1262 = vld [vmem:[%s249 + $0x1de0] sm:$0xff]
        %v1263 = vld [vmem:[%s249 + $0x1de8] sm:$0xff]
        %v1264 = vld [vmem:[%s249 + $0x1df0] sm:$0xff]
        %v1265 = vld [vmem:[%s249 + $0x1df8] sm:$0xff]
        %v1266 = vld [vmem:[%s249 + $0x1e00] sm:$0xff]
        %v1267 = vld [vmem:[%s249 + $0x1e08] sm:$0xff]
        %v1268 = vld [vmem:[%s249 + $0x1e10] sm:$0xff]
        %v1269 = vld [vmem:[%s249 + $0x1e18] sm:$0xff]
        %v1270 = vld [vmem:[%s249 + $0x1e20] sm:$0xff]
        %v1271 = vld [vmem:[%s249 + $0x1e28] sm:$0xff]
        %v1272 = vld [vmem:[%s249 + $0x1e30] sm:$0xff]
        %v1273 = vld [vmem:[%s249 + $0x1e38] sm:$0xff]
        %v1274 = vld [vmem:[%s249 + $0x1e40] sm:$0xff]
        %v1275 = vld [vmem:[%s249 + $0x1e48] sm:$0xff]
        %v1276 = vld [vmem:[%s249 + $0x1e50] sm:$0xff]
        %v1277 = vld [vmem:[%s249 + $0x1e58] sm:$0xff]
        %v1278 = vld [vmem:[%s249 + $0x1e60] sm:$0xff]
        %v1279 = vld [vmem:[%s249 + $0x1e68] sm:$0xff]
        %v1280 = vld [vmem:[%s249 + $0x1e70] sm:$0xff]
        %v1281 = vld [vmem:[%s249 + $0x1e78] sm:$0xff]
        %v1282 = vld [vmem:[%s249 + $0x1e80] sm:$0xff]
        %v1283 = vld [vmem:[%s249 + $0x1e88] sm:$0xff]
        %v1284 = vld [vmem:[%s249 + $0x1e90] sm:$0xff]
        %v1285 = vld [vmem:[%s249 + $0x1e98] sm:$0xff]
        %v1286 = vld [vmem:[%s249 + $0x1ea0] sm:$0xff]
        %v1287 = vld [vmem:[%s249 + $0x1ea8] sm:$0xff]
        %v1288 = vld [vmem:[%s249 + $0x1eb0] sm:$0xff]
        %v1289 = vld [vmem:[%s249 + $0x1eb8] sm:$0xff]
        %v1290 = vld [vmem:[%s249 + $0x1ec0] sm:$0xff]
        %v1291 = vld [vmem:[%s249 + $0x1ec8] sm:$0xff]
        %v1292 = vld [vmem:[%s249 + $0x1ed0] sm:$0xff]
        %v1293 = vld [vmem:[%s249 + $0x1ed8] sm:$0xff]
        %v1294 = vld [vmem:[%s249 + $0x1ee0] sm:$0xff]
        %v1295 = vld [vmem:[%s249 + $0x1ee8] sm:$0xff]
        %v1296 = vld [vmem:[%s249 + $0x1ef0] sm:$0xff]
        %v1297 = vld [vmem:[%s249 + $0x1ef8] sm:$0xff]
        %v1298 = vld [vmem:[%s249 + $0x1f00] sm:$0xff]
        %v1299 = vld [vmem:[%s249 + $0x1f08] sm:$0xff]
        %v1300 = vld [vmem:[%s249 + $0x1f10] sm:$0xff]
        %v1301 = vld [vmem:[%s249 + $0x1f18] sm:$0xff]
        %v1302 = vld [vmem:[%s249 + $0x1f20] sm:$0xff]
        %v1303 = vld [vmem:[%s249 + $0x1f28] sm:$0xff]
        %v1304 = vld [vmem:[%s249 + $0x1f30] sm:$0xff]
        %v1305 = vld [vmem:[%s249 + $0x1f38] sm:$0xff]
        %v1306 = vld [vmem:[%s249 + $0x1f40] sm:$0xff]
        %v1307 = vld [vmem:[%s249 + $0x1f48] sm:$0xff]
        %v1308 = vld [vmem:[%s249 + $0x1f50] sm:$0xff]
        %v1309 = vld [vmem:[%s249 + $0x1f58] sm:$0xff]
        %v1310 = vld [vmem:[%s249 + $0x1f60] sm:$0xff]
        %v1311 = vld [vmem:[%s249 + $0x1f68] sm:$0xff]
        %v1312 = vld [vmem:[%s249 + $0x1f70] sm:$0xff]
        %v1313 = vld [vmem:[%s249 + $0x1f78] sm:$0xff]
        %v1314 = vld [vmem:[%s249 + $0x1f80] sm:$0xff]
        %v1315 = vld [vmem:[%s249 + $0x1f88] sm:$0xff]
        %v1316 = vld [vmem:[%s249 + $0x1f90] sm:$0xff]
        %v1317 = vld [vmem:[%s249 + $0x1f98] sm:$0xff]
        %v1318 = vld [vmem:[%s249 + $0x1fa0] sm:$0xff]
        %v1319 = vld [vmem:[%s249 + $0x1fa8] sm:$0xff]
        %v1320 = vld [vmem:[%s249 + $0x1fb0] sm:$0xff]
        %v1321 = vld [vmem:[%s249 + $0x1fb8] sm:$0xff]
        %v1322 = vld [vmem:[%s249 + $0x1fc0] sm:$0xff]
        %v1323 = vld [vmem:[%s249 + $0x1fc8] sm:$0xff]
        %v1324 = vld [vmem:[%s249 + $0x1fd0] sm:$0xff]
        %v1325 = vld [vmem:[%s249 + $0x1fd8] sm:$0xff]
        %v1326 = vld [vmem:[%s249 + $0x1fe0] sm:$0xff]
        %v1327 = vld [vmem:[%s249 + $0x1fe8] sm:$0xff]
        %v1328 = vld [vmem:[%s249 + $0x1ff0] sm:$0xff]
        %v1329 = vld [vmem:[%s249 + $0x1ff8] sm:$0xff]
        %v1330 = vunpack.c.l.s8.bf16 %v306
        %v1331 = vunpack.c.l.s8.bf16 %v307
        %v1332 = vunpack.c.l.s8.bf16 %v308
        %v1333 = vunpack.c.l.s8.bf16 %v309
        %v1334 = vunpack.c.l.s8.bf16 %v310
        %v1335 = vunpack.c.l.s8.bf16 %v311
        %v1336 = vunpack.c.l.s8.bf16 %v312
        %v1337 = vunpack.c.l.s8.bf16 %v313
        %v1338 = vunpack.c.h.s8.bf16 %v306
        %v1339 = vunpack.c.h.s8.bf16 %v307
        %v1340 = vunpack.c.h.s8.bf16 %v308
        %v1341 = vunpack.c.h.s8.bf16 %v309
        %v1342 = vunpack.c.h.s8.bf16 %v310
        %v1343 = vunpack.c.h.s8.bf16 %v311
        %v1344 = vunpack.c.h.s8.bf16 %v312
        %v1345 = vunpack.c.h.s8.bf16 %v313
        %v1346 = vunpack.c.l.s8.bf16 %v314
        %v1347 = vunpack.c.l.s8.bf16 %v315
        %v1348 = vunpack.c.l.s8.bf16 %v316
        %v1349 = vunpack.c.l.s8.bf16 %v317
        %v1350 = vunpack.c.l.s8.bf16 %v318
        %v1351 = vunpack.c.l.s8.bf16 %v319
        %v1352 = vunpack.c.l.s8.bf16 %v320
        %v1353 = vunpack.c.l.s8.bf16 %v321
        %v1354 = vunpack.c.h.s8.bf16 %v314
        %v1355 = vunpack.c.h.s8.bf16 %v315
        %v1356 = vunpack.c.h.s8.bf16 %v316
        %v1357 = vunpack.c.h.s8.bf16 %v317
        %v1358 = vunpack.c.h.s8.bf16 %v318
        %v1359 = vunpack.c.h.s8.bf16 %v319
        %v1360 = vunpack.c.h.s8.bf16 %v320
        %v1361 = vunpack.c.h.s8.bf16 %v321
        %v1362 = vunpack.c.l.s8.bf16 %v322
        %v1363 = vunpack.c.l.s8.bf16 %v323
        %v1364 = vunpack.c.l.s8.bf16 %v324
        %v1365 = vunpack.c.l.s8.bf16 %v325
        %v1366 = vunpack.c.l.s8.bf16 %v326
        %v1367 = vunpack.c.l.s8.bf16 %v327
        %v1368 = vunpack.c.l.s8.bf16 %v328
        %v1369 = vunpack.c.l.s8.bf16 %v329
        %v1370 = vunpack.c.h.s8.bf16 %v322
        %v1371 = vunpack.c.h.s8.bf16 %v323
        %v1372 = vunpack.c.h.s8.bf16 %v324
        %v1373 = vunpack.c.h.s8.bf16 %v325
        %v1374 = vunpack.c.h.s8.bf16 %v326
        %v1375 = vunpack.c.h.s8.bf16 %v327
        %v1376 = vunpack.c.h.s8.bf16 %v328
        %v1377 = vunpack.c.h.s8.bf16 %v329
        %v1378 = vunpack.c.l.s8.bf16 %v330
        %v1379 = vunpack.c.l.s8.bf16 %v331
        %v1380 = vunpack.c.l.s8.bf16 %v332
        %v1381 = vunpack.c.l.s8.bf16 %v333
        %v1382 = vunpack.c.l.s8.bf16 %v334
        %v1383 = vunpack.c.l.s8.bf16 %v335
        %v1384 = vunpack.c.l.s8.bf16 %v336
        %v1385 = vunpack.c.l.s8.bf16 %v337
        %v1386 = vunpack.c.h.s8.bf16 %v330
        %v1387 = vunpack.c.h.s8.bf16 %v331
        %v1388 = vunpack.c.h.s8.bf16 %v332
        %v1389 = vunpack.c.h.s8.bf16 %v333
        %v1390 = vunpack.c.h.s8.bf16 %v334
        %v1391 = vunpack.c.h.s8.bf16 %v335
        %v1392 = vunpack.c.h.s8.bf16 %v336
        %v1393 = vunpack.c.h.s8.bf16 %v337
        %v1394 = vunpack.c.l.s8.bf16 %v338
        %v1395 = vunpack.c.l.s8.bf16 %v339
        %v1396 = vunpack.c.l.s8.bf16 %v340
        %v1397 = vunpack.c.l.s8.bf16 %v341
        %v1398 = vunpack.c.l.s8.bf16 %v342
        %v1399 = vunpack.c.l.s8.bf16 %v343
        %v1400 = vunpack.c.l.s8.bf16 %v344
        %v1401 = vunpack.c.l.s8.bf16 %v345
        %v1402 = vunpack.c.h.s8.bf16 %v338
        %v1403 = vunpack.c.h.s8.bf16 %v339
        %v1404 = vunpack.c.h.s8.bf16 %v340
        %v1405 = vunpack.c.h.s8.bf16 %v341
        %v1406 = vunpack.c.h.s8.bf16 %v342
        %v1407 = vunpack.c.h.s8.bf16 %v343
        %v1408 = vunpack.c.h.s8.bf16 %v344
        %v1409 = vunpack.c.h.s8.bf16 %v345
        %v1410 = vunpack.c.l.s8.bf16 %v346
        %v1411 = vunpack.c.l.s8.bf16 %v347
        %v1412 = vunpack.c.l.s8.bf16 %v348
        %v1413 = vunpack.c.l.s8.bf16 %v349
        %v1414 = vunpack.c.l.s8.bf16 %v350
        %v1415 = vunpack.c.l.s8.bf16 %v351
        %v1416 = vunpack.c.l.s8.bf16 %v352
        %v1417 = vunpack.c.l.s8.bf16 %v353
        %v1418 = vunpack.c.h.s8.bf16 %v346
        %v1419 = vunpack.c.h.s8.bf16 %v347
        %v1420 = vunpack.c.h.s8.bf16 %v348
        %v1421 = vunpack.c.h.s8.bf16 %v349
        %v1422 = vunpack.c.h.s8.bf16 %v350
        %v1423 = vunpack.c.h.s8.bf16 %v351
        %v1424 = vunpack.c.h.s8.bf16 %v352
        %v1425 = vunpack.c.h.s8.bf16 %v353
        %v1426 = vunpack.c.l.s8.bf16 %v354
        %v1427 = vunpack.c.l.s8.bf16 %v355
        %v1428 = vunpack.c.l.s8.bf16 %v356
        %v1429 = vunpack.c.l.s8.bf16 %v357
        %v1430 = vunpack.c.l.s8.bf16 %v358
        %v1431 = vunpack.c.l.s8.bf16 %v359
        %v1432 = vunpack.c.l.s8.bf16 %v360
        %v1433 = vunpack.c.l.s8.bf16 %v361
        %v1434 = vunpack.c.h.s8.bf16 %v354
        %v1435 = vunpack.c.h.s8.bf16 %v355
        %v1436 = vunpack.c.h.s8.bf16 %v356
        %v1437 = vunpack.c.h.s8.bf16 %v357
        %v1438 = vunpack.c.h.s8.bf16 %v358
        %v1439 = vunpack.c.h.s8.bf16 %v359
        %v1440 = vunpack.c.h.s8.bf16 %v360
        %v1441 = vunpack.c.h.s8.bf16 %v361
        %v1442 = vunpack.c.l.s8.bf16 %v362
        %v1443 = vunpack.c.l.s8.bf16 %v363
        %v1444 = vunpack.c.l.s8.bf16 %v364
        %v1445 = vunpack.c.l.s8.bf16 %v365
        %v1446 = vunpack.c.l.s8.bf16 %v366
        %v1447 = vunpack.c.l.s8.bf16 %v367
        %v1448 = vunpack.c.l.s8.bf16 %v368
        %v1449 = vunpack.c.l.s8.bf16 %v369
        %v1450 = vunpack.c.h.s8.bf16 %v362
        %v1451 = vunpack.c.h.s8.bf16 %v363
        %v1452 = vunpack.c.h.s8.bf16 %v364
        %v1453 = vunpack.c.h.s8.bf16 %v365
        %v1454 = vunpack.c.h.s8.bf16 %v366
        %v1455 = vunpack.c.h.s8.bf16 %v367
        %v1456 = vunpack.c.h.s8.bf16 %v368
        %v1457 = vunpack.c.h.s8.bf16 %v369
        %v1458 = vunpack.c.l.s8.bf16 %v370
        %v1459 = vunpack.c.l.s8.bf16 %v371
        %v1460 = vunpack.c.l.s8.bf16 %v372
        %v1461 = vunpack.c.l.s8.bf16 %v373
        %v1462 = vunpack.c.l.s8.bf16 %v374
        %v1463 = vunpack.c.l.s8.bf16 %v375
        %v1464 = vunpack.c.l.s8.bf16 %v376
        %v1465 = vunpack.c.l.s8.bf16 %v377
        %v1466 = vunpack.c.h.s8.bf16 %v370
        %v1467 = vunpack.c.h.s8.bf16 %v371
        %v1468 = vunpack.c.h.s8.bf16 %v372
        %v1469 = vunpack.c.h.s8.bf16 %v373
        %v1470 = vunpack.c.h.s8.bf16 %v374
        %v1471 = vunpack.c.h.s8.bf16 %v375
        %v1472 = vunpack.c.h.s8.bf16 %v376
        %v1473 = vunpack.c.h.s8.bf16 %v377
        %v1474 = vunpack.c.l.s8.bf16 %v378
        %v1475 = vunpack.c.l.s8.bf16 %v379
        %v1476 = vunpack.c.l.s8.bf16 %v380
        %v1477 = vunpack.c.l.s8.bf16 %v381
        %v1478 = vunpack.c.l.s8.bf16 %v382
        %v1479 = vunpack.c.l.s8.bf16 %v383
        %v1480 = vunpack.c.l.s8.bf16 %v384
        %v1481 = vunpack.c.l.s8.bf16 %v385
        %v1482 = vunpack.c.h.s8.bf16 %v378
        %v1483 = vunpack.c.h.s8.bf16 %v379
        %v1484 = vunpack.c.h.s8.bf16 %v380
        %v1485 = vunpack.c.h.s8.bf16 %v381
        %v1486 = vunpack.c.h.s8.bf16 %v382
        %v1487 = vunpack.c.h.s8.bf16 %v383
        %v1488 = vunpack.c.h.s8.bf16 %v384
        %v1489 = vunpack.c.h.s8.bf16 %v385
        %v1490 = vunpack.c.l.s8.bf16 %v386
        %v1491 = vunpack.c.l.s8.bf16 %v387
        %v1492 = vunpack.c.l.s8.bf16 %v388
        %v1493 = vunpack.c.l.s8.bf16 %v389
        %v1494 = vunpack.c.l.s8.bf16 %v390
        %v1495 = vunpack.c.l.s8.bf16 %v391
        %v1496 = vunpack.c.l.s8.bf16 %v392
        %v1497 = vunpack.c.l.s8.bf16 %v393
        %v1498 = vunpack.c.h.s8.bf16 %v386
        %v1499 = vunpack.c.h.s8.bf16 %v387
        %v1500 = vunpack.c.h.s8.bf16 %v388
        %v1501 = vunpack.c.h.s8.bf16 %v389
        %v1502 = vunpack.c.h.s8.bf16 %v390
        %v1503 = vunpack.c.h.s8.bf16 %v391
        %v1504 = vunpack.c.h.s8.bf16 %v392
        %v1505 = vunpack.c.h.s8.bf16 %v393
        %v1506 = vunpack.c.l.s8.bf16 %v394
        %v1507 = vunpack.c.l.s8.bf16 %v395
        %v1508 = vunpack.c.l.s8.bf16 %v396
        %v1509 = vunpack.c.l.s8.bf16 %v397
        %v1510 = vunpack.c.l.s8.bf16 %v398
        %v1511 = vunpack.c.l.s8.bf16 %v399
        %v1512 = vunpack.c.l.s8.bf16 %v400
        %v1513 = vunpack.c.l.s8.bf16 %v401
        %v1514 = vunpack.c.h.s8.bf16 %v394
        %v1515 = vunpack.c.h.s8.bf16 %v395
        %v1516 = vunpack.c.h.s8.bf16 %v396
        %v1517 = vunpack.c.h.s8.bf16 %v397
        %v1518 = vunpack.c.h.s8.bf16 %v398
        %v1519 = vunpack.c.h.s8.bf16 %v399
        %v1520 = vunpack.c.h.s8.bf16 %v400
        %v1521 = vunpack.c.h.s8.bf16 %v401
        %v1522 = vunpack.c.l.s8.bf16 %v402
        %v1523 = vunpack.c.l.s8.bf16 %v403
        %v1524 = vunpack.c.l.s8.bf16 %v404
        %v1525 = vunpack.c.l.s8.bf16 %v405
        %v1526 = vunpack.c.l.s8.bf16 %v406
        %v1527 = vunpack.c.l.s8.bf16 %v407
        %v1528 = vunpack.c.l.s8.bf16 %v408
        %v1529 = vunpack.c.l.s8.bf16 %v409
        %v1530 = vunpack.c.h.s8.bf16 %v402
        %v1531 = vunpack.c.h.s8.bf16 %v403
        %v1532 = vunpack.c.h.s8.bf16 %v404
        %v1533 = vunpack.c.h.s8.bf16 %v405
        %v1534 = vunpack.c.h.s8.bf16 %v406
        %v1535 = vunpack.c.h.s8.bf16 %v407
        %v1536 = vunpack.c.h.s8.bf16 %v408
        %v1537 = vunpack.c.h.s8.bf16 %v409
        %v1538 = vunpack.c.l.s8.bf16 %v410
        %v1539 = vunpack.c.l.s8.bf16 %v411
        %v1540 = vunpack.c.l.s8.bf16 %v412
        %v1541 = vunpack.c.l.s8.bf16 %v413
        %v1542 = vunpack.c.l.s8.bf16 %v414
        %v1543 = vunpack.c.l.s8.bf16 %v415
        %v1544 = vunpack.c.l.s8.bf16 %v416
        %v1545 = vunpack.c.l.s8.bf16 %v417
        %v1546 = vunpack.c.h.s8.bf16 %v410
        %v1547 = vunpack.c.h.s8.bf16 %v411
        %v1548 = vunpack.c.h.s8.bf16 %v412
        %v1549 = vunpack.c.h.s8.bf16 %v413
        %v1550 = vunpack.c.h.s8.bf16 %v414
        %v1551 = vunpack.c.h.s8.bf16 %v415
        %v1552 = vunpack.c.h.s8.bf16 %v416
        %v1553 = vunpack.c.h.s8.bf16 %v417
        %v1554 = vunpack.c.l.s8.bf16 %v418
        %v1555 = vunpack.c.l.s8.bf16 %v419
        %v1556 = vunpack.c.l.s8.bf16 %v420
        %v1557 = vunpack.c.l.s8.bf16 %v421
        %v1558 = vunpack.c.l.s8.bf16 %v422
        %v1559 = vunpack.c.l.s8.bf16 %v423
        %v1560 = vunpack.c.l.s8.bf16 %v424
        %v1561 = vunpack.c.l.s8.bf16 %v425
        %v1562 = vunpack.c.h.s8.bf16 %v418
        %v1563 = vunpack.c.h.s8.bf16 %v419
        %v1564 = vunpack.c.h.s8.bf16 %v420
        %v1565 = vunpack.c.h.s8.bf16 %v421
        %v1566 = vunpack.c.h.s8.bf16 %v422
        %v1567 = vunpack.c.h.s8.bf16 %v423
        %v1568 = vunpack.c.h.s8.bf16 %v424
        %v1569 = vunpack.c.h.s8.bf16 %v425
        %v1570 = vunpack.c.l.s8.bf16 %v426
        %v1571 = vunpack.c.l.s8.bf16 %v427
        %v1572 = vunpack.c.l.s8.bf16 %v428
        %v1573 = vunpack.c.l.s8.bf16 %v429
        %v1574 = vunpack.c.l.s8.bf16 %v430
        %v1575 = vunpack.c.l.s8.bf16 %v431
        %v1576 = vunpack.c.l.s8.bf16 %v432
        %v1577 = vunpack.c.l.s8.bf16 %v433
        %v1578 = vunpack.c.h.s8.bf16 %v426
        %v1579 = vunpack.c.h.s8.bf16 %v427
        %v1580 = vunpack.c.h.s8.bf16 %v428
        %v1581 = vunpack.c.h.s8.bf16 %v429
        %v1582 = vunpack.c.h.s8.bf16 %v430
        %v1583 = vunpack.c.h.s8.bf16 %v431
        %v1584 = vunpack.c.h.s8.bf16 %v432
        %v1585 = vunpack.c.h.s8.bf16 %v433
        %v1586 = vunpack.c.l.s8.bf16 %v434
        %v1587 = vunpack.c.l.s8.bf16 %v435
        %v1588 = vunpack.c.l.s8.bf16 %v436
        %v1589 = vunpack.c.l.s8.bf16 %v437
        %v1590 = vunpack.c.l.s8.bf16 %v438
        %v1591 = vunpack.c.l.s8.bf16 %v439
        %v1592 = vunpack.c.l.s8.bf16 %v440
        %v1593 = vunpack.c.l.s8.bf16 %v441
        %v1594 = vunpack.c.h.s8.bf16 %v434
        %v1595 = vunpack.c.h.s8.bf16 %v435
        %v1596 = vunpack.c.h.s8.bf16 %v436
        %v1597 = vunpack.c.h.s8.bf16 %v437
        %v1598 = vunpack.c.h.s8.bf16 %v438
        %v1599 = vunpack.c.h.s8.bf16 %v439
        %v1600 = vunpack.c.h.s8.bf16 %v440
        %v1601 = vunpack.c.h.s8.bf16 %v441
        %v1602 = vunpack.c.l.s8.bf16 %v442
        %v1603 = vunpack.c.l.s8.bf16 %v443
        %v1604 = vunpack.c.l.s8.bf16 %v444
        %v1605 = vunpack.c.l.s8.bf16 %v445
        %v1606 = vunpack.c.l.s8.bf16 %v446
        %v1607 = vunpack.c.l.s8.bf16 %v447
        %v1608 = vunpack.c.l.s8.bf16 %v448
        %v1609 = vunpack.c.l.s8.bf16 %v449
        %v1610 = vunpack.c.h.s8.bf16 %v442
        %v1611 = vunpack.c.h.s8.bf16 %v443
        %v1612 = vunpack.c.h.s8.bf16 %v444
        %v1613 = vunpack.c.h.s8.bf16 %v445
        %v1614 = vunpack.c.h.s8.bf16 %v446
        %v1615 = vunpack.c.h.s8.bf16 %v447
        %v1616 = vunpack.c.h.s8.bf16 %v448
        %v1617 = vunpack.c.h.s8.bf16 %v449
        %v1618 = vunpack.c.l.s8.bf16 %v450
        %v1619 = vunpack.c.l.s8.bf16 %v451
        %v1620 = vunpack.c.l.s8.bf16 %v452
        %v1621 = vunpack.c.l.s8.bf16 %v453
        %v1622 = vunpack.c.l.s8.bf16 %v454
        %v1623 = vunpack.c.l.s8.bf16 %v455
        %v1624 = vunpack.c.l.s8.bf16 %v456
        %v1625 = vunpack.c.l.s8.bf16 %v457
        %v1626 = vunpack.c.h.s8.bf16 %v450
        %v1627 = vunpack.c.h.s8.bf16 %v451
        %v1628 = vunpack.c.h.s8.bf16 %v452
        %v1629 = vunpack.c.h.s8.bf16 %v453
        %v1630 = vunpack.c.h.s8.bf16 %v454
        %v1631 = vunpack.c.h.s8.bf16 %v455
        %v1632 = vunpack.c.h.s8.bf16 %v456
        %v1633 = vunpack.c.h.s8.bf16 %v457
        %v1634 = vunpack.c.l.s8.bf16 %v458
        %v1635 = vunpack.c.l.s8.bf16 %v459
        %v1636 = vunpack.c.l.s8.bf16 %v460
        %v1637 = vunpack.c.l.s8.bf16 %v461
        %v1638 = vunpack.c.l.s8.bf16 %v462
        %v1639 = vunpack.c.l.s8.bf16 %v463
        %v1640 = vunpack.c.l.s8.bf16 %v464
        %v1641 = vunpack.c.l.s8.bf16 %v465
        %v1642 = vunpack.c.h.s8.bf16 %v458
        %v1643 = vunpack.c.h.s8.bf16 %v459
        %v1644 = vunpack.c.h.s8.bf16 %v460
        %v1645 = vunpack.c.h.s8.bf16 %v461
        %v1646 = vunpack.c.h.s8.bf16 %v462
        %v1647 = vunpack.c.h.s8.bf16 %v463
        %v1648 = vunpack.c.h.s8.bf16 %v464
        %v1649 = vunpack.c.h.s8.bf16 %v465
        %v1650 = vunpack.c.l.s8.bf16 %v466
        %v1651 = vunpack.c.l.s8.bf16 %v467
        %v1652 = vunpack.c.l.s8.bf16 %v468
        %v1653 = vunpack.c.l.s8.bf16 %v469
        %v1654 = vunpack.c.l.s8.bf16 %v470
        %v1655 = vunpack.c.l.s8.bf16 %v471
        %v1656 = vunpack.c.l.s8.bf16 %v472
        %v1657 = vunpack.c.l.s8.bf16 %v473
        %v1658 = vunpack.c.h.s8.bf16 %v466
        %v1659 = vunpack.c.h.s8.bf16 %v467
        %v1660 = vunpack.c.h.s8.bf16 %v468
        %v1661 = vunpack.c.h.s8.bf16 %v469
        %v1662 = vunpack.c.h.s8.bf16 %v470
        %v1663 = vunpack.c.h.s8.bf16 %v471
        %v1664 = vunpack.c.h.s8.bf16 %v472
        %v1665 = vunpack.c.h.s8.bf16 %v473
        %v1666 = vunpack.c.l.s8.bf16 %v474
        %v1667 = vunpack.c.l.s8.bf16 %v475
        %v1668 = vunpack.c.l.s8.bf16 %v476
        %v1669 = vunpack.c.l.s8.bf16 %v477
        %v1670 = vunpack.c.l.s8.bf16 %v478
        %v1671 = vunpack.c.l.s8.bf16 %v479
        %v1672 = vunpack.c.l.s8.bf16 %v480
        %v1673 = vunpack.c.l.s8.bf16 %v481
        %v1674 = vunpack.c.h.s8.bf16 %v474
        %v1675 = vunpack.c.h.s8.bf16 %v475
        %v1676 = vunpack.c.h.s8.bf16 %v476
        %v1677 = vunpack.c.h.s8.bf16 %v477
        %v1678 = vunpack.c.h.s8.bf16 %v478
        %v1679 = vunpack.c.h.s8.bf16 %v479
        %v1680 = vunpack.c.h.s8.bf16 %v480
        %v1681 = vunpack.c.h.s8.bf16 %v481
        %v1682 = vunpack.c.l.s8.bf16 %v482
        %v1683 = vunpack.c.l.s8.bf16 %v483
        %v1684 = vunpack.c.l.s8.bf16 %v484
        %v1685 = vunpack.c.l.s8.bf16 %v485
        %v1686 = vunpack.c.l.s8.bf16 %v486
        %v1687 = vunpack.c.l.s8.bf16 %v487
        %v1688 = vunpack.c.l.s8.bf16 %v488
        %v1689 = vunpack.c.l.s8.bf16 %v489
        %v1690 = vunpack.c.h.s8.bf16 %v482
        %v1691 = vunpack.c.h.s8.bf16 %v483
        %v1692 = vunpack.c.h.s8.bf16 %v484
        %v1693 = vunpack.c.h.s8.bf16 %v485
        %v1694 = vunpack.c.h.s8.bf16 %v486
        %v1695 = vunpack.c.h.s8.bf16 %v487
        %v1696 = vunpack.c.h.s8.bf16 %v488
        %v1697 = vunpack.c.h.s8.bf16 %v489
        %v1698 = vunpack.c.l.s8.bf16 %v490
        %v1699 = vunpack.c.l.s8.bf16 %v491
        %v1700 = vunpack.c.l.s8.bf16 %v492
        %v1701 = vunpack.c.l.s8.bf16 %v493
        %v1702 = vunpack.c.l.s8.bf16 %v494
        %v1703 = vunpack.c.l.s8.bf16 %v495
        %v1704 = vunpack.c.l.s8.bf16 %v496
        %v1705 = vunpack.c.l.s8.bf16 %v497
        %v1706 = vunpack.c.h.s8.bf16 %v490
        %v1707 = vunpack.c.h.s8.bf16 %v491
        %v1708 = vunpack.c.h.s8.bf16 %v492
        %v1709 = vunpack.c.h.s8.bf16 %v493
        %v1710 = vunpack.c.h.s8.bf16 %v494
        %v1711 = vunpack.c.h.s8.bf16 %v495
        %v1712 = vunpack.c.h.s8.bf16 %v496
        %v1713 = vunpack.c.h.s8.bf16 %v497
        %v1714 = vunpack.c.l.s8.bf16 %v498
        %v1715 = vunpack.c.l.s8.bf16 %v499
        %v1716 = vunpack.c.l.s8.bf16 %v500
        %v1717 = vunpack.c.l.s8.bf16 %v501
        %v1718 = vunpack.c.l.s8.bf16 %v502
        %v1719 = vunpack.c.l.s8.bf16 %v503
        %v1720 = vunpack.c.l.s8.bf16 %v504
        %v1721 = vunpack.c.l.s8.bf16 %v505
        %v1722 = vunpack.c.h.s8.bf16 %v498
        %v1723 = vunpack.c.h.s8.bf16 %v499
        %v1724 = vunpack.c.h.s8.bf16 %v500
        %v1725 = vunpack.c.h.s8.bf16 %v501
        %v1726 = vunpack.c.h.s8.bf16 %v502
        %v1727 = vunpack.c.h.s8.bf16 %v503
        %v1728 = vunpack.c.h.s8.bf16 %v504
        %v1729 = vunpack.c.h.s8.bf16 %v505
        %v1730 = vunpack.c.l.s8.bf16 %v506
        %v1731 = vunpack.c.l.s8.bf16 %v507
        %v1732 = vunpack.c.l.s8.bf16 %v508
        %v1733 = vunpack.c.l.s8.bf16 %v509
        %v1734 = vunpack.c.l.s8.bf16 %v510
        %v1735 = vunpack.c.l.s8.bf16 %v511
        %v1736 = vunpack.c.l.s8.bf16 %v512
        %v1737 = vunpack.c.l.s8.bf16 %v513
        %v1738 = vunpack.c.h.s8.bf16 %v506
        %v1739 = vunpack.c.h.s8.bf16 %v507
        %v1740 = vunpack.c.h.s8.bf16 %v508
        %v1741 = vunpack.c.h.s8.bf16 %v509
        %v1742 = vunpack.c.h.s8.bf16 %v510
        %v1743 = vunpack.c.h.s8.bf16 %v511
        %v1744 = vunpack.c.h.s8.bf16 %v512
        %v1745 = vunpack.c.h.s8.bf16 %v513
        %v1746 = vunpack.c.l.s8.bf16 %v514
        %v1747 = vunpack.c.l.s8.bf16 %v515
        %v1748 = vunpack.c.l.s8.bf16 %v516
        %v1749 = vunpack.c.l.s8.bf16 %v517
        %v1750 = vunpack.c.l.s8.bf16 %v518
        %v1751 = vunpack.c.l.s8.bf16 %v519
        %v1752 = vunpack.c.l.s8.bf16 %v520
        %v1753 = vunpack.c.l.s8.bf16 %v521
        %v1754 = vunpack.c.h.s8.bf16 %v514
        %v1755 = vunpack.c.h.s8.bf16 %v515
        %v1756 = vunpack.c.h.s8.bf16 %v516
        %v1757 = vunpack.c.h.s8.bf16 %v517
        %v1758 = vunpack.c.h.s8.bf16 %v518
        %v1759 = vunpack.c.h.s8.bf16 %v519
        %v1760 = vunpack.c.h.s8.bf16 %v520
        %v1761 = vunpack.c.h.s8.bf16 %v521
        %v1762 = vunpack.c.l.s8.bf16 %v522
        %v1763 = vunpack.c.l.s8.bf16 %v523
        %v1764 = vunpack.c.l.s8.bf16 %v524
        %v1765 = vunpack.c.l.s8.bf16 %v525
        %v1766 = vunpack.c.l.s8.bf16 %v526
        %v1767 = vunpack.c.l.s8.bf16 %v527
        %v1768 = vunpack.c.l.s8.bf16 %v528
        %v1769 = vunpack.c.l.s8.bf16 %v529
        %v1770 = vunpack.c.h.s8.bf16 %v522
        %v1771 = vunpack.c.h.s8.bf16 %v523
        %v1772 = vunpack.c.h.s8.bf16 %v524
        %v1773 = vunpack.c.h.s8.bf16 %v525
        %v1774 = vunpack.c.h.s8.bf16 %v526
        %v1775 = vunpack.c.h.s8.bf16 %v527
        %v1776 = vunpack.c.h.s8.bf16 %v528
        %v1777 = vunpack.c.h.s8.bf16 %v529
        %v1778 = vunpack.c.l.s8.bf16 %v530
        %v1779 = vunpack.c.l.s8.bf16 %v531
        %v1780 = vunpack.c.l.s8.bf16 %v532
        %v1781 = vunpack.c.l.s8.bf16 %v533
        %v1782 = vunpack.c.l.s8.bf16 %v534
        %v1783 = vunpack.c.l.s8.bf16 %v535
        %v1784 = vunpack.c.l.s8.bf16 %v536
        %v1785 = vunpack.c.l.s8.bf16 %v537
        %v1786 = vunpack.c.h.s8.bf16 %v530
        %v1787 = vunpack.c.h.s8.bf16 %v531
        %v1788 = vunpack.c.h.s8.bf16 %v532
        %v1789 = vunpack.c.h.s8.bf16 %v533
        %v1790 = vunpack.c.h.s8.bf16 %v534
        %v1791 = vunpack.c.h.s8.bf16 %v535
        %v1792 = vunpack.c.h.s8.bf16 %v536
        %v1793 = vunpack.c.h.s8.bf16 %v537
        %v1794 = vunpack.c.l.s8.bf16 %v538
        %v1795 = vunpack.c.l.s8.bf16 %v539
        %v1796 = vunpack.c.l.s8.bf16 %v540
        %v1797 = vunpack.c.l.s8.bf16 %v541
        %v1798 = vunpack.c.l.s8.bf16 %v542
        %v1799 = vunpack.c.l.s8.bf16 %v543
        %v1800 = vunpack.c.l.s8.bf16 %v544
        %v1801 = vunpack.c.l.s8.bf16 %v545
        %v1802 = vunpack.c.h.s8.bf16 %v538
        %v1803 = vunpack.c.h.s8.bf16 %v539
        %v1804 = vunpack.c.h.s8.bf16 %v540
        %v1805 = vunpack.c.h.s8.bf16 %v541
        %v1806 = vunpack.c.h.s8.bf16 %v542
        %v1807 = vunpack.c.h.s8.bf16 %v543
        %v1808 = vunpack.c.h.s8.bf16 %v544
        %v1809 = vunpack.c.h.s8.bf16 %v545
        %v1810 = vunpack.c.l.s8.bf16 %v546
        %v1811 = vunpack.c.l.s8.bf16 %v547
        %v1812 = vunpack.c.l.s8.bf16 %v548
        %v1813 = vunpack.c.l.s8.bf16 %v549
        %v1814 = vunpack.c.l.s8.bf16 %v550
        %v1815 = vunpack.c.l.s8.bf16 %v551
        %v1816 = vunpack.c.l.s8.bf16 %v552
        %v1817 = vunpack.c.l.s8.bf16 %v553
        %v1818 = vunpack.c.h.s8.bf16 %v546
        %v1819 = vunpack.c.h.s8.bf16 %v547
        %v1820 = vunpack.c.h.s8.bf16 %v548
        %v1821 = vunpack.c.h.s8.bf16 %v549
        %v1822 = vunpack.c.h.s8.bf16 %v550
        %v1823 = vunpack.c.h.s8.bf16 %v551
        %v1824 = vunpack.c.h.s8.bf16 %v552
        %v1825 = vunpack.c.h.s8.bf16 %v553
        %v1826 = vunpack.c.l.s8.bf16 %v554
        %v1827 = vunpack.c.l.s8.bf16 %v555
        %v1828 = vunpack.c.l.s8.bf16 %v556
        %v1829 = vunpack.c.l.s8.bf16 %v557
        %v1830 = vunpack.c.l.s8.bf16 %v558
        %v1831 = vunpack.c.l.s8.bf16 %v559
        %v1832 = vunpack.c.l.s8.bf16 %v560
        %v1833 = vunpack.c.l.s8.bf16 %v561
        %v1834 = vunpack.c.h.s8.bf16 %v554
        %v1835 = vunpack.c.h.s8.bf16 %v555
        %v1836 = vunpack.c.h.s8.bf16 %v556
        %v1837 = vunpack.c.h.s8.bf16 %v557
        %v1838 = vunpack.c.h.s8.bf16 %v558
        %v1839 = vunpack.c.h.s8.bf16 %v559
        %v1840 = vunpack.c.h.s8.bf16 %v560
        %v1841 = vunpack.c.h.s8.bf16 %v561
        %v1842 = vunpack.c.l.s8.bf16 %v562
        %v1843 = vunpack.c.l.s8.bf16 %v563
        %v1844 = vunpack.c.l.s8.bf16 %v564
        %v1845 = vunpack.c.l.s8.bf16 %v565
        %v1846 = vunpack.c.l.s8.bf16 %v566
        %v1847 = vunpack.c.l.s8.bf16 %v567
        %v1848 = vunpack.c.l.s8.bf16 %v568
        %v1849 = vunpack.c.l.s8.bf16 %v569
        %v1850 = vunpack.c.h.s8.bf16 %v562
        %v1851 = vunpack.c.h.s8.bf16 %v563
        %v1852 = vunpack.c.h.s8.bf16 %v564
        %v1853 = vunpack.c.h.s8.bf16 %v565
        %v1854 = vunpack.c.h.s8.bf16 %v566
        %v1855 = vunpack.c.h.s8.bf16 %v567
        %v1856 = vunpack.c.h.s8.bf16 %v568
        %v1857 = vunpack.c.h.s8.bf16 %v569
        %v1858 = vunpack.c.l.s8.bf16 %v570
        %v1859 = vunpack.c.l.s8.bf16 %v571
        %v1860 = vunpack.c.l.s8.bf16 %v572
        %v1861 = vunpack.c.l.s8.bf16 %v573
        %v1862 = vunpack.c.l.s8.bf16 %v574
        %v1863 = vunpack.c.l.s8.bf16 %v575
        %v1864 = vunpack.c.l.s8.bf16 %v576
        %v1865 = vunpack.c.l.s8.bf16 %v577
        %v1866 = vunpack.c.h.s8.bf16 %v570
        %v1867 = vunpack.c.h.s8.bf16 %v571
        %v1868 = vunpack.c.h.s8.bf16 %v572
        %v1869 = vunpack.c.h.s8.bf16 %v573
        %v1870 = vunpack.c.h.s8.bf16 %v574
        %v1871 = vunpack.c.h.s8.bf16 %v575
        %v1872 = vunpack.c.h.s8.bf16 %v576
        %v1873 = vunpack.c.h.s8.bf16 %v577
        %v1874 = vunpack.c.l.s8.bf16 %v578
        %v1875 = vunpack.c.l.s8.bf16 %v579
        %v1876 = vunpack.c.l.s8.bf16 %v580
        %v1877 = vunpack.c.l.s8.bf16 %v581
        %v1878 = vunpack.c.l.s8.bf16 %v582
        %v1879 = vunpack.c.l.s8.bf16 %v583
        %v1880 = vunpack.c.l.s8.bf16 %v584
        %v1881 = vunpack.c.l.s8.bf16 %v585
        %v1882 = vunpack.c.h.s8.bf16 %v578
        %v1883 = vunpack.c.h.s8.bf16 %v579
        %v1884 = vunpack.c.h.s8.bf16 %v580
        %v1885 = vunpack.c.h.s8.bf16 %v581
        %v1886 = vunpack.c.h.s8.bf16 %v582
        %v1887 = vunpack.c.h.s8.bf16 %v583
        %v1888 = vunpack.c.h.s8.bf16 %v584
        %v1889 = vunpack.c.h.s8.bf16 %v585
        %v1890 = vunpack.c.l.s8.bf16 %v586
        %v1891 = vunpack.c.l.s8.bf16 %v587
        %v1892 = vunpack.c.l.s8.bf16 %v588
        %v1893 = vunpack.c.l.s8.bf16 %v589
        %v1894 = vunpack.c.l.s8.bf16 %v590
        %v1895 = vunpack.c.l.s8.bf16 %v591
        %v1896 = vunpack.c.l.s8.bf16 %v592
        %v1897 = vunpack.c.l.s8.bf16 %v593
        %v1898 = vunpack.c.h.s8.bf16 %v586
        %v1899 = vunpack.c.h.s8.bf16 %v587
        %v1900 = vunpack.c.h.s8.bf16 %v588
        %v1901 = vunpack.c.h.s8.bf16 %v589
        %v1902 = vunpack.c.h.s8.bf16 %v590
        %v1903 = vunpack.c.h.s8.bf16 %v591
        %v1904 = vunpack.c.h.s8.bf16 %v592
        %v1905 = vunpack.c.h.s8.bf16 %v593
        %v1906 = vunpack.c.l.s8.bf16 %v594
        %v1907 = vunpack.c.l.s8.bf16 %v595
        %v1908 = vunpack.c.l.s8.bf16 %v596
        %v1909 = vunpack.c.l.s8.bf16 %v597
        %v1910 = vunpack.c.l.s8.bf16 %v598
        %v1911 = vunpack.c.l.s8.bf16 %v599
        %v1912 = vunpack.c.l.s8.bf16 %v600
        %v1913 = vunpack.c.l.s8.bf16 %v601
        %v1914 = vunpack.c.h.s8.bf16 %v594
        %v1915 = vunpack.c.h.s8.bf16 %v595
        %v1916 = vunpack.c.h.s8.bf16 %v596
        %v1917 = vunpack.c.h.s8.bf16 %v597
        %v1918 = vunpack.c.h.s8.bf16 %v598
        %v1919 = vunpack.c.h.s8.bf16 %v599
        %v1920 = vunpack.c.h.s8.bf16 %v600
        %v1921 = vunpack.c.h.s8.bf16 %v601
        %v1922 = vunpack.c.l.s8.bf16 %v602
        %v1923 = vunpack.c.l.s8.bf16 %v603
        %v1924 = vunpack.c.l.s8.bf16 %v604
        %v1925 = vunpack.c.l.s8.bf16 %v605
        %v1926 = vunpack.c.l.s8.bf16 %v606
        %v1927 = vunpack.c.l.s8.bf16 %v607
        %v1928 = vunpack.c.l.s8.bf16 %v608
        %v1929 = vunpack.c.l.s8.bf16 %v609
        %v1930 = vunpack.c.h.s8.bf16 %v602
        %v1931 = vunpack.c.h.s8.bf16 %v603
        %v1932 = vunpack.c.h.s8.bf16 %v604
        %v1933 = vunpack.c.h.s8.bf16 %v605
        %v1934 = vunpack.c.h.s8.bf16 %v606
        %v1935 = vunpack.c.h.s8.bf16 %v607
        %v1936 = vunpack.c.h.s8.bf16 %v608
        %v1937 = vunpack.c.h.s8.bf16 %v609
        %v1938 = vunpack.c.l.s8.bf16 %v610
        %v1939 = vunpack.c.l.s8.bf16 %v611
        %v1940 = vunpack.c.l.s8.bf16 %v612
        %v1941 = vunpack.c.l.s8.bf16 %v613
        %v1942 = vunpack.c.l.s8.bf16 %v614
        %v1943 = vunpack.c.l.s8.bf16 %v615
        %v1944 = vunpack.c.l.s8.bf16 %v616
        %v1945 = vunpack.c.l.s8.bf16 %v617
        %v1946 = vunpack.c.h.s8.bf16 %v610
        %v1947 = vunpack.c.h.s8.bf16 %v611
        %v1948 = vunpack.c.h.s8.bf16 %v612
        %v1949 = vunpack.c.h.s8.bf16 %v613
        %v1950 = vunpack.c.h.s8.bf16 %v614
        %v1951 = vunpack.c.h.s8.bf16 %v615
        %v1952 = vunpack.c.h.s8.bf16 %v616
        %v1953 = vunpack.c.h.s8.bf16 %v617
        %v1954 = vunpack.c.l.s8.bf16 %v618
        %v1955 = vunpack.c.l.s8.bf16 %v619
        %v1956 = vunpack.c.l.s8.bf16 %v620
        %v1957 = vunpack.c.l.s8.bf16 %v621
        %v1958 = vunpack.c.l.s8.bf16 %v622
        %v1959 = vunpack.c.l.s8.bf16 %v623
        %v1960 = vunpack.c.l.s8.bf16 %v624
        %v1961 = vunpack.c.l.s8.bf16 %v625
        %v1962 = vunpack.c.h.s8.bf16 %v618
        %v1963 = vunpack.c.h.s8.bf16 %v619
        %v1964 = vunpack.c.h.s8.bf16 %v620
        %v1965 = vunpack.c.h.s8.bf16 %v621
        %v1966 = vunpack.c.h.s8.bf16 %v622
        %v1967 = vunpack.c.h.s8.bf16 %v623
        %v1968 = vunpack.c.h.s8.bf16 %v624
        %v1969 = vunpack.c.h.s8.bf16 %v625
        %v1970 = vunpack.c.l.s8.bf16 %v626
        %v1971 = vunpack.c.l.s8.bf16 %v627
        %v1972 = vunpack.c.l.s8.bf16 %v628
        %v1973 = vunpack.c.l.s8.bf16 %v629
        %v1974 = vunpack.c.l.s8.bf16 %v630
        %v1975 = vunpack.c.l.s8.bf16 %v631
        %v1976 = vunpack.c.l.s8.bf16 %v632
        %v1977 = vunpack.c.l.s8.bf16 %v633
        %v1978 = vunpack.c.h.s8.bf16 %v626
        %v1979 = vunpack.c.h.s8.bf16 %v627
        %v1980 = vunpack.c.h.s8.bf16 %v628
        %v1981 = vunpack.c.h.s8.bf16 %v629
        %v1982 = vunpack.c.h.s8.bf16 %v630
        %v1983 = vunpack.c.h.s8.bf16 %v631
        %v1984 = vunpack.c.h.s8.bf16 %v632
        %v1985 = vunpack.c.h.s8.bf16 %v633
        %v1986 = vunpack.c.l.s8.bf16 %v634
        %v1987 = vunpack.c.l.s8.bf16 %v635
        %v1988 = vunpack.c.l.s8.bf16 %v636
        %v1989 = vunpack.c.l.s8.bf16 %v637
        %v1990 = vunpack.c.l.s8.bf16 %v638
        %v1991 = vunpack.c.l.s8.bf16 %v639
        %v1992 = vunpack.c.l.s8.bf16 %v640
        %v1993 = vunpack.c.l.s8.bf16 %v641
        %v1994 = vunpack.c.h.s8.bf16 %v634
        %v1995 = vunpack.c.h.s8.bf16 %v635
        %v1996 = vunpack.c.h.s8.bf16 %v636
        %v1997 = vunpack.c.h.s8.bf16 %v637
        %v1998 = vunpack.c.h.s8.bf16 %v638
        %v1999 = vunpack.c.h.s8.bf16 %v639
        %v2000 = vunpack.c.h.s8.bf16 %v640
        %v2001 = vunpack.c.h.s8.bf16 %v641
        %v2002 = vunpack.c.l.s8.bf16 %v642
        %v2003 = vunpack.c.l.s8.bf16 %v643
        %v2004 = vunpack.c.l.s8.bf16 %v644
        %v2005 = vunpack.c.l.s8.bf16 %v645
        %v2006 = vunpack.c.l.s8.bf16 %v646
        %v2007 = vunpack.c.l.s8.bf16 %v647
        %v2008 = vunpack.c.l.s8.bf16 %v648
        %v2009 = vunpack.c.l.s8.bf16 %v649
        %v2010 = vunpack.c.h.s8.bf16 %v642
        %v2011 = vunpack.c.h.s8.bf16 %v643
        %v2012 = vunpack.c.h.s8.bf16 %v644
        %v2013 = vunpack.c.h.s8.bf16 %v645
        %v2014 = vunpack.c.h.s8.bf16 %v646
        %v2015 = vunpack.c.h.s8.bf16 %v647
        %v2016 = vunpack.c.h.s8.bf16 %v648
        %v2017 = vunpack.c.h.s8.bf16 %v649
        %v2018 = vunpack.c.l.s8.bf16 %v650
        %v2019 = vunpack.c.l.s8.bf16 %v651
        %v2020 = vunpack.c.l.s8.bf16 %v652
        %v2021 = vunpack.c.l.s8.bf16 %v653
        %v2022 = vunpack.c.l.s8.bf16 %v654
        %v2023 = vunpack.c.l.s8.bf16 %v655
        %v2024 = vunpack.c.l.s8.bf16 %v656
        %v2025 = vunpack.c.l.s8.bf16 %v657
        %v2026 = vunpack.c.h.s8.bf16 %v650
        %v2027 = vunpack.c.h.s8.bf16 %v651
        %v2028 = vunpack.c.h.s8.bf16 %v652
        %v2029 = vunpack.c.h.s8.bf16 %v653
        %v2030 = vunpack.c.h.s8.bf16 %v654
        %v2031 = vunpack.c.h.s8.bf16 %v655
        %v2032 = vunpack.c.h.s8.bf16 %v656
        %v2033 = vunpack.c.h.s8.bf16 %v657
        %v2034 = vunpack.c.l.s8.bf16 %v658
        %v2035 = vunpack.c.l.s8.bf16 %v659
        %v2036 = vunpack.c.l.s8.bf16 %v660
        %v2037 = vunpack.c.l.s8.bf16 %v661
        %v2038 = vunpack.c.l.s8.bf16 %v662
        %v2039 = vunpack.c.l.s8.bf16 %v663
        %v2040 = vunpack.c.l.s8.bf16 %v664
        %v2041 = vunpack.c.l.s8.bf16 %v665
        %v2042 = vunpack.c.h.s8.bf16 %v658
        %v2043 = vunpack.c.h.s8.bf16 %v659
        %v2044 = vunpack.c.h.s8.bf16 %v660
        %v2045 = vunpack.c.h.s8.bf16 %v661
        %v2046 = vunpack.c.h.s8.bf16 %v662
        %v2047 = vunpack.c.h.s8.bf16 %v663
        %v2048 = vunpack.c.h.s8.bf16 %v664
        %v2049 = vunpack.c.h.s8.bf16 %v665
        %v2050 = vunpack.c.l.s8.bf16 %v666
        %v2051 = vunpack.c.l.s8.bf16 %v667
        %v2052 = vunpack.c.l.s8.bf16 %v668
        %v2053 = vunpack.c.l.s8.bf16 %v669
        %v2054 = vunpack.c.l.s8.bf16 %v670
        %v2055 = vunpack.c.l.s8.bf16 %v671
        %v2056 = vunpack.c.l.s8.bf16 %v672
        %v2057 = vunpack.c.l.s8.bf16 %v673
        %v2058 = vunpack.c.h.s8.bf16 %v666
        %v2059 = vunpack.c.h.s8.bf16 %v667
        %v2060 = vunpack.c.h.s8.bf16 %v668
        %v2061 = vunpack.c.h.s8.bf16 %v669
        %v2062 = vunpack.c.h.s8.bf16 %v670
        %v2063 = vunpack.c.h.s8.bf16 %v671
        %v2064 = vunpack.c.h.s8.bf16 %v672
        %v2065 = vunpack.c.h.s8.bf16 %v673
        %v2066 = vunpack.c.l.s8.bf16 %v674
        %v2067 = vunpack.c.l.s8.bf16 %v675
        %v2068 = vunpack.c.l.s8.bf16 %v676
        %v2069 = vunpack.c.l.s8.bf16 %v677
        %v2070 = vunpack.c.l.s8.bf16 %v678
        %v2071 = vunpack.c.l.s8.bf16 %v679
        %v2072 = vunpack.c.l.s8.bf16 %v680
        %v2073 = vunpack.c.l.s8.bf16 %v681
        %v2074 = vunpack.c.h.s8.bf16 %v674
        %v2075 = vunpack.c.h.s8.bf16 %v675
        %v2076 = vunpack.c.h.s8.bf16 %v676
        %v2077 = vunpack.c.h.s8.bf16 %v677
        %v2078 = vunpack.c.h.s8.bf16 %v678
        %v2079 = vunpack.c.h.s8.bf16 %v679
        %v2080 = vunpack.c.h.s8.bf16 %v680
        %v2081 = vunpack.c.h.s8.bf16 %v681
        %v2082 = vunpack.c.l.s8.bf16 %v682
        %v2083 = vunpack.c.l.s8.bf16 %v683
        %v2084 = vunpack.c.l.s8.bf16 %v684
        %v2085 = vunpack.c.l.s8.bf16 %v685
        %v2086 = vunpack.c.l.s8.bf16 %v686
        %v2087 = vunpack.c.l.s8.bf16 %v687
        %v2088 = vunpack.c.l.s8.bf16 %v688
        %v2089 = vunpack.c.l.s8.bf16 %v689
        %v2090 = vunpack.c.h.s8.bf16 %v682
        %v2091 = vunpack.c.h.s8.bf16 %v683
        %v2092 = vunpack.c.h.s8.bf16 %v684
        %v2093 = vunpack.c.h.s8.bf16 %v685
        %v2094 = vunpack.c.h.s8.bf16 %v686
        %v2095 = vunpack.c.h.s8.bf16 %v687
        %v2096 = vunpack.c.h.s8.bf16 %v688
        %v2097 = vunpack.c.h.s8.bf16 %v689
        %v2098 = vunpack.c.l.s8.bf16 %v690
        %v2099 = vunpack.c.l.s8.bf16 %v691
        %v2100 = vunpack.c.l.s8.bf16 %v692
        %v2101 = vunpack.c.l.s8.bf16 %v693
        %v2102 = vunpack.c.l.s8.bf16 %v694
        %v2103 = vunpack.c.l.s8.bf16 %v695
        %v2104 = vunpack.c.l.s8.bf16 %v696
        %v2105 = vunpack.c.l.s8.bf16 %v697
        %v2106 = vunpack.c.h.s8.bf16 %v690
        %v2107 = vunpack.c.h.s8.bf16 %v691
        %v2108 = vunpack.c.h.s8.bf16 %v692
        %v2109 = vunpack.c.h.s8.bf16 %v693
        %v2110 = vunpack.c.h.s8.bf16 %v694
        %v2111 = vunpack.c.h.s8.bf16 %v695
        %v2112 = vunpack.c.h.s8.bf16 %v696
        %v2113 = vunpack.c.h.s8.bf16 %v697
        %v2114 = vunpack.c.l.s8.bf16 %v698
        %v2115 = vunpack.c.l.s8.bf16 %v699
        %v2116 = vunpack.c.l.s8.bf16 %v700
        %v2117 = vunpack.c.l.s8.bf16 %v701
        %v2118 = vunpack.c.l.s8.bf16 %v702
        %v2119 = vunpack.c.l.s8.bf16 %v703
        %v2120 = vunpack.c.l.s8.bf16 %v704
        %v2121 = vunpack.c.l.s8.bf16 %v705
        %v2122 = vunpack.c.h.s8.bf16 %v698
        %v2123 = vunpack.c.h.s8.bf16 %v699
        %v2124 = vunpack.c.h.s8.bf16 %v700
        %v2125 = vunpack.c.h.s8.bf16 %v701
        %v2126 = vunpack.c.h.s8.bf16 %v702
        %v2127 = vunpack.c.h.s8.bf16 %v703
        %v2128 = vunpack.c.h.s8.bf16 %v704
        %v2129 = vunpack.c.h.s8.bf16 %v705
        %v2130 = vunpack.c.l.s8.bf16 %v706
        %v2131 = vunpack.c.l.s8.bf16 %v707
        %v2132 = vunpack.c.l.s8.bf16 %v708
        %v2133 = vunpack.c.l.s8.bf16 %v709
        %v2134 = vunpack.c.l.s8.bf16 %v710
        %v2135 = vunpack.c.l.s8.bf16 %v711
        %v2136 = vunpack.c.l.s8.bf16 %v712
        %v2137 = vunpack.c.l.s8.bf16 %v713
        %v2138 = vunpack.c.h.s8.bf16 %v706
        %v2139 = vunpack.c.h.s8.bf16 %v707
        %v2140 = vunpack.c.h.s8.bf16 %v708
        %v2141 = vunpack.c.h.s8.bf16 %v709
        %v2142 = vunpack.c.h.s8.bf16 %v710
        %v2143 = vunpack.c.h.s8.bf16 %v711
        %v2144 = vunpack.c.h.s8.bf16 %v712
        %v2145 = vunpack.c.h.s8.bf16 %v713
        %v2146 = vunpack.c.l.s8.bf16 %v714
        %v2147 = vunpack.c.l.s8.bf16 %v715
        %v2148 = vunpack.c.l.s8.bf16 %v716
        %v2149 = vunpack.c.l.s8.bf16 %v717
        %v2150 = vunpack.c.l.s8.bf16 %v718
        %v2151 = vunpack.c.l.s8.bf16 %v719
        %v2152 = vunpack.c.l.s8.bf16 %v720
        %v2153 = vunpack.c.l.s8.bf16 %v721
        %v2154 = vunpack.c.h.s8.bf16 %v714
        %v2155 = vunpack.c.h.s8.bf16 %v715
        %v2156 = vunpack.c.h.s8.bf16 %v716
        %v2157 = vunpack.c.h.s8.bf16 %v717
        %v2158 = vunpack.c.h.s8.bf16 %v718
        %v2159 = vunpack.c.h.s8.bf16 %v719
        %v2160 = vunpack.c.h.s8.bf16 %v720
        %v2161 = vunpack.c.h.s8.bf16 %v721
        %v2162 = vunpack.c.l.s8.bf16 %v722
        %v2163 = vunpack.c.l.s8.bf16 %v723
        %v2164 = vunpack.c.l.s8.bf16 %v724
        %v2165 = vunpack.c.l.s8.bf16 %v725
        %v2166 = vunpack.c.l.s8.bf16 %v726
        %v2167 = vunpack.c.l.s8.bf16 %v727
        %v2168 = vunpack.c.l.s8.bf16 %v728
        %v2169 = vunpack.c.l.s8.bf16 %v729
        %v2170 = vunpack.c.h.s8.bf16 %v722
        %v2171 = vunpack.c.h.s8.bf16 %v723
        %v2172 = vunpack.c.h.s8.bf16 %v724
        %v2173 = vunpack.c.h.s8.bf16 %v725
        %v2174 = vunpack.c.h.s8.bf16 %v726
        %v2175 = vunpack.c.h.s8.bf16 %v727
        %v2176 = vunpack.c.h.s8.bf16 %v728
        %v2177 = vunpack.c.h.s8.bf16 %v729
        %v2178 = vunpack.c.l.s8.bf16 %v730
        %v2179 = vunpack.c.l.s8.bf16 %v731
        %v2180 = vunpack.c.l.s8.bf16 %v732
        %v2181 = vunpack.c.l.s8.bf16 %v733
        %v2182 = vunpack.c.l.s8.bf16 %v734
        %v2183 = vunpack.c.l.s8.bf16 %v735
        %v2184 = vunpack.c.l.s8.bf16 %v736
        %v2185 = vunpack.c.l.s8.bf16 %v737
        %v2186 = vunpack.c.h.s8.bf16 %v730
        %v2187 = vunpack.c.h.s8.bf16 %v731
        %v2188 = vunpack.c.h.s8.bf16 %v732
        %v2189 = vunpack.c.h.s8.bf16 %v733
        %v2190 = vunpack.c.h.s8.bf16 %v734
        %v2191 = vunpack.c.h.s8.bf16 %v735
        %v2192 = vunpack.c.h.s8.bf16 %v736
        %v2193 = vunpack.c.h.s8.bf16 %v737
        %v2194 = vunpack.c.l.s8.bf16 %v738
        %v2195 = vunpack.c.l.s8.bf16 %v739
        %v2196 = vunpack.c.l.s8.bf16 %v740
        %v2197 = vunpack.c.l.s8.bf16 %v741
        %v2198 = vunpack.c.l.s8.bf16 %v742
        %v2199 = vunpack.c.l.s8.bf16 %v743
        %v2200 = vunpack.c.l.s8.bf16 %v744
        %v2201 = vunpack.c.l.s8.bf16 %v745
        %v2202 = vunpack.c.h.s8.bf16 %v738
        %v2203 = vunpack.c.h.s8.bf16 %v739
        %v2204 = vunpack.c.h.s8.bf16 %v740
        %v2205 = vunpack.c.h.s8.bf16 %v741
        %v2206 = vunpack.c.h.s8.bf16 %v742
        %v2207 = vunpack.c.h.s8.bf16 %v743
        %v2208 = vunpack.c.h.s8.bf16 %v744
        %v2209 = vunpack.c.h.s8.bf16 %v745
        %v2210 = vunpack.c.l.s8.bf16 %v746
        %v2211 = vunpack.c.l.s8.bf16 %v747
        %v2212 = vunpack.c.l.s8.bf16 %v748
        %v2213 = vunpack.c.l.s8.bf16 %v749
        %v2214 = vunpack.c.l.s8.bf16 %v750
        %v2215 = vunpack.c.l.s8.bf16 %v751
        %v2216 = vunpack.c.l.s8.bf16 %v752
        %v2217 = vunpack.c.l.s8.bf16 %v753
        %v2218 = vunpack.c.h.s8.bf16 %v746
        %v2219 = vunpack.c.h.s8.bf16 %v747
        %v2220 = vunpack.c.h.s8.bf16 %v748
        %v2221 = vunpack.c.h.s8.bf16 %v749
        %v2222 = vunpack.c.h.s8.bf16 %v750
        %v2223 = vunpack.c.h.s8.bf16 %v751
        %v2224 = vunpack.c.h.s8.bf16 %v752
        %v2225 = vunpack.c.h.s8.bf16 %v753
        %v2226 = vunpack.c.l.s8.bf16 %v754
        %v2227 = vunpack.c.l.s8.bf16 %v755
        %v2228 = vunpack.c.l.s8.bf16 %v756
        %v2229 = vunpack.c.l.s8.bf16 %v757
        %v2230 = vunpack.c.l.s8.bf16 %v758
        %v2231 = vunpack.c.l.s8.bf16 %v759
        %v2232 = vunpack.c.l.s8.bf16 %v760
        %v2233 = vunpack.c.l.s8.bf16 %v761
        %v2234 = vunpack.c.h.s8.bf16 %v754
        %v2235 = vunpack.c.h.s8.bf16 %v755
        %v2236 = vunpack.c.h.s8.bf16 %v756
        %v2237 = vunpack.c.h.s8.bf16 %v757
        %v2238 = vunpack.c.h.s8.bf16 %v758
        %v2239 = vunpack.c.h.s8.bf16 %v759
        %v2240 = vunpack.c.h.s8.bf16 %v760
        %v2241 = vunpack.c.h.s8.bf16 %v761
        %v2242 = vunpack.c.l.s8.bf16 %v762
        %v2243 = vunpack.c.l.s8.bf16 %v763
        %v2244 = vunpack.c.l.s8.bf16 %v764
        %v2245 = vunpack.c.l.s8.bf16 %v765
        %v2246 = vunpack.c.l.s8.bf16 %v766
        %v2247 = vunpack.c.l.s8.bf16 %v767
        %v2248 = vunpack.c.l.s8.bf16 %v768
        %v2249 = vunpack.c.l.s8.bf16 %v769
        %v2250 = vunpack.c.h.s8.bf16 %v762
        %v2251 = vunpack.c.h.s8.bf16 %v763
        %v2252 = vunpack.c.h.s8.bf16 %v764
        %v2253 = vunpack.c.h.s8.bf16 %v765
        %v2254 = vunpack.c.h.s8.bf16 %v766
        %v2255 = vunpack.c.h.s8.bf16 %v767
        %v2256 = vunpack.c.h.s8.bf16 %v768
        %v2257 = vunpack.c.h.s8.bf16 %v769
        %v2258 = vunpack.c.l.s8.bf16 %v770
        %v2259 = vunpack.c.l.s8.bf16 %v771
        %v2260 = vunpack.c.l.s8.bf16 %v772
        %v2261 = vunpack.c.l.s8.bf16 %v773
        %v2262 = vunpack.c.l.s8.bf16 %v774
        %v2263 = vunpack.c.l.s8.bf16 %v775
        %v2264 = vunpack.c.l.s8.bf16 %v776
        %v2265 = vunpack.c.l.s8.bf16 %v777
        %v2266 = vunpack.c.h.s8.bf16 %v770
        %v2267 = vunpack.c.h.s8.bf16 %v771
        %v2268 = vunpack.c.h.s8.bf16 %v772
        %v2269 = vunpack.c.h.s8.bf16 %v773
        %v2270 = vunpack.c.h.s8.bf16 %v774
        %v2271 = vunpack.c.h.s8.bf16 %v775
        %v2272 = vunpack.c.h.s8.bf16 %v776
        %v2273 = vunpack.c.h.s8.bf16 %v777
        %v2274 = vunpack.c.l.s8.bf16 %v778
        %v2275 = vunpack.c.l.s8.bf16 %v779
        %v2276 = vunpack.c.l.s8.bf16 %v780
        %v2277 = vunpack.c.l.s8.bf16 %v781
        %v2278 = vunpack.c.l.s8.bf16 %v782
        %v2279 = vunpack.c.l.s8.bf16 %v783
        %v2280 = vunpack.c.l.s8.bf16 %v784
        %v2281 = vunpack.c.l.s8.bf16 %v785
        %v2282 = vunpack.c.h.s8.bf16 %v778
        %v2283 = vunpack.c.h.s8.bf16 %v779
        %v2284 = vunpack.c.h.s8.bf16 %v780
        %v2285 = vunpack.c.h.s8.bf16 %v781
        %v2286 = vunpack.c.h.s8.bf16 %v782
        %v2287 = vunpack.c.h.s8.bf16 %v783
        %v2288 = vunpack.c.h.s8.bf16 %v784
        %v2289 = vunpack.c.h.s8.bf16 %v785
        %v2290 = vunpack.c.l.s8.bf16 %v786
        %v2291 = vunpack.c.l.s8.bf16 %v787
        %v2292 = vunpack.c.l.s8.bf16 %v788
        %v2293 = vunpack.c.l.s8.bf16 %v789
        %v2294 = vunpack.c.l.s8.bf16 %v790
        %v2295 = vunpack.c.l.s8.bf16 %v791
        %v2296 = vunpack.c.l.s8.bf16 %v792
        %v2297 = vunpack.c.l.s8.bf16 %v793
        %v2298 = vunpack.c.h.s8.bf16 %v786
        %v2299 = vunpack.c.h.s8.bf16 %v787
        %v2300 = vunpack.c.h.s8.bf16 %v788
        %v2301 = vunpack.c.h.s8.bf16 %v789
        %v2302 = vunpack.c.h.s8.bf16 %v790
        %v2303 = vunpack.c.h.s8.bf16 %v791
        %v2304 = vunpack.c.h.s8.bf16 %v792
        %v2305 = vunpack.c.h.s8.bf16 %v793
        %v2306 = vunpack.c.l.s8.bf16 %v794
        %v2307 = vunpack.c.l.s8.bf16 %v795
        %v2308 = vunpack.c.l.s8.bf16 %v796
        %v2309 = vunpack.c.l.s8.bf16 %v797
        %v2310 = vunpack.c.l.s8.bf16 %v798
        %v2311 = vunpack.c.l.s8.bf16 %v799
        %v2312 = vunpack.c.l.s8.bf16 %v800
        %v2313 = vunpack.c.l.s8.bf16 %v801
        %v2314 = vunpack.c.h.s8.bf16 %v794
        %v2315 = vunpack.c.h.s8.bf16 %v795
        %v2316 = vunpack.c.h.s8.bf16 %v796
        %v2317 = vunpack.c.h.s8.bf16 %v797
        %v2318 = vunpack.c.h.s8.bf16 %v798
        %v2319 = vunpack.c.h.s8.bf16 %v799
        %v2320 = vunpack.c.h.s8.bf16 %v800
        %v2321 = vunpack.c.h.s8.bf16 %v801
        %v2322 = vunpack.c.l.s8.bf16 %v802
        %v2323 = vunpack.c.l.s8.bf16 %v803
        %v2324 = vunpack.c.l.s8.bf16 %v804
        %v2325 = vunpack.c.l.s8.bf16 %v805
        %v2326 = vunpack.c.l.s8.bf16 %v806
        %v2327 = vunpack.c.l.s8.bf16 %v807
        %v2328 = vunpack.c.l.s8.bf16 %v808
        %v2329 = vunpack.c.l.s8.bf16 %v809
        %v2330 = vunpack.c.h.s8.bf16 %v802
        %v2331 = vunpack.c.h.s8.bf16 %v803
        %v2332 = vunpack.c.h.s8.bf16 %v804
        %v2333 = vunpack.c.h.s8.bf16 %v805
        %v2334 = vunpack.c.h.s8.bf16 %v806
        %v2335 = vunpack.c.h.s8.bf16 %v807
        %v2336 = vunpack.c.h.s8.bf16 %v808
        %v2337 = vunpack.c.h.s8.bf16 %v809
        %v2338 = vunpack.c.l.s8.bf16 %v810
        %v2339 = vunpack.c.l.s8.bf16 %v811
        %v2340 = vunpack.c.l.s8.bf16 %v812
        %v2341 = vunpack.c.l.s8.bf16 %v813
        %v2342 = vunpack.c.l.s8.bf16 %v814
        %v2343 = vunpack.c.l.s8.bf16 %v815
        %v2344 = vunpack.c.l.s8.bf16 %v816
        %v2345 = vunpack.c.l.s8.bf16 %v817
        %v2346 = vunpack.c.h.s8.bf16 %v810
        %v2347 = vunpack.c.h.s8.bf16 %v811
        %v2348 = vunpack.c.h.s8.bf16 %v812
        %v2349 = vunpack.c.h.s8.bf16 %v813
        %v2350 = vunpack.c.h.s8.bf16 %v814
        %v2351 = vunpack.c.h.s8.bf16 %v815
        %v2352 = vunpack.c.h.s8.bf16 %v816
        %v2353 = vunpack.c.h.s8.bf16 %v817
        %v2354 = vunpack.c.l.s8.bf16 %v818
        %v2355 = vunpack.c.l.s8.bf16 %v819
        %v2356 = vunpack.c.l.s8.bf16 %v820
        %v2357 = vunpack.c.l.s8.bf16 %v821
        %v2358 = vunpack.c.l.s8.bf16 %v822
        %v2359 = vunpack.c.l.s8.bf16 %v823
        %v2360 = vunpack.c.l.s8.bf16 %v824
        %v2361 = vunpack.c.l.s8.bf16 %v825
        %v2362 = vunpack.c.h.s8.bf16 %v818
        %v2363 = vunpack.c.h.s8.bf16 %v819
        %v2364 = vunpack.c.h.s8.bf16 %v820
        %v2365 = vunpack.c.h.s8.bf16 %v821
        %v2366 = vunpack.c.h.s8.bf16 %v822
        %v2367 = vunpack.c.h.s8.bf16 %v823
        %v2368 = vunpack.c.h.s8.bf16 %v824
        %v2369 = vunpack.c.h.s8.bf16 %v825
        %v2370 = vunpack.c.l.s8.bf16 %v826
        %v2371 = vunpack.c.l.s8.bf16 %v827
        %v2372 = vunpack.c.l.s8.bf16 %v828
        %v2373 = vunpack.c.l.s8.bf16 %v829
        %v2374 = vunpack.c.l.s8.bf16 %v830
        %v2375 = vunpack.c.l.s8.bf16 %v831
        %v2376 = vunpack.c.l.s8.bf16 %v832
        %v2377 = vunpack.c.l.s8.bf16 %v833
        %v2378 = vunpack.c.h.s8.bf16 %v826
        %v2379 = vunpack.c.h.s8.bf16 %v827
        %v2380 = vunpack.c.h.s8.bf16 %v828
        %v2381 = vunpack.c.h.s8.bf16 %v829
        %v2382 = vunpack.c.h.s8.bf16 %v830
        %v2383 = vunpack.c.h.s8.bf16 %v831
        %v2384 = vunpack.c.h.s8.bf16 %v832
        %v2385 = vunpack.c.h.s8.bf16 %v833
        %v2386 = vunpack.c.l.s8.bf16 %v834
        %v2387 = vunpack.c.l.s8.bf16 %v835
        %v2388 = vunpack.c.l.s8.bf16 %v836
        %v2389 = vunpack.c.l.s8.bf16 %v837
        %v2390 = vunpack.c.l.s8.bf16 %v838
        %v2391 = vunpack.c.l.s8.bf16 %v839
        %v2392 = vunpack.c.l.s8.bf16 %v840
        %v2393 = vunpack.c.l.s8.bf16 %v841
        %v2394 = vunpack.c.h.s8.bf16 %v834
        %v2395 = vunpack.c.h.s8.bf16 %v835
        %v2396 = vunpack.c.h.s8.bf16 %v836
        %v2397 = vunpack.c.h.s8.bf16 %v837
        %v2398 = vunpack.c.h.s8.bf16 %v838
        %v2399 = vunpack.c.h.s8.bf16 %v839
        %v2400 = vunpack.c.h.s8.bf16 %v840
        %v2401 = vunpack.c.h.s8.bf16 %v841
        %v2402 = vunpack.c.l.s8.bf16 %v842
        %v2403 = vunpack.c.l.s8.bf16 %v843
        %v2404 = vunpack.c.l.s8.bf16 %v844
        %v2405 = vunpack.c.l.s8.bf16 %v845
        %v2406 = vunpack.c.l.s8.bf16 %v846
        %v2407 = vunpack.c.l.s8.bf16 %v847
        %v2408 = vunpack.c.l.s8.bf16 %v848
        %v2409 = vunpack.c.l.s8.bf16 %v849
        %v2410 = vunpack.c.h.s8.bf16 %v842
        %v2411 = vunpack.c.h.s8.bf16 %v843
        %v2412 = vunpack.c.h.s8.bf16 %v844
        %v2413 = vunpack.c.h.s8.bf16 %v845
        %v2414 = vunpack.c.h.s8.bf16 %v846
        %v2415 = vunpack.c.h.s8.bf16 %v847
        %v2416 = vunpack.c.h.s8.bf16 %v848
        %v2417 = vunpack.c.h.s8.bf16 %v849
        %v2418 = vunpack.c.l.s8.bf16 %v850
        %v2419 = vunpack.c.l.s8.bf16 %v851
        %v2420 = vunpack.c.l.s8.bf16 %v852
        %v2421 = vunpack.c.l.s8.bf16 %v853
        %v2422 = vunpack.c.l.s8.bf16 %v854
        %v2423 = vunpack.c.l.s8.bf16 %v855
        %v2424 = vunpack.c.l.s8.bf16 %v856
        %v2425 = vunpack.c.l.s8.bf16 %v857
        %v2426 = vunpack.c.h.s8.bf16 %v850
        %v2427 = vunpack.c.h.s8.bf16 %v851
        %v2428 = vunpack.c.h.s8.bf16 %v852
        %v2429 = vunpack.c.h.s8.bf16 %v853
        %v2430 = vunpack.c.h.s8.bf16 %v854
        %v2431 = vunpack.c.h.s8.bf16 %v855
        %v2432 = vunpack.c.h.s8.bf16 %v856
        %v2433 = vunpack.c.h.s8.bf16 %v857
        %v2434 = vunpack.c.l.s8.bf16 %v858
        %v2435 = vunpack.c.l.s8.bf16 %v859
        %v2436 = vunpack.c.l.s8.bf16 %v860
        %v2437 = vunpack.c.l.s8.bf16 %v861
        %v2438 = vunpack.c.l.s8.bf16 %v862
        %v2439 = vunpack.c.l.s8.bf16 %v863
        %v2440 = vunpack.c.l.s8.bf16 %v864
        %v2441 = vunpack.c.l.s8.bf16 %v865
        %v2442 = vunpack.c.h.s8.bf16 %v858
        %v2443 = vunpack.c.h.s8.bf16 %v859
        %v2444 = vunpack.c.h.s8.bf16 %v860
        %v2445 = vunpack.c.h.s8.bf16 %v861
        %v2446 = vunpack.c.h.s8.bf16 %v862
        %v2447 = vunpack.c.h.s8.bf16 %v863
        %v2448 = vunpack.c.h.s8.bf16 %v864
        %v2449 = vunpack.c.h.s8.bf16 %v865
        %v2450 = vunpack.c.l.s8.bf16 %v866
        %v2451 = vunpack.c.l.s8.bf16 %v867
        %v2452 = vunpack.c.l.s8.bf16 %v868
        %v2453 = vunpack.c.l.s8.bf16 %v869
        %v2454 = vunpack.c.l.s8.bf16 %v870
        %v2455 = vunpack.c.l.s8.bf16 %v871
        %v2456 = vunpack.c.l.s8.bf16 %v872
        %v2457 = vunpack.c.l.s8.bf16 %v873
        %v2458 = vunpack.c.h.s8.bf16 %v866
        %v2459 = vunpack.c.h.s8.bf16 %v867
        %v2460 = vunpack.c.h.s8.bf16 %v868
        %v2461 = vunpack.c.h.s8.bf16 %v869
        %v2462 = vunpack.c.h.s8.bf16 %v870
        %v2463 = vunpack.c.h.s8.bf16 %v871
        %v2464 = vunpack.c.h.s8.bf16 %v872
        %v2465 = vunpack.c.h.s8.bf16 %v873
        %v2466 = vunpack.c.l.s8.bf16 %v874
        %v2467 = vunpack.c.l.s8.bf16 %v875
        %v2468 = vunpack.c.l.s8.bf16 %v876
        %v2469 = vunpack.c.l.s8.bf16 %v877
        %v2470 = vunpack.c.l.s8.bf16 %v878
        %v2471 = vunpack.c.l.s8.bf16 %v879
        %v2472 = vunpack.c.l.s8.bf16 %v880
        %v2473 = vunpack.c.l.s8.bf16 %v881
        %v2474 = vunpack.c.h.s8.bf16 %v874
        %v2475 = vunpack.c.h.s8.bf16 %v875
        %v2476 = vunpack.c.h.s8.bf16 %v876
        %v2477 = vunpack.c.h.s8.bf16 %v877
        %v2478 = vunpack.c.h.s8.bf16 %v878
        %v2479 = vunpack.c.h.s8.bf16 %v879
        %v2480 = vunpack.c.h.s8.bf16 %v880
        %v2481 = vunpack.c.h.s8.bf16 %v881
        %v2482 = vunpack.c.l.s8.bf16 %v882
        %v2483 = vunpack.c.l.s8.bf16 %v883
        %v2484 = vunpack.c.l.s8.bf16 %v884
        %v2485 = vunpack.c.l.s8.bf16 %v885
        %v2486 = vunpack.c.l.s8.bf16 %v886
        %v2487 = vunpack.c.l.s8.bf16 %v887
        %v2488 = vunpack.c.l.s8.bf16 %v888
        %v2489 = vunpack.c.l.s8.bf16 %v889
        %v2490 = vunpack.c.h.s8.bf16 %v882
        %v2491 = vunpack.c.h.s8.bf16 %v883
        %v2492 = vunpack.c.h.s8.bf16 %v884
        %v2493 = vunpack.c.h.s8.bf16 %v885
        %v2494 = vunpack.c.h.s8.bf16 %v886
        %v2495 = vunpack.c.h.s8.bf16 %v887
        %v2496 = vunpack.c.h.s8.bf16 %v888
        %v2497 = vunpack.c.h.s8.bf16 %v889
        %v2498 = vunpack.c.l.s8.bf16 %v890
        %v2499 = vunpack.c.l.s8.bf16 %v891
        %v2500 = vunpack.c.l.s8.bf16 %v892
        %v2501 = vunpack.c.l.s8.bf16 %v893
        %v2502 = vunpack.c.l.s8.bf16 %v894
        %v2503 = vunpack.c.l.s8.bf16 %v895
        %v2504 = vunpack.c.l.s8.bf16 %v896
        %v2505 = vunpack.c.l.s8.bf16 %v897
        %v2506 = vunpack.c.h.s8.bf16 %v890
        %v2507 = vunpack.c.h.s8.bf16 %v891
        %v2508 = vunpack.c.h.s8.bf16 %v892
        %v2509 = vunpack.c.h.s8.bf16 %v893
        %v2510 = vunpack.c.h.s8.bf16 %v894
        %v2511 = vunpack.c.h.s8.bf16 %v895
        %v2512 = vunpack.c.h.s8.bf16 %v896
        %v2513 = vunpack.c.h.s8.bf16 %v897
        %v2514 = vunpack.c.l.s8.bf16 %v898
        %v2515 = vunpack.c.l.s8.bf16 %v899
        %v2516 = vunpack.c.l.s8.bf16 %v900
        %v2517 = vunpack.c.l.s8.bf16 %v901
        %v2518 = vunpack.c.l.s8.bf16 %v902
        %v2519 = vunpack.c.l.s8.bf16 %v903
        %v2520 = vunpack.c.l.s8.bf16 %v904
        %v2521 = vunpack.c.l.s8.bf16 %v905
        %v2522 = vunpack.c.h.s8.bf16 %v898
        %v2523 = vunpack.c.h.s8.bf16 %v899
        %v2524 = vunpack.c.h.s8.bf16 %v900
        %v2525 = vunpack.c.h.s8.bf16 %v901
        %v2526 = vunpack.c.h.s8.bf16 %v902
        %v2527 = vunpack.c.h.s8.bf16 %v903
        %v2528 = vunpack.c.h.s8.bf16 %v904
        %v2529 = vunpack.c.h.s8.bf16 %v905
        %v2530 = vunpack.c.l.s8.bf16 %v906
        %v2531 = vunpack.c.l.s8.bf16 %v907
        %v2532 = vunpack.c.l.s8.bf16 %v908
        %v2533 = vunpack.c.l.s8.bf16 %v909
        %v2534 = vunpack.c.l.s8.bf16 %v910
        %v2535 = vunpack.c.l.s8.bf16 %v911
        %v2536 = vunpack.c.l.s8.bf16 %v912
        %v2537 = vunpack.c.l.s8.bf16 %v913
        %v2538 = vunpack.c.h.s8.bf16 %v906
        %v2539 = vunpack.c.h.s8.bf16 %v907
        %v2540 = vunpack.c.h.s8.bf16 %v908
        %v2541 = vunpack.c.h.s8.bf16 %v909
        %v2542 = vunpack.c.h.s8.bf16 %v910
        %v2543 = vunpack.c.h.s8.bf16 %v911
        %v2544 = vunpack.c.h.s8.bf16 %v912
        %v2545 = vunpack.c.h.s8.bf16 %v913
        %v2546 = vunpack.c.l.s8.bf16 %v914
        %v2547 = vunpack.c.l.s8.bf16 %v915
        %v2548 = vunpack.c.l.s8.bf16 %v916
        %v2549 = vunpack.c.l.s8.bf16 %v917
        %v2550 = vunpack.c.l.s8.bf16 %v918
        %v2551 = vunpack.c.l.s8.bf16 %v919
        %v2552 = vunpack.c.l.s8.bf16 %v920
        %v2553 = vunpack.c.l.s8.bf16 %v921
        %v2554 = vunpack.c.h.s8.bf16 %v914
        %v2555 = vunpack.c.h.s8.bf16 %v915
        %v2556 = vunpack.c.h.s8.bf16 %v916
        %v2557 = vunpack.c.h.s8.bf16 %v917
        %v2558 = vunpack.c.h.s8.bf16 %v918
        %v2559 = vunpack.c.h.s8.bf16 %v919
        %v2560 = vunpack.c.h.s8.bf16 %v920
        %v2561 = vunpack.c.h.s8.bf16 %v921
        %v2562 = vunpack.c.l.s8.bf16 %v922
        %v2563 = vunpack.c.l.s8.bf16 %v923
        %v2564 = vunpack.c.l.s8.bf16 %v924
        %v2565 = vunpack.c.l.s8.bf16 %v925
        %v2566 = vunpack.c.l.s8.bf16 %v926
        %v2567 = vunpack.c.l.s8.bf16 %v927
        %v2568 = vunpack.c.l.s8.bf16 %v928
        %v2569 = vunpack.c.l.s8.bf16 %v929
        %v2570 = vunpack.c.h.s8.bf16 %v922
        %v2571 = vunpack.c.h.s8.bf16 %v923
        %v2572 = vunpack.c.h.s8.bf16 %v924
        %v2573 = vunpack.c.h.s8.bf16 %v925
        %v2574 = vunpack.c.h.s8.bf16 %v926
        %v2575 = vunpack.c.h.s8.bf16 %v927
        %v2576 = vunpack.c.h.s8.bf16 %v928
        %v2577 = vunpack.c.h.s8.bf16 %v929
        %v2578 = vunpack.c.l.s8.bf16 %v930
        %v2579 = vunpack.c.l.s8.bf16 %v931
        %v2580 = vunpack.c.l.s8.bf16 %v932
        %v2581 = vunpack.c.l.s8.bf16 %v933
        %v2582 = vunpack.c.l.s8.bf16 %v934
        %v2583 = vunpack.c.l.s8.bf16 %v935
        %v2584 = vunpack.c.l.s8.bf16 %v936
        %v2585 = vunpack.c.l.s8.bf16 %v937
        %v2586 = vunpack.c.h.s8.bf16 %v930
        %v2587 = vunpack.c.h.s8.bf16 %v931
        %v2588 = vunpack.c.h.s8.bf16 %v932
        %v2589 = vunpack.c.h.s8.bf16 %v933
        %v2590 = vunpack.c.h.s8.bf16 %v934
        %v2591 = vunpack.c.h.s8.bf16 %v935
        %v2592 = vunpack.c.h.s8.bf16 %v936
        %v2593 = vunpack.c.h.s8.bf16 %v937
        %v2594 = vunpack.c.l.s8.bf16 %v938
        %v2595 = vunpack.c.l.s8.bf16 %v939
        %v2596 = vunpack.c.l.s8.bf16 %v940
        %v2597 = vunpack.c.l.s8.bf16 %v941
        %v2598 = vunpack.c.l.s8.bf16 %v942
        %v2599 = vunpack.c.l.s8.bf16 %v943
        %v2600 = vunpack.c.l.s8.bf16 %v944
        %v2601 = vunpack.c.l.s8.bf16 %v945
        %v2602 = vunpack.c.h.s8.bf16 %v938
        %v2603 = vunpack.c.h.s8.bf16 %v939
        %v2604 = vunpack.c.h.s8.bf16 %v940
        %v2605 = vunpack.c.h.s8.bf16 %v941
        %v2606 = vunpack.c.h.s8.bf16 %v942
        %v2607 = vunpack.c.h.s8.bf16 %v943
        %v2608 = vunpack.c.h.s8.bf16 %v944
        %v2609 = vunpack.c.h.s8.bf16 %v945
        %v2610 = vunpack.c.l.s8.bf16 %v946
        %v2611 = vunpack.c.l.s8.bf16 %v947
        %v2612 = vunpack.c.l.s8.bf16 %v948
        %v2613 = vunpack.c.l.s8.bf16 %v949
        %v2614 = vunpack.c.l.s8.bf16 %v950
        %v2615 = vunpack.c.l.s8.bf16 %v951
        %v2616 = vunpack.c.l.s8.bf16 %v952
        %v2617 = vunpack.c.l.s8.bf16 %v953
        %v2618 = vunpack.c.h.s8.bf16 %v946
        %v2619 = vunpack.c.h.s8.bf16 %v947
        %v2620 = vunpack.c.h.s8.bf16 %v948
        %v2621 = vunpack.c.h.s8.bf16 %v949
        %v2622 = vunpack.c.h.s8.bf16 %v950
        %v2623 = vunpack.c.h.s8.bf16 %v951
        %v2624 = vunpack.c.h.s8.bf16 %v952
        %v2625 = vunpack.c.h.s8.bf16 %v953
        %v2626 = vunpack.c.l.s8.bf16 %v954
        %v2627 = vunpack.c.l.s8.bf16 %v955
        %v2628 = vunpack.c.l.s8.bf16 %v956
        %v2629 = vunpack.c.l.s8.bf16 %v957
        %v2630 = vunpack.c.l.s8.bf16 %v958
        %v2631 = vunpack.c.l.s8.bf16 %v959
        %v2632 = vunpack.c.l.s8.bf16 %v960
        %v2633 = vunpack.c.l.s8.bf16 %v961
        %v2634 = vunpack.c.h.s8.bf16 %v954
        %v2635 = vunpack.c.h.s8.bf16 %v955
        %v2636 = vunpack.c.h.s8.bf16 %v956
        %v2637 = vunpack.c.h.s8.bf16 %v957
        %v2638 = vunpack.c.h.s8.bf16 %v958
        %v2639 = vunpack.c.h.s8.bf16 %v959
        %v2640 = vunpack.c.h.s8.bf16 %v960
        %v2641 = vunpack.c.h.s8.bf16 %v961
        %v2642 = vunpack.c.l.s8.bf16 %v962
        %v2643 = vunpack.c.l.s8.bf16 %v963
        %v2644 = vunpack.c.l.s8.bf16 %v964
        %v2645 = vunpack.c.l.s8.bf16 %v965
        %v2646 = vunpack.c.l.s8.bf16 %v966
        %v2647 = vunpack.c.l.s8.bf16 %v967
        %v2648 = vunpack.c.l.s8.bf16 %v968
        %v2649 = vunpack.c.l.s8.bf16 %v969
        %v2650 = vunpack.c.h.s8.bf16 %v962
        %v2651 = vunpack.c.h.s8.bf16 %v963
        %v2652 = vunpack.c.h.s8.bf16 %v964
        %v2653 = vunpack.c.h.s8.bf16 %v965
        %v2654 = vunpack.c.h.s8.bf16 %v966
        %v2655 = vunpack.c.h.s8.bf16 %v967
        %v2656 = vunpack.c.h.s8.bf16 %v968
        %v2657 = vunpack.c.h.s8.bf16 %v969
        %v2658 = vunpack.c.l.s8.bf16 %v970
        %v2659 = vunpack.c.l.s8.bf16 %v971
        %v2660 = vunpack.c.l.s8.bf16 %v972
        %v2661 = vunpack.c.l.s8.bf16 %v973
        %v2662 = vunpack.c.l.s8.bf16 %v974
        %v2663 = vunpack.c.l.s8.bf16 %v975
        %v2664 = vunpack.c.l.s8.bf16 %v976
        %v2665 = vunpack.c.l.s8.bf16 %v977
        %v2666 = vunpack.c.h.s8.bf16 %v970
        %v2667 = vunpack.c.h.s8.bf16 %v971
        %v2668 = vunpack.c.h.s8.bf16 %v972
        %v2669 = vunpack.c.h.s8.bf16 %v973
        %v2670 = vunpack.c.h.s8.bf16 %v974
        %v2671 = vunpack.c.h.s8.bf16 %v975
        %v2672 = vunpack.c.h.s8.bf16 %v976
        %v2673 = vunpack.c.h.s8.bf16 %v977
        %v2674 = vunpack.c.l.s8.bf16 %v978
        %v2675 = vunpack.c.l.s8.bf16 %v979
        %v2676 = vunpack.c.l.s8.bf16 %v980
        %v2677 = vunpack.c.l.s8.bf16 %v981
        %v2678 = vunpack.c.l.s8.bf16 %v982
        %v2679 = vunpack.c.l.s8.bf16 %v983
        %v2680 = vunpack.c.l.s8.bf16 %v984
        %v2681 = vunpack.c.l.s8.bf16 %v985
        %v2682 = vunpack.c.h.s8.bf16 %v978
        %v2683 = vunpack.c.h.s8.bf16 %v979
        %v2684 = vunpack.c.h.s8.bf16 %v980
        %v2685 = vunpack.c.h.s8.bf16 %v981
        %v2686 = vunpack.c.h.s8.bf16 %v982
        %v2687 = vunpack.c.h.s8.bf16 %v983
        %v2688 = vunpack.c.h.s8.bf16 %v984
        %v2689 = vunpack.c.h.s8.bf16 %v985
        %v2690 = vunpack.c.l.s8.bf16 %v986
        %v2691 = vunpack.c.l.s8.bf16 %v987
        %v2692 = vunpack.c.l.s8.bf16 %v988
        %v2693 = vunpack.c.l.s8.bf16 %v989
        %v2694 = vunpack.c.l.s8.bf16 %v990
        %v2695 = vunpack.c.l.s8.bf16 %v991
        %v2696 = vunpack.c.l.s8.bf16 %v992
        %v2697 = vunpack.c.l.s8.bf16 %v993
        %v2698 = vunpack.c.h.s8.bf16 %v986
        %v2699 = vunpack.c.h.s8.bf16 %v987
        %v2700 = vunpack.c.h.s8.bf16 %v988
        %v2701 = vunpack.c.h.s8.bf16 %v989
        %v2702 = vunpack.c.h.s8.bf16 %v990
        %v2703 = vunpack.c.h.s8.bf16 %v991
        %v2704 = vunpack.c.h.s8.bf16 %v992
        %v2705 = vunpack.c.h.s8.bf16 %v993
        %v2706 = vunpack.c.l.s8.bf16 %v994
        %v2707 = vunpack.c.l.s8.bf16 %v995
        %v2708 = vunpack.c.l.s8.bf16 %v996
        %v2709 = vunpack.c.l.s8.bf16 %v997
        %v2710 = vunpack.c.l.s8.bf16 %v998
        %v2711 = vunpack.c.l.s8.bf16 %v999
        %v2712 = vunpack.c.l.s8.bf16 %v1000
        %v2713 = vunpack.c.l.s8.bf16 %v1001
        %v2714 = vunpack.c.h.s8.bf16 %v994
        %v2715 = vunpack.c.h.s8.bf16 %v995
        %v2716 = vunpack.c.h.s8.bf16 %v996
        %v2717 = vunpack.c.h.s8.bf16 %v997
        %v2718 = vunpack.c.h.s8.bf16 %v998
        %v2719 = vunpack.c.h.s8.bf16 %v999
        %v2720 = vunpack.c.h.s8.bf16 %v1000
        %v2721 = vunpack.c.h.s8.bf16 %v1001
        %v2722 = vunpack.c.l.s8.bf16 %v1002
        %v2723 = vunpack.c.l.s8.bf16 %v1003
        %v2724 = vunpack.c.l.s8.bf16 %v1004
        %v2725 = vunpack.c.l.s8.bf16 %v1005
        %v2726 = vunpack.c.l.s8.bf16 %v1006
        %v2727 = vunpack.c.l.s8.bf16 %v1007
        %v2728 = vunpack.c.l.s8.bf16 %v1008
        %v2729 = vunpack.c.l.s8.bf16 %v1009
        %v2730 = vunpack.c.h.s8.bf16 %v1002
        %v2731 = vunpack.c.h.s8.bf16 %v1003
        %v2732 = vunpack.c.h.s8.bf16 %v1004
        %v2733 = vunpack.c.h.s8.bf16 %v1005
        %v2734 = vunpack.c.h.s8.bf16 %v1006
        %v2735 = vunpack.c.h.s8.bf16 %v1007
        %v2736 = vunpack.c.h.s8.bf16 %v1008
        %v2737 = vunpack.c.h.s8.bf16 %v1009
        %v2738 = vunpack.c.l.s8.bf16 %v1010
        %v2739 = vunpack.c.l.s8.bf16 %v1011
        %v2740 = vunpack.c.l.s8.bf16 %v1012
        %v2741 = vunpack.c.l.s8.bf16 %v1013
        %v2742 = vunpack.c.l.s8.bf16 %v1014
        %v2743 = vunpack.c.l.s8.bf16 %v1015
        %v2744 = vunpack.c.l.s8.bf16 %v1016
        %v2745 = vunpack.c.l.s8.bf16 %v1017
        %v2746 = vunpack.c.h.s8.bf16 %v1010
        %v2747 = vunpack.c.h.s8.bf16 %v1011
        %v2748 = vunpack.c.h.s8.bf16 %v1012
        %v2749 = vunpack.c.h.s8.bf16 %v1013
        %v2750 = vunpack.c.h.s8.bf16 %v1014
        %v2751 = vunpack.c.h.s8.bf16 %v1015
        %v2752 = vunpack.c.h.s8.bf16 %v1016
        %v2753 = vunpack.c.h.s8.bf16 %v1017
        %v2754 = vunpack.c.l.s8.bf16 %v1018
        %v2755 = vunpack.c.l.s8.bf16 %v1019
        %v2756 = vunpack.c.l.s8.bf16 %v1020
        %v2757 = vunpack.c.l.s8.bf16 %v1021
        %v2758 = vunpack.c.l.s8.bf16 %v1022
        %v2759 = vunpack.c.l.s8.bf16 %v1023
        %v2760 = vunpack.c.l.s8.bf16 %v1024
        %v2761 = vunpack.c.l.s8.bf16 %v1025
        %v2762 = vunpack.c.h.s8.bf16 %v1018
        %v2763 = vunpack.c.h.s8.bf16 %v1019
        %v2764 = vunpack.c.h.s8.bf16 %v1020
        %v2765 = vunpack.c.h.s8.bf16 %v1021
        %v2766 = vunpack.c.h.s8.bf16 %v1022
        %v2767 = vunpack.c.h.s8.bf16 %v1023
        %v2768 = vunpack.c.h.s8.bf16 %v1024
        %v2769 = vunpack.c.h.s8.bf16 %v1025
        %v2770 = vunpack.c.l.s8.bf16 %v1026
        %v2771 = vunpack.c.l.s8.bf16 %v1027
        %v2772 = vunpack.c.l.s8.bf16 %v1028
        %v2773 = vunpack.c.l.s8.bf16 %v1029
        %v2774 = vunpack.c.l.s8.bf16 %v1030
        %v2775 = vunpack.c.l.s8.bf16 %v1031
        %v2776 = vunpack.c.l.s8.bf16 %v1032
        %v2777 = vunpack.c.l.s8.bf16 %v1033
        %v2778 = vunpack.c.h.s8.bf16 %v1026
        %v2779 = vunpack.c.h.s8.bf16 %v1027
        %v2780 = vunpack.c.h.s8.bf16 %v1028
        %v2781 = vunpack.c.h.s8.bf16 %v1029
        %v2782 = vunpack.c.h.s8.bf16 %v1030
        %v2783 = vunpack.c.h.s8.bf16 %v1031
        %v2784 = vunpack.c.h.s8.bf16 %v1032
        %v2785 = vunpack.c.h.s8.bf16 %v1033
        %v2786 = vunpack.c.l.s8.bf16 %v1034
        %v2787 = vunpack.c.l.s8.bf16 %v1035
        %v2788 = vunpack.c.l.s8.bf16 %v1036
        %v2789 = vunpack.c.l.s8.bf16 %v1037
        %v2790 = vunpack.c.l.s8.bf16 %v1038
        %v2791 = vunpack.c.l.s8.bf16 %v1039
        %v2792 = vunpack.c.l.s8.bf16 %v1040
        %v2793 = vunpack.c.l.s8.bf16 %v1041
        %v2794 = vunpack.c.h.s8.bf16 %v1034
        %v2795 = vunpack.c.h.s8.bf16 %v1035
        %v2796 = vunpack.c.h.s8.bf16 %v1036
        %v2797 = vunpack.c.h.s8.bf16 %v1037
        %v2798 = vunpack.c.h.s8.bf16 %v1038
        %v2799 = vunpack.c.h.s8.bf16 %v1039
        %v2800 = vunpack.c.h.s8.bf16 %v1040
        %v2801 = vunpack.c.h.s8.bf16 %v1041
        %v2802 = vunpack.c.l.s8.bf16 %v1042
        %v2803 = vunpack.c.l.s8.bf16 %v1043
        %v2804 = vunpack.c.l.s8.bf16 %v1044
        %v2805 = vunpack.c.l.s8.bf16 %v1045
        %v2806 = vunpack.c.l.s8.bf16 %v1046
        %v2807 = vunpack.c.l.s8.bf16 %v1047
        %v2808 = vunpack.c.l.s8.bf16 %v1048
        %v2809 = vunpack.c.l.s8.bf16 %v1049
        %v2810 = vunpack.c.h.s8.bf16 %v1042
        %v2811 = vunpack.c.h.s8.bf16 %v1043
        %v2812 = vunpack.c.h.s8.bf16 %v1044
        %v2813 = vunpack.c.h.s8.bf16 %v1045
        %v2814 = vunpack.c.h.s8.bf16 %v1046
        %v2815 = vunpack.c.h.s8.bf16 %v1047
        %v2816 = vunpack.c.h.s8.bf16 %v1048
        %v2817 = vunpack.c.h.s8.bf16 %v1049
        %v2818 = vunpack.c.l.s8.bf16 %v1050
        %v2819 = vunpack.c.l.s8.bf16 %v1051
        %v2820 = vunpack.c.l.s8.bf16 %v1052
        %v2821 = vunpack.c.l.s8.bf16 %v1053
        %v2822 = vunpack.c.l.s8.bf16 %v1054
        %v2823 = vunpack.c.l.s8.bf16 %v1055
        %v2824 = vunpack.c.l.s8.bf16 %v1056
        %v2825 = vunpack.c.l.s8.bf16 %v1057
        %v2826 = vunpack.c.h.s8.bf16 %v1050
        %v2827 = vunpack.c.h.s8.bf16 %v1051
        %v2828 = vunpack.c.h.s8.bf16 %v1052
        %v2829 = vunpack.c.h.s8.bf16 %v1053
        %v2830 = vunpack.c.h.s8.bf16 %v1054
        %v2831 = vunpack.c.h.s8.bf16 %v1055
        %v2832 = vunpack.c.h.s8.bf16 %v1056
        %v2833 = vunpack.c.h.s8.bf16 %v1057
        %v2834 = vunpack.c.l.s8.bf16 %v1058
        %v2835 = vunpack.c.l.s8.bf16 %v1059
        %v2836 = vunpack.c.l.s8.bf16 %v1060
        %v2837 = vunpack.c.l.s8.bf16 %v1061
        %v2838 = vunpack.c.l.s8.bf16 %v1062
        %v2839 = vunpack.c.l.s8.bf16 %v1063
        %v2840 = vunpack.c.l.s8.bf16 %v1064
        %v2841 = vunpack.c.l.s8.bf16 %v1065
        %v2842 = vunpack.c.h.s8.bf16 %v1058
        %v2843 = vunpack.c.h.s8.bf16 %v1059
        %v2844 = vunpack.c.h.s8.bf16 %v1060
        %v2845 = vunpack.c.h.s8.bf16 %v1061
        %v2846 = vunpack.c.h.s8.bf16 %v1062
        %v2847 = vunpack.c.h.s8.bf16 %v1063
        %v2848 = vunpack.c.h.s8.bf16 %v1064
        %v2849 = vunpack.c.h.s8.bf16 %v1065
        %v2850 = vunpack.c.l.s8.bf16 %v1066
        %v2851 = vunpack.c.l.s8.bf16 %v1067
        %v2852 = vunpack.c.l.s8.bf16 %v1068
        %v2853 = vunpack.c.l.s8.bf16 %v1069
        %v2854 = vunpack.c.l.s8.bf16 %v1070
        %v2855 = vunpack.c.l.s8.bf16 %v1071
        %v2856 = vunpack.c.l.s8.bf16 %v1072
        %v2857 = vunpack.c.l.s8.bf16 %v1073
        %v2858 = vunpack.c.h.s8.bf16 %v1066
        %v2859 = vunpack.c.h.s8.bf16 %v1067
        %v2860 = vunpack.c.h.s8.bf16 %v1068
        %v2861 = vunpack.c.h.s8.bf16 %v1069
        %v2862 = vunpack.c.h.s8.bf16 %v1070
        %v2863 = vunpack.c.h.s8.bf16 %v1071
        %v2864 = vunpack.c.h.s8.bf16 %v1072
        %v2865 = vunpack.c.h.s8.bf16 %v1073
        %v2866 = vunpack.c.l.s8.bf16 %v1074
        %v2867 = vunpack.c.l.s8.bf16 %v1075
        %v2868 = vunpack.c.l.s8.bf16 %v1076
        %v2869 = vunpack.c.l.s8.bf16 %v1077
        %v2870 = vunpack.c.l.s8.bf16 %v1078
        %v2871 = vunpack.c.l.s8.bf16 %v1079
        %v2872 = vunpack.c.l.s8.bf16 %v1080
        %v2873 = vunpack.c.l.s8.bf16 %v1081
        %v2874 = vunpack.c.h.s8.bf16 %v1074
        %v2875 = vunpack.c.h.s8.bf16 %v1075
        %v2876 = vunpack.c.h.s8.bf16 %v1076
        %v2877 = vunpack.c.h.s8.bf16 %v1077
        %v2878 = vunpack.c.h.s8.bf16 %v1078
        %v2879 = vunpack.c.h.s8.bf16 %v1079
        %v2880 = vunpack.c.h.s8.bf16 %v1080
        %v2881 = vunpack.c.h.s8.bf16 %v1081
        %v2882 = vunpack.c.l.s8.bf16 %v1082
        %v2883 = vunpack.c.l.s8.bf16 %v1083
        %v2884 = vunpack.c.l.s8.bf16 %v1084
        %v2885 = vunpack.c.l.s8.bf16 %v1085
        %v2886 = vunpack.c.l.s8.bf16 %v1086
        %v2887 = vunpack.c.l.s8.bf16 %v1087
        %v2888 = vunpack.c.l.s8.bf16 %v1088
        %v2889 = vunpack.c.l.s8.bf16 %v1089
        %v2890 = vunpack.c.h.s8.bf16 %v1082
        %v2891 = vunpack.c.h.s8.bf16 %v1083
        %v2892 = vunpack.c.h.s8.bf16 %v1084
        %v2893 = vunpack.c.h.s8.bf16 %v1085
        %v2894 = vunpack.c.h.s8.bf16 %v1086
        %v2895 = vunpack.c.h.s8.bf16 %v1087
        %v2896 = vunpack.c.h.s8.bf16 %v1088
        %v2897 = vunpack.c.h.s8.bf16 %v1089
        %v2898 = vunpack.c.l.s8.bf16 %v1090
        %v2899 = vunpack.c.l.s8.bf16 %v1091
        %v2900 = vunpack.c.l.s8.bf16 %v1092
        %v2901 = vunpack.c.l.s8.bf16 %v1093
        %v2902 = vunpack.c.l.s8.bf16 %v1094
        %v2903 = vunpack.c.l.s8.bf16 %v1095
        %v2904 = vunpack.c.l.s8.bf16 %v1096
        %v2905 = vunpack.c.l.s8.bf16 %v1097
        %v2906 = vunpack.c.h.s8.bf16 %v1090
        %v2907 = vunpack.c.h.s8.bf16 %v1091
        %v2908 = vunpack.c.h.s8.bf16 %v1092
        %v2909 = vunpack.c.h.s8.bf16 %v1093
        %v2910 = vunpack.c.h.s8.bf16 %v1094
        %v2911 = vunpack.c.h.s8.bf16 %v1095
        %v2912 = vunpack.c.h.s8.bf16 %v1096
        %v2913 = vunpack.c.h.s8.bf16 %v1097
        %v2914 = vunpack.c.l.s8.bf16 %v1098
        %v2915 = vunpack.c.l.s8.bf16 %v1099
        %v2916 = vunpack.c.l.s8.bf16 %v1100
        %v2917 = vunpack.c.l.s8.bf16 %v1101
        %v2918 = vunpack.c.l.s8.bf16 %v1102
        %v2919 = vunpack.c.l.s8.bf16 %v1103
        %v2920 = vunpack.c.l.s8.bf16 %v1104
        %v2921 = vunpack.c.l.s8.bf16 %v1105
        %v2922 = vunpack.c.h.s8.bf16 %v1098
        %v2923 = vunpack.c.h.s8.bf16 %v1099
        %v2924 = vunpack.c.h.s8.bf16 %v1100
        %v2925 = vunpack.c.h.s8.bf16 %v1101
        %v2926 = vunpack.c.h.s8.bf16 %v1102
        %v2927 = vunpack.c.h.s8.bf16 %v1103
        %v2928 = vunpack.c.h.s8.bf16 %v1104
        %v2929 = vunpack.c.h.s8.bf16 %v1105
        %v2930 = vunpack.c.l.s8.bf16 %v1106
        %v2931 = vunpack.c.l.s8.bf16 %v1107
        %v2932 = vunpack.c.l.s8.bf16 %v1108
        %v2933 = vunpack.c.l.s8.bf16 %v1109
        %v2934 = vunpack.c.l.s8.bf16 %v1110
        %v2935 = vunpack.c.l.s8.bf16 %v1111
        %v2936 = vunpack.c.l.s8.bf16 %v1112
        %v2937 = vunpack.c.l.s8.bf16 %v1113
        %v2938 = vunpack.c.h.s8.bf16 %v1106
        %v2939 = vunpack.c.h.s8.bf16 %v1107
        %v2940 = vunpack.c.h.s8.bf16 %v1108
        %v2941 = vunpack.c.h.s8.bf16 %v1109
        %v2942 = vunpack.c.h.s8.bf16 %v1110
        %v2943 = vunpack.c.h.s8.bf16 %v1111
        %v2944 = vunpack.c.h.s8.bf16 %v1112
        %v2945 = vunpack.c.h.s8.bf16 %v1113
        %v2946 = vunpack.c.l.s8.bf16 %v1114
        %v2947 = vunpack.c.l.s8.bf16 %v1115
        %v2948 = vunpack.c.l.s8.bf16 %v1116
        %v2949 = vunpack.c.l.s8.bf16 %v1117
        %v2950 = vunpack.c.l.s8.bf16 %v1118
        %v2951 = vunpack.c.l.s8.bf16 %v1119
        %v2952 = vunpack.c.l.s8.bf16 %v1120
        %v2953 = vunpack.c.l.s8.bf16 %v1121
        %v2954 = vunpack.c.h.s8.bf16 %v1114
        %v2955 = vunpack.c.h.s8.bf16 %v1115
        %v2956 = vunpack.c.h.s8.bf16 %v1116
        %v2957 = vunpack.c.h.s8.bf16 %v1117
        %v2958 = vunpack.c.h.s8.bf16 %v1118
        %v2959 = vunpack.c.h.s8.bf16 %v1119
        %v2960 = vunpack.c.h.s8.bf16 %v1120
        %v2961 = vunpack.c.h.s8.bf16 %v1121
        %v2962 = vunpack.c.l.s8.bf16 %v1122
        %v2963 = vunpack.c.l.s8.bf16 %v1123
        %v2964 = vunpack.c.l.s8.bf16 %v1124
        %v2965 = vunpack.c.l.s8.bf16 %v1125
        %v2966 = vunpack.c.l.s8.bf16 %v1126
        %v2967 = vunpack.c.l.s8.bf16 %v1127
        %v2968 = vunpack.c.l.s8.bf16 %v1128
        %v2969 = vunpack.c.l.s8.bf16 %v1129
        %v2970 = vunpack.c.h.s8.bf16 %v1122
        %v2971 = vunpack.c.h.s8.bf16 %v1123
        %v2972 = vunpack.c.h.s8.bf16 %v1124
        %v2973 = vunpack.c.h.s8.bf16 %v1125
        %v2974 = vunpack.c.h.s8.bf16 %v1126
        %v2975 = vunpack.c.h.s8.bf16 %v1127
        %v2976 = vunpack.c.h.s8.bf16 %v1128
        %v2977 = vunpack.c.h.s8.bf16 %v1129
        %v2978 = vunpack.c.l.s8.bf16 %v1130
        %v2979 = vunpack.c.l.s8.bf16 %v1131
        %v2980 = vunpack.c.l.s8.bf16 %v1132
        %v2981 = vunpack.c.l.s8.bf16 %v1133
        %v2982 = vunpack.c.l.s8.bf16 %v1134
        %v2983 = vunpack.c.l.s8.bf16 %v1135
        %v2984 = vunpack.c.l.s8.bf16 %v1136
        %v2985 = vunpack.c.l.s8.bf16 %v1137
        %v2986 = vunpack.c.h.s8.bf16 %v1130
        %v2987 = vunpack.c.h.s8.bf16 %v1131
        %v2988 = vunpack.c.h.s8.bf16 %v1132
        %v2989 = vunpack.c.h.s8.bf16 %v1133
        %v2990 = vunpack.c.h.s8.bf16 %v1134
        %v2991 = vunpack.c.h.s8.bf16 %v1135
        %v2992 = vunpack.c.h.s8.bf16 %v1136
        %v2993 = vunpack.c.h.s8.bf16 %v1137
        %v2994 = vunpack.c.l.s8.bf16 %v1138
        %v2995 = vunpack.c.l.s8.bf16 %v1139
        %v2996 = vunpack.c.l.s8.bf16 %v1140
        %v2997 = vunpack.c.l.s8.bf16 %v1141
        %v2998 = vunpack.c.l.s8.bf16 %v1142
        %v2999 = vunpack.c.l.s8.bf16 %v1143
        %v3000 = vunpack.c.l.s8.bf16 %v1144
        %v3001 = vunpack.c.l.s8.bf16 %v1145
        %v3002 = vunpack.c.h.s8.bf16 %v1138
        %v3003 = vunpack.c.h.s8.bf16 %v1139
        %v3004 = vunpack.c.h.s8.bf16 %v1140
        %v3005 = vunpack.c.h.s8.bf16 %v1141
        %v3006 = vunpack.c.h.s8.bf16 %v1142
        %v3007 = vunpack.c.h.s8.bf16 %v1143
        %v3008 = vunpack.c.h.s8.bf16 %v1144
        %v3009 = vunpack.c.h.s8.bf16 %v1145
        %v3010 = vunpack.c.l.s8.bf16 %v1146
        %v3011 = vunpack.c.l.s8.bf16 %v1147
        %v3012 = vunpack.c.l.s8.bf16 %v1148
        %v3013 = vunpack.c.l.s8.bf16 %v1149
        %v3014 = vunpack.c.l.s8.bf16 %v1150
        %v3015 = vunpack.c.l.s8.bf16 %v1151
        %v3016 = vunpack.c.l.s8.bf16 %v1152
        %v3017 = vunpack.c.l.s8.bf16 %v1153
        %v3018 = vunpack.c.h.s8.bf16 %v1146
        %v3019 = vunpack.c.h.s8.bf16 %v1147
        %v3020 = vunpack.c.h.s8.bf16 %v1148
        %v3021 = vunpack.c.h.s8.bf16 %v1149
        %v3022 = vunpack.c.h.s8.bf16 %v1150
        %v3023 = vunpack.c.h.s8.bf16 %v1151
        %v3024 = vunpack.c.h.s8.bf16 %v1152
        %v3025 = vunpack.c.h.s8.bf16 %v1153
        %v3026 = vunpack.c.l.s8.bf16 %v1154
        %v3027 = vunpack.c.l.s8.bf16 %v1155
        %v3028 = vunpack.c.l.s8.bf16 %v1156
        %v3029 = vunpack.c.l.s8.bf16 %v1157
        %v3030 = vunpack.c.l.s8.bf16 %v1158
        %v3031 = vunpack.c.l.s8.bf16 %v1159
        %v3032 = vunpack.c.l.s8.bf16 %v1160
        %v3033 = vunpack.c.l.s8.bf16 %v1161
        %v3034 = vunpack.c.h.s8.bf16 %v1154
        %v3035 = vunpack.c.h.s8.bf16 %v1155
        %v3036 = vunpack.c.h.s8.bf16 %v1156
        %v3037 = vunpack.c.h.s8.bf16 %v1157
        %v3038 = vunpack.c.h.s8.bf16 %v1158
        %v3039 = vunpack.c.h.s8.bf16 %v1159
        %v3040 = vunpack.c.h.s8.bf16 %v1160
        %v3041 = vunpack.c.h.s8.bf16 %v1161
        %v3042 = vunpack.c.l.s8.bf16 %v1162
        %v3043 = vunpack.c.l.s8.bf16 %v1163
        %v3044 = vunpack.c.l.s8.bf16 %v1164
        %v3045 = vunpack.c.l.s8.bf16 %v1165
        %v3046 = vunpack.c.l.s8.bf16 %v1166
        %v3047 = vunpack.c.l.s8.bf16 %v1167
        %v3048 = vunpack.c.l.s8.bf16 %v1168
        %v3049 = vunpack.c.l.s8.bf16 %v1169
        %v3050 = vunpack.c.h.s8.bf16 %v1162
        %v3051 = vunpack.c.h.s8.bf16 %v1163
        %v3052 = vunpack.c.h.s8.bf16 %v1164
        %v3053 = vunpack.c.h.s8.bf16 %v1165
        %v3054 = vunpack.c.h.s8.bf16 %v1166
        %v3055 = vunpack.c.h.s8.bf16 %v1167
        %v3056 = vunpack.c.h.s8.bf16 %v1168
        %v3057 = vunpack.c.h.s8.bf16 %v1169
        %v3058 = vunpack.c.l.s8.bf16 %v1170
        %v3059 = vunpack.c.l.s8.bf16 %v1171
        %v3060 = vunpack.c.l.s8.bf16 %v1172
        %v3061 = vunpack.c.l.s8.bf16 %v1173
        %v3062 = vunpack.c.l.s8.bf16 %v1174
        %v3063 = vunpack.c.l.s8.bf16 %v1175
        %v3064 = vunpack.c.l.s8.bf16 %v1176
        %v3065 = vunpack.c.l.s8.bf16 %v1177
        %v3066 = vunpack.c.h.s8.bf16 %v1170
        %v3067 = vunpack.c.h.s8.bf16 %v1171
        %v3068 = vunpack.c.h.s8.bf16 %v1172
        %v3069 = vunpack.c.h.s8.bf16 %v1173
        %v3070 = vunpack.c.h.s8.bf16 %v1174
        %v3071 = vunpack.c.h.s8.bf16 %v1175
        %v3072 = vunpack.c.h.s8.bf16 %v1176
        %v3073 = vunpack.c.h.s8.bf16 %v1177
        %v3074 = vunpack.c.l.s8.bf16 %v1178
        %v3075 = vunpack.c.l.s8.bf16 %v1179
        %v3076 = vunpack.c.l.s8.bf16 %v1180
        %v3077 = vunpack.c.l.s8.bf16 %v1181
        %v3078 = vunpack.c.l.s8.bf16 %v1182
        %v3079 = vunpack.c.l.s8.bf16 %v1183
        %v3080 = vunpack.c.l.s8.bf16 %v1184
        %v3081 = vunpack.c.l.s8.bf16 %v1185
        %v3082 = vunpack.c.h.s8.bf16 %v1178
        %v3083 = vunpack.c.h.s8.bf16 %v1179
        %v3084 = vunpack.c.h.s8.bf16 %v1180
        %v3085 = vunpack.c.h.s8.bf16 %v1181
        %v3086 = vunpack.c.h.s8.bf16 %v1182
        %v3087 = vunpack.c.h.s8.bf16 %v1183
        %v3088 = vunpack.c.h.s8.bf16 %v1184
        %v3089 = vunpack.c.h.s8.bf16 %v1185
        %v3090 = vunpack.c.l.s8.bf16 %v1186
        %v3091 = vunpack.c.l.s8.bf16 %v1187
        %v3092 = vunpack.c.l.s8.bf16 %v1188
        %v3093 = vunpack.c.l.s8.bf16 %v1189
        %v3094 = vunpack.c.l.s8.bf16 %v1190
        %v3095 = vunpack.c.l.s8.bf16 %v1191
        %v3096 = vunpack.c.l.s8.bf16 %v1192
        %v3097 = vunpack.c.l.s8.bf16 %v1193
        %v3098 = vunpack.c.h.s8.bf16 %v1186
        %v3099 = vunpack.c.h.s8.bf16 %v1187
        %v3100 = vunpack.c.h.s8.bf16 %v1188
        %v3101 = vunpack.c.h.s8.bf16 %v1189
        %v3102 = vunpack.c.h.s8.bf16 %v1190
        %v3103 = vunpack.c.h.s8.bf16 %v1191
        %v3104 = vunpack.c.h.s8.bf16 %v1192
        %v3105 = vunpack.c.h.s8.bf16 %v1193
        %v3106 = vunpack.c.l.s8.bf16 %v1194
        %v3107 = vunpack.c.l.s8.bf16 %v1195
        %v3108 = vunpack.c.l.s8.bf16 %v1196
        %v3109 = vunpack.c.l.s8.bf16 %v1197
        %v3110 = vunpack.c.l.s8.bf16 %v1198
        %v3111 = vunpack.c.l.s8.bf16 %v1199
        %v3112 = vunpack.c.l.s8.bf16 %v1200
        %v3113 = vunpack.c.l.s8.bf16 %v1201
        %v3114 = vunpack.c.h.s8.bf16 %v1194
        %v3115 = vunpack.c.h.s8.bf16 %v1195
        %v3116 = vunpack.c.h.s8.bf16 %v1196
        %v3117 = vunpack.c.h.s8.bf16 %v1197
        %v3118 = vunpack.c.h.s8.bf16 %v1198
        %v3119 = vunpack.c.h.s8.bf16 %v1199
        %v3120 = vunpack.c.h.s8.bf16 %v1200
        %v3121 = vunpack.c.h.s8.bf16 %v1201
        %v3122 = vunpack.c.l.s8.bf16 %v1202
        %v3123 = vunpack.c.l.s8.bf16 %v1203
        %v3124 = vunpack.c.l.s8.bf16 %v1204
        %v3125 = vunpack.c.l.s8.bf16 %v1205
        %v3126 = vunpack.c.l.s8.bf16 %v1206
        %v3127 = vunpack.c.l.s8.bf16 %v1207
        %v3128 = vunpack.c.l.s8.bf16 %v1208
        %v3129 = vunpack.c.l.s8.bf16 %v1209
        %v3130 = vunpack.c.h.s8.bf16 %v1202
        %v3131 = vunpack.c.h.s8.bf16 %v1203
        %v3132 = vunpack.c.h.s8.bf16 %v1204
        %v3133 = vunpack.c.h.s8.bf16 %v1205
        %v3134 = vunpack.c.h.s8.bf16 %v1206
        %v3135 = vunpack.c.h.s8.bf16 %v1207
        %v3136 = vunpack.c.h.s8.bf16 %v1208
        %v3137 = vunpack.c.h.s8.bf16 %v1209
        %v3138 = vunpack.c.l.s8.bf16 %v1210
        %v3139 = vunpack.c.l.s8.bf16 %v1211
        %v3140 = vunpack.c.l.s8.bf16 %v1212
        %v3141 = vunpack.c.l.s8.bf16 %v1213
        %v3142 = vunpack.c.l.s8.bf16 %v1214
        %v3143 = vunpack.c.l.s8.bf16 %v1215
        %v3144 = vunpack.c.l.s8.bf16 %v1216
        %v3145 = vunpack.c.l.s8.bf16 %v1217
        %v3146 = vunpack.c.h.s8.bf16 %v1210
        %v3147 = vunpack.c.h.s8.bf16 %v1211
        %v3148 = vunpack.c.h.s8.bf16 %v1212
        %v3149 = vunpack.c.h.s8.bf16 %v1213
        %v3150 = vunpack.c.h.s8.bf16 %v1214
        %v3151 = vunpack.c.h.s8.bf16 %v1215
        %v3152 = vunpack.c.h.s8.bf16 %v1216
        %v3153 = vunpack.c.h.s8.bf16 %v1217
        %v3154 = vunpack.c.l.s8.bf16 %v1218
        %v3155 = vunpack.c.l.s8.bf16 %v1219
        %v3156 = vunpack.c.l.s8.bf16 %v1220
        %v3157 = vunpack.c.l.s8.bf16 %v1221
        %v3158 = vunpack.c.l.s8.bf16 %v1222
        %v3159 = vunpack.c.l.s8.bf16 %v1223
        %v3160 = vunpack.c.l.s8.bf16 %v1224
        %v3161 = vunpack.c.l.s8.bf16 %v1225
        %v3162 = vunpack.c.h.s8.bf16 %v1218
        %v3163 = vunpack.c.h.s8.bf16 %v1219
        %v3164 = vunpack.c.h.s8.bf16 %v1220
        %v3165 = vunpack.c.h.s8.bf16 %v1221
        %v3166 = vunpack.c.h.s8.bf16 %v1222
        %v3167 = vunpack.c.h.s8.bf16 %v1223
        %v3168 = vunpack.c.h.s8.bf16 %v1224
        %v3169 = vunpack.c.h.s8.bf16 %v1225
        %v3170 = vunpack.c.l.s8.bf16 %v1226
        %v3171 = vunpack.c.l.s8.bf16 %v1227
        %v3172 = vunpack.c.l.s8.bf16 %v1228
        %v3173 = vunpack.c.l.s8.bf16 %v1229
        %v3174 = vunpack.c.l.s8.bf16 %v1230
        %v3175 = vunpack.c.l.s8.bf16 %v1231
        %v3176 = vunpack.c.l.s8.bf16 %v1232
        %v3177 = vunpack.c.l.s8.bf16 %v1233
        %v3178 = vunpack.c.h.s8.bf16 %v1226
        %v3179 = vunpack.c.h.s8.bf16 %v1227
        %v3180 = vunpack.c.h.s8.bf16 %v1228
        %v3181 = vunpack.c.h.s8.bf16 %v1229
        %v3182 = vunpack.c.h.s8.bf16 %v1230
        %v3183 = vunpack.c.h.s8.bf16 %v1231
        %v3184 = vunpack.c.h.s8.bf16 %v1232
        %v3185 = vunpack.c.h.s8.bf16 %v1233
        %v3186 = vunpack.c.l.s8.bf16 %v1234
        %v3187 = vunpack.c.l.s8.bf16 %v1235
        %v3188 = vunpack.c.l.s8.bf16 %v1236
        %v3189 = vunpack.c.l.s8.bf16 %v1237
        %v3190 = vunpack.c.l.s8.bf16 %v1238
        %v3191 = vunpack.c.l.s8.bf16 %v1239
        %v3192 = vunpack.c.l.s8.bf16 %v1240
        %v3193 = vunpack.c.l.s8.bf16 %v1241
        %v3194 = vunpack.c.h.s8.bf16 %v1234
        %v3195 = vunpack.c.h.s8.bf16 %v1235
        %v3196 = vunpack.c.h.s8.bf16 %v1236
        %v3197 = vunpack.c.h.s8.bf16 %v1237
        %v3198 = vunpack.c.h.s8.bf16 %v1238
        %v3199 = vunpack.c.h.s8.bf16 %v1239
        %v3200 = vunpack.c.h.s8.bf16 %v1240
        %v3201 = vunpack.c.h.s8.bf16 %v1241
        %v3202 = vunpack.c.l.s8.bf16 %v1242
        %v3203 = vunpack.c.l.s8.bf16 %v1243
        %v3204 = vunpack.c.l.s8.bf16 %v1244
        %v3205 = vunpack.c.l.s8.bf16 %v1245
        %v3206 = vunpack.c.l.s8.bf16 %v1246
        %v3207 = vunpack.c.l.s8.bf16 %v1247
        %v3208 = vunpack.c.l.s8.bf16 %v1248
        %v3209 = vunpack.c.l.s8.bf16 %v1249
        %v3210 = vunpack.c.h.s8.bf16 %v1242
        %v3211 = vunpack.c.h.s8.bf16 %v1243
        %v3212 = vunpack.c.h.s8.bf16 %v1244
        %v3213 = vunpack.c.h.s8.bf16 %v1245
        %v3214 = vunpack.c.h.s8.bf16 %v1246
        %v3215 = vunpack.c.h.s8.bf16 %v1247
        %v3216 = vunpack.c.h.s8.bf16 %v1248
        %v3217 = vunpack.c.h.s8.bf16 %v1249
        %v3218 = vunpack.c.l.s8.bf16 %v1250
        %v3219 = vunpack.c.l.s8.bf16 %v1251
        %v3220 = vunpack.c.l.s8.bf16 %v1252
        %v3221 = vunpack.c.l.s8.bf16 %v1253
        %v3222 = vunpack.c.l.s8.bf16 %v1254
        %v3223 = vunpack.c.l.s8.bf16 %v1255
        %v3224 = vunpack.c.l.s8.bf16 %v1256
        %v3225 = vunpack.c.l.s8.bf16 %v1257
        %v3226 = vunpack.c.h.s8.bf16 %v1250
        %v3227 = vunpack.c.h.s8.bf16 %v1251
        %v3228 = vunpack.c.h.s8.bf16 %v1252
        %v3229 = vunpack.c.h.s8.bf16 %v1253
        %v3230 = vunpack.c.h.s8.bf16 %v1254
        %v3231 = vunpack.c.h.s8.bf16 %v1255
        %v3232 = vunpack.c.h.s8.bf16 %v1256
        %v3233 = vunpack.c.h.s8.bf16 %v1257
        %v3234 = vunpack.c.l.s8.bf16 %v1258
        %v3235 = vunpack.c.l.s8.bf16 %v1259
        %v3236 = vunpack.c.l.s8.bf16 %v1260
        %v3237 = vunpack.c.l.s8.bf16 %v1261
        %v3238 = vunpack.c.l.s8.bf16 %v1262
        %v3239 = vunpack.c.l.s8.bf16 %v1263
        %v3240 = vunpack.c.l.s8.bf16 %v1264
        %v3241 = vunpack.c.l.s8.bf16 %v1265
        %v3242 = vunpack.c.h.s8.bf16 %v1258
        %v3243 = vunpack.c.h.s8.bf16 %v1259
        %v3244 = vunpack.c.h.s8.bf16 %v1260
        %v3245 = vunpack.c.h.s8.bf16 %v1261
        %v3246 = vunpack.c.h.s8.bf16 %v1262
        %v3247 = vunpack.c.h.s8.bf16 %v1263
        %v3248 = vunpack.c.h.s8.bf16 %v1264
        %v3249 = vunpack.c.h.s8.bf16 %v1265
        %v3250 = vunpack.c.l.s8.bf16 %v1266
        %v3251 = vunpack.c.l.s8.bf16 %v1267
        %v3252 = vunpack.c.l.s8.bf16 %v1268
        %v3253 = vunpack.c.l.s8.bf16 %v1269
        %v3254 = vunpack.c.l.s8.bf16 %v1270
        %v3255 = vunpack.c.l.s8.bf16 %v1271
        %v3256 = vunpack.c.l.s8.bf16 %v1272
        %v3257 = vunpack.c.l.s8.bf16 %v1273
        %v3258 = vunpack.c.h.s8.bf16 %v1266
        %v3259 = vunpack.c.h.s8.bf16 %v1267
        %v3260 = vunpack.c.h.s8.bf16 %v1268
        %v3261 = vunpack.c.h.s8.bf16 %v1269
        %v3262 = vunpack.c.h.s8.bf16 %v1270
        %v3263 = vunpack.c.h.s8.bf16 %v1271
        %v3264 = vunpack.c.h.s8.bf16 %v1272
        %v3265 = vunpack.c.h.s8.bf16 %v1273
        %v3266 = vunpack.c.l.s8.bf16 %v1274
        %v3267 = vunpack.c.l.s8.bf16 %v1275
        %v3268 = vunpack.c.l.s8.bf16 %v1276
        %v3269 = vunpack.c.l.s8.bf16 %v1277
        %v3270 = vunpack.c.l.s8.bf16 %v1278
        %v3271 = vunpack.c.l.s8.bf16 %v1279
        %v3272 = vunpack.c.l.s8.bf16 %v1280
        %v3273 = vunpack.c.l.s8.bf16 %v1281
        %v3274 = vunpack.c.h.s8.bf16 %v1274
        %v3275 = vunpack.c.h.s8.bf16 %v1275
        %v3276 = vunpack.c.h.s8.bf16 %v1276
        %v3277 = vunpack.c.h.s8.bf16 %v1277
        %v3278 = vunpack.c.h.s8.bf16 %v1278
        %v3279 = vunpack.c.h.s8.bf16 %v1279
        %v3280 = vunpack.c.h.s8.bf16 %v1280
        %v3281 = vunpack.c.h.s8.bf16 %v1281
        %v3282 = vunpack.c.l.s8.bf16 %v1282
        %v3283 = vunpack.c.l.s8.bf16 %v1283
        %v3284 = vunpack.c.l.s8.bf16 %v1284
        %v3285 = vunpack.c.l.s8.bf16 %v1285
        %v3286 = vunpack.c.l.s8.bf16 %v1286
        %v3287 = vunpack.c.l.s8.bf16 %v1287
        %v3288 = vunpack.c.l.s8.bf16 %v1288
        %v3289 = vunpack.c.l.s8.bf16 %v1289
        %v3290 = vunpack.c.h.s8.bf16 %v1282
        %v3291 = vunpack.c.h.s8.bf16 %v1283
        %v3292 = vunpack.c.h.s8.bf16 %v1284
        %v3293 = vunpack.c.h.s8.bf16 %v1285
        %v3294 = vunpack.c.h.s8.bf16 %v1286
        %v3295 = vunpack.c.h.s8.bf16 %v1287
        %v3296 = vunpack.c.h.s8.bf16 %v1288
        %v3297 = vunpack.c.h.s8.bf16 %v1289
        %v3298 = vunpack.c.l.s8.bf16 %v1290
        %v3299 = vunpack.c.l.s8.bf16 %v1291
        %v3300 = vunpack.c.l.s8.bf16 %v1292
        %v3301 = vunpack.c.l.s8.bf16 %v1293
        %v3302 = vunpack.c.l.s8.bf16 %v1294
        %v3303 = vunpack.c.l.s8.bf16 %v1295
        %v3304 = vunpack.c.l.s8.bf16 %v1296
        %v3305 = vunpack.c.l.s8.bf16 %v1297
        %v3306 = vunpack.c.h.s8.bf16 %v1290
        %v3307 = vunpack.c.h.s8.bf16 %v1291
        %v3308 = vunpack.c.h.s8.bf16 %v1292
        %v3309 = vunpack.c.h.s8.bf16 %v1293
        %v3310 = vunpack.c.h.s8.bf16 %v1294
        %v3311 = vunpack.c.h.s8.bf16 %v1295
        %v3312 = vunpack.c.h.s8.bf16 %v1296
        %v3313 = vunpack.c.h.s8.bf16 %v1297
        %v3314 = vunpack.c.l.s8.bf16 %v1298
        %v3315 = vunpack.c.l.s8.bf16 %v1299
        %v3316 = vunpack.c.l.s8.bf16 %v1300
        %v3317 = vunpack.c.l.s8.bf16 %v1301
        %v3318 = vunpack.c.l.s8.bf16 %v1302
        %v3319 = vunpack.c.l.s8.bf16 %v1303
        %v3320 = vunpack.c.l.s8.bf16 %v1304
        %v3321 = vunpack.c.l.s8.bf16 %v1305
        %v3322 = vunpack.c.h.s8.bf16 %v1298
        %v3323 = vunpack.c.h.s8.bf16 %v1299
        %v3324 = vunpack.c.h.s8.bf16 %v1300
        %v3325 = vunpack.c.h.s8.bf16 %v1301
        %v3326 = vunpack.c.h.s8.bf16 %v1302
        %v3327 = vunpack.c.h.s8.bf16 %v1303
        %v3328 = vunpack.c.h.s8.bf16 %v1304
        %v3329 = vunpack.c.h.s8.bf16 %v1305
        %v3330 = vunpack.c.l.s8.bf16 %v1306
        %v3331 = vunpack.c.l.s8.bf16 %v1307
        %v3332 = vunpack.c.l.s8.bf16 %v1308
        %v3333 = vunpack.c.l.s8.bf16 %v1309
        %v3334 = vunpack.c.l.s8.bf16 %v1310
        %v3335 = vunpack.c.l.s8.bf16 %v1311
        %v3336 = vunpack.c.l.s8.bf16 %v1312
        %v3337 = vunpack.c.l.s8.bf16 %v1313
        %v3338 = vunpack.c.h.s8.bf16 %v1306
        %v3339 = vunpack.c.h.s8.bf16 %v1307
        %v3340 = vunpack.c.h.s8.bf16 %v1308
        %v3341 = vunpack.c.h.s8.bf16 %v1309
        %v3342 = vunpack.c.h.s8.bf16 %v1310
        %v3343 = vunpack.c.h.s8.bf16 %v1311
        %v3344 = vunpack.c.h.s8.bf16 %v1312
        %v3345 = vunpack.c.h.s8.bf16 %v1313
        %v3346 = vunpack.c.l.s8.bf16 %v1314
        %v3347 = vunpack.c.l.s8.bf16 %v1315
        %v3348 = vunpack.c.l.s8.bf16 %v1316
        %v3349 = vunpack.c.l.s8.bf16 %v1317
        %v3350 = vunpack.c.l.s8.bf16 %v1318
        %v3351 = vunpack.c.l.s8.bf16 %v1319
        %v3352 = vunpack.c.l.s8.bf16 %v1320
        %v3353 = vunpack.c.l.s8.bf16 %v1321
        %v3354 = vunpack.c.h.s8.bf16 %v1314
        %v3355 = vunpack.c.h.s8.bf16 %v1315
        %v3356 = vunpack.c.h.s8.bf16 %v1316
        %v3357 = vunpack.c.h.s8.bf16 %v1317
        %v3358 = vunpack.c.h.s8.bf16 %v1318
        %v3359 = vunpack.c.h.s8.bf16 %v1319
        %v3360 = vunpack.c.h.s8.bf16 %v1320
        %v3361 = vunpack.c.h.s8.bf16 %v1321
        %v3362 = vunpack.c.l.s8.bf16 %v1322
        %v3363 = vunpack.c.l.s8.bf16 %v1323
        %v3364 = vunpack.c.l.s8.bf16 %v1324
        %v3365 = vunpack.c.l.s8.bf16 %v1325
        %v3366 = vunpack.c.l.s8.bf16 %v1326
        %v3367 = vunpack.c.l.s8.bf16 %v1327
        %v3368 = vunpack.c.l.s8.bf16 %v1328
        %v3369 = vunpack.c.l.s8.bf16 %v1329
        %v3370 = vunpack.c.h.s8.bf16 %v1322
        %v3371 = vunpack.c.h.s8.bf16 %v1323
        %v3372 = vunpack.c.h.s8.bf16 %v1324
        %v3373 = vunpack.c.h.s8.bf16 %v1325
        %v3374 = vunpack.c.h.s8.bf16 %v1326
        %v3375 = vunpack.c.h.s8.bf16 %v1327
        %v3376 = vunpack.c.h.s8.bf16 %v1328
        %v3377 = vunpack.c.h.s8.bf16 %v1329
        %v3378 = vld [vmem:[#allocation2] sm:$0xff]
        %v3379 = vld [vmem:[#allocation2 + $0x8] sm:$0xff]
        %v3380 = vld [vmem:[#allocation2 + $0x10] sm:$0xff]
        %v3381 = vld [vmem:[#allocation2 + $0x18] sm:$0xff]
        %v3382 = vld [vmem:[#allocation2 + $0x20] sm:$0xff]
        %v3383 = vld [vmem:[#allocation2 + $0x28] sm:$0xff]
        %v3384 = vld [vmem:[#allocation2 + $0x30] sm:$0xff]
        %v3385 = vld [vmem:[#allocation2 + $0x38] sm:$0xff]
        %v3386 = vld [vmem:[#allocation2 + $0x40] sm:$0xff]
        %v3387 = vld [vmem:[#allocation2 + $0x48] sm:$0xff]
        %v3388 = vld [vmem:[#allocation2 + $0x50] sm:$0xff]
        %v3389 = vld [vmem:[#allocation2 + $0x58] sm:$0xff]
        %v3390 = vld [vmem:[#allocation2 + $0x60] sm:$0xff]
        %v3391 = vld [vmem:[#allocation2 + $0x68] sm:$0xff]
        %v3392 = vld [vmem:[#allocation2 + $0x70] sm:$0xff]
        %v3393 = vld [vmem:[#allocation2 + $0x78] sm:$0xff]
        %v3410 = vunpack.c.l.b16 %v3378
        %v3411 = vunpack.c.h.b16 %v3378
        %v3412 = vunpack.c.l.b16 %v3379
        %v3413 = vunpack.c.h.b16 %v3379
        %v3414 = vunpack.c.l.b16 %v3380
        %v3415 = vunpack.c.h.b16 %v3380
        %v3416 = vunpack.c.l.b16 %v3381
        %v3417 = vunpack.c.h.b16 %v3381
        %v3418 = vunpack.c.l.b16 %v3382
        %v3419 = vunpack.c.h.b16 %v3382
        %v3420 = vunpack.c.l.b16 %v3383
        %v3421 = vunpack.c.h.b16 %v3383
        %v3422 = vunpack.c.l.b16 %v3384
        %v3423 = vunpack.c.h.b16 %v3384
        %v3424 = vunpack.c.l.b16 %v3385
        %v3425 = vunpack.c.h.b16 %v3385
        %v3426 = vunpack.c.l.b16 %v3386
        %v3427 = vunpack.c.h.b16 %v3386
        %v3428 = vunpack.c.l.b16 %v3387
        %v3429 = vunpack.c.h.b16 %v3387
        %v3430 = vunpack.c.l.b16 %v3388
        %v3431 = vunpack.c.h.b16 %v3388
        %v3432 = vunpack.c.l.b16 %v3389
        %v3433 = vunpack.c.h.b16 %v3389
        %v3434 = vunpack.c.l.b16 %v3390
        %v3435 = vunpack.c.h.b16 %v3390
        %v3436 = vunpack.c.l.b16 %v3391
        %v3437 = vunpack.c.h.b16 %v3391
        %v3438 = vunpack.c.l.b16 %v3392
        %v3439 = vunpack.c.h.b16 %v3392
        %v3440 = vunpack.c.l.b16 %v3393
        %v3441 = vunpack.c.h.b16 %v3393
        %v3442 = vpack.c.b16 %v3410, %v3410
        %v3443 = vpack.c.b16 %v3411, %v3411
        %v3444 = vpack.c.b16 %v3412, %v3412
        %v3445 = vpack.c.b16 %v3413, %v3413
        %v3446 = vpack.c.b16 %v3414, %v3414
        %v3447 = vpack.c.b16 %v3415, %v3415
        %v3448 = vpack.c.b16 %v3416, %v3416
        %v3449 = vpack.c.b16 %v3417, %v3417
        %v3450 = vpack.c.b16 %v3418, %v3418
        %v3451 = vpack.c.b16 %v3419, %v3419
        %v3452 = vpack.c.b16 %v3420, %v3420
        %v3453 = vpack.c.b16 %v3421, %v3421
        %v3454 = vpack.c.b16 %v3422, %v3422
        %v3455 = vpack.c.b16 %v3423, %v3423
        %v3456 = vpack.c.b16 %v3424, %v3424
        %v3457 = vpack.c.b16 %v3425, %v3425
        %v3458 = vpack.c.b16 %v3426, %v3426
        %v3459 = vpack.c.b16 %v3427, %v3427
        %v3460 = vpack.c.b16 %v3428, %v3428
        %v3461 = vpack.c.b16 %v3429, %v3429
        %v3462 = vpack.c.b16 %v3430, %v3430
        %v3463 = vpack.c.b16 %v3431, %v3431
        %v3464 = vpack.c.b16 %v3432, %v3432
        %v3465 = vpack.c.b16 %v3433, %v3433
        %v3466 = vpack.c.b16 %v3434, %v3434
        %v3467 = vpack.c.b16 %v3435, %v3435
        %v3468 = vpack.c.b16 %v3436, %v3436
        %v3469 = vpack.c.b16 %v3437, %v3437
        %v3470 = vpack.c.b16 %v3438, %v3438
        %v3471 = vpack.c.b16 %v3439, %v3439
        %v3472 = vpack.c.b16 %v3440, %v3440
        %v3473 = vpack.c.b16 %v3441, %v3441
        %3506 = vmatprep.subr.bf16.mxu0 %v1331
        %3507 = vmatpush1.bf16.msra.mxu0 %v1330
        %3508 = vmatprep.subr.bf16.mxu0 %v1339
        %3509 = vmatpush1.bf16.msra.mxu0 %v1338
        %3510 = vmatprep.subr.bf16.mxu0 %v1347
        %3511 = vmatpush1.bf16.msra.mxu0 %v1346
        %3512 = vmatprep.subr.bf16.mxu0 %v1355
        %3513 = vmatpush1.bf16.msra.mxu0 %v1354
        %3514 = vmatprep.subr.bf16.mxu0 %v1363
        %3515 = vmatpush1.bf16.msra.mxu0 %v1362
        %3516 = vmatprep.subr.bf16.mxu0 %v1371
        %3517 = vmatpush1.bf16.msra.mxu0 %v1370
        %3518 = vmatprep.subr.bf16.mxu0 %v1379
        %3519 = vmatpush1.bf16.msra.mxu0 %v1378
        %3520 = vmatprep.subr.bf16.mxu0 %v1387
        %3521 = vmatpush1.bf16.msra.mxu0 %v1386
        %3522 = vmatprep.subr.bf16.mxu0 %v1395
        %3523 = vmatpush1.bf16.msra.mxu0 %v1394
        %3524 = vmatprep.subr.bf16.mxu0 %v1403
        %3525 = vmatpush1.bf16.msra.mxu0 %v1402
        %3526 = vmatprep.subr.bf16.mxu0 %v1411
        %3527 = vmatpush1.bf16.msra.mxu0 %v1410
        %3528 = vmatprep.subr.bf16.mxu0 %v1419
        %3529 = vmatpush1.bf16.msra.mxu0 %v1418
        %3530 = vmatprep.subr.bf16.mxu0 %v1427
        %3531 = vmatpush1.bf16.msra.mxu0 %v1426
        %3532 = vmatprep.subr.bf16.mxu0 %v1435
        %3533 = vmatpush1.bf16.msra.mxu0 %v1434
        %3534 = vmatprep.subr.bf16.mxu0 %v1443
        %3535 = vmatpush1.bf16.msra.mxu0 %v1442
        %3536 = vmatprep.subr.bf16.mxu0 %v1451
        %3537 = vmatpush1.bf16.msra.mxu0 %v1450
        %3538 = vmatprep.mubr.bf16.mxu0 %v3443
        %3539 = vmatmul.mubr.bf16.gmra.mrb[0].mxu0 %v3442
        %v3540 = vpop.f32.mrb[0].mxu0
        %v3541 = vadd.f32 0.0, %v3540
        %v3542 = vpop.f32.mrb[0].mxu0
        %v3543 = vadd.f32 0.0, %v3542
        %v3544 = vpop.f32.mrb[0].mxu0
        %v3545 = vpop.f32.mrb[0].mxu0
        %3546 = vdwg.mxu0
        %3547 = vmatprep.subr.bf16.mxu0 %v1459
        %3548 = vmatpush1.bf16.msra.mxu0 %v1458
        %3549 = vmatprep.subr.bf16.mxu0 %v1467
        %3550 = vmatpush1.bf16.msra.mxu0 %v1466
        %3551 = vmatprep.subr.bf16.mxu0 %v1475
        %3552 = vmatpush1.bf16.msra.mxu0 %v1474
        %3553 = vmatprep.subr.bf16.mxu0 %v1483
        %3554 = vmatpush1.bf16.msra.mxu0 %v1482
        %3555 = vmatprep.subr.bf16.mxu0 %v1491
        %3556 = vmatpush1.bf16.msra.mxu0 %v1490
        %3557 = vmatprep.subr.bf16.mxu0 %v1499
        %3558 = vmatpush1.bf16.msra.mxu0 %v1498
        %3559 = vmatprep.subr.bf16.mxu0 %v1507
        %3560 = vmatpush1.bf16.msra.mxu0 %v1506
        %3561 = vmatprep.subr.bf16.mxu0 %v1515
        %3562 = vmatpush1.bf16.msra.mxu0 %v1514
        %3563 = vmatprep.subr.bf16.mxu0 %v1523
        %3564 = vmatpush1.bf16.msra.mxu0 %v1522
        %3565 = vmatprep.subr.bf16.mxu0 %v1531
        %3566 = vmatpush1.bf16.msra.mxu0 %v1530
        %3567 = vmatprep.subr.bf16.mxu0 %v1539
        %3568 = vmatpush1.bf16.msra.mxu0 %v1538
        %3569 = vmatprep.subr.bf16.mxu0 %v1547
        %3570 = vmatpush1.bf16.msra.mxu0 %v1546
        %3571 = vmatprep.subr.bf16.mxu0 %v1555
        %3572 = vmatpush1.bf16.msra.mxu0 %v1554
        %3573 = vmatprep.subr.bf16.mxu0 %v1563
        %3574 = vmatpush1.bf16.msra.mxu0 %v1562
        %3575 = vmatprep.subr.bf16.mxu0 %v1571
        %3576 = vmatpush1.bf16.msra.mxu0 %v1570
        %3577 = vmatprep.subr.bf16.mxu0 %v1579
        %3578 = vmatpush1.bf16.msra.mxu0 %v1578
        %3579 = vmatprep.mubr.bf16.mxu0 %v3445
        %3580 = vmatmul.mubr.bf16.gmra.mrb[0].mxu0 %v3444
        %v3581 = vpop.f32.mrb[0].mxu0
        %v3582 = vadd.f32 %v3541, %v3581
        %v3583 = vpop.f32.mrb[0].mxu0
        %v3584 = vadd.f32 %v3543, %v3583
        %v3585 = vpop.f32.mrb[0].mxu0
        %v3586 = vpop.f32.mrb[0].mxu0
        %3587 = vdwg.mxu0
        %3588 = vmatprep.subr.bf16.mxu0 %v1587
        %3589 = vmatpush1.bf16.msra.mxu0 %v1586
        %3590 = vmatprep.subr.bf16.mxu0 %v1595
        %3591 = vmatpush1.bf16.msra.mxu0 %v1594
        %3592 = vmatprep.subr.bf16.mxu0 %v1603
        %3593 = vmatpush1.bf16.msra.mxu0 %v1602
        %3594 = vmatprep.subr.bf16.mxu0 %v1611
        %3595 = vmatpush1.bf16.msra.mxu0 %v1610
        %3596 = vmatprep.subr.bf16.mxu0 %v1619
        %3597 = vmatpush1.bf16.msra.mxu0 %v1618
        %3598 = vmatprep.subr.bf16.mxu0 %v1627
        %3599 = vmatpush1.bf16.msra.mxu0 %v1626
        %3600 = vmatprep.subr.bf16.mxu0 %v1635
        %3601 = vmatpush1.bf16.msra.mxu0 %v1634
        %3602 = vmatprep.subr.bf16.mxu0 %v1643
        %3603 = vmatpush1.bf16.msra.mxu0 %v1642
        %3604 = vmatprep.subr.bf16.mxu0 %v1651
        %3605 = vmatpush1.bf16.msra.mxu0 %v1650
        %3606 = vmatprep.subr.bf16.mxu0 %v1659
        %3607 = vmatpush1.bf16.msra.mxu0 %v1658
        %3608 = vmatprep.subr.bf16.mxu0 %v1667
        %3609 = vmatpush1.bf16.msra.mxu0 %v1666
        %3610 = vmatprep.subr.bf16.mxu0 %v1675
        %3611 = vmatpush1.bf16.msra.mxu0 %v1674
        %3612 = vmatprep.subr.bf16.mxu0 %v1683
        %3613 = vmatpush1.bf16.msra.mxu0 %v1682
        %3614 = vmatprep.subr.bf16.mxu0 %v1691
        %3615 = vmatpush1.bf16.msra.mxu0 %v1690
        %3616 = vmatprep.subr.bf16.mxu0 %v1699
        %3617 = vmatpush1.bf16.msra.mxu0 %v1698
        %3618 = vmatprep.subr.bf16.mxu0 %v1707
        %3619 = vmatpush1.bf16.msra.mxu0 %v1706
        %3620 = vmatprep.mubr.bf16.mxu0 %v3447
        %3621 = vmatmul.mubr.bf16.gmra.mrb[0].mxu0 %v3446
        %v3622 = vpop.f32.mrb[0].mxu0
        %v3623 = vadd.f32 %v3582, %v3622
        %v3624 = vpop.f32.mrb[0].mxu0
        %v3625 = vadd.f32 %v3584, %v3624
        %v3626 = vpop.f32.mrb[0].mxu0
        %v3627 = vpop.f32.mrb[0].mxu0
        %3628 = vdwg.mxu0
        %3629 = vmatprep.subr.bf16.mxu0 %v1715
        %3630 = vmatpush1.bf16.msra.mxu0 %v1714
        %3631 = vmatprep.subr.bf16.mxu0 %v1723
        %3632 = vmatpush1.bf16.msra.mxu0 %v1722
        %3633 = vmatprep.subr.bf16.mxu0 %v1731
        %3634 = vmatpush1.bf16.msra.mxu0 %v1730
        %3635 = vmatprep.subr.bf16.mxu0 %v1739
        %3636 = vmatpush1.bf16.msra.mxu0 %v1738
        %3637 = vmatprep.subr.bf16.mxu0 %v1747
        %3638 = vmatpush1.bf16.msra.mxu0 %v1746
        %3639 = vmatprep.subr.bf16.mxu0 %v1755
        %3640 = vmatpush1.bf16.msra.mxu0 %v1754
        %3641 = vmatprep.subr.bf16.mxu0 %v1763
        %3642 = vmatpush1.bf16.msra.mxu0 %v1762
        %3643 = vmatprep.subr.bf16.mxu0 %v1771
        %3644 = vmatpush1.bf16.msra.mxu0 %v1770
        %3645 = vmatprep.subr.bf16.mxu0 %v1779
        %3646 = vmatpush1.bf16.msra.mxu0 %v1778
        %3647 = vmatprep.subr.bf16.mxu0 %v1787
        %3648 = vmatpush1.bf16.msra.mxu0 %v1786
        %3649 = vmatprep.subr.bf16.mxu0 %v1795
        %3650 = vmatpush1.bf16.msra.mxu0 %v1794
        %3651 = vmatprep.subr.bf16.mxu0 %v1803
        %3652 = vmatpush1.bf16.msra.mxu0 %v1802
        %3653 = vmatprep.subr.bf16.mxu0 %v1811
        %3654 = vmatpush1.bf16.msra.mxu0 %v1810
        %3655 = vmatprep.subr.bf16.mxu0 %v1819
        %3656 = vmatpush1.bf16.msra.mxu0 %v1818
        %3657 = vmatprep.subr.bf16.mxu0 %v1827
        %3658 = vmatpush1.bf16.msra.mxu0 %v1826
        %3659 = vmatprep.subr.bf16.mxu0 %v1835
        %3660 = vmatpush1.bf16.msra.mxu0 %v1834
        %3661 = vmatprep.mubr.bf16.mxu0 %v3449
        %3662 = vmatmul.mubr.bf16.gmra.mrb[0].mxu0 %v3448
        %v3663 = vpop.f32.mrb[0].mxu0
        %v3664 = vadd.f32 %v3623, %v3663
        %v3665 = vpop.f32.mrb[0].mxu0
        %v3666 = vadd.f32 %v3625, %v3665
        %v3667 = vpop.f32.mrb[0].mxu0
        %v3668 = vpop.f32.mrb[0].mxu0
        %3669 = vdwg.mxu0
        %3670 = vmatprep.subr.bf16.mxu0 %v1843
        %3671 = vmatpush1.bf16.msra.mxu0 %v1842
        %3672 = vmatprep.subr.bf16.mxu0 %v1851
        %3673 = vmatpush1.bf16.msra.mxu0 %v1850
        %3674 = vmatprep.subr.bf16.mxu0 %v1859
        %3675 = vmatpush1.bf16.msra.mxu0 %v1858
        %3676 = vmatprep.subr.bf16.mxu0 %v1867
        %3677 = vmatpush1.bf16.msra.mxu0 %v1866
        %3678 = vmatprep.subr.bf16.mxu0 %v1875
        %3679 = vmatpush1.bf16.msra.mxu0 %v1874
        %3680 = vmatprep.subr.bf16.mxu0 %v1883
        %3681 = vmatpush1.bf16.msra.mxu0 %v1882
        %3682 = vmatprep.subr.bf16.mxu0 %v1891
        %3683 = vmatpush1.bf16.msra.mxu0 %v1890
        %3684 = vmatprep.subr.bf16.mxu0 %v1899
        %3685 = vmatpush1.bf16.msra.mxu0 %v1898
        %3686 = vmatprep.subr.bf16.mxu0 %v1907
        %3687 = vmatpush1.bf16.msra.mxu0 %v1906
        %3688 = vmatprep.subr.bf16.mxu0 %v1915
        %3689 = vmatpush1.bf16.msra.mxu0 %v1914
        %3690 = vmatprep.subr.bf16.mxu0 %v1923
        %3691 = vmatpush1.bf16.msra.mxu0 %v1922
        %3692 = vmatprep.subr.bf16.mxu0 %v1931
        %3693 = vmatpush1.bf16.msra.mxu0 %v1930
        %3694 = vmatprep.subr.bf16.mxu0 %v1939
        %3695 = vmatpush1.bf16.msra.mxu0 %v1938
        %3696 = vmatprep.subr.bf16.mxu0 %v1947
        %3697 = vmatpush1.bf16.msra.mxu0 %v1946
        %3698 = vmatprep.subr.bf16.mxu0 %v1955
        %3699 = vmatpush1.bf16.msra.mxu0 %v1954
        %3700 = vmatprep.subr.bf16.mxu0 %v1963
        %3701 = vmatpush1.bf16.msra.mxu0 %v1962
        %3702 = vmatprep.mubr.bf16.mxu0 %v3451
        %3703 = vmatmul.mubr.bf16.gmra.mrb[0].mxu0 %v3450
        %v3704 = vpop.f32.mrb[0].mxu0
        %v3705 = vadd.f32 %v3664, %v3704
        %v3706 = vpop.f32.mrb[0].mxu0
        %v3707 = vadd.f32 %v3666, %v3706
        %v3708 = vpop.f32.mrb[0].mxu0
        %v3709 = vpop.f32.mrb[0].mxu0
        %3710 = vdwg.mxu0
        %3711 = vmatprep.subr.bf16.mxu0 %v1971
        %3712 = vmatpush1.bf16.msra.mxu0 %v1970
        %3713 = vmatprep.subr.bf16.mxu0 %v1979
        %3714 = vmatpush1.bf16.msra.mxu0 %v1978
        %3715 = vmatprep.subr.bf16.mxu0 %v1987
        %3716 = vmatpush1.bf16.msra.mxu0 %v1986
        %3717 = vmatprep.subr.bf16.mxu0 %v1995
        %3718 = vmatpush1.bf16.msra.mxu0 %v1994
        %3719 = vmatprep.subr.bf16.mxu0 %v2003
        %3720 = vmatpush1.bf16.msra.mxu0 %v2002
        %3721 = vmatprep.subr.bf16.mxu0 %v2011
        %3722 = vmatpush1.bf16.msra.mxu0 %v2010
        %3723 = vmatprep.subr.bf16.mxu0 %v2019
        %3724 = vmatpush1.bf16.msra.mxu0 %v2018
        %3725 = vmatprep.subr.bf16.mxu0 %v2027
        %3726 = vmatpush1.bf16.msra.mxu0 %v2026
        %3727 = vmatprep.subr.bf16.mxu0 %v2035
        %3728 = vmatpush1.bf16.msra.mxu0 %v2034
        %3729 = vmatprep.subr.bf16.mxu0 %v2043
        %3730 = vmatpush1.bf16.msra.mxu0 %v2042
        %3731 = vmatprep.subr.bf16.mxu0 %v2051
        %3732 = vmatpush1.bf16.msra.mxu0 %v2050
        %3733 = vmatprep.subr.bf16.mxu0 %v2059
        %3734 = vmatpush1.bf16.msra.mxu0 %v2058
        %3735 = vmatprep.subr.bf16.mxu0 %v2067
        %3736 = vmatpush1.bf16.msra.mxu0 %v2066
        %3737 = vmatprep.subr.bf16.mxu0 %v2075
        %3738 = vmatpush1.bf16.msra.mxu0 %v2074
        %3739 = vmatprep.subr.bf16.mxu0 %v2083
        %3740 = vmatpush1.bf16.msra.mxu0 %v2082
        %3741 = vmatprep.subr.bf16.mxu0 %v2091
        %3742 = vmatpush1.bf16.msra.mxu0 %v2090
        %3743 = vmatprep.mubr.bf16.mxu0 %v3453
        %3744 = vmatmul.mubr.bf16.gmra.mrb[0].mxu0 %v3452
        %v3745 = vpop.f32.mrb[0].mxu0
        %v3746 = vadd.f32 %v3705, %v3745
        %v3747 = vpop.f32.mrb[0].mxu0
        %v3748 = vadd.f32 %v3707, %v3747
        %v3749 = vpop.f32.mrb[0].mxu0
        %v3750 = vpop.f32.mrb[0].mxu0
        %3751 = vdwg.mxu0
        %3752 = vmatprep.subr.bf16.mxu0 %v2099
        %3753 = vmatpush1.bf16.msra.mxu0 %v2098
        %3754 = vmatprep.subr.bf16.mxu0 %v2107
        %3755 = vmatpush1.bf16.msra.mxu0 %v2106
        %3756 = vmatprep.subr.bf16.mxu0 %v2115
        %3757 = vmatpush1.bf16.msra.mxu0 %v2114
        %3758 = vmatprep.subr.bf16.mxu0 %v2123
        %3759 = vmatpush1.bf16.msra.mxu0 %v2122
        %3760 = vmatprep.subr.bf16.mxu0 %v2131
        %3761 = vmatpush1.bf16.msra.mxu0 %v2130
        %3762 = vmatprep.subr.bf16.mxu0 %v2139
        %3763 = vmatpush1.bf16.msra.mxu0 %v2138
        %3764 = vmatprep.subr.bf16.mxu0 %v2147
        %3765 = vmatpush1.bf16.msra.mxu0 %v2146
        %3766 = vmatprep.subr.bf16.mxu0 %v2155
        %3767 = vmatpush1.bf16.msra.mxu0 %v2154
        %3768 = vmatprep.subr.bf16.mxu0 %v2163
        %3769 = vmatpush1.bf16.msra.mxu0 %v2162
        %3770 = vmatprep.subr.bf16.mxu0 %v2171
        %3771 = vmatpush1.bf16.msra.mxu0 %v2170
        %3772 = vmatprep.subr.bf16.mxu0 %v2179
        %3773 = vmatpush1.bf16.msra.mxu0 %v2178
        %3774 = vmatprep.subr.bf16.mxu0 %v2187
        %3775 = vmatpush1.bf16.msra.mxu0 %v2186
        %3776 = vmatprep.subr.bf16.mxu0 %v2195
        %3777 = vmatpush1.bf16.msra.mxu0 %v2194
        %3778 = vmatprep.subr.bf16.mxu0 %v2203
        %3779 = vmatpush1.bf16.msra.mxu0 %v2202
        %3780 = vmatprep.subr.bf16.mxu0 %v2211
        %3781 = vmatpush1.bf16.msra.mxu0 %v2210
        %3782 = vmatprep.subr.bf16.mxu0 %v2219
        %3783 = vmatpush1.bf16.msra.mxu0 %v2218
        %3784 = vmatprep.mubr.bf16.mxu0 %v3455
        %3785 = vmatmul.mubr.bf16.gmra.mrb[0].mxu0 %v3454
        %v3786 = vpop.f32.mrb[0].mxu0
        %v3787 = vadd.f32 %v3746, %v3786
        %v3788 = vpop.f32.mrb[0].mxu0
        %v3789 = vadd.f32 %v3748, %v3788
        %v3790 = vpop.f32.mrb[0].mxu0
        %v3791 = vpop.f32.mrb[0].mxu0
        %3792 = vdwg.mxu0
        %3793 = vmatprep.subr.bf16.mxu0 %v2227
        %3794 = vmatpush1.bf16.msra.mxu0 %v2226
        %3795 = vmatprep.subr.bf16.mxu0 %v2235
        %3796 = vmatpush1.bf16.msra.mxu0 %v2234
        %3797 = vmatprep.subr.bf16.mxu0 %v2243
        %3798 = vmatpush1.bf16.msra.mxu0 %v2242
        %3799 = vmatprep.subr.bf16.mxu0 %v2251
        %3800 = vmatpush1.bf16.msra.mxu0 %v2250
        %3801 = vmatprep.subr.bf16.mxu0 %v2259
        %3802 = vmatpush1.bf16.msra.mxu0 %v2258
        %3803 = vmatprep.subr.bf16.mxu0 %v2267
        %3804 = vmatpush1.bf16.msra.mxu0 %v2266
        %3805 = vmatprep.subr.bf16.mxu0 %v2275
        %3806 = vmatpush1.bf16.msra.mxu0 %v2274
        %3807 = vmatprep.subr.bf16.mxu0 %v2283
        %3808 = vmatpush1.bf16.msra.mxu0 %v2282
        %3809 = vmatprep.subr.bf16.mxu0 %v2291
        %3810 = vmatpush1.bf16.msra.mxu0 %v2290
        %3811 = vmatprep.subr.bf16.mxu0 %v2299
        %3812 = vmatpush1.bf16.msra.mxu0 %v2298
        %3813 = vmatprep.subr.bf16.mxu0 %v2307
        %3814 = vmatpush1.bf16.msra.mxu0 %v2306
        %3815 = vmatprep.subr.bf16.mxu0 %v2315
        %3816 = vmatpush1.bf16.msra.mxu0 %v2314
        %3817 = vmatprep.subr.bf16.mxu0 %v2323
        %3818 = vmatpush1.bf16.msra.mxu0 %v2322
        %3819 = vmatprep.subr.bf16.mxu0 %v2331
        %3820 = vmatpush1.bf16.msra.mxu0 %v2330
        %3821 = vmatprep.subr.bf16.mxu0 %v2339
        %3822 = vmatpush1.bf16.msra.mxu0 %v2338
        %3823 = vmatprep.subr.bf16.mxu0 %v2347
        %3824 = vmatpush1.bf16.msra.mxu0 %v2346
        %3825 = vmatprep.mubr.bf16.mxu0 %v3457
        %3826 = vmatmul.mubr.bf16.gmra.mrb[0].mxu0 %v3456
        %v3827 = vpop.f32.mrb[0].mxu0
        %v3828 = vadd.f32 %v3787, %v3827
        %v3829 = vpop.f32.mrb[0].mxu0
        %v3830 = vadd.f32 %v3789, %v3829
        %v3831 = vpop.f32.mrb[0].mxu0
        %v3832 = vpop.f32.mrb[0].mxu0
        %3833 = vdwg.mxu0
        %3834 = vmatprep.subr.bf16.mxu0 %v2355
        %3835 = vmatpush1.bf16.msra.mxu0 %v2354
        %3836 = vmatprep.subr.bf16.mxu0 %v2363
        %3837 = vmatpush1.bf16.msra.mxu0 %v2362
        %3838 = vmatprep.subr.bf16.mxu0 %v2371
        %3839 = vmatpush1.bf16.msra.mxu0 %v2370
        %3840 = vmatprep.subr.bf16.mxu0 %v2379
        %3841 = vmatpush1.bf16.msra.mxu0 %v2378
        %3842 = vmatprep.subr.bf16.mxu0 %v2387
        %3843 = vmatpush1.bf16.msra.mxu0 %v2386
        %3844 = vmatprep.subr.bf16.mxu0 %v2395
        %3845 = vmatpush1.bf16.msra.mxu0 %v2394
        %3846 = vmatprep.subr.bf16.mxu0 %v2403
        %3847 = vmatpush1.bf16.msra.mxu0 %v2402
        %3848 = vmatprep.subr.bf16.mxu0 %v2411
        %3849 = vmatpush1.bf16.msra.mxu0 %v2410
        %3850 = vmatprep.subr.bf16.mxu0 %v2419
        %3851 = vmatpush1.bf16.msra.mxu0 %v2418
        %3852 = vmatprep.subr.bf16.mxu0 %v2427
        %3853 = vmatpush1.bf16.msra.mxu0 %v2426
        %3854 = vmatprep.subr.bf16.mxu0 %v2435
        %3855 = vmatpush1.bf16.msra.mxu0 %v2434
        %3856 = vmatprep.subr.bf16.mxu0 %v2443
        %3857 = vmatpush1.bf16.msra.mxu0 %v2442
        %3858 = vmatprep.subr.bf16.mxu0 %v2451
        %3859 = vmatpush1.bf16.msra.mxu0 %v2450
        %3860 = vmatprep.subr.bf16.mxu0 %v2459
        %3861 = vmatpush1.bf16.msra.mxu0 %v2458
        %3862 = vmatprep.subr.bf16.mxu0 %v2467
        %3863 = vmatpush1.bf16.msra.mxu0 %v2466
        %3864 = vmatprep.subr.bf16.mxu0 %v2475
        %3865 = vmatpush1.bf16.msra.mxu0 %v2474
        %3866 = vmatprep.mubr.bf16.mxu0 %v3459
        %3867 = vmatmul.mubr.bf16.gmra.mrb[0].mxu0 %v3458
        %v3868 = vpop.f32.mrb[0].mxu0
        %v3869 = vadd.f32 %v3828, %v3868
        %v3870 = vpop.f32.mrb[0].mxu0
        %v3871 = vadd.f32 %v3830, %v3870
        %v3872 = vpop.f32.mrb[0].mxu0
        %v3873 = vpop.f32.mrb[0].mxu0
        %3874 = vdwg.mxu0
        %3875 = vmatprep.subr.bf16.mxu0 %v2483
        %3876 = vmatpush1.bf16.msra.mxu0 %v2482
        %3877 = vmatprep.subr.bf16.mxu0 %v2491
        %3878 = vmatpush1.bf16.msra.mxu0 %v2490
        %3879 = vmatprep.subr.bf16.mxu0 %v2499
        %3880 = vmatpush1.bf16.msra.mxu0 %v2498
        %3881 = vmatprep.subr.bf16.mxu0 %v2507
        %3882 = vmatpush1.bf16.msra.mxu0 %v2506
        %3883 = vmatprep.subr.bf16.mxu0 %v2515
        %3884 = vmatpush1.bf16.msra.mxu0 %v2514
        %3885 = vmatprep.subr.bf16.mxu0 %v2523
        %3886 = vmatpush1.bf16.msra.mxu0 %v2522
        %3887 = vmatprep.subr.bf16.mxu0 %v2531
        %3888 = vmatpush1.bf16.msra.mxu0 %v2530
        %3889 = vmatprep.subr.bf16.mxu0 %v2539
        %3890 = vmatpush1.bf16.msra.mxu0 %v2538
        %3891 = vmatprep.subr.bf16.mxu0 %v2547
        %3892 = vmatpush1.bf16.msra.mxu0 %v2546
        %3893 = vmatprep.subr.bf16.mxu0 %v2555
        %3894 = vmatpush1.bf16.msra.mxu0 %v2554
        %3895 = vmatprep.subr.bf16.mxu0 %v2563
        %3896 = vmatpush1.bf16.msra.mxu0 %v2562
        %3897 = vmatprep.subr.bf16.mxu0 %v2571
        %3898 = vmatpush1.bf16.msra.mxu0 %v2570
        %3899 = vmatprep.subr.bf16.mxu0 %v2579
        %3900 = vmatpush1.bf16.msra.mxu0 %v2578
        %3901 = vmatprep.subr.bf16.mxu0 %v2587
        %3902 = vmatpush1.bf16.msra.mxu0 %v2586
        %3903 = vmatprep.subr.bf16.mxu0 %v2595
        %3904 = vmatpush1.bf16.msra.mxu0 %v2594
        %3905 = vmatprep.subr.bf16.mxu0 %v2603
        %3906 = vmatpush1.bf16.msra.mxu0 %v2602
        %3907 = vmatprep.mubr.bf16.mxu0 %v3461
        %3908 = vmatmul.mubr.bf16.gmra.mrb[0].mxu0 %v3460
        %v3909 = vpop.f32.mrb[0].mxu0
        %v3910 = vadd.f32 %v3869, %v3909
        %v3911 = vpop.f32.mrb[0].mxu0
        %v3912 = vadd.f32 %v3871, %v3911
        %v3913 = vpop.f32.mrb[0].mxu0
        %v3914 = vpop.f32.mrb[0].mxu0
        %3915 = vdwg.mxu0
        %3916 = vmatprep.subr.bf16.mxu0 %v2611
        %3917 = vmatpush1.bf16.msra.mxu0 %v2610
        %3918 = vmatprep.subr.bf16.mxu0 %v2619
        %3919 = vmatpush1.bf16.msra.mxu0 %v2618
        %3920 = vmatprep.subr.bf16.mxu0 %v2627
        %3921 = vmatpush1.bf16.msra.mxu0 %v2626
        %3922 = vmatprep.subr.bf16.mxu0 %v2635
        %3923 = vmatpush1.bf16.msra.mxu0 %v2634
        %3924 = vmatprep.subr.bf16.mxu0 %v2643
        %3925 = vmatpush1.bf16.msra.mxu0 %v2642
        %3926 = vmatprep.subr.bf16.mxu0 %v2651
        %3927 = vmatpush1.bf16.msra.mxu0 %v2650
        %3928 = vmatprep.subr.bf16.mxu0 %v2659
        %3929 = vmatpush1.bf16.msra.mxu0 %v2658
        %3930 = vmatprep.subr.bf16.mxu0 %v2667
        %3931 = vmatpush1.bf16.msra.mxu0 %v2666
        %3932 = vmatprep.subr.bf16.mxu0 %v2675
        %3933 = vmatpush1.bf16.msra.mxu0 %v2674
        %3934 = vmatprep.subr.bf16.mxu0 %v2683
        %3935 = vmatpush1.bf16.msra.mxu0 %v2682
        %3936 = vmatprep.subr.bf16.mxu0 %v2691
        %3937 = vmatpush1.bf16.msra.mxu0 %v2690
        %3938 = vmatprep.subr.bf16.mxu0 %v2699
        %3939 = vmatpush1.bf16.msra.mxu0 %v2698
        %3940 = vmatprep.subr.bf16.mxu0 %v2707
        %3941 = vmatpush1.bf16.msra.mxu0 %v2706
        %3942 = vmatprep.subr.bf16.mxu0 %v2715
        %3943 = vmatpush1.bf16.msra.mxu0 %v2714
        %3944 = vmatprep.subr.bf16.mxu0 %v2723
        %3945 = vmatpush1.bf16.msra.mxu0 %v2722
        %3946 = vmatprep.subr.bf16.mxu0 %v2731
        %3947 = vmatpush1.bf16.msra.mxu0 %v2730
        %3948 = vmatprep.mubr.bf16.mxu0 %v3463
        %3949 = vmatmul.mubr.bf16.gmra.mrb[0].mxu0 %v3462
        %v3950 = vpop.f32.mrb[0].mxu0
        %v3951 = vadd.f32 %v3910, %v3950
        %v3952 = vpop.f32.mrb[0].mxu0
        %v3953 = vadd.f32 %v3912, %v3952
        %v3954 = vpop.f32.mrb[0].mxu0
        %v3955 = vpop.f32.mrb[0].mxu0
        %3956 = vdwg.mxu0
        %3957 = vmatprep.subr.bf16.mxu0 %v2739
        %3958 = vmatpush1.bf16.msra.mxu0 %v2738
        %3959 = vmatprep.subr.bf16.mxu0 %v2747
        %3960 = vmatpush1.bf16.msra.mxu0 %v2746
        %3961 = vmatprep.subr.bf16.mxu0 %v2755
        %3962 = vmatpush1.bf16.msra.mxu0 %v2754
        %3963 = vmatprep.subr.bf16.mxu0 %v2763
        %3964 = vmatpush1.bf16.msra.mxu0 %v2762
        %3965 = vmatprep.subr.bf16.mxu0 %v2771
        %3966 = vmatpush1.bf16.msra.mxu0 %v2770
        %3967 = vmatprep.subr.bf16.mxu0 %v2779
        %3968 = vmatpush1.bf16.msra.mxu0 %v2778
        %3969 = vmatprep.subr.bf16.mxu0 %v2787
        %3970 = vmatpush1.bf16.msra.mxu0 %v2786
        %3971 = vmatprep.subr.bf16.mxu0 %v2795
        %3972 = vmatpush1.bf16.msra.mxu0 %v2794
        %3973 = vmatprep.subr.bf16.mxu0 %v2803
        %3974 = vmatpush1.bf16.msra.mxu0 %v2802
        %3975 = vmatprep.subr.bf16.mxu0 %v2811
        %3976 = vmatpush1.bf16.msra.mxu0 %v2810
        %3977 = vmatprep.subr.bf16.mxu0 %v2819
        %3978 = vmatpush1.bf16.msra.mxu0 %v2818
        %3979 = vmatprep.subr.bf16.mxu0 %v2827
        %3980 = vmatpush1.bf16.msra.mxu0 %v2826
        %3981 = vmatprep.subr.bf16.mxu0 %v2835
        %3982 = vmatpush1.bf16.msra.mxu0 %v2834
        %3983 = vmatprep.subr.bf16.mxu0 %v2843
        %3984 = vmatpush1.bf16.msra.mxu0 %v2842
        %3985 = vmatprep.subr.bf16.mxu0 %v2851
        %3986 = vmatpush1.bf16.msra.mxu0 %v2850
        %3987 = vmatprep.subr.bf16.mxu0 %v2859
        %3988 = vmatpush1.bf16.msra.mxu0 %v2858
        %3989 = vmatprep.mubr.bf16.mxu0 %v3465
        %3990 = vmatmul.mubr.bf16.gmra.mrb[0].mxu0 %v3464
        %v3991 = vpop.f32.mrb[0].mxu0
        %v3992 = vadd.f32 %v3951, %v3991
        %v3993 = vpop.f32.mrb[0].mxu0
        %v3994 = vadd.f32 %v3953, %v3993
        %v3995 = vpop.f32.mrb[0].mxu0
        %v3996 = vpop.f32.mrb[0].mxu0
        %3997 = vdwg.mxu0
        %3998 = vmatprep.subr.bf16.mxu0 %v2867
        %3999 = vmatpush1.bf16.msra.mxu0 %v2866
        %4000 = vmatprep.subr.bf16.mxu0 %v2875
        %4001 = vmatpush1.bf16.msra.mxu0 %v2874
        %4002 = vmatprep.subr.bf16.mxu0 %v2883
        %4003 = vmatpush1.bf16.msra.mxu0 %v2882
        %4004 = vmatprep.subr.bf16.mxu0 %v2891
        %4005 = vmatpush1.bf16.msra.mxu0 %v2890
        %4006 = vmatprep.subr.bf16.mxu0 %v2899
        %4007 = vmatpush1.bf16.msra.mxu0 %v2898
        %4008 = vmatprep.subr.bf16.mxu0 %v2907
        %4009 = vmatpush1.bf16.msra.mxu0 %v2906
        %4010 = vmatprep.subr.bf16.mxu0 %v2915
        %4011 = vmatpush1.bf16.msra.mxu0 %v2914
        %4012 = vmatprep.subr.bf16.mxu0 %v2923
        %4013 = vmatpush1.bf16.msra.mxu0 %v2922
        %4014 = vmatprep.subr.bf16.mxu0 %v2931
        %4015 = vmatpush1.bf16.msra.mxu0 %v2930
        %4016 = vmatprep.subr.bf16.mxu0 %v2939
        %4017 = vmatpush1.bf16.msra.mxu0 %v2938
        %4018 = vmatprep.subr.bf16.mxu0 %v2947
        %4019 = vmatpush1.bf16.msra.mxu0 %v2946
        %4020 = vmatprep.subr.bf16.mxu0 %v2955
        %4021 = vmatpush1.bf16.msra.mxu0 %v2954
        %4022 = vmatprep.subr.bf16.mxu0 %v2963
        %4023 = vmatpush1.bf16.msra.mxu0 %v2962
        %4024 = vmatprep.subr.bf16.mxu0 %v2971
        %4025 = vmatpush1.bf16.msra.mxu0 %v2970
        %4026 = vmatprep.subr.bf16.mxu0 %v2979
        %4027 = vmatpush1.bf16.msra.mxu0 %v2978
        %4028 = vmatprep.subr.bf16.mxu0 %v2987
        %4029 = vmatpush1.bf16.msra.mxu0 %v2986
        %4030 = vmatprep.mubr.bf16.mxu0 %v3467
        %4031 = vmatmul.mubr.bf16.gmra.mrb[0].mxu0 %v3466
        %v4032 = vpop.f32.mrb[0].mxu0
        %v4033 = vadd.f32 %v3992, %v4032
        %v4034 = vpop.f32.mrb[0].mxu0
        %v4035 = vadd.f32 %v3994, %v4034
        %v4036 = vpop.f32.mrb[0].mxu0
        %v4037 = vpop.f32.mrb[0].mxu0
        %4038 = vdwg.mxu0
        %4039 = vmatprep.subr.bf16.mxu0 %v2995
        %4040 = vmatpush1.bf16.msra.mxu0 %v2994
        %4041 = vmatprep.subr.bf16.mxu0 %v3003
        %4042 = vmatpush1.bf16.msra.mxu0 %v3002
        %4043 = vmatprep.subr.bf16.mxu0 %v3011
        %4044 = vmatpush1.bf16.msra.mxu0 %v3010
        %4045 = vmatprep.subr.bf16.mxu0 %v3019
        %4046 = vmatpush1.bf16.msra.mxu0 %v3018
        %4047 = vmatprep.subr.bf16.mxu0 %v3027
        %4048 = vmatpush1.bf16.msra.mxu0 %v3026
        %4049 = vmatprep.subr.bf16.mxu0 %v3035
        %4050 = vmatpush1.bf16.msra.mxu0 %v3034
        %4051 = vmatprep.subr.bf16.mxu0 %v3043
        %4052 = vmatpush1.bf16.msra.mxu0 %v3042
        %4053 = vmatprep.subr.bf16.mxu0 %v3051
        %4054 = vmatpush1.bf16.msra.mxu0 %v3050
        %4055 = vmatprep.subr.bf16.mxu0 %v3059
        %4056 = vmatpush1.bf16.msra.mxu0 %v3058
        %4057 = vmatprep.subr.bf16.mxu0 %v3067
        %4058 = vmatpush1.bf16.msra.mxu0 %v3066
        %4059 = vmatprep.subr.bf16.mxu0 %v3075
        %4060 = vmatpush1.bf16.msra.mxu0 %v3074
        %4061 = vmatprep.subr.bf16.mxu0 %v3083
        %4062 = vmatpush1.bf16.msra.mxu0 %v3082
        %4063 = vmatprep.subr.bf16.mxu0 %v3091
        %4064 = vmatpush1.bf16.msra.mxu0 %v3090
        %4065 = vmatprep.subr.bf16.mxu0 %v3099
        %4066 = vmatpush1.bf16.msra.mxu0 %v3098
        %4067 = vmatprep.subr.bf16.mxu0 %v3107
        %4068 = vmatpush1.bf16.msra.mxu0 %v3106
        %4069 = vmatprep.subr.bf16.mxu0 %v3115
        %4070 = vmatpush1.bf16.msra.mxu0 %v3114
        %4071 = vmatprep.mubr.bf16.mxu0 %v3469
        %4072 = vmatmul.mubr.bf16.gmra.mrb[0].mxu0 %v3468
        %v4073 = vpop.f32.mrb[0].mxu0
        %v4074 = vadd.f32 %v4033, %v4073
        %v4075 = vpop.f32.mrb[0].mxu0
        %v4076 = vadd.f32 %v4035, %v4075
        %v4077 = vpop.f32.mrb[0].mxu0
        %v4078 = vpop.f32.mrb[0].mxu0
        %4079 = vdwg.mxu0
        %4080 = vmatprep.subr.bf16.mxu0 %v3123
        %4081 = vmatpush1.bf16.msra.mxu0 %v3122
        %4082 = vmatprep.subr.bf16.mxu0 %v3131
        %4083 = vmatpush1.bf16.msra.mxu0 %v3130
        %4084 = vmatprep.subr.bf16.mxu0 %v3139
        %4085 = vmatpush1.bf16.msra.mxu0 %v3138
        %4086 = vmatprep.subr.bf16.mxu0 %v3147
        %4087 = vmatpush1.bf16.msra.mxu0 %v3146
        %4088 = vmatprep.subr.bf16.mxu0 %v3155
        %4089 = vmatpush1.bf16.msra.mxu0 %v3154
        %4090 = vmatprep.subr.bf16.mxu0 %v3163
        %4091 = vmatpush1.bf16.msra.mxu0 %v3162
        %4092 = vmatprep.subr.bf16.mxu0 %v3171
        %4093 = vmatpush1.bf16.msra.mxu0 %v3170
        %4094 = vmatprep.subr.bf16.mxu0 %v3179
        %4095 = vmatpush1.bf16.msra.mxu0 %v3178
        %4096 = vmatprep.subr.bf16.mxu0 %v3187
        %4097 = vmatpush1.bf16.msra.mxu0 %v3186
        %4098 = vmatprep.subr.bf16.mxu0 %v3195
        %4099 = vmatpush1.bf16.msra.mxu0 %v3194
        %4100 = vmatprep.subr.bf16.mxu0 %v3203
        %4101 = vmatpush1.bf16.msra.mxu0 %v3202
        %4102 = vmatprep.subr.bf16.mxu0 %v3211
        %4103 = vmatpush1.bf16.msra.mxu0 %v3210
        %4104 = vmatprep.subr.bf16.mxu0 %v3219
        %4105 = vmatpush1.bf16.msra.mxu0 %v3218
        %4106 = vmatprep.subr.bf16.mxu0 %v3227
        %4107 = vmatpush1.bf16.msra.mxu0 %v3226
        %4108 = vmatprep.subr.bf16.mxu0 %v3235
        %4109 = vmatpush1.bf16.msra.mxu0 %v3234
        %4110 = vmatprep.subr.bf16.mxu0 %v3243
        %4111 = vmatpush1.bf16.msra.mxu0 %v3242
        %4112 = vmatprep.mubr.bf16.mxu0 %v3471
        %4113 = vmatmul.mubr.bf16.gmra.mrb[0].mxu0 %v3470
        %v4114 = vpop.f32.mrb[0].mxu0
        %v4115 = vadd.f32 %v4074, %v4114
        %v4116 = vpop.f32.mrb[0].mxu0
        %v4117 = vadd.f32 %v4076, %v4116
        %v4118 = vpop.f32.mrb[0].mxu0
        %v4119 = vpop.f32.mrb[0].mxu0
        %4120 = vdwg.mxu0
        %4121 = vmatprep.subr.bf16.mxu0 %v3251
        %4122 = vmatpush1.bf16.msra.mxu0 %v3250
        %4123 = vmatprep.subr.bf16.mxu0 %v3259
        %4124 = vmatpush1.bf16.msra.mxu0 %v3258
        %4125 = vmatprep.subr.bf16.mxu0 %v3267
        %4126 = vmatpush1.bf16.msra.mxu0 %v3266
        %4127 = vmatprep.subr.bf16.mxu0 %v3275
        %4128 = vmatpush1.bf16.msra.mxu0 %v3274
        %4129 = vmatprep.subr.bf16.mxu0 %v3283
        %4130 = vmatpush1.bf16.msra.mxu0 %v3282
        %4131 = vmatprep.subr.bf16.mxu0 %v3291
        %4132 = vmatpush1.bf16.msra.mxu0 %v3290
        %4133 = vmatprep.subr.bf16.mxu0 %v3299
        %4134 = vmatpush1.bf16.msra.mxu0 %v3298
        %4135 = vmatprep.subr.bf16.mxu0 %v3307
        %4136 = vmatpush1.bf16.msra.mxu0 %v3306
        %4137 = vmatprep.subr.bf16.mxu0 %v3315
        %4138 = vmatpush1.bf16.msra.mxu0 %v3314
        %4139 = vmatprep.subr.bf16.mxu0 %v3323
        %4140 = vmatpush1.bf16.msra.mxu0 %v3322
        %4141 = vmatprep.subr.bf16.mxu0 %v3331
        %4142 = vmatpush1.bf16.msra.mxu0 %v3330
        %4143 = vmatprep.subr.bf16.mxu0 %v3339
        %4144 = vmatpush1.bf16.msra.mxu0 %v3338
        %4145 = vmatprep.subr.bf16.mxu0 %v3347
        %4146 = vmatpush1.bf16.msra.mxu0 %v3346
        %4147 = vmatprep.subr.bf16.mxu0 %v3355
        %4148 = vmatpush1.bf16.msra.mxu0 %v3354
        %4149 = vmatprep.subr.bf16.mxu0 %v3363
        %4150 = vmatpush1.bf16.msra.mxu0 %v3362
        %4151 = vmatprep.subr.bf16.mxu0 %v3371
        %4152 = vmatpush1.bf16.msra.mxu0 %v3370
        %4153 = vmatprep.mubr.bf16.mxu0 %v3473
        %4154 = vmatmul.mubr.bf16.gmra.mrb[0].mxu0 %v3472
        %v4155 = vpop.f32.mrb[0].mxu0
        %v4156 = vadd.f32 %v4115, %v4155
        %v4157 = vpop.f32.mrb[0].mxu0
        %v4158 = vadd.f32 %v4117, %v4157
        %v4159 = vpop.f32.mrb[0].mxu0
        %v4160 = vpop.f32.mrb[0].mxu0
        %4161 = vdwg.mxu0
        %4162 = vmatprep.subr.bf16.mxu0 %v1333
        %4163 = vmatpush1.bf16.msra.mxu0 %v1332
        %4164 = vmatprep.subr.bf16.mxu0 %v1341
        %4165 = vmatpush1.bf16.msra.mxu0 %v1340
        %4166 = vmatprep.subr.bf16.mxu0 %v1349
        %4167 = vmatpush1.bf16.msra.mxu0 %v1348
        %4168 = vmatprep.subr.bf16.mxu0 %v1357
        %4169 = vmatpush1.bf16.msra.mxu0 %v1356
        %4170 = vmatprep.subr.bf16.mxu0 %v1365
        %4171 = vmatpush1.bf16.msra.mxu0 %v1364
        %4172 = vmatprep.subr.bf16.mxu0 %v1373
        %4173 = vmatpush1.bf16.msra.mxu0 %v1372
        %4174 = vmatprep.subr.bf16.mxu0 %v1381
        %4175 = vmatpush1.bf16.msra.mxu0 %v1380
        %4176 = vmatprep.subr.bf16.mxu0 %v1389
        %4177 = vmatpush1.bf16.msra.mxu0 %v1388
        %4178 = vmatprep.subr.bf16.mxu0 %v1397
        %4179 = vmatpush1.bf16.msra.mxu0 %v1396
        %4180 = vmatprep.subr.bf16.mxu0 %v1405
        %4181 = vmatpush1.bf16.msra.mxu0 %v1404
        %4182 = vmatprep.subr.bf16.mxu0 %v1413
        %4183 = vmatpush1.bf16.msra.mxu0 %v1412
        %4184 = vmatprep.subr.bf16.mxu0 %v1421
        %4185 = vmatpush1.bf16.msra.mxu0 %v1420
        %4186 = vmatprep.subr.bf16.mxu0 %v1429
        %4187 = vmatpush1.bf16.msra.mxu0 %v1428
        %4188 = vmatprep.subr.bf16.mxu0 %v1437
        %4189 = vmatpush1.bf16.msra.mxu0 %v1436
        %4190 = vmatprep.subr.bf16.mxu0 %v1445
        %4191 = vmatpush1.bf16.msra.mxu0 %v1444
        %4192 = vmatprep.subr.bf16.mxu0 %v1453
        %4193 = vmatpush1.bf16.msra.mxu0 %v1452
        %4194 = vmatprep.mubr.bf16.mxu0 %v3443
        %4195 = vmatmul.mubr.bf16.gmra.mrb[0].mxu0 %v3442
        %v4196 = vpop.f32.mrb[0].mxu0
        %v4197 = vadd.f32 0.0, %v4196
        %v4198 = vpop.f32.mrb[0].mxu0
        %v4199 = vadd.f32 0.0, %v4198
        %v4200 = vpop.f32.mrb[0].mxu0
        %v4201 = vpop.f32.mrb[0].mxu0
        %4202 = vdwg.mxu0
        %4203 = vmatprep.subr.bf16.mxu0 %v1461
        %4204 = vmatpush1.bf16.msra.mxu0 %v1460
        %4205 = vmatprep.subr.bf16.mxu0 %v1469
        %4206 = vmatpush1.bf16.msra.mxu0 %v1468
        %4207 = vmatprep.subr.bf16.mxu0 %v1477
        %4208 = vmatpush1.bf16.msra.mxu0 %v1476
        %4209 = vmatprep.subr.bf16.mxu0 %v1485
        %4210 = vmatpush1.bf16.msra.mxu0 %v1484
        %4211 = vmatprep.subr.bf16.mxu0 %v1493
        %4212 = vmatpush1.bf16.msra.mxu0 %v1492
        %4213 = vmatprep.subr.bf16.mxu0 %v1501
        %4214 = vmatpush1.bf16.msra.mxu0 %v1500
        %4215 = vmatprep.subr.bf16.mxu0 %v1509
        %4216 = vmatpush1.bf16.msra.mxu0 %v1508
        %4217 = vmatprep.subr.bf16.mxu0 %v1517
        %4218 = vmatpush1.bf16.msra.mxu0 %v1516
        %4219 = vmatprep.subr.bf16.mxu0 %v1525
        %4220 = vmatpush1.bf16.msra.mxu0 %v1524
        %4221 = vmatprep.subr.bf16.mxu0 %v1533
        %4222 = vmatpush1.bf16.msra.mxu0 %v1532
        %4223 = vmatprep.subr.bf16.mxu0 %v1541
        %4224 = vmatpush1.bf16.msra.mxu0 %v1540
        %4225 = vmatprep.subr.bf16.mxu0 %v1549
        %4226 = vmatpush1.bf16.msra.mxu0 %v1548
        %4227 = vmatprep.subr.bf16.mxu0 %v1557
        %4228 = vmatpush1.bf16.msra.mxu0 %v1556
        %4229 = vmatprep.subr.bf16.mxu0 %v1565
        %4230 = vmatpush1.bf16.msra.mxu0 %v1564
        %4231 = vmatprep.subr.bf16.mxu0 %v1573
        %4232 = vmatpush1.bf16.msra.mxu0 %v1572
        %4233 = vmatprep.subr.bf16.mxu0 %v1581
        %4234 = vmatpush1.bf16.msra.mxu0 %v1580
        %4235 = vmatprep.mubr.bf16.mxu0 %v3445
        %4236 = vmatmul.mubr.bf16.gmra.mrb[0].mxu0 %v3444
        %v4237 = vpop.f32.mrb[0].mxu0
        %v4238 = vadd.f32 %v4197, %v4237
        %v4239 = vpop.f32.mrb[0].mxu0
        %v4240 = vadd.f32 %v4199, %v4239
        %v4241 = vpop.f32.mrb[0].mxu0
        %v4242 = vpop.f32.mrb[0].mxu0
        %4243 = vdwg.mxu0
        %4244 = vmatprep.subr.bf16.mxu0 %v1589
        %4245 = vmatpush1.bf16.msra.mxu0 %v1588
        %4246 = vmatprep.subr.bf16.mxu0 %v1597
        %4247 = vmatpush1.bf16.msra.mxu0 %v1596
        %4248 = vmatprep.subr.bf16.mxu0 %v1605
        %4249 = vmatpush1.bf16.msra.mxu0 %v1604
        %4250 = vmatprep.subr.bf16.mxu0 %v1613
        %4251 = vmatpush1.bf16.msra.mxu0 %v1612
        %4252 = vmatprep.subr.bf16.mxu0 %v1621
        %4253 = vmatpush1.bf16.msra.mxu0 %v1620
        %4254 = vmatprep.subr.bf16.mxu0 %v1629
        %4255 = vmatpush1.bf16.msra.mxu0 %v1628
        %4256 = vmatprep.subr.bf16.mxu0 %v1637
        %4257 = vmatpush1.bf16.msra.mxu0 %v1636
        %4258 = vmatprep.subr.bf16.mxu0 %v1645
        %4259 = vmatpush1.bf16.msra.mxu0 %v1644
        %4260 = vmatprep.subr.bf16.mxu0 %v1653
        %4261 = vmatpush1.bf16.msra.mxu0 %v1652
        %4262 = vmatprep.subr.bf16.mxu0 %v1661
        %4263 = vmatpush1.bf16.msra.mxu0 %v1660
        %4264 = vmatprep.subr.bf16.mxu0 %v1669
        %4265 = vmatpush1.bf16.msra.mxu0 %v1668
        %4266 = vmatprep.subr.bf16.mxu0 %v1677
        %4267 = vmatpush1.bf16.msra.mxu0 %v1676
        %4268 = vmatprep.subr.bf16.mxu0 %v1685
        %4269 = vmatpush1.bf16.msra.mxu0 %v1684
        %4270 = vmatprep.subr.bf16.mxu0 %v1693
        %4271 = vmatpush1.bf16.msra.mxu0 %v1692
        %4272 = vmatprep.subr.bf16.mxu0 %v1701
        %4273 = vmatpush1.bf16.msra.mxu0 %v1700
        %4274 = vmatprep.subr.bf16.mxu0 %v1709
        %4275 = vmatpush1.bf16.msra.mxu0 %v1708
        %4276 = vmatprep.mubr.bf16.mxu0 %v3447
        %4277 = vmatmul.mubr.bf16.gmra.mrb[0].mxu0 %v3446
        %v4278 = vpop.f32.mrb[0].mxu0
        %v4279 = vadd.f32 %v4238, %v4278
        %v4280 = vpop.f32.mrb[0].mxu0
        %v4281 = vadd.f32 %v4240, %v4280
        %v4282 = vpop.f32.mrb[0].mxu0
        %v4283 = vpop.f32.mrb[0].mxu0
        %4284 = vdwg.mxu0
        %4285 = vmatprep.subr.bf16.mxu0 %v1717
        %4286 = vmatpush1.bf16.msra.mxu0 %v1716
        %4287 = vmatprep.subr.bf16.mxu0 %v1725
        %4288 = vmatpush1.bf16.msra.mxu0 %v1724
        %4289 = vmatprep.subr.bf16.mxu0 %v1733
        %4290 = vmatpush1.bf16.msra.mxu0 %v1732
        %4291 = vmatprep.subr.bf16.mxu0 %v1741
        %4292 = vmatpush1.bf16.msra.mxu0 %v1740
        %4293 = vmatprep.subr.bf16.mxu0 %v1749
        %4294 = vmatpush1.bf16.msra.mxu0 %v1748
        %4295 = vmatprep.subr.bf16.mxu0 %v1757
        %4296 = vmatpush1.bf16.msra.mxu0 %v1756
        %4297 = vmatprep.subr.bf16.mxu0 %v1765
        %4298 = vmatpush1.bf16.msra.mxu0 %v1764
        %4299 = vmatprep.subr.bf16.mxu0 %v1773
        %4300 = vmatpush1.bf16.msra.mxu0 %v1772
        %4301 = vmatprep.subr.bf16.mxu0 %v1781
        %4302 = vmatpush1.bf16.msra.mxu0 %v1780
        %4303 = vmatprep.subr.bf16.mxu0 %v1789
        %4304 = vmatpush1.bf16.msra.mxu0 %v1788
        %4305 = vmatprep.subr.bf16.mxu0 %v1797
        %4306 = vmatpush1.bf16.msra.mxu0 %v1796
        %4307 = vmatprep.subr.bf16.mxu0 %v1805
        %4308 = vmatpush1.bf16.msra.mxu0 %v1804
        %4309 = vmatprep.subr.bf16.mxu0 %v1813
        %4310 = vmatpush1.bf16.msra.mxu0 %v1812
        %4311 = vmatprep.subr.bf16.mxu0 %v1821
        %4312 = vmatpush1.bf16.msra.mxu0 %v1820
        %4313 = vmatprep.subr.bf16.mxu0 %v1829
        %4314 = vmatpush1.bf16.msra.mxu0 %v1828
        %4315 = vmatprep.subr.bf16.mxu0 %v1837
        %4316 = vmatpush1.bf16.msra.mxu0 %v1836
        %4317 = vmatprep.mubr.bf16.mxu0 %v3449
        %4318 = vmatmul.mubr.bf16.gmra.mrb[0].mxu0 %v3448
        %v4319 = vpop.f32.mrb[0].mxu0
        %v4320 = vadd.f32 %v4279, %v4319
        %v4321 = vpop.f32.mrb[0].mxu0
        %v4322 = vadd.f32 %v4281, %v4321
        %v4323 = vpop.f32.mrb[0].mxu0
        %v4324 = vpop.f32.mrb[0].mxu0
        %4325 = vdwg.mxu0
        %4326 = vmatprep.subr.bf16.mxu0 %v1845
        %4327 = vmatpush1.bf16.msra.mxu0 %v1844
        %4328 = vmatprep.subr.bf16.mxu0 %v1853
        %4329 = vmatpush1.bf16.msra.mxu0 %v1852
        %4330 = vmatprep.subr.bf16.mxu0 %v1861
        %4331 = vmatpush1.bf16.msra.mxu0 %v1860
        %4332 = vmatprep.subr.bf16.mxu0 %v1869
        %4333 = vmatpush1.bf16.msra.mxu0 %v1868
        %4334 = vmatprep.subr.bf16.mxu0 %v1877
        %4335 = vmatpush1.bf16.msra.mxu0 %v1876
        %4336 = vmatprep.subr.bf16.mxu0 %v1885
        %4337 = vmatpush1.bf16.msra.mxu0 %v1884
        %4338 = vmatprep.subr.bf16.mxu0 %v1893
        %4339 = vmatpush1.bf16.msra.mxu0 %v1892
        %4340 = vmatprep.subr.bf16.mxu0 %v1901
        %4341 = vmatpush1.bf16.msra.mxu0 %v1900
        %4342 = vmatprep.subr.bf16.mxu0 %v1909
        %4343 = vmatpush1.bf16.msra.mxu0 %v1908
        %4344 = vmatprep.subr.bf16.mxu0 %v1917
        %4345 = vmatpush1.bf16.msra.mxu0 %v1916
        %4346 = vmatprep.subr.bf16.mxu0 %v1925
        %4347 = vmatpush1.bf16.msra.mxu0 %v1924
        %4348 = vmatprep.subr.bf16.mxu0 %v1933
        %4349 = vmatpush1.bf16.msra.mxu0 %v1932
        %4350 = vmatprep.subr.bf16.mxu0 %v1941
        %4351 = vmatpush1.bf16.msra.mxu0 %v1940
        %4352 = vmatprep.subr.bf16.mxu0 %v1949
        %4353 = vmatpush1.bf16.msra.mxu0 %v1948
        %4354 = vmatprep.subr.bf16.mxu0 %v1957
        %4355 = vmatpush1.bf16.msra.mxu0 %v1956
        %4356 = vmatprep.subr.bf16.mxu0 %v1965
        %4357 = vmatpush1.bf16.msra.mxu0 %v1964
        %4358 = vmatprep.mubr.bf16.mxu0 %v3451
        %4359 = vmatmul.mubr.bf16.gmra.mrb[0].mxu0 %v3450
        %v4360 = vpop.f32.mrb[0].mxu0
        %v4361 = vadd.f32 %v4320, %v4360
        %v4362 = vpop.f32.mrb[0].mxu0
        %v4363 = vadd.f32 %v4322, %v4362
        %v4364 = vpop.f32.mrb[0].mxu0
        %v4365 = vpop.f32.mrb[0].mxu0
        %4366 = vdwg.mxu0
        %4367 = vmatprep.subr.bf16.mxu0 %v1973
        %4368 = vmatpush1.bf16.msra.mxu0 %v1972
        %4369 = vmatprep.subr.bf16.mxu0 %v1981
        %4370 = vmatpush1.bf16.msra.mxu0 %v1980
        %4371 = vmatprep.subr.bf16.mxu0 %v1989
        %4372 = vmatpush1.bf16.msra.mxu0 %v1988
        %4373 = vmatprep.subr.bf16.mxu0 %v1997
        %4374 = vmatpush1.bf16.msra.mxu0 %v1996
        %4375 = vmatprep.subr.bf16.mxu0 %v2005
        %4376 = vmatpush1.bf16.msra.mxu0 %v2004
        %4377 = vmatprep.subr.bf16.mxu0 %v2013
        %4378 = vmatpush1.bf16.msra.mxu0 %v2012
        %4379 = vmatprep.subr.bf16.mxu0 %v2021
        %4380 = vmatpush1.bf16.msra.mxu0 %v2020
        %4381 = vmatprep.subr.bf16.mxu0 %v2029
        %4382 = vmatpush1.bf16.msra.mxu0 %v2028
        %4383 = vmatprep.subr.bf16.mxu0 %v2037
        %4384 = vmatpush1.bf16.msra.mxu0 %v2036
        %4385 = vmatprep.subr.bf16.mxu0 %v2045
        %4386 = vmatpush1.bf16.msra.mxu0 %v2044
        %4387 = vmatprep.subr.bf16.mxu0 %v2053
        %4388 = vmatpush1.bf16.msra.mxu0 %v2052
        %4389 = vmatprep.subr.bf16.mxu0 %v2061
        %4390 = vmatpush1.bf16.msra.mxu0 %v2060
        %4391 = vmatprep.subr.bf16.mxu0 %v2069
        %4392 = vmatpush1.bf16.msra.mxu0 %v2068
        %4393 = vmatprep.subr.bf16.mxu0 %v2077
        %4394 = vmatpush1.bf16.msra.mxu0 %v2076
        %4395 = vmatprep.subr.bf16.mxu0 %v2085
        %4396 = vmatpush1.bf16.msra.mxu0 %v2084
        %4397 = vmatprep.subr.bf16.mxu0 %v2093
        %4398 = vmatpush1.bf16.msra.mxu0 %v2092
        %4399 = vmatprep.mubr.bf16.mxu0 %v3453
        %4400 = vmatmul.mubr.bf16.gmra.mrb[0].mxu0 %v3452
        %v4401 = vpop.f32.mrb[0].mxu0
        %v4402 = vadd.f32 %v4361, %v4401
        %v4403 = vpop.f32.mrb[0].mxu0
        %v4404 = vadd.f32 %v4363, %v4403
        %v4405 = vpop.f32.mrb[0].mxu0
        %v4406 = vpop.f32.mrb[0].mxu0
        %4407 = vdwg.mxu0
        %4408 = vmatprep.subr.bf16.mxu0 %v2101
        %4409 = vmatpush1.bf16.msra.mxu0 %v2100
        %4410 = vmatprep.subr.bf16.mxu0 %v2109
        %4411 = vmatpush1.bf16.msra.mxu0 %v2108
        %4412 = vmatprep.subr.bf16.mxu0 %v2117
        %4413 = vmatpush1.bf16.msra.mxu0 %v2116
        %4414 = vmatprep.subr.bf16.mxu0 %v2125
        %4415 = vmatpush1.bf16.msra.mxu0 %v2124
        %4416 = vmatprep.subr.bf16.mxu0 %v2133
        %4417 = vmatpush1.bf16.msra.mxu0 %v2132
        %4418 = vmatprep.subr.bf16.mxu0 %v2141
        %4419 = vmatpush1.bf16.msra.mxu0 %v2140
        %4420 = vmatprep.subr.bf16.mxu0 %v2149
        %4421 = vmatpush1.bf16.msra.mxu0 %v2148
        %4422 = vmatprep.subr.bf16.mxu0 %v2157
        %4423 = vmatpush1.bf16.msra.mxu0 %v2156
        %4424 = vmatprep.subr.bf16.mxu0 %v2165
        %4425 = vmatpush1.bf16.msra.mxu0 %v2164
        %4426 = vmatprep.subr.bf16.mxu0 %v2173
        %4427 = vmatpush1.bf16.msra.mxu0 %v2172
        %4428 = vmatprep.subr.bf16.mxu0 %v2181
        %4429 = vmatpush1.bf16.msra.mxu0 %v2180
        %4430 = vmatprep.subr.bf16.mxu0 %v2189
        %4431 = vmatpush1.bf16.msra.mxu0 %v2188
        %4432 = vmatprep.subr.bf16.mxu0 %v2197
        %4433 = vmatpush1.bf16.msra.mxu0 %v2196
        %4434 = vmatprep.subr.bf16.mxu0 %v2205
        %4435 = vmatpush1.bf16.msra.mxu0 %v2204
        %4436 = vmatprep.subr.bf16.mxu0 %v2213
        %4437 = vmatpush1.bf16.msra.mxu0 %v2212
        %4438 = vmatprep.subr.bf16.mxu0 %v2221
        %4439 = vmatpush1.bf16.msra.mxu0 %v2220
        %4440 = vmatprep.mubr.bf16.mxu0 %v3455
        %4441 = vmatmul.mubr.bf16.gmra.mrb[0].mxu0 %v3454
        %v4442 = vpop.f32.mrb[0].mxu0
        %v4443 = vadd.f32 %v4402, %v4442
        %v4444 = vpop.f32.mrb[0].mxu0
        %v4445 = vadd.f32 %v4404, %v4444
        %v4446 = vpop.f32.mrb[0].mxu0
        %v4447 = vpop.f32.mrb[0].mxu0
        %4448 = vdwg.mxu0
        %4449 = vmatprep.subr.bf16.mxu0 %v2229
        %4450 = vmatpush1.bf16.msra.mxu0 %v2228
        %4451 = vmatprep.subr.bf16.mxu0 %v2237
        %4452 = vmatpush1.bf16.msra.mxu0 %v2236
        %4453 = vmatprep.subr.bf16.mxu0 %v2245
        %4454 = vmatpush1.bf16.msra.mxu0 %v2244
        %4455 = vmatprep.subr.bf16.mxu0 %v2253
        %4456 = vmatpush1.bf16.msra.mxu0 %v2252
        %4457 = vmatprep.subr.bf16.mxu0 %v2261
        %4458 = vmatpush1.bf16.msra.mxu0 %v2260
        %4459 = vmatprep.subr.bf16.mxu0 %v2269
        %4460 = vmatpush1.bf16.msra.mxu0 %v2268
        %4461 = vmatprep.subr.bf16.mxu0 %v2277
        %4462 = vmatpush1.bf16.msra.mxu0 %v2276
        %4463 = vmatprep.subr.bf16.mxu0 %v2285
        %4464 = vmatpush1.bf16.msra.mxu0 %v2284
        %4465 = vmatprep.subr.bf16.mxu0 %v2293
        %4466 = vmatpush1.bf16.msra.mxu0 %v2292
        %4467 = vmatprep.subr.bf16.mxu0 %v2301
        %4468 = vmatpush1.bf16.msra.mxu0 %v2300
        %4469 = vmatprep.subr.bf16.mxu0 %v2309
        %4470 = vmatpush1.bf16.msra.mxu0 %v2308
        %4471 = vmatprep.subr.bf16.mxu0 %v2317
        %4472 = vmatpush1.bf16.msra.mxu0 %v2316
        %4473 = vmatprep.subr.bf16.mxu0 %v2325
        %4474 = vmatpush1.bf16.msra.mxu0 %v2324
        %4475 = vmatprep.subr.bf16.mxu0 %v2333
        %4476 = vmatpush1.bf16.msra.mxu0 %v2332
        %4477 = vmatprep.subr.bf16.mxu0 %v2341
        %4478 = vmatpush1.bf16.msra.mxu0 %v2340
        %4479 = vmatprep.subr.bf16.mxu0 %v2349
        %4480 = vmatpush1.bf16.msra.mxu0 %v2348
        %4481 = vmatprep.mubr.bf16.mxu0 %v3457
        %4482 = vmatmul.mubr.bf16.gmra.mrb[0].mxu0 %v3456
        %v4483 = vpop.f32.mrb[0].mxu0
        %v4484 = vadd.f32 %v4443, %v4483
        %v4485 = vpop.f32.mrb[0].mxu0
        %v4486 = vadd.f32 %v4445, %v4485
        %v4487 = vpop.f32.mrb[0].mxu0
        %v4488 = vpop.f32.mrb[0].mxu0
        %4489 = vdwg.mxu0
        %4490 = vmatprep.subr.bf16.mxu0 %v2357
        %4491 = vmatpush1.bf16.msra.mxu0 %v2356
        %4492 = vmatprep.subr.bf16.mxu0 %v2365
        %4493 = vmatpush1.bf16.msra.mxu0 %v2364
        %4494 = vmatprep.subr.bf16.mxu0 %v2373
        %4495 = vmatpush1.bf16.msra.mxu0 %v2372
        %4496 = vmatprep.subr.bf16.mxu0 %v2381
        %4497 = vmatpush1.bf16.msra.mxu0 %v2380
        %4498 = vmatprep.subr.bf16.mxu0 %v2389
        %4499 = vmatpush1.bf16.msra.mxu0 %v2388
        %4500 = vmatprep.subr.bf16.mxu0 %v2397
        %4501 = vmatpush1.bf16.msra.mxu0 %v2396
        %4502 = vmatprep.subr.bf16.mxu0 %v2405
        %4503 = vmatpush1.bf16.msra.mxu0 %v2404
        %4504 = vmatprep.subr.bf16.mxu0 %v2413
        %4505 = vmatpush1.bf16.msra.mxu0 %v2412
        %4506 = vmatprep.subr.bf16.mxu0 %v2421
        %4507 = vmatpush1.bf16.msra.mxu0 %v2420
        %4508 = vmatprep.subr.bf16.mxu0 %v2429
        %4509 = vmatpush1.bf16.msra.mxu0 %v2428
        %4510 = vmatprep.subr.bf16.mxu0 %v2437
        %4511 = vmatpush1.bf16.msra.mxu0 %v2436
        %4512 = vmatprep.subr.bf16.mxu0 %v2445
        %4513 = vmatpush1.bf16.msra.mxu0 %v2444
        %4514 = vmatprep.subr.bf16.mxu0 %v2453
        %4515 = vmatpush1.bf16.msra.mxu0 %v2452
        %4516 = vmatprep.subr.bf16.mxu0 %v2461
        %4517 = vmatpush1.bf16.msra.mxu0 %v2460
        %4518 = vmatprep.subr.bf16.mxu0 %v2469
        %4519 = vmatpush1.bf16.msra.mxu0 %v2468
        %4520 = vmatprep.subr.bf16.mxu0 %v2477
        %4521 = vmatpush1.bf16.msra.mxu0 %v2476
        %4522 = vmatprep.mubr.bf16.mxu0 %v3459
        %4523 = vmatmul.mubr.bf16.gmra.mrb[0].mxu0 %v3458
        %v4524 = vpop.f32.mrb[0].mxu0
        %v4525 = vadd.f32 %v4484, %v4524
        %v4526 = vpop.f32.mrb[0].mxu0
        %v4527 = vadd.f32 %v4486, %v4526
        %v4528 = vpop.f32.mrb[0].mxu0
        %v4529 = vpop.f32.mrb[0].mxu0
        %4530 = vdwg.mxu0
        %4531 = vmatprep.subr.bf16.mxu0 %v2485
        %4532 = vmatpush1.bf16.msra.mxu0 %v2484
        %4533 = vmatprep.subr.bf16.mxu0 %v2493
        %4534 = vmatpush1.bf16.msra.mxu0 %v2492
        %4535 = vmatprep.subr.bf16.mxu0 %v2501
        %4536 = vmatpush1.bf16.msra.mxu0 %v2500
        %4537 = vmatprep.subr.bf16.mxu0 %v2509
        %4538 = vmatpush1.bf16.msra.mxu0 %v2508
        %4539 = vmatprep.subr.bf16.mxu0 %v2517
        %4540 = vmatpush1.bf16.msra.mxu0 %v2516
        %4541 = vmatprep.subr.bf16.mxu0 %v2525
        %4542 = vmatpush1.bf16.msra.mxu0 %v2524
        %4543 = vmatprep.subr.bf16.mxu0 %v2533
        %4544 = vmatpush1.bf16.msra.mxu0 %v2532
        %4545 = vmatprep.subr.bf16.mxu0 %v2541
        %4546 = vmatpush1.bf16.msra.mxu0 %v2540
        %4547 = vmatprep.subr.bf16.mxu0 %v2549
        %4548 = vmatpush1.bf16.msra.mxu0 %v2548
        %4549 = vmatprep.subr.bf16.mxu0 %v2557
        %4550 = vmatpush1.bf16.msra.mxu0 %v2556
        %4551 = vmatprep.subr.bf16.mxu0 %v2565
        %4552 = vmatpush1.bf16.msra.mxu0 %v2564
        %4553 = vmatprep.subr.bf16.mxu0 %v2573
        %4554 = vmatpush1.bf16.msra.mxu0 %v2572
        %4555 = vmatprep.subr.bf16.mxu0 %v2581
        %4556 = vmatpush1.bf16.msra.mxu0 %v2580
        %4557 = vmatprep.subr.bf16.mxu0 %v2589
        %4558 = vmatpush1.bf16.msra.mxu0 %v2588
        %4559 = vmatprep.subr.bf16.mxu0 %v2597
        %4560 = vmatpush1.bf16.msra.mxu0 %v2596
        %4561 = vmatprep.subr.bf16.mxu0 %v2605
        %4562 = vmatpush1.bf16.msra.mxu0 %v2604
        %4563 = vmatprep.mubr.bf16.mxu0 %v3461
        %4564 = vmatmul.mubr.bf16.gmra.mrb[0].mxu0 %v3460
        %v4565 = vpop.f32.mrb[0].mxu0
        %v4566 = vadd.f32 %v4525, %v4565
        %v4567 = vpop.f32.mrb[0].mxu0
        %v4568 = vadd.f32 %v4527, %v4567
        %v4569 = vpop.f32.mrb[0].mxu0
        %v4570 = vpop.f32.mrb[0].mxu0
        %4571 = vdwg.mxu0
        %4572 = vmatprep.subr.bf16.mxu0 %v2613
        %4573 = vmatpush1.bf16.msra.mxu0 %v2612
        %4574 = vmatprep.subr.bf16.mxu0 %v2621
        %4575 = vmatpush1.bf16.msra.mxu0 %v2620
        %4576 = vmatprep.subr.bf16.mxu0 %v2629
        %4577 = vmatpush1.bf16.msra.mxu0 %v2628
        %4578 = vmatprep.subr.bf16.mxu0 %v2637
        %4579 = vmatpush1.bf16.msra.mxu0 %v2636
        %4580 = vmatprep.subr.bf16.mxu0 %v2645
        %4581 = vmatpush1.bf16.msra.mxu0 %v2644
        %4582 = vmatprep.subr.bf16.mxu0 %v2653
        %4583 = vmatpush1.bf16.msra.mxu0 %v2652
        %4584 = vmatprep.subr.bf16.mxu0 %v2661
        %4585 = vmatpush1.bf16.msra.mxu0 %v2660
        %4586 = vmatprep.subr.bf16.mxu0 %v2669
        %4587 = vmatpush1.bf16.msra.mxu0 %v2668
        %4588 = vmatprep.subr.bf16.mxu0 %v2677
        %4589 = vmatpush1.bf16.msra.mxu0 %v2676
        %4590 = vmatprep.subr.bf16.mxu0 %v2685
        %4591 = vmatpush1.bf16.msra.mxu0 %v2684
        %4592 = vmatprep.subr.bf16.mxu0 %v2693
        %4593 = vmatpush1.bf16.msra.mxu0 %v2692
        %4594 = vmatprep.subr.bf16.mxu0 %v2701
        %4595 = vmatpush1.bf16.msra.mxu0 %v2700
        %4596 = vmatprep.subr.bf16.mxu0 %v2709
        %4597 = vmatpush1.bf16.msra.mxu0 %v2708
        %4598 = vmatprep.subr.bf16.mxu0 %v2717
        %4599 = vmatpush1.bf16.msra.mxu0 %v2716
        %4600 = vmatprep.subr.bf16.mxu0 %v2725
        %4601 = vmatpush1.bf16.msra.mxu0 %v2724
        %4602 = vmatprep.subr.bf16.mxu0 %v2733
        %4603 = vmatpush1.bf16.msra.mxu0 %v2732
        %4604 = vmatprep.mubr.bf16.mxu0 %v3463
        %4605 = vmatmul.mubr.bf16.gmra.mrb[0].mxu0 %v3462
        %v4606 = vpop.f32.mrb[0].mxu0
        %v4607 = vadd.f32 %v4566, %v4606
        %v4608 = vpop.f32.mrb[0].mxu0
        %v4609 = vadd.f32 %v4568, %v4608
        %v4610 = vpop.f32.mrb[0].mxu0
        %v4611 = vpop.f32.mrb[0].mxu0
        %4612 = vdwg.mxu0
        %4613 = vmatprep.subr.bf16.mxu0 %v2741
        %4614 = vmatpush1.bf16.msra.mxu0 %v2740
        %4615 = vmatprep.subr.bf16.mxu0 %v2749
        %4616 = vmatpush1.bf16.msra.mxu0 %v2748
        %4617 = vmatprep.subr.bf16.mxu0 %v2757
        %4618 = vmatpush1.bf16.msra.mxu0 %v2756
        %4619 = vmatprep.subr.bf16.mxu0 %v2765
        %4620 = vmatpush1.bf16.msra.mxu0 %v2764
        %4621 = vmatprep.subr.bf16.mxu0 %v2773
        %4622 = vmatpush1.bf16.msra.mxu0 %v2772
        %4623 = vmatprep.subr.bf16.mxu0 %v2781
        %4624 = vmatpush1.bf16.msra.mxu0 %v2780
        %4625 = vmatprep.subr.bf16.mxu0 %v2789
        %4626 = vmatpush1.bf16.msra.mxu0 %v2788
        %4627 = vmatprep.subr.bf16.mxu0 %v2797
        %4628 = vmatpush1.bf16.msra.mxu0 %v2796
        %4629 = vmatprep.subr.bf16.mxu0 %v2805
        %4630 = vmatpush1.bf16.msra.mxu0 %v2804
        %4631 = vmatprep.subr.bf16.mxu0 %v2813
        %4632 = vmatpush1.bf16.msra.mxu0 %v2812
        %4633 = vmatprep.subr.bf16.mxu0 %v2821
        %4634 = vmatpush1.bf16.msra.mxu0 %v2820
        %4635 = vmatprep.subr.bf16.mxu0 %v2829
        %4636 = vmatpush1.bf16.msra.mxu0 %v2828
        %4637 = vmatprep.subr.bf16.mxu0 %v2837
        %4638 = vmatpush1.bf16.msra.mxu0 %v2836
        %4639 = vmatprep.subr.bf16.mxu0 %v2845
        %4640 = vmatpush1.bf16.msra.mxu0 %v2844
        %4641 = vmatprep.subr.bf16.mxu0 %v2853
        %4642 = vmatpush1.bf16.msra.mxu0 %v2852
        %4643 = vmatprep.subr.bf16.mxu0 %v2861
        %4644 = vmatpush1.bf16.msra.mxu0 %v2860
        %4645 = vmatprep.mubr.bf16.mxu0 %v3465
        %4646 = vmatmul.mubr.bf16.gmra.mrb[0].mxu0 %v3464
        %v4647 = vpop.f32.mrb[0].mxu0
        %v4648 = vadd.f32 %v4607, %v4647
        %v4649 = vpop.f32.mrb[0].mxu0
        %v4650 = vadd.f32 %v4609, %v4649
        %v4651 = vpop.f32.mrb[0].mxu0
        %v4652 = vpop.f32.mrb[0].mxu0
        %4653 = vdwg.mxu0
        %4654 = vmatprep.subr.bf16.mxu0 %v2869
        %4655 = vmatpush1.bf16.msra.mxu0 %v2868
        %4656 = vmatprep.subr.bf16.mxu0 %v2877
        %4657 = vmatpush1.bf16.msra.mxu0 %v2876
        %4658 = vmatprep.subr.bf16.mxu0 %v2885
        %4659 = vmatpush1.bf16.msra.mxu0 %v2884
        %4660 = vmatprep.subr.bf16.mxu0 %v2893
        %4661 = vmatpush1.bf16.msra.mxu0 %v2892
        %4662 = vmatprep.subr.bf16.mxu0 %v2901
        %4663 = vmatpush1.bf16.msra.mxu0 %v2900
        %4664 = vmatprep.subr.bf16.mxu0 %v2909
        %4665 = vmatpush1.bf16.msra.mxu0 %v2908
        %4666 = vmatprep.subr.bf16.mxu0 %v2917
        %4667 = vmatpush1.bf16.msra.mxu0 %v2916
        %4668 = vmatprep.subr.bf16.mxu0 %v2925
        %4669 = vmatpush1.bf16.msra.mxu0 %v2924
        %4670 = vmatprep.subr.bf16.mxu0 %v2933
        %4671 = vmatpush1.bf16.msra.mxu0 %v2932
        %4672 = vmatprep.subr.bf16.mxu0 %v2941
        %4673 = vmatpush1.bf16.msra.mxu0 %v2940
        %4674 = vmatprep.subr.bf16.mxu0 %v2949
        %4675 = vmatpush1.bf16.msra.mxu0 %v2948
        %4676 = vmatprep.subr.bf16.mxu0 %v2957
        %4677 = vmatpush1.bf16.msra.mxu0 %v2956
        %4678 = vmatprep.subr.bf16.mxu0 %v2965
        %4679 = vmatpush1.bf16.msra.mxu0 %v2964
        %4680 = vmatprep.subr.bf16.mxu0 %v2973
        %4681 = vmatpush1.bf16.msra.mxu0 %v2972
        %4682 = vmatprep.subr.bf16.mxu0 %v2981
        %4683 = vmatpush1.bf16.msra.mxu0 %v2980
        %4684 = vmatprep.subr.bf16.mxu0 %v2989
        %4685 = vmatpush1.bf16.msra.mxu0 %v2988
        %4686 = vmatprep.mubr.bf16.mxu0 %v3467
        %4687 = vmatmul.mubr.bf16.gmra.mrb[0].mxu0 %v3466
        %v4688 = vpop.f32.mrb[0].mxu0
        %v4689 = vadd.f32 %v4648, %v4688
        %v4690 = vpop.f32.mrb[0].mxu0
        %v4691 = vadd.f32 %v4650, %v4690
        %v4692 = vpop.f32.mrb[0].mxu0
        %v4693 = vpop.f32.mrb[0].mxu0
        %4694 = vdwg.mxu0
        %4695 = vmatprep.subr.bf16.mxu0 %v2997
        %4696 = vmatpush1.bf16.msra.mxu0 %v2996
        %4697 = vmatprep.subr.bf16.mxu0 %v3005
        %4698 = vmatpush1.bf16.msra.mxu0 %v3004
        %4699 = vmatprep.subr.bf16.mxu0 %v3013
        %4700 = vmatpush1.bf16.msra.mxu0 %v3012
        %4701 = vmatprep.subr.bf16.mxu0 %v3021
        %4702 = vmatpush1.bf16.msra.mxu0 %v3020
        %4703 = vmatprep.subr.bf16.mxu0 %v3029
        %4704 = vmatpush1.bf16.msra.mxu0 %v3028
        %4705 = vmatprep.subr.bf16.mxu0 %v3037
        %4706 = vmatpush1.bf16.msra.mxu0 %v3036
        %4707 = vmatprep.subr.bf16.mxu0 %v3045
        %4708 = vmatpush1.bf16.msra.mxu0 %v3044
        %4709 = vmatprep.subr.bf16.mxu0 %v3053
        %4710 = vmatpush1.bf16.msra.mxu0 %v3052
        %4711 = vmatprep.subr.bf16.mxu0 %v3061
        %4712 = vmatpush1.bf16.msra.mxu0 %v3060
        %4713 = vmatprep.subr.bf16.mxu0 %v3069
        %4714 = vmatpush1.bf16.msra.mxu0 %v3068
        %4715 = vmatprep.subr.bf16.mxu0 %v3077
        %4716 = vmatpush1.bf16.msra.mxu0 %v3076
        %4717 = vmatprep.subr.bf16.mxu0 %v3085
        %4718 = vmatpush1.bf16.msra.mxu0 %v3084
        %4719 = vmatprep.subr.bf16.mxu0 %v3093
        %4720 = vmatpush1.bf16.msra.mxu0 %v3092
        %4721 = vmatprep.subr.bf16.mxu0 %v3101
        %4722 = vmatpush1.bf16.msra.mxu0 %v3100
        %4723 = vmatprep.subr.bf16.mxu0 %v3109
        %4724 = vmatpush1.bf16.msra.mxu0 %v3108
        %4725 = vmatprep.subr.bf16.mxu0 %v3117
        %4726 = vmatpush1.bf16.msra.mxu0 %v3116
        %4727 = vmatprep.mubr.bf16.mxu0 %v3469
        %4728 = vmatmul.mubr.bf16.gmra.mrb[0].mxu0 %v3468
        %v4729 = vpop.f32.mrb[0].mxu0
        %v4730 = vadd.f32 %v4689, %v4729
        %v4731 = vpop.f32.mrb[0].mxu0
        %v4732 = vadd.f32 %v4691, %v4731
        %v4733 = vpop.f32.mrb[0].mxu0
        %v4734 = vpop.f32.mrb[0].mxu0
        %4735 = vdwg.mxu0
        %4736 = vmatprep.subr.bf16.mxu0 %v3125
        %4737 = vmatpush1.bf16.msra.mxu0 %v3124
        %4738 = vmatprep.subr.bf16.mxu0 %v3133
        %4739 = vmatpush1.bf16.msra.mxu0 %v3132
        %4740 = vmatprep.subr.bf16.mxu0 %v3141
        %4741 = vmatpush1.bf16.msra.mxu0 %v3140
        %4742 = vmatprep.subr.bf16.mxu0 %v3149
        %4743 = vmatpush1.bf16.msra.mxu0 %v3148
        %4744 = vmatprep.subr.bf16.mxu0 %v3157
        %4745 = vmatpush1.bf16.msra.mxu0 %v3156
        %4746 = vmatprep.subr.bf16.mxu0 %v3165
        %4747 = vmatpush1.bf16.msra.mxu0 %v3164
        %4748 = vmatprep.subr.bf16.mxu0 %v3173
        %4749 = vmatpush1.bf16.msra.mxu0 %v3172
        %4750 = vmatprep.subr.bf16.mxu0 %v3181
        %4751 = vmatpush1.bf16.msra.mxu0 %v3180
        %4752 = vmatprep.subr.bf16.mxu0 %v3189
        %4753 = vmatpush1.bf16.msra.mxu0 %v3188
        %4754 = vmatprep.subr.bf16.mxu0 %v3197
        %4755 = vmatpush1.bf16.msra.mxu0 %v3196
        %4756 = vmatprep.subr.bf16.mxu0 %v3205
        %4757 = vmatpush1.bf16.msra.mxu0 %v3204
        %4758 = vmatprep.subr.bf16.mxu0 %v3213
        %4759 = vmatpush1.bf16.msra.mxu0 %v3212
        %4760 = vmatprep.subr.bf16.mxu0 %v3221
        %4761 = vmatpush1.bf16.msra.mxu0 %v3220
        %4762 = vmatprep.subr.bf16.mxu0 %v3229
        %4763 = vmatpush1.bf16.msra.mxu0 %v3228
        %4764 = vmatprep.subr.bf16.mxu0 %v3237
        %4765 = vmatpush1.bf16.msra.mxu0 %v3236
        %4766 = vmatprep.subr.bf16.mxu0 %v3245
        %4767 = vmatpush1.bf16.msra.mxu0 %v3244
        %4768 = vmatprep.mubr.bf16.mxu0 %v3471
        %4769 = vmatmul.mubr.bf16.gmra.mrb[0].mxu0 %v3470
        %v4770 = vpop.f32.mrb[0].mxu0
        %v4771 = vadd.f32 %v4730, %v4770
        %v4772 = vpop.f32.mrb[0].mxu0
        %v4773 = vadd.f32 %v4732, %v4772
        %v4774 = vpop.f32.mrb[0].mxu0
        %v4775 = vpop.f32.mrb[0].mxu0
        %4776 = vdwg.mxu0
        %4777 = vmatprep.subr.bf16.mxu0 %v3253
        %4778 = vmatpush1.bf16.msra.mxu0 %v3252
        %4779 = vmatprep.subr.bf16.mxu0 %v3261
        %4780 = vmatpush1.bf16.msra.mxu0 %v3260
        %4781 = vmatprep.subr.bf16.mxu0 %v3269
        %4782 = vmatpush1.bf16.msra.mxu0 %v3268
        %4783 = vmatprep.subr.bf16.mxu0 %v3277
        %4784 = vmatpush1.bf16.msra.mxu0 %v3276
        %4785 = vmatprep.subr.bf16.mxu0 %v3285
        %4786 = vmatpush1.bf16.msra.mxu0 %v3284
        %4787 = vmatprep.subr.bf16.mxu0 %v3293
        %4788 = vmatpush1.bf16.msra.mxu0 %v3292
        %4789 = vmatprep.subr.bf16.mxu0 %v3301
        %4790 = vmatpush1.bf16.msra.mxu0 %v3300
        %4791 = vmatprep.subr.bf16.mxu0 %v3309
        %4792 = vmatpush1.bf16.msra.mxu0 %v3308
        %4793 = vmatprep.subr.bf16.mxu0 %v3317
        %4794 = vmatpush1.bf16.msra.mxu0 %v3316
        %4795 = vmatprep.subr.bf16.mxu0 %v3325
        %4796 = vmatpush1.bf16.msra.mxu0 %v3324
        %4797 = vmatprep.subr.bf16.mxu0 %v3333
        %4798 = vmatpush1.bf16.msra.mxu0 %v3332
        %4799 = vmatprep.subr.bf16.mxu0 %v3341
        %4800 = vmatpush1.bf16.msra.mxu0 %v3340
        %4801 = vmatprep.subr.bf16.mxu0 %v3349
        %4802 = vmatpush1.bf16.msra.mxu0 %v3348
        %4803 = vmatprep.subr.bf16.mxu0 %v3357
        %4804 = vmatpush1.bf16.msra.mxu0 %v3356
        %4805 = vmatprep.subr.bf16.mxu0 %v3365
        %4806 = vmatpush1.bf16.msra.mxu0 %v3364
        %4807 = vmatprep.subr.bf16.mxu0 %v3373
        %4808 = vmatpush1.bf16.msra.mxu0 %v3372
        %4809 = vmatprep.mubr.bf16.mxu0 %v3473
        %4810 = vmatmul.mubr.bf16.gmra.mrb[0].mxu0 %v3472
        %v4811 = vpop.f32.mrb[0].mxu0
        %v4812 = vadd.f32 %v4771, %v4811
        %v4813 = vpop.f32.mrb[0].mxu0
        %v4814 = vadd.f32 %v4773, %v4813
        %v4815 = vpop.f32.mrb[0].mxu0
        %v4816 = vpop.f32.mrb[0].mxu0
        %4817 = vdwg.mxu0
        %4818 = vmatprep.subr.bf16.mxu0 %v1335
        %4819 = vmatpush1.bf16.msra.mxu0 %v1334
        %4820 = vmatprep.subr.bf16.mxu0 %v1343
        %4821 = vmatpush1.bf16.msra.mxu0 %v1342
        %4822 = vmatprep.subr.bf16.mxu0 %v1351
        %4823 = vmatpush1.bf16.msra.mxu0 %v1350
        %4824 = vmatprep.subr.bf16.mxu0 %v1359
        %4825 = vmatpush1.bf16.msra.mxu0 %v1358
        %4826 = vmatprep.subr.bf16.mxu0 %v1367
        %4827 = vmatpush1.bf16.msra.mxu0 %v1366
        %4828 = vmatprep.subr.bf16.mxu0 %v1375
        %4829 = vmatpush1.bf16.msra.mxu0 %v1374
        %4830 = vmatprep.subr.bf16.mxu0 %v1383
        %4831 = vmatpush1.bf16.msra.mxu0 %v1382
        %4832 = vmatprep.subr.bf16.mxu0 %v1391
        %4833 = vmatpush1.bf16.msra.mxu0 %v1390
        %4834 = vmatprep.subr.bf16.mxu0 %v1399
        %4835 = vmatpush1.bf16.msra.mxu0 %v1398
        %4836 = vmatprep.subr.bf16.mxu0 %v1407
        %4837 = vmatpush1.bf16.msra.mxu0 %v1406
        %4838 = vmatprep.subr.bf16.mxu0 %v1415
        %4839 = vmatpush1.bf16.msra.mxu0 %v1414
        %4840 = vmatprep.subr.bf16.mxu0 %v1423
        %4841 = vmatpush1.bf16.msra.mxu0 %v1422
        %4842 = vmatprep.subr.bf16.mxu0 %v1431
        %4843 = vmatpush1.bf16.msra.mxu0 %v1430
        %4844 = vmatprep.subr.bf16.mxu0 %v1439
        %4845 = vmatpush1.bf16.msra.mxu0 %v1438
        %4846 = vmatprep.subr.bf16.mxu0 %v1447
        %4847 = vmatpush1.bf16.msra.mxu0 %v1446
        %4848 = vmatprep.subr.bf16.mxu0 %v1455
        %4849 = vmatpush1.bf16.msra.mxu0 %v1454
        %4850 = vmatprep.mubr.bf16.mxu0 %v3443
        %4851 = vmatmul.mubr.bf16.gmra.mrb[0].mxu0 %v3442
        %v4852 = vpop.f32.mrb[0].mxu0
        %v4853 = vadd.f32 0.0, %v4852
        %v4854 = vpop.f32.mrb[0].mxu0
        %v4855 = vadd.f32 0.0, %v4854
        %v4856 = vpop.f32.mrb[0].mxu0
        %v4857 = vpop.f32.mrb[0].mxu0
        %4858 = vdwg.mxu0
        %4859 = vmatprep.subr.bf16.mxu0 %v1463
        %4860 = vmatpush1.bf16.msra.mxu0 %v1462
        %4861 = vmatprep.subr.bf16.mxu0 %v1471
        %4862 = vmatpush1.bf16.msra.mxu0 %v1470
        %4863 = vmatprep.subr.bf16.mxu0 %v1479
        %4864 = vmatpush1.bf16.msra.mxu0 %v1478
        %4865 = vmatprep.subr.bf16.mxu0 %v1487
        %4866 = vmatpush1.bf16.msra.mxu0 %v1486
        %4867 = vmatprep.subr.bf16.mxu0 %v1495
        %4868 = vmatpush1.bf16.msra.mxu0 %v1494
        %4869 = vmatprep.subr.bf16.mxu0 %v1503
        %4870 = vmatpush1.bf16.msra.mxu0 %v1502
        %4871 = vmatprep.subr.bf16.mxu0 %v1511
        %4872 = vmatpush1.bf16.msra.mxu0 %v1510
        %4873 = vmatprep.subr.bf16.mxu0 %v1519
        %4874 = vmatpush1.bf16.msra.mxu0 %v1518
        %4875 = vmatprep.subr.bf16.mxu0 %v1527
        %4876 = vmatpush1.bf16.msra.mxu0 %v1526
        %4877 = vmatprep.subr.bf16.mxu0 %v1535
        %4878 = vmatpush1.bf16.msra.mxu0 %v1534
        %4879 = vmatprep.subr.bf16.mxu0 %v1543
        %4880 = vmatpush1.bf16.msra.mxu0 %v1542
        %4881 = vmatprep.subr.bf16.mxu0 %v1551
        %4882 = vmatpush1.bf16.msra.mxu0 %v1550
        %4883 = vmatprep.subr.bf16.mxu0 %v1559
        %4884 = vmatpush1.bf16.msra.mxu0 %v1558
        %4885 = vmatprep.subr.bf16.mxu0 %v1567
        %4886 = vmatpush1.bf16.msra.mxu0 %v1566
        %4887 = vmatprep.subr.bf16.mxu0 %v1575
        %4888 = vmatpush1.bf16.msra.mxu0 %v1574
        %4889 = vmatprep.subr.bf16.mxu0 %v1583
        %4890 = vmatpush1.bf16.msra.mxu0 %v1582
        %4891 = vmatprep.mubr.bf16.mxu0 %v3445
        %4892 = vmatmul.mubr.bf16.gmra.mrb[0].mxu0 %v3444
        %v4893 = vpop.f32.mrb[0].mxu0
        %v4894 = vadd.f32 %v4853, %v4893
        %v4895 = vpop.f32.mrb[0].mxu0
        %v4896 = vadd.f32 %v4855, %v4895
        %v4897 = vpop.f32.mrb[0].mxu0
        %v4898 = vpop.f32.mrb[0].mxu0
        %4899 = vdwg.mxu0
        %4900 = vmatprep.subr.bf16.mxu0 %v1591
        %4901 = vmatpush1.bf16.msra.mxu0 %v1590
        %4902 = vmatprep.subr.bf16.mxu0 %v1599
        %4903 = vmatpush1.bf16.msra.mxu0 %v1598
        %4904 = vmatprep.subr.bf16.mxu0 %v1607
        %4905 = vmatpush1.bf16.msra.mxu0 %v1606
        %4906 = vmatprep.subr.bf16.mxu0 %v1615
        %4907 = vmatpush1.bf16.msra.mxu0 %v1614
        %4908 = vmatprep.subr.bf16.mxu0 %v1623
        %4909 = vmatpush1.bf16.msra.mxu0 %v1622
        %4910 = vmatprep.subr.bf16.mxu0 %v1631
        %4911 = vmatpush1.bf16.msra.mxu0 %v1630
        %4912 = vmatprep.subr.bf16.mxu0 %v1639
        %4913 = vmatpush1.bf16.msra.mxu0 %v1638
        %4914 = vmatprep.subr.bf16.mxu0 %v1647
        %4915 = vmatpush1.bf16.msra.mxu0 %v1646
        %4916 = vmatprep.subr.bf16.mxu0 %v1655
        %4917 = vmatpush1.bf16.msra.mxu0 %v1654
        %4918 = vmatprep.subr.bf16.mxu0 %v1663
        %4919 = vmatpush1.bf16.msra.mxu0 %v1662
        %4920 = vmatprep.subr.bf16.mxu0 %v1671
        %4921 = vmatpush1.bf16.msra.mxu0 %v1670
        %4922 = vmatprep.subr.bf16.mxu0 %v1679
        %4923 = vmatpush1.bf16.msra.mxu0 %v1678
        %4924 = vmatprep.subr.bf16.mxu0 %v1687
        %4925 = vmatpush1.bf16.msra.mxu0 %v1686
        %4926 = vmatprep.subr.bf16.mxu0 %v1695
        %4927 = vmatpush1.bf16.msra.mxu0 %v1694
        %4928 = vmatprep.subr.bf16.mxu0 %v1703
        %4929 = vmatpush1.bf16.msra.mxu0 %v1702
        %4930 = vmatprep.subr.bf16.mxu0 %v1711
        %4931 = vmatpush1.bf16.msra.mxu0 %v1710
        %4932 = vmatprep.mubr.bf16.mxu0 %v3447
        %4933 = vmatmul.mubr.bf16.gmra.mrb[0].mxu0 %v3446
        %v4934 = vpop.f32.mrb[0].mxu0
        %v4935 = vadd.f32 %v4894, %v4934
        %v4936 = vpop.f32.mrb[0].mxu0
        %v4937 = vadd.f32 %v4896, %v4936
        %v4938 = vpop.f32.mrb[0].mxu0
        %v4939 = vpop.f32.mrb[0].mxu0
        %4940 = vdwg.mxu0
        %4941 = vmatprep.subr.bf16.mxu0 %v1719
        %4942 = vmatpush1.bf16.msra.mxu0 %v1718
        %4943 = vmatprep.subr.bf16.mxu0 %v1727
        %4944 = vmatpush1.bf16.msra.mxu0 %v1726
        %4945 = vmatprep.subr.bf16.mxu0 %v1735
        %4946 = vmatpush1.bf16.msra.mxu0 %v1734
        %4947 = vmatprep.subr.bf16.mxu0 %v1743
        %4948 = vmatpush1.bf16.msra.mxu0 %v1742
        %4949 = vmatprep.subr.bf16.mxu0 %v1751
        %4950 = vmatpush1.bf16.msra.mxu0 %v1750
        %4951 = vmatprep.subr.bf16.mxu0 %v1759
        %4952 = vmatpush1.bf16.msra.mxu0 %v1758
        %4953 = vmatprep.subr.bf16.mxu0 %v1767
        %4954 = vmatpush1.bf16.msra.mxu0 %v1766
        %4955 = vmatprep.subr.bf16.mxu0 %v1775
        %4956 = vmatpush1.bf16.msra.mxu0 %v1774
        %4957 = vmatprep.subr.bf16.mxu0 %v1783
        %4958 = vmatpush1.bf16.msra.mxu0 %v1782
        %4959 = vmatprep.subr.bf16.mxu0 %v1791
        %4960 = vmatpush1.bf16.msra.mxu0 %v1790
        %4961 = vmatprep.subr.bf16.mxu0 %v1799
        %4962 = vmatpush1.bf16.msra.mxu0 %v1798
        %4963 = vmatprep.subr.bf16.mxu0 %v1807
        %4964 = vmatpush1.bf16.msra.mxu0 %v1806
        %4965 = vmatprep.subr.bf16.mxu0 %v1815
        %4966 = vmatpush1.bf16.msra.mxu0 %v1814
        %4967 = vmatprep.subr.bf16.mxu0 %v1823
        %4968 = vmatpush1.bf16.msra.mxu0 %v1822
        %4969 = vmatprep.subr.bf16.mxu0 %v1831
        %4970 = vmatpush1.bf16.msra.mxu0 %v1830
        %4971 = vmatprep.subr.bf16.mxu0 %v1839
        %4972 = vmatpush1.bf16.msra.mxu0 %v1838
        %4973 = vmatprep.mubr.bf16.mxu0 %v3449
        %4974 = vmatmul.mubr.bf16.gmra.mrb[0].mxu0 %v3448
        %v4975 = vpop.f32.mrb[0].mxu0
        %v4976 = vadd.f32 %v4935, %v4975
        %v4977 = vpop.f32.mrb[0].mxu0
        %v4978 = vadd.f32 %v4937, %v4977
        %v4979 = vpop.f32.mrb[0].mxu0
        %v4980 = vpop.f32.mrb[0].mxu0
        %4981 = vdwg.mxu0
        %4982 = vmatprep.subr.bf16.mxu0 %v1847
        %4983 = vmatpush1.bf16.msra.mxu0 %v1846
        %4984 = vmatprep.subr.bf16.mxu0 %v1855
        %4985 = vmatpush1.bf16.msra.mxu0 %v1854
        %4986 = vmatprep.subr.bf16.mxu0 %v1863
        %4987 = vmatpush1.bf16.msra.mxu0 %v1862
        %4988 = vmatprep.subr.bf16.mxu0 %v1871
        %4989 = vmatpush1.bf16.msra.mxu0 %v1870
        %4990 = vmatprep.subr.bf16.mxu0 %v1879
        %4991 = vmatpush1.bf16.msra.mxu0 %v1878
        %4992 = vmatprep.subr.bf16.mxu0 %v1887
        %4993 = vmatpush1.bf16.msra.mxu0 %v1886
        %4994 = vmatprep.subr.bf16.mxu0 %v1895
        %4995 = vmatpush1.bf16.msra.mxu0 %v1894
        %4996 = vmatprep.subr.bf16.mxu0 %v1903
        %4997 = vmatpush1.bf16.msra.mxu0 %v1902
        %4998 = vmatprep.subr.bf16.mxu0 %v1911
        %4999 = vmatpush1.bf16.msra.mxu0 %v1910
        %5000 = vmatprep.subr.bf16.mxu0 %v1919
        %5001 = vmatpush1.bf16.msra.mxu0 %v1918
        %5002 = vmatprep.subr.bf16.mxu0 %v1927
        %5003 = vmatpush1.bf16.msra.mxu0 %v1926
        %5004 = vmatprep.subr.bf16.mxu0 %v1935
        %5005 = vmatpush1.bf16.msra.mxu0 %v1934
        %5006 = vmatprep.subr.bf16.mxu0 %v1943
        %5007 = vmatpush1.bf16.msra.mxu0 %v1942
        %5008 = vmatprep.subr.bf16.mxu0 %v1951
        %5009 = vmatpush1.bf16.msra.mxu0 %v1950
        %5010 = vmatprep.subr.bf16.mxu0 %v1959
        %5011 = vmatpush1.bf16.msra.mxu0 %v1958
        %5012 = vmatprep.subr.bf16.mxu0 %v1967
        %5013 = vmatpush1.bf16.msra.mxu0 %v1966
        %5014 = vmatprep.mubr.bf16.mxu0 %v3451
        %5015 = vmatmul.mubr.bf16.gmra.mrb[0].mxu0 %v3450
        %v5016 = vpop.f32.mrb[0].mxu0
        %v5017 = vadd.f32 %v4976, %v5016
        %v5018 = vpop.f32.mrb[0].mxu0
        %v5019 = vadd.f32 %v4978, %v5018
        %v5020 = vpop.f32.mrb[0].mxu0
        %v5021 = vpop.f32.mrb[0].mxu0
        %5022 = vdwg.mxu0
        %5023 = vmatprep.subr.bf16.mxu0 %v1975
        %5024 = vmatpush1.bf16.msra.mxu0 %v1974
        %5025 = vmatprep.subr.bf16.mxu0 %v1983
        %5026 = vmatpush1.bf16.msra.mxu0 %v1982
        %5027 = vmatprep.subr.bf16.mxu0 %v1991
        %5028 = vmatpush1.bf16.msra.mxu0 %v1990
        %5029 = vmatprep.subr.bf16.mxu0 %v1999
        %5030 = vmatpush1.bf16.msra.mxu0 %v1998
        %5031 = vmatprep.subr.bf16.mxu0 %v2007
        %5032 = vmatpush1.bf16.msra.mxu0 %v2006
        %5033 = vmatprep.subr.bf16.mxu0 %v2015
        %5034 = vmatpush1.bf16.msra.mxu0 %v2014
        %5035 = vmatprep.subr.bf16.mxu0 %v2023
        %5036 = vmatpush1.bf16.msra.mxu0 %v2022
        %5037 = vmatprep.subr.bf16.mxu0 %v2031
        %5038 = vmatpush1.bf16.msra.mxu0 %v2030
        %5039 = vmatprep.subr.bf16.mxu0 %v2039
        %5040 = vmatpush1.bf16.msra.mxu0 %v2038
        %5041 = vmatprep.subr.bf16.mxu0 %v2047
        %5042 = vmatpush1.bf16.msra.mxu0 %v2046
        %5043 = vmatprep.subr.bf16.mxu0 %v2055
        %5044 = vmatpush1.bf16.msra.mxu0 %v2054
        %5045 = vmatprep.subr.bf16.mxu0 %v2063
        %5046 = vmatpush1.bf16.msra.mxu0 %v2062
        %5047 = vmatprep.subr.bf16.mxu0 %v2071
        %5048 = vmatpush1.bf16.msra.mxu0 %v2070
        %5049 = vmatprep.subr.bf16.mxu0 %v2079
        %5050 = vmatpush1.bf16.msra.mxu0 %v2078
        %5051 = vmatprep.subr.bf16.mxu0 %v2087
        %5052 = vmatpush1.bf16.msra.mxu0 %v2086
        %5053 = vmatprep.subr.bf16.mxu0 %v2095
        %5054 = vmatpush1.bf16.msra.mxu0 %v2094
        %5055 = vmatprep.mubr.bf16.mxu0 %v3453
        %5056 = vmatmul.mubr.bf16.gmra.mrb[0].mxu0 %v3452
        %v5057 = vpop.f32.mrb[0].mxu0
        %v5058 = vadd.f32 %v5017, %v5057
        %v5059 = vpop.f32.mrb[0].mxu0
        %v5060 = vadd.f32 %v5019, %v5059
        %v5061 = vpop.f32.mrb[0].mxu0
        %v5062 = vpop.f32.mrb[0].mxu0
        %5063 = vdwg.mxu0
        %5064 = vmatprep.subr.bf16.mxu0 %v2103
        %5065 = vmatpush1.bf16.msra.mxu0 %v2102
        %5066 = vmatprep.subr.bf16.mxu0 %v2111
        %5067 = vmatpush1.bf16.msra.mxu0 %v2110
        %5068 = vmatprep.subr.bf16.mxu0 %v2119
        %5069 = vmatpush1.bf16.msra.mxu0 %v2118
        %5070 = vmatprep.subr.bf16.mxu0 %v2127
        %5071 = vmatpush1.bf16.msra.mxu0 %v2126
        %5072 = vmatprep.subr.bf16.mxu0 %v2135
        %5073 = vmatpush1.bf16.msra.mxu0 %v2134
        %5074 = vmatprep.subr.bf16.mxu0 %v2143
        %5075 = vmatpush1.bf16.msra.mxu0 %v2142
        %5076 = vmatprep.subr.bf16.mxu0 %v2151
        %5077 = vmatpush1.bf16.msra.mxu0 %v2150
        %5078 = vmatprep.subr.bf16.mxu0 %v2159
        %5079 = vmatpush1.bf16.msra.mxu0 %v2158
        %5080 = vmatprep.subr.bf16.mxu0 %v2167
        %5081 = vmatpush1.bf16.msra.mxu0 %v2166
        %5082 = vmatprep.subr.bf16.mxu0 %v2175
        %5083 = vmatpush1.bf16.msra.mxu0 %v2174
        %5084 = vmatprep.subr.bf16.mxu0 %v2183
        %5085 = vmatpush1.bf16.msra.mxu0 %v2182
        %5086 = vmatprep.subr.bf16.mxu0 %v2191
        %5087 = vmatpush1.bf16.msra.mxu0 %v2190
        %5088 = vmatprep.subr.bf16.mxu0 %v2199
        %5089 = vmatpush1.bf16.msra.mxu0 %v2198
        %5090 = vmatprep.subr.bf16.mxu0 %v2207
        %5091 = vmatpush1.bf16.msra.mxu0 %v2206
        %5092 = vmatprep.subr.bf16.mxu0 %v2215
        %5093 = vmatpush1.bf16.msra.mxu0 %v2214
        %5094 = vmatprep.subr.bf16.mxu0 %v2223
        %5095 = vmatpush1.bf16.msra.mxu0 %v2222
        %5096 = vmatprep.mubr.bf16.mxu0 %v3455
        %5097 = vmatmul.mubr.bf16.gmra.mrb[0].mxu0 %v3454
        %v5098 = vpop.f32.mrb[0].mxu0
        %v5099 = vadd.f32 %v5058, %v5098
        %v5100 = vpop.f32.mrb[0].mxu0
        %v5101 = vadd.f32 %v5060, %v5100
        %v5102 = vpop.f32.mrb[0].mxu0
        %v5103 = vpop.f32.mrb[0].mxu0
        %5104 = vdwg.mxu0
        %5105 = vmatprep.subr.bf16.mxu0 %v2231
        %5106 = vmatpush1.bf16.msra.mxu0 %v2230
        %5107 = vmatprep.subr.bf16.mxu0 %v2239
        %5108 = vmatpush1.bf16.msra.mxu0 %v2238
        %5109 = vmatprep.subr.bf16.mxu0 %v2247
        %5110 = vmatpush1.bf16.msra.mxu0 %v2246
        %5111 = vmatprep.subr.bf16.mxu0 %v2255
        %5112 = vmatpush1.bf16.msra.mxu0 %v2254
        %5113 = vmatprep.subr.bf16.mxu0 %v2263
        %5114 = vmatpush1.bf16.msra.mxu0 %v2262
        %5115 = vmatprep.subr.bf16.mxu0 %v2271
        %5116 = vmatpush1.bf16.msra.mxu0 %v2270
        %5117 = vmatprep.subr.bf16.mxu0 %v2279
        %5118 = vmatpush1.bf16.msra.mxu0 %v2278
        %5119 = vmatprep.subr.bf16.mxu0 %v2287
        %5120 = vmatpush1.bf16.msra.mxu0 %v2286
        %5121 = vmatprep.subr.bf16.mxu0 %v2295
        %5122 = vmatpush1.bf16.msra.mxu0 %v2294
        %5123 = vmatprep.subr.bf16.mxu0 %v2303
        %5124 = vmatpush1.bf16.msra.mxu0 %v2302
        %5125 = vmatprep.subr.bf16.mxu0 %v2311
        %5126 = vmatpush1.bf16.msra.mxu0 %v2310
        %5127 = vmatprep.subr.bf16.mxu0 %v2319
        %5128 = vmatpush1.bf16.msra.mxu0 %v2318
        %5129 = vmatprep.subr.bf16.mxu0 %v2327
        %5130 = vmatpush1.bf16.msra.mxu0 %v2326
        %5131 = vmatprep.subr.bf16.mxu0 %v2335
        %5132 = vmatpush1.bf16.msra.mxu0 %v2334
        %5133 = vmatprep.subr.bf16.mxu0 %v2343
        %5134 = vmatpush1.bf16.msra.mxu0 %v2342
        %5135 = vmatprep.subr.bf16.mxu0 %v2351
        %5136 = vmatpush1.bf16.msra.mxu0 %v2350
        %5137 = vmatprep.mubr.bf16.mxu0 %v3457
        %5138 = vmatmul.mubr.bf16.gmra.mrb[0].mxu0 %v3456
        %v5139 = vpop.f32.mrb[0].mxu0
        %v5140 = vadd.f32 %v5099, %v5139
        %v5141 = vpop.f32.mrb[0].mxu0
        %v5142 = vadd.f32 %v5101, %v5141
        %v5143 = vpop.f32.mrb[0].mxu0
        %v5144 = vpop.f32.mrb[0].mxu0
        %5145 = vdwg.mxu0
        %5146 = vmatprep.subr.bf16.mxu0 %v2359
        %5147 = vmatpush1.bf16.msra.mxu0 %v2358
        %5148 = vmatprep.subr.bf16.mxu0 %v2367
        %5149 = vmatpush1.bf16.msra.mxu0 %v2366
        %5150 = vmatprep.subr.bf16.mxu0 %v2375
        %5151 = vmatpush1.bf16.msra.mxu0 %v2374
        %5152 = vmatprep.subr.bf16.mxu0 %v2383
        %5153 = vmatpush1.bf16.msra.mxu0 %v2382
        %5154 = vmatprep.subr.bf16.mxu0 %v2391
        %5155 = vmatpush1.bf16.msra.mxu0 %v2390
        %5156 = vmatprep.subr.bf16.mxu0 %v2399
        %5157 = vmatpush1.bf16.msra.mxu0 %v2398
        %5158 = vmatprep.subr.bf16.mxu0 %v2407
        %5159 = vmatpush1.bf16.msra.mxu0 %v2406
        %5160 = vmatprep.subr.bf16.mxu0 %v2415
        %5161 = vmatpush1.bf16.msra.mxu0 %v2414
        %5162 = vmatprep.subr.bf16.mxu0 %v2423
        %5163 = vmatpush1.bf16.msra.mxu0 %v2422
        %5164 = vmatprep.subr.bf16.mxu0 %v2431
        %5165 = vmatpush1.bf16.msra.mxu0 %v2430
        %5166 = vmatprep.subr.bf16.mxu0 %v2439
        %5167 = vmatpush1.bf16.msra.mxu0 %v2438
        %5168 = vmatprep.subr.bf16.mxu0 %v2447
        %5169 = vmatpush1.bf16.msra.mxu0 %v2446
        %5170 = vmatprep.subr.bf16.mxu0 %v2455
        %5171 = vmatpush1.bf16.msra.mxu0 %v2454
        %5172 = vmatprep.subr.bf16.mxu0 %v2463
        %5173 = vmatpush1.bf16.msra.mxu0 %v2462
        %5174 = vmatprep.subr.bf16.mxu0 %v2471
        %5175 = vmatpush1.bf16.msra.mxu0 %v2470
        %5176 = vmatprep.subr.bf16.mxu0 %v2479
        %5177 = vmatpush1.bf16.msra.mxu0 %v2478
        %5178 = vmatprep.mubr.bf16.mxu0 %v3459
        %5179 = vmatmul.mubr.bf16.gmra.mrb[0].mxu0 %v3458
        %v5180 = vpop.f32.mrb[0].mxu0
        %v5181 = vadd.f32 %v5140, %v5180
        %v5182 = vpop.f32.mrb[0].mxu0
        %v5183 = vadd.f32 %v5142, %v5182
        %v5184 = vpop.f32.mrb[0].mxu0
        %v5185 = vpop.f32.mrb[0].mxu0
        %5186 = vdwg.mxu0
        %5187 = vmatprep.subr.bf16.mxu0 %v2487
        %5188 = vmatpush1.bf16.msra.mxu0 %v2486
        %5189 = vmatprep.subr.bf16.mxu0 %v2495
        %5190 = vmatpush1.bf16.msra.mxu0 %v2494
        %5191 = vmatprep.subr.bf16.mxu0 %v2503
        %5192 = vmatpush1.bf16.msra.mxu0 %v2502
        %5193 = vmatprep.subr.bf16.mxu0 %v2511
        %5194 = vmatpush1.bf16.msra.mxu0 %v2510
        %5195 = vmatprep.subr.bf16.mxu0 %v2519
        %5196 = vmatpush1.bf16.msra.mxu0 %v2518
        %5197 = vmatprep.subr.bf16.mxu0 %v2527
        %5198 = vmatpush1.bf16.msra.mxu0 %v2526
        %5199 = vmatprep.subr.bf16.mxu0 %v2535
        %5200 = vmatpush1.bf16.msra.mxu0 %v2534
        %5201 = vmatprep.subr.bf16.mxu0 %v2543
        %5202 = vmatpush1.bf16.msra.mxu0 %v2542
        %5203 = vmatprep.subr.bf16.mxu0 %v2551
        %5204 = vmatpush1.bf16.msra.mxu0 %v2550
        %5205 = vmatprep.subr.bf16.mxu0 %v2559
        %5206 = vmatpush1.bf16.msra.mxu0 %v2558
        %5207 = vmatprep.subr.bf16.mxu0 %v2567
        %5208 = vmatpush1.bf16.msra.mxu0 %v2566
        %5209 = vmatprep.subr.bf16.mxu0 %v2575
        %5210 = vmatpush1.bf16.msra.mxu0 %v2574
        %5211 = vmatprep.subr.bf16.mxu0 %v2583
        %5212 = vmatpush1.bf16.msra.mxu0 %v2582
        %5213 = vmatprep.subr.bf16.mxu0 %v2591
        %5214 = vmatpush1.bf16.msra.mxu0 %v2590
        %5215 = vmatprep.subr.bf16.mxu0 %v2599
        %5216 = vmatpush1.bf16.msra.mxu0 %v2598
        %5217 = vmatprep.subr.bf16.mxu0 %v2607
        %5218 = vmatpush1.bf16.msra.mxu0 %v2606
        %5219 = vmatprep.mubr.bf16.mxu0 %v3461
        %5220 = vmatmul.mubr.bf16.gmra.mrb[0].mxu0 %v3460
        %v5221 = vpop.f32.mrb[0].mxu0
        %v5222 = vadd.f32 %v5181, %v5221
        %v5223 = vpop.f32.mrb[0].mxu0
        %v5224 = vadd.f32 %v5183, %v5223
        %v5225 = vpop.f32.mrb[0].mxu0
        %v5226 = vpop.f32.mrb[0].mxu0
        %5227 = vdwg.mxu0
        %5228 = vmatprep.subr.bf16.mxu0 %v2615
        %5229 = vmatpush1.bf16.msra.mxu0 %v2614
        %5230 = vmatprep.subr.bf16.mxu0 %v2623
        %5231 = vmatpush1.bf16.msra.mxu0 %v2622
        %5232 = vmatprep.subr.bf16.mxu0 %v2631
        %5233 = vmatpush1.bf16.msra.mxu0 %v2630
        %5234 = vmatprep.subr.bf16.mxu0 %v2639
        %5235 = vmatpush1.bf16.msra.mxu0 %v2638
        %5236 = vmatprep.subr.bf16.mxu0 %v2647
        %5237 = vmatpush1.bf16.msra.mxu0 %v2646
        %5238 = vmatprep.subr.bf16.mxu0 %v2655
        %5239 = vmatpush1.bf16.msra.mxu0 %v2654
        %5240 = vmatprep.subr.bf16.mxu0 %v2663
        %5241 = vmatpush1.bf16.msra.mxu0 %v2662
        %5242 = vmatprep.subr.bf16.mxu0 %v2671
        %5243 = vmatpush1.bf16.msra.mxu0 %v2670
        %5244 = vmatprep.subr.bf16.mxu0 %v2679
        %5245 = vmatpush1.bf16.msra.mxu0 %v2678
        %5246 = vmatprep.subr.bf16.mxu0 %v2687
        %5247 = vmatpush1.bf16.msra.mxu0 %v2686
        %5248 = vmatprep.subr.bf16.mxu0 %v2695
        %5249 = vmatpush1.bf16.msra.mxu0 %v2694
        %5250 = vmatprep.subr.bf16.mxu0 %v2703
        %5251 = vmatpush1.bf16.msra.mxu0 %v2702
        %5252 = vmatprep.subr.bf16.mxu0 %v2711
        %5253 = vmatpush1.bf16.msra.mxu0 %v2710
        %5254 = vmatprep.subr.bf16.mxu0 %v2719
        %5255 = vmatpush1.bf16.msra.mxu0 %v2718
        %5256 = vmatprep.subr.bf16.mxu0 %v2727
        %5257 = vmatpush1.bf16.msra.mxu0 %v2726
        %5258 = vmatprep.subr.bf16.mxu0 %v2735
        %5259 = vmatpush1.bf16.msra.mxu0 %v2734
        %5260 = vmatprep.mubr.bf16.mxu0 %v3463
        %5261 = vmatmul.mubr.bf16.gmra.mrb[0].mxu0 %v3462
        %v5262 = vpop.f32.mrb[0].mxu0
        %v5263 = vadd.f32 %v5222, %v5262
        %v5264 = vpop.f32.mrb[0].mxu0
        %v5265 = vadd.f32 %v5224, %v5264
        %v5266 = vpop.f32.mrb[0].mxu0
        %v5267 = vpop.f32.mrb[0].mxu0
        %5268 = vdwg.mxu0
        %5269 = vmatprep.subr.bf16.mxu0 %v2743
        %5270 = vmatpush1.bf16.msra.mxu0 %v2742
        %5271 = vmatprep.subr.bf16.mxu0 %v2751
        %5272 = vmatpush1.bf16.msra.mxu0 %v2750
        %5273 = vmatprep.subr.bf16.mxu0 %v2759
        %5274 = vmatpush1.bf16.msra.mxu0 %v2758
        %5275 = vmatprep.subr.bf16.mxu0 %v2767
        %5276 = vmatpush1.bf16.msra.mxu0 %v2766
        %5277 = vmatprep.subr.bf16.mxu0 %v2775
        %5278 = vmatpush1.bf16.msra.mxu0 %v2774
        %5279 = vmatprep.subr.bf16.mxu0 %v2783
        %5280 = vmatpush1.bf16.msra.mxu0 %v2782
        %5281 = vmatprep.subr.bf16.mxu0 %v2791
        %5282 = vmatpush1.bf16.msra.mxu0 %v2790
        %5283 = vmatprep.subr.bf16.mxu0 %v2799
        %5284 = vmatpush1.bf16.msra.mxu0 %v2798
        %5285 = vmatprep.subr.bf16.mxu0 %v2807
        %5286 = vmatpush1.bf16.msra.mxu0 %v2806
        %5287 = vmatprep.subr.bf16.mxu0 %v2815
        %5288 = vmatpush1.bf16.msra.mxu0 %v2814
        %5289 = vmatprep.subr.bf16.mxu0 %v2823
        %5290 = vmatpush1.bf16.msra.mxu0 %v2822
        %5291 = vmatprep.subr.bf16.mxu0 %v2831
        %5292 = vmatpush1.bf16.msra.mxu0 %v2830
        %5293 = vmatprep.subr.bf16.mxu0 %v2839
        %5294 = vmatpush1.bf16.msra.mxu0 %v2838
        %5295 = vmatprep.subr.bf16.mxu0 %v2847
        %5296 = vmatpush1.bf16.msra.mxu0 %v2846
        %5297 = vmatprep.subr.bf16.mxu0 %v2855
        %5298 = vmatpush1.bf16.msra.mxu0 %v2854
        %5299 = vmatprep.subr.bf16.mxu0 %v2863
        %5300 = vmatpush1.bf16.msra.mxu0 %v2862
        %5301 = vmatprep.mubr.bf16.mxu0 %v3465
        %5302 = vmatmul.mubr.bf16.gmra.mrb[0].mxu0 %v3464
        %v5303 = vpop.f32.mrb[0].mxu0
        %v5304 = vadd.f32 %v5263, %v5303
        %v5305 = vpop.f32.mrb[0].mxu0
        %v5306 = vadd.f32 %v5265, %v5305
        %v5307 = vpop.f32.mrb[0].mxu0
        %v5308 = vpop.f32.mrb[0].mxu0
        %5309 = vdwg.mxu0
        %5310 = vmatprep.subr.bf16.mxu0 %v2871
        %5311 = vmatpush1.bf16.msra.mxu0 %v2870
        %5312 = vmatprep.subr.bf16.mxu0 %v2879
        %5313 = vmatpush1.bf16.msra.mxu0 %v2878
        %5314 = vmatprep.subr.bf16.mxu0 %v2887
        %5315 = vmatpush1.bf16.msra.mxu0 %v2886
        %5316 = vmatprep.subr.bf16.mxu0 %v2895
        %5317 = vmatpush1.bf16.msra.mxu0 %v2894
        %5318 = vmatprep.subr.bf16.mxu0 %v2903
        %5319 = vmatpush1.bf16.msra.mxu0 %v2902
        %5320 = vmatprep.subr.bf16.mxu0 %v2911
        %5321 = vmatpush1.bf16.msra.mxu0 %v2910
        %5322 = vmatprep.subr.bf16.mxu0 %v2919
        %5323 = vmatpush1.bf16.msra.mxu0 %v2918
        %5324 = vmatprep.subr.bf16.mxu0 %v2927
        %5325 = vmatpush1.bf16.msra.mxu0 %v2926
        %5326 = vmatprep.subr.bf16.mxu0 %v2935
        %5327 = vmatpush1.bf16.msra.mxu0 %v2934
        %5328 = vmatprep.subr.bf16.mxu0 %v2943
        %5329 = vmatpush1.bf16.msra.mxu0 %v2942
        %5330 = vmatprep.subr.bf16.mxu0 %v2951
        %5331 = vmatpush1.bf16.msra.mxu0 %v2950
        %5332 = vmatprep.subr.bf16.mxu0 %v2959
        %5333 = vmatpush1.bf16.msra.mxu0 %v2958
        %5334 = vmatprep.subr.bf16.mxu0 %v2967
        %5335 = vmatpush1.bf16.msra.mxu0 %v2966
        %5336 = vmatprep.subr.bf16.mxu0 %v2975
        %5337 = vmatpush1.bf16.msra.mxu0 %v2974
        %5338 = vmatprep.subr.bf16.mxu0 %v2983
        %5339 = vmatpush1.bf16.msra.mxu0 %v2982
        %5340 = vmatprep.subr.bf16.mxu0 %v2991
        %5341 = vmatpush1.bf16.msra.mxu0 %v2990
        %5342 = vmatprep.mubr.bf16.mxu0 %v3467
        %5343 = vmatmul.mubr.bf16.gmra.mrb[0].mxu0 %v3466
        %v5344 = vpop.f32.mrb[0].mxu0
        %v5345 = vadd.f32 %v5304, %v5344
        %v5346 = vpop.f32.mrb[0].mxu0
        %v5347 = vadd.f32 %v5306, %v5346
        %v5348 = vpop.f32.mrb[0].mxu0
        %v5349 = vpop.f32.mrb[0].mxu0
        %5350 = vdwg.mxu0
        %5351 = vmatprep.subr.bf16.mxu0 %v2999
        %5352 = vmatpush1.bf16.msra.mxu0 %v2998
        %5353 = vmatprep.subr.bf16.mxu0 %v3007
        %5354 = vmatpush1.bf16.msra.mxu0 %v3006
        %5355 = vmatprep.subr.bf16.mxu0 %v3015
        %5356 = vmatpush1.bf16.msra.mxu0 %v3014
        %5357 = vmatprep.subr.bf16.mxu0 %v3023
        %5358 = vmatpush1.bf16.msra.mxu0 %v3022
        %5359 = vmatprep.subr.bf16.mxu0 %v3031
        %5360 = vmatpush1.bf16.msra.mxu0 %v3030
        %5361 = vmatprep.subr.bf16.mxu0 %v3039
        %5362 = vmatpush1.bf16.msra.mxu0 %v3038
        %5363 = vmatprep.subr.bf16.mxu0 %v3047
        %5364 = vmatpush1.bf16.msra.mxu0 %v3046
        %5365 = vmatprep.subr.bf16.mxu0 %v3055
        %5366 = vmatpush1.bf16.msra.mxu0 %v3054
        %5367 = vmatprep.subr.bf16.mxu0 %v3063
        %5368 = vmatpush1.bf16.msra.mxu0 %v3062
        %5369 = vmatprep.subr.bf16.mxu0 %v3071
        %5370 = vmatpush1.bf16.msra.mxu0 %v3070
        %5371 = vmatprep.subr.bf16.mxu0 %v3079
        %5372 = vmatpush1.bf16.msra.mxu0 %v3078
        %5373 = vmatprep.subr.bf16.mxu0 %v3087
        %5374 = vmatpush1.bf16.msra.mxu0 %v3086
        %5375 = vmatprep.subr.bf16.mxu0 %v3095
        %5376 = vmatpush1.bf16.msra.mxu0 %v3094
        %5377 = vmatprep.subr.bf16.mxu0 %v3103
        %5378 = vmatpush1.bf16.msra.mxu0 %v3102
        %5379 = vmatprep.subr.bf16.mxu0 %v3111
        %5380 = vmatpush1.bf16.msra.mxu0 %v3110
        %5381 = vmatprep.subr.bf16.mxu0 %v3119
        %5382 = vmatpush1.bf16.msra.mxu0 %v3118
        %5383 = vmatprep.mubr.bf16.mxu0 %v3469
        %5384 = vmatmul.mubr.bf16.gmra.mrb[0].mxu0 %v3468
        %v5385 = vpop.f32.mrb[0].mxu0
        %v5386 = vadd.f32 %v5345, %v5385
        %v5387 = vpop.f32.mrb[0].mxu0
        %v5388 = vadd.f32 %v5347, %v5387
        %v5389 = vpop.f32.mrb[0].mxu0
        %v5390 = vpop.f32.mrb[0].mxu0
        %5391 = vdwg.mxu0
        %5392 = vmatprep.subr.bf16.mxu0 %v3127
        %5393 = vmatpush1.bf16.msra.mxu0 %v3126
        %5394 = vmatprep.subr.bf16.mxu0 %v3135
        %5395 = vmatpush1.bf16.msra.mxu0 %v3134
        %5396 = vmatprep.subr.bf16.mxu0 %v3143
        %5397 = vmatpush1.bf16.msra.mxu0 %v3142
        %5398 = vmatprep.subr.bf16.mxu0 %v3151
        %5399 = vmatpush1.bf16.msra.mxu0 %v3150
        %5400 = vmatprep.subr.bf16.mxu0 %v3159
        %5401 = vmatpush1.bf16.msra.mxu0 %v3158
        %5402 = vmatprep.subr.bf16.mxu0 %v3167
        %5403 = vmatpush1.bf16.msra.mxu0 %v3166
        %5404 = vmatprep.subr.bf16.mxu0 %v3175
        %5405 = vmatpush1.bf16.msra.mxu0 %v3174
        %5406 = vmatprep.subr.bf16.mxu0 %v3183
        %5407 = vmatpush1.bf16.msra.mxu0 %v3182
        %5408 = vmatprep.subr.bf16.mxu0 %v3191
        %5409 = vmatpush1.bf16.msra.mxu0 %v3190
        %5410 = vmatprep.subr.bf16.mxu0 %v3199
        %5411 = vmatpush1.bf16.msra.mxu0 %v3198
        %5412 = vmatprep.subr.bf16.mxu0 %v3207
        %5413 = vmatpush1.bf16.msra.mxu0 %v3206
        %5414 = vmatprep.subr.bf16.mxu0 %v3215
        %5415 = vmatpush1.bf16.msra.mxu0 %v3214
        %5416 = vmatprep.subr.bf16.mxu0 %v3223
        %5417 = vmatpush1.bf16.msra.mxu0 %v3222
        %5418 = vmatprep.subr.bf16.mxu0 %v3231
        %5419 = vmatpush1.bf16.msra.mxu0 %v3230
        %5420 = vmatprep.subr.bf16.mxu0 %v3239
        %5421 = vmatpush1.bf16.msra.mxu0 %v3238
        %5422 = vmatprep.subr.bf16.mxu0 %v3247
        %5423 = vmatpush1.bf16.msra.mxu0 %v3246
        %5424 = vmatprep.mubr.bf16.mxu0 %v3471
        %5425 = vmatmul.mubr.bf16.gmra.mrb[0].mxu0 %v3470
        %v5426 = vpop.f32.mrb[0].mxu0
        %v5427 = vadd.f32 %v5386, %v5426
        %v5428 = vpop.f32.mrb[0].mxu0
        %v5429 = vadd.f32 %v5388, %v5428
        %v5430 = vpop.f32.mrb[0].mxu0
        %v5431 = vpop.f32.mrb[0].mxu0
        %5432 = vdwg.mxu0
        %5433 = vmatprep.subr.bf16.mxu0 %v3255
        %5434 = vmatpush1.bf16.msra.mxu0 %v3254
        %5435 = vmatprep.subr.bf16.mxu0 %v3263
        %5436 = vmatpush1.bf16.msra.mxu0 %v3262
        %5437 = vmatprep.subr.bf16.mxu0 %v3271
        %5438 = vmatpush1.bf16.msra.mxu0 %v3270
        %5439 = vmatprep.subr.bf16.mxu0 %v3279
        %5440 = vmatpush1.bf16.msra.mxu0 %v3278
        %5441 = vmatprep.subr.bf16.mxu0 %v3287
        %5442 = vmatpush1.bf16.msra.mxu0 %v3286
        %5443 = vmatprep.subr.bf16.mxu0 %v3295
        %5444 = vmatpush1.bf16.msra.mxu0 %v3294
        %5445 = vmatprep.subr.bf16.mxu0 %v3303
        %5446 = vmatpush1.bf16.msra.mxu0 %v3302
        %5447 = vmatprep.subr.bf16.mxu0 %v3311
        %5448 = vmatpush1.bf16.msra.mxu0 %v3310
        %5449 = vmatprep.subr.bf16.mxu0 %v3319
        %5450 = vmatpush1.bf16.msra.mxu0 %v3318
        %5451 = vmatprep.subr.bf16.mxu0 %v3327
        %5452 = vmatpush1.bf16.msra.mxu0 %v3326
        %5453 = vmatprep.subr.bf16.mxu0 %v3335
        %5454 = vmatpush1.bf16.msra.mxu0 %v3334
        %5455 = vmatprep.subr.bf16.mxu0 %v3343
        %5456 = vmatpush1.bf16.msra.mxu0 %v3342
        %5457 = vmatprep.subr.bf16.mxu0 %v3351
        %5458 = vmatpush1.bf16.msra.mxu0 %v3350
        %5459 = vmatprep.subr.bf16.mxu0 %v3359
        %5460 = vmatpush1.bf16.msra.mxu0 %v3358
        %5461 = vmatprep.subr.bf16.mxu0 %v3367
        %5462 = vmatpush1.bf16.msra.mxu0 %v3366
        %5463 = vmatprep.subr.bf16.mxu0 %v3375
        %5464 = vmatpush1.bf16.msra.mxu0 %v3374
        %5465 = vmatprep.mubr.bf16.mxu0 %v3473
        %5466 = vmatmul.mubr.bf16.gmra.mrb[0].mxu0 %v3472
        %v5467 = vpop.f32.mrb[0].mxu0
        %v5468 = vadd.f32 %v5427, %v5467
        %v5469 = vpop.f32.mrb[0].mxu0
        %v5470 = vadd.f32 %v5429, %v5469
        %v5471 = vpop.f32.mrb[0].mxu0
        %v5472 = vpop.f32.mrb[0].mxu0
        %5473 = vdwg.mxu0
        %5474 = vmatprep.subr.bf16.mxu0 %v1337
        %5475 = vmatpush1.bf16.msra.mxu0 %v1336
        %5476 = vmatprep.subr.bf16.mxu0 %v1345
        %5477 = vmatpush1.bf16.msra.mxu0 %v1344
        %5478 = vmatprep.subr.bf16.mxu0 %v1353
        %5479 = vmatpush1.bf16.msra.mxu0 %v1352
        %5480 = vmatprep.subr.bf16.mxu0 %v1361
        %5481 = vmatpush1.bf16.msra.mxu0 %v1360
        %5482 = vmatprep.subr.bf16.mxu0 %v1369
        %5483 = vmatpush1.bf16.msra.mxu0 %v1368
        %5484 = vmatprep.subr.bf16.mxu0 %v1377
        %5485 = vmatpush1.bf16.msra.mxu0 %v1376
        %5486 = vmatprep.subr.bf16.mxu0 %v1385
        %5487 = vmatpush1.bf16.msra.mxu0 %v1384
        %5488 = vmatprep.subr.bf16.mxu0 %v1393
        %5489 = vmatpush1.bf16.msra.mxu0 %v1392
        %5490 = vmatprep.subr.bf16.mxu0 %v1401
        %5491 = vmatpush1.bf16.msra.mxu0 %v1400
        %5492 = vmatprep.subr.bf16.mxu0 %v1409
        %5493 = vmatpush1.bf16.msra.mxu0 %v1408
        %5494 = vmatprep.subr.bf16.mxu0 %v1417
        %5495 = vmatpush1.bf16.msra.mxu0 %v1416
        %5496 = vmatprep.subr.bf16.mxu0 %v1425
        %5497 = vmatpush1.bf16.msra.mxu0 %v1424
        %5498 = vmatprep.subr.bf16.mxu0 %v1433
        %5499 = vmatpush1.bf16.msra.mxu0 %v1432
        %5500 = vmatprep.subr.bf16.mxu0 %v1441
        %5501 = vmatpush1.bf16.msra.mxu0 %v1440
        %5502 = vmatprep.subr.bf16.mxu0 %v1449
        %5503 = vmatpush1.bf16.msra.mxu0 %v1448
        %5504 = vmatprep.subr.bf16.mxu0 %v1457
        %5505 = vmatpush1.bf16.msra.mxu0 %v1456
        %5506 = vmatprep.mubr.bf16.mxu0 %v3443
        %5507 = vmatmul.mubr.bf16.gmra.mrb[0].mxu0 %v3442
        %v5508 = vpop.f32.mrb[0].mxu0
        %v5509 = vadd.f32 0.0, %v5508
        %v5510 = vpop.f32.mrb[0].mxu0
        %v5511 = vadd.f32 0.0, %v5510
        %v5512 = vpop.f32.mrb[0].mxu0
        %v5513 = vpop.f32.mrb[0].mxu0
        %5514 = vdwg.mxu0
        %5515 = vmatprep.subr.bf16.mxu0 %v1465
        %5516 = vmatpush1.bf16.msra.mxu0 %v1464
        %5517 = vmatprep.subr.bf16.mxu0 %v1473
        %5518 = vmatpush1.bf16.msra.mxu0 %v1472
        %5519 = vmatprep.subr.bf16.mxu0 %v1481
        %5520 = vmatpush1.bf16.msra.mxu0 %v1480
        %5521 = vmatprep.subr.bf16.mxu0 %v1489
        %5522 = vmatpush1.bf16.msra.mxu0 %v1488
        %5523 = vmatprep.subr.bf16.mxu0 %v1497
        %5524 = vmatpush1.bf16.msra.mxu0 %v1496
        %5525 = vmatprep.subr.bf16.mxu0 %v1505
        %5526 = vmatpush1.bf16.msra.mxu0 %v1504
        %5527 = vmatprep.subr.bf16.mxu0 %v1513
        %5528 = vmatpush1.bf16.msra.mxu0 %v1512
        %5529 = vmatprep.subr.bf16.mxu0 %v1521
        %5530 = vmatpush1.bf16.msra.mxu0 %v1520
        %5531 = vmatprep.subr.bf16.mxu0 %v1529
        %5532 = vmatpush1.bf16.msra.mxu0 %v1528
        %5533 = vmatprep.subr.bf16.mxu0 %v1537
        %5534 = vmatpush1.bf16.msra.mxu0 %v1536
        %5535 = vmatprep.subr.bf16.mxu0 %v1545
        %5536 = vmatpush1.bf16.msra.mxu0 %v1544
        %5537 = vmatprep.subr.bf16.mxu0 %v1553
        %5538 = vmatpush1.bf16.msra.mxu0 %v1552
        %5539 = vmatprep.subr.bf16.mxu0 %v1561
        %5540 = vmatpush1.bf16.msra.mxu0 %v1560
        %5541 = vmatprep.subr.bf16.mxu0 %v1569
        %5542 = vmatpush1.bf16.msra.mxu0 %v1568
        %5543 = vmatprep.subr.bf16.mxu0 %v1577
        %5544 = vmatpush1.bf16.msra.mxu0 %v1576
        %5545 = vmatprep.subr.bf16.mxu0 %v1585
        %5546 = vmatpush1.bf16.msra.mxu0 %v1584
        %5547 = vmatprep.mubr.bf16.mxu0 %v3445
        %5548 = vmatmul.mubr.bf16.gmra.mrb[0].mxu0 %v3444
        %v5549 = vpop.f32.mrb[0].mxu0
        %v5550 = vadd.f32 %v5509, %v5549
        %v5551 = vpop.f32.mrb[0].mxu0
        %v5552 = vadd.f32 %v5511, %v5551
        %v5553 = vpop.f32.mrb[0].mxu0
        %v5554 = vpop.f32.mrb[0].mxu0
        %5555 = vdwg.mxu0
        %5556 = vmatprep.subr.bf16.mxu0 %v1593
        %5557 = vmatpush1.bf16.msra.mxu0 %v1592
        %5558 = vmatprep.subr.bf16.mxu0 %v1601
        %5559 = vmatpush1.bf16.msra.mxu0 %v1600
        %5560 = vmatprep.subr.bf16.mxu0 %v1609
        %5561 = vmatpush1.bf16.msra.mxu0 %v1608
        %5562 = vmatprep.subr.bf16.mxu0 %v1617
        %5563 = vmatpush1.bf16.msra.mxu0 %v1616
        %5564 = vmatprep.subr.bf16.mxu0 %v1625
        %5565 = vmatpush1.bf16.msra.mxu0 %v1624
        %5566 = vmatprep.subr.bf16.mxu0 %v1633
        %5567 = vmatpush1.bf16.msra.mxu0 %v1632
        %5568 = vmatprep.subr.bf16.mxu0 %v1641
        %5569 = vmatpush1.bf16.msra.mxu0 %v1640
        %5570 = vmatprep.subr.bf16.mxu0 %v1649
        %5571 = vmatpush1.bf16.msra.mxu0 %v1648
        %5572 = vmatprep.subr.bf16.mxu0 %v1657
        %5573 = vmatpush1.bf16.msra.mxu0 %v1656
        %5574 = vmatprep.subr.bf16.mxu0 %v1665
        %5575 = vmatpush1.bf16.msra.mxu0 %v1664
        %5576 = vmatprep.subr.bf16.mxu0 %v1673
        %5577 = vmatpush1.bf16.msra.mxu0 %v1672
        %5578 = vmatprep.subr.bf16.mxu0 %v1681
        %5579 = vmatpush1.bf16.msra.mxu0 %v1680
        %5580 = vmatprep.subr.bf16.mxu0 %v1689
        %5581 = vmatpush1.bf16.msra.mxu0 %v1688
        %5582 = vmatprep.subr.bf16.mxu0 %v1697
        %5583 = vmatpush1.bf16.msra.mxu0 %v1696
        %5584 = vmatprep.subr.bf16.mxu0 %v1705
        %5585 = vmatpush1.bf16.msra.mxu0 %v1704
        %5586 = vmatprep.subr.bf16.mxu0 %v1713
        %5587 = vmatpush1.bf16.msra.mxu0 %v1712
        %5588 = vmatprep.mubr.bf16.mxu0 %v3447
        %5589 = vmatmul.mubr.bf16.gmra.mrb[0].mxu0 %v3446
        %v5590 = vpop.f32.mrb[0].mxu0
        %v5591 = vadd.f32 %v5550, %v5590
        %v5592 = vpop.f32.mrb[0].mxu0
        %v5593 = vadd.f32 %v5552, %v5592
        %v5594 = vpop.f32.mrb[0].mxu0
        %v5595 = vpop.f32.mrb[0].mxu0
        %5596 = vdwg.mxu0
        %5597 = vmatprep.subr.bf16.mxu0 %v1721
        %5598 = vmatpush1.bf16.msra.mxu0 %v1720
        %5599 = vmatprep.subr.bf16.mxu0 %v1729
        %5600 = vmatpush1.bf16.msra.mxu0 %v1728
        %5601 = vmatprep.subr.bf16.mxu0 %v1737
        %5602 = vmatpush1.bf16.msra.mxu0 %v1736
        %5603 = vmatprep.subr.bf16.mxu0 %v1745
        %5604 = vmatpush1.bf16.msra.mxu0 %v1744
        %5605 = vmatprep.subr.bf16.mxu0 %v1753
        %5606 = vmatpush1.bf16.msra.mxu0 %v1752
        %5607 = vmatprep.subr.bf16.mxu0 %v1761
        %5608 = vmatpush1.bf16.msra.mxu0 %v1760
        %5609 = vmatprep.subr.bf16.mxu0 %v1769
        %5610 = vmatpush1.bf16.msra.mxu0 %v1768
        %5611 = vmatprep.subr.bf16.mxu0 %v1777
        %5612 = vmatpush1.bf16.msra.mxu0 %v1776
        %5613 = vmatprep.subr.bf16.mxu0 %v1785
        %5614 = vmatpush1.bf16.msra.mxu0 %v1784
        %5615 = vmatprep.subr.bf16.mxu0 %v1793
        %5616 = vmatpush1.bf16.msra.mxu0 %v1792
        %5617 = vmatprep.subr.bf16.mxu0 %v1801
        %5618 = vmatpush1.bf16.msra.mxu0 %v1800
        %5619 = vmatprep.subr.bf16.mxu0 %v1809
        %5620 = vmatpush1.bf16.msra.mxu0 %v1808
        %5621 = vmatprep.subr.bf16.mxu0 %v1817
        %5622 = vmatpush1.bf16.msra.mxu0 %v1816
        %5623 = vmatprep.subr.bf16.mxu0 %v1825
        %5624 = vmatpush1.bf16.msra.mxu0 %v1824
        %5625 = vmatprep.subr.bf16.mxu0 %v1833
        %5626 = vmatpush1.bf16.msra.mxu0 %v1832
        %5627 = vmatprep.subr.bf16.mxu0 %v1841
        %5628 = vmatpush1.bf16.msra.mxu0 %v1840
        %5629 = vmatprep.mubr.bf16.mxu0 %v3449
        %5630 = vmatmul.mubr.bf16.gmra.mrb[0].mxu0 %v3448
        %v5631 = vpop.f32.mrb[0].mxu0
        %v5632 = vadd.f32 %v5591, %v5631
        %v5633 = vpop.f32.mrb[0].mxu0
        %v5634 = vadd.f32 %v5593, %v5633
        %v5635 = vpop.f32.mrb[0].mxu0
        %v5636 = vpop.f32.mrb[0].mxu0
        %5637 = vdwg.mxu0
        %5638 = vmatprep.subr.bf16.mxu0 %v1849
        %5639 = vmatpush1.bf16.msra.mxu0 %v1848
        %5640 = vmatprep.subr.bf16.mxu0 %v1857
        %5641 = vmatpush1.bf16.msra.mxu0 %v1856
        %5642 = vmatprep.subr.bf16.mxu0 %v1865
        %5643 = vmatpush1.bf16.msra.mxu0 %v1864
        %5644 = vmatprep.subr.bf16.mxu0 %v1873
        %5645 = vmatpush1.bf16.msra.mxu0 %v1872
        %5646 = vmatprep.subr.bf16.mxu0 %v1881
        %5647 = vmatpush1.bf16.msra.mxu0 %v1880
        %5648 = vmatprep.subr.bf16.mxu0 %v1889
        %5649 = vmatpush1.bf16.msra.mxu0 %v1888
        %5650 = vmatprep.subr.bf16.mxu0 %v1897
        %5651 = vmatpush1.bf16.msra.mxu0 %v1896
        %5652 = vmatprep.subr.bf16.mxu0 %v1905
        %5653 = vmatpush1.bf16.msra.mxu0 %v1904
        %5654 = vmatprep.subr.bf16.mxu0 %v1913
        %5655 = vmatpush1.bf16.msra.mxu0 %v1912
        %5656 = vmatprep.subr.bf16.mxu0 %v1921
        %5657 = vmatpush1.bf16.msra.mxu0 %v1920
        %5658 = vmatprep.subr.bf16.mxu0 %v1929
        %5659 = vmatpush1.bf16.msra.mxu0 %v1928
        %5660 = vmatprep.subr.bf16.mxu0 %v1937
        %5661 = vmatpush1.bf16.msra.mxu0 %v1936
        %5662 = vmatprep.subr.bf16.mxu0 %v1945
        %5663 = vmatpush1.bf16.msra.mxu0 %v1944
        %5664 = vmatprep.subr.bf16.mxu0 %v1953
        %5665 = vmatpush1.bf16.msra.mxu0 %v1952
        %5666 = vmatprep.subr.bf16.mxu0 %v1961
        %5667 = vmatpush1.bf16.msra.mxu0 %v1960
        %5668 = vmatprep.subr.bf16.mxu0 %v1969
        %5669 = vmatpush1.bf16.msra.mxu0 %v1968
        %5670 = vmatprep.mubr.bf16.mxu0 %v3451
        %5671 = vmatmul.mubr.bf16.gmra.mrb[0].mxu0 %v3450
        %v5672 = vpop.f32.mrb[0].mxu0
        %v5673 = vadd.f32 %v5632, %v5672
        %v5674 = vpop.f32.mrb[0].mxu0
        %v5675 = vadd.f32 %v5634, %v5674
        %v5676 = vpop.f32.mrb[0].mxu0
        %v5677 = vpop.f32.mrb[0].mxu0
        %5678 = vdwg.mxu0
        %5679 = vmatprep.subr.bf16.mxu0 %v1977
        %5680 = vmatpush1.bf16.msra.mxu0 %v1976
        %5681 = vmatprep.subr.bf16.mxu0 %v1985
        %5682 = vmatpush1.bf16.msra.mxu0 %v1984
        %5683 = vmatprep.subr.bf16.mxu0 %v1993
        %5684 = vmatpush1.bf16.msra.mxu0 %v1992
        %5685 = vmatprep.subr.bf16.mxu0 %v2001
        %5686 = vmatpush1.bf16.msra.mxu0 %v2000
        %5687 = vmatprep.subr.bf16.mxu0 %v2009
        %5688 = vmatpush1.bf16.msra.mxu0 %v2008
        %5689 = vmatprep.subr.bf16.mxu0 %v2017
        %5690 = vmatpush1.bf16.msra.mxu0 %v2016
        %5691 = vmatprep.subr.bf16.mxu0 %v2025
        %5692 = vmatpush1.bf16.msra.mxu0 %v2024
        %5693 = vmatprep.subr.bf16.mxu0 %v2033
        %5694 = vmatpush1.bf16.msra.mxu0 %v2032
        %5695 = vmatprep.subr.bf16.mxu0 %v2041
        %5696 = vmatpush1.bf16.msra.mxu0 %v2040
        %5697 = vmatprep.subr.bf16.mxu0 %v2049
        %5698 = vmatpush1.bf16.msra.mxu0 %v2048
        %5699 = vmatprep.subr.bf16.mxu0 %v2057
        %5700 = vmatpush1.bf16.msra.mxu0 %v2056
        %5701 = vmatprep.subr.bf16.mxu0 %v2065
        %5702 = vmatpush1.bf16.msra.mxu0 %v2064
        %5703 = vmatprep.subr.bf16.mxu0 %v2073
        %5704 = vmatpush1.bf16.msra.mxu0 %v2072
        %5705 = vmatprep.subr.bf16.mxu0 %v2081
        %5706 = vmatpush1.bf16.msra.mxu0 %v2080
        %5707 = vmatprep.subr.bf16.mxu0 %v2089
        %5708 = vmatpush1.bf16.msra.mxu0 %v2088
        %5709 = vmatprep.subr.bf16.mxu0 %v2097
        %5710 = vmatpush1.bf16.msra.mxu0 %v2096
        %5711 = vmatprep.mubr.bf16.mxu0 %v3453
        %5712 = vmatmul.mubr.bf16.gmra.mrb[0].mxu0 %v3452
        %v5713 = vpop.f32.mrb[0].mxu0
        %v5714 = vadd.f32 %v5673, %v5713
        %v5715 = vpop.f32.mrb[0].mxu0
        %v5716 = vadd.f32 %v5675, %v5715
        %v5717 = vpop.f32.mrb[0].mxu0
        %v5718 = vpop.f32.mrb[0].mxu0
        %5719 = vdwg.mxu0
        %5720 = vmatprep.subr.bf16.mxu0 %v2105
        %5721 = vmatpush1.bf16.msra.mxu0 %v2104
        %5722 = vmatprep.subr.bf16.mxu0 %v2113
        %5723 = vmatpush1.bf16.msra.mxu0 %v2112
        %5724 = vmatprep.subr.bf16.mxu0 %v2121
        %5725 = vmatpush1.bf16.msra.mxu0 %v2120
        %5726 = vmatprep.subr.bf16.mxu0 %v2129
        %5727 = vmatpush1.bf16.msra.mxu0 %v2128
        %5728 = vmatprep.subr.bf16.mxu0 %v2137
        %5729 = vmatpush1.bf16.msra.mxu0 %v2136
        %5730 = vmatprep.subr.bf16.mxu0 %v2145
        %5731 = vmatpush1.bf16.msra.mxu0 %v2144
        %5732 = vmatprep.subr.bf16.mxu0 %v2153
        %5733 = vmatpush1.bf16.msra.mxu0 %v2152
        %5734 = vmatprep.subr.bf16.mxu0 %v2161
        %5735 = vmatpush1.bf16.msra.mxu0 %v2160
        %5736 = vmatprep.subr.bf16.mxu0 %v2169
        %5737 = vmatpush1.bf16.msra.mxu0 %v2168
        %5738 = vmatprep.subr.bf16.mxu0 %v2177
        %5739 = vmatpush1.bf16.msra.mxu0 %v2176
        %5740 = vmatprep.subr.bf16.mxu0 %v2185
        %5741 = vmatpush1.bf16.msra.mxu0 %v2184
        %5742 = vmatprep.subr.bf16.mxu0 %v2193
        %5743 = vmatpush1.bf16.msra.mxu0 %v2192
        %5744 = vmatprep.subr.bf16.mxu0 %v2201
        %5745 = vmatpush1.bf16.msra.mxu0 %v2200
        %5746 = vmatprep.subr.bf16.mxu0 %v2209
        %5747 = vmatpush1.bf16.msra.mxu0 %v2208
        %5748 = vmatprep.subr.bf16.mxu0 %v2217
        %5749 = vmatpush1.bf16.msra.mxu0 %v2216
        %5750 = vmatprep.subr.bf16.mxu0 %v2225
        %5751 = vmatpush1.bf16.msra.mxu0 %v2224
        %5752 = vmatprep.mubr.bf16.mxu0 %v3455
        %5753 = vmatmul.mubr.bf16.gmra.mrb[0].mxu0 %v3454
        %v5754 = vpop.f32.mrb[0].mxu0
        %v5755 = vadd.f32 %v5714, %v5754
        %v5756 = vpop.f32.mrb[0].mxu0
        %v5757 = vadd.f32 %v5716, %v5756
        %v5758 = vpop.f32.mrb[0].mxu0
        %v5759 = vpop.f32.mrb[0].mxu0
        %5760 = vdwg.mxu0
        %5761 = vmatprep.subr.bf16.mxu0 %v2233
        %5762 = vmatpush1.bf16.msra.mxu0 %v2232
        %5763 = vmatprep.subr.bf16.mxu0 %v2241
        %5764 = vmatpush1.bf16.msra.mxu0 %v2240
        %5765 = vmatprep.subr.bf16.mxu0 %v2249
        %5766 = vmatpush1.bf16.msra.mxu0 %v2248
        %5767 = vmatprep.subr.bf16.mxu0 %v2257
        %5768 = vmatpush1.bf16.msra.mxu0 %v2256
        %5769 = vmatprep.subr.bf16.mxu0 %v2265
        %5770 = vmatpush1.bf16.msra.mxu0 %v2264
        %5771 = vmatprep.subr.bf16.mxu0 %v2273
        %5772 = vmatpush1.bf16.msra.mxu0 %v2272
        %5773 = vmatprep.subr.bf16.mxu0 %v2281
        %5774 = vmatpush1.bf16.msra.mxu0 %v2280
        %5775 = vmatprep.subr.bf16.mxu0 %v2289
        %5776 = vmatpush1.bf16.msra.mxu0 %v2288
        %5777 = vmatprep.subr.bf16.mxu0 %v2297
        %5778 = vmatpush1.bf16.msra.mxu0 %v2296
        %5779 = vmatprep.subr.bf16.mxu0 %v2305
        %5780 = vmatpush1.bf16.msra.mxu0 %v2304
        %5781 = vmatprep.subr.bf16.mxu0 %v2313
        %5782 = vmatpush1.bf16.msra.mxu0 %v2312
        %5783 = vmatprep.subr.bf16.mxu0 %v2321
        %5784 = vmatpush1.bf16.msra.mxu0 %v2320
        %5785 = vmatprep.subr.bf16.mxu0 %v2329
        %5786 = vmatpush1.bf16.msra.mxu0 %v2328
        %5787 = vmatprep.subr.bf16.mxu0 %v2337
        %5788 = vmatpush1.bf16.msra.mxu0 %v2336
        %5789 = vmatprep.subr.bf16.mxu0 %v2345
        %5790 = vmatpush1.bf16.msra.mxu0 %v2344
        %5791 = vmatprep.subr.bf16.mxu0 %v2353
        %5792 = vmatpush1.bf16.msra.mxu0 %v2352
        %5793 = vmatprep.mubr.bf16.mxu0 %v3457
        %5794 = vmatmul.mubr.bf16.gmra.mrb[0].mxu0 %v3456
        %v5795 = vpop.f32.mrb[0].mxu0
        %v5796 = vadd.f32 %v5755, %v5795
        %v5797 = vpop.f32.mrb[0].mxu0
        %v5798 = vadd.f32 %v5757, %v5797
        %v5799 = vpop.f32.mrb[0].mxu0
        %v5800 = vpop.f32.mrb[0].mxu0
        %5801 = vdwg.mxu0
        %5802 = vmatprep.subr.bf16.mxu0 %v2361
        %5803 = vmatpush1.bf16.msra.mxu0 %v2360
        %5804 = vmatprep.subr.bf16.mxu0 %v2369
        %5805 = vmatpush1.bf16.msra.mxu0 %v2368
        %5806 = vmatprep.subr.bf16.mxu0 %v2377
        %5807 = vmatpush1.bf16.msra.mxu0 %v2376
        %5808 = vmatprep.subr.bf16.mxu0 %v2385
        %5809 = vmatpush1.bf16.msra.mxu0 %v2384
        %5810 = vmatprep.subr.bf16.mxu0 %v2393
        %5811 = vmatpush1.bf16.msra.mxu0 %v2392
        %5812 = vmatprep.subr.bf16.mxu0 %v2401
        %5813 = vmatpush1.bf16.msra.mxu0 %v2400
        %5814 = vmatprep.subr.bf16.mxu0 %v2409
        %5815 = vmatpush1.bf16.msra.mxu0 %v2408
        %5816 = vmatprep.subr.bf16.mxu0 %v2417
        %5817 = vmatpush1.bf16.msra.mxu0 %v2416
        %5818 = vmatprep.subr.bf16.mxu0 %v2425
        %5819 = vmatpush1.bf16.msra.mxu0 %v2424
        %5820 = vmatprep.subr.bf16.mxu0 %v2433
        %5821 = vmatpush1.bf16.msra.mxu0 %v2432
        %5822 = vmatprep.subr.bf16.mxu0 %v2441
        %5823 = vmatpush1.bf16.msra.mxu0 %v2440
        %5824 = vmatprep.subr.bf16.mxu0 %v2449
        %5825 = vmatpush1.bf16.msra.mxu0 %v2448
        %5826 = vmatprep.subr.bf16.mxu0 %v2457
        %5827 = vmatpush1.bf16.msra.mxu0 %v2456
        %5828 = vmatprep.subr.bf16.mxu0 %v2465
        %5829 = vmatpush1.bf16.msra.mxu0 %v2464
        %5830 = vmatprep.subr.bf16.mxu0 %v2473
        %5831 = vmatpush1.bf16.msra.mxu0 %v2472
        %5832 = vmatprep.subr.bf16.mxu0 %v2481
        %5833 = vmatpush1.bf16.msra.mxu0 %v2480
        %5834 = vmatprep.mubr.bf16.mxu0 %v3459
        %5835 = vmatmul.mubr.bf16.gmra.mrb[0].mxu0 %v3458
        %v5836 = vpop.f32.mrb[0].mxu0
        %v5837 = vadd.f32 %v5796, %v5836
        %v5838 = vpop.f32.mrb[0].mxu0
        %v5839 = vadd.f32 %v5798, %v5838
        %v5840 = vpop.f32.mrb[0].mxu0
        %v5841 = vpop.f32.mrb[0].mxu0
        %5842 = vdwg.mxu0
        %5843 = vmatprep.subr.bf16.mxu0 %v2489
        %5844 = vmatpush1.bf16.msra.mxu0 %v2488
        %5845 = vmatprep.subr.bf16.mxu0 %v2497
        %5846 = vmatpush1.bf16.msra.mxu0 %v2496
        %5847 = vmatprep.subr.bf16.mxu0 %v2505
        %5848 = vmatpush1.bf16.msra.mxu0 %v2504
        %5849 = vmatprep.subr.bf16.mxu0 %v2513
        %5850 = vmatpush1.bf16.msra.mxu0 %v2512
        %5851 = vmatprep.subr.bf16.mxu0 %v2521
        %5852 = vmatpush1.bf16.msra.mxu0 %v2520
        %5853 = vmatprep.subr.bf16.mxu0 %v2529
        %5854 = vmatpush1.bf16.msra.mxu0 %v2528
        %5855 = vmatprep.subr.bf16.mxu0 %v2537
        %5856 = vmatpush1.bf16.msra.mxu0 %v2536
        %5857 = vmatprep.subr.bf16.mxu0 %v2545
        %5858 = vmatpush1.bf16.msra.mxu0 %v2544
        %5859 = vmatprep.subr.bf16.mxu0 %v2553
        %5860 = vmatpush1.bf16.msra.mxu0 %v2552
        %5861 = vmatprep.subr.bf16.mxu0 %v2561
        %5862 = vmatpush1.bf16.msra.mxu0 %v2560
        %5863 = vmatprep.subr.bf16.mxu0 %v2569
        %5864 = vmatpush1.bf16.msra.mxu0 %v2568
        %5865 = vmatprep.subr.bf16.mxu0 %v2577
        %5866 = vmatpush1.bf16.msra.mxu0 %v2576
        %5867 = vmatprep.subr.bf16.mxu0 %v2585
        %5868 = vmatpush1.bf16.msra.mxu0 %v2584
        %5869 = vmatprep.subr.bf16.mxu0 %v2593
        %5870 = vmatpush1.bf16.msra.mxu0 %v2592
        %5871 = vmatprep.subr.bf16.mxu0 %v2601
        %5872 = vmatpush1.bf16.msra.mxu0 %v2600
        %5873 = vmatprep.subr.bf16.mxu0 %v2609
        %5874 = vmatpush1.bf16.msra.mxu0 %v2608
        %5875 = vmatprep.mubr.bf16.mxu0 %v3461
        %5876 = vmatmul.mubr.bf16.gmra.mrb[0].mxu0 %v3460
        %v5877 = vpop.f32.mrb[0].mxu0
        %v5878 = vadd.f32 %v5837, %v5877
        %v5879 = vpop.f32.mrb[0].mxu0
        %v5880 = vadd.f32 %v5839, %v5879
        %v5881 = vpop.f32.mrb[0].mxu0
        %v5882 = vpop.f32.mrb[0].mxu0
        %5883 = vdwg.mxu0
        %5884 = vmatprep.subr.bf16.mxu0 %v2617
        %5885 = vmatpush1.bf16.msra.mxu0 %v2616
        %5886 = vmatprep.subr.bf16.mxu0 %v2625
        %5887 = vmatpush1.bf16.msra.mxu0 %v2624
        %5888 = vmatprep.subr.bf16.mxu0 %v2633
        %5889 = vmatpush1.bf16.msra.mxu0 %v2632
        %5890 = vmatprep.subr.bf16.mxu0 %v2641
        %5891 = vmatpush1.bf16.msra.mxu0 %v2640
        %5892 = vmatprep.subr.bf16.mxu0 %v2649
        %5893 = vmatpush1.bf16.msra.mxu0 %v2648
        %5894 = vmatprep.subr.bf16.mxu0 %v2657
        %5895 = vmatpush1.bf16.msra.mxu0 %v2656
        %5896 = vmatprep.subr.bf16.mxu0 %v2665
        %5897 = vmatpush1.bf16.msra.mxu0 %v2664
        %5898 = vmatprep.subr.bf16.mxu0 %v2673
        %5899 = vmatpush1.bf16.msra.mxu0 %v2672
        %5900 = vmatprep.subr.bf16.mxu0 %v2681
        %5901 = vmatpush1.bf16.msra.mxu0 %v2680
        %5902 = vmatprep.subr.bf16.mxu0 %v2689
        %5903 = vmatpush1.bf16.msra.mxu0 %v2688
        %5904 = vmatprep.subr.bf16.mxu0 %v2697
        %5905 = vmatpush1.bf16.msra.mxu0 %v2696
        %5906 = vmatprep.subr.bf16.mxu0 %v2705
        %5907 = vmatpush1.bf16.msra.mxu0 %v2704
        %5908 = vmatprep.subr.bf16.mxu0 %v2713
        %5909 = vmatpush1.bf16.msra.mxu0 %v2712
        %5910 = vmatprep.subr.bf16.mxu0 %v2721
        %5911 = vmatpush1.bf16.msra.mxu0 %v2720
        %5912 = vmatprep.subr.bf16.mxu0 %v2729
        %5913 = vmatpush1.bf16.msra.mxu0 %v2728
        %5914 = vmatprep.subr.bf16.mxu0 %v2737
        %5915 = vmatpush1.bf16.msra.mxu0 %v2736
        %5916 = vmatprep.mubr.bf16.mxu0 %v3463
        %5917 = vmatmul.mubr.bf16.gmra.mrb[0].mxu0 %v3462
        %v5918 = vpop.f32.mrb[0].mxu0
        %v5919 = vadd.f32 %v5878, %v5918
        %v5920 = vpop.f32.mrb[0].mxu0
        %v5921 = vadd.f32 %v5880, %v5920
        %v5922 = vpop.f32.mrb[0].mxu0
        %v5923 = vpop.f32.mrb[0].mxu0
        %5924 = vdwg.mxu0
        %5925 = vmatprep.subr.bf16.mxu0 %v2745
        %5926 = vmatpush1.bf16.msra.mxu0 %v2744
        %5927 = vmatprep.subr.bf16.mxu0 %v2753
        %5928 = vmatpush1.bf16.msra.mxu0 %v2752
        %5929 = vmatprep.subr.bf16.mxu0 %v2761
        %5930 = vmatpush1.bf16.msra.mxu0 %v2760
        %5931 = vmatprep.subr.bf16.mxu0 %v2769
        %5932 = vmatpush1.bf16.msra.mxu0 %v2768
        %5933 = vmatprep.subr.bf16.mxu0 %v2777
        %5934 = vmatpush1.bf16.msra.mxu0 %v2776
        %5935 = vmatprep.subr.bf16.mxu0 %v2785
        %5936 = vmatpush1.bf16.msra.mxu0 %v2784
        %5937 = vmatprep.subr.bf16.mxu0 %v2793
        %5938 = vmatpush1.bf16.msra.mxu0 %v2792
        %5939 = vmatprep.subr.bf16.mxu0 %v2801
        %5940 = vmatpush1.bf16.msra.mxu0 %v2800
        %5941 = vmatprep.subr.bf16.mxu0 %v2809
        %5942 = vmatpush1.bf16.msra.mxu0 %v2808
        %5943 = vmatprep.subr.bf16.mxu0 %v2817
        %5944 = vmatpush1.bf16.msra.mxu0 %v2816
        %5945 = vmatprep.subr.bf16.mxu0 %v2825
        %5946 = vmatpush1.bf16.msra.mxu0 %v2824
        %5947 = vmatprep.subr.bf16.mxu0 %v2833
        %5948 = vmatpush1.bf16.msra.mxu0 %v2832
        %5949 = vmatprep.subr.bf16.mxu0 %v2841
        %5950 = vmatpush1.bf16.msra.mxu0 %v2840
        %5951 = vmatprep.subr.bf16.mxu0 %v2849
        %5952 = vmatpush1.bf16.msra.mxu0 %v2848
        %5953 = vmatprep.subr.bf16.mxu0 %v2857
        %5954 = vmatpush1.bf16.msra.mxu0 %v2856
        %5955 = vmatprep.subr.bf16.mxu0 %v2865
        %5956 = vmatpush1.bf16.msra.mxu0 %v2864
        %5957 = vmatprep.mubr.bf16.mxu0 %v3465
        %5958 = vmatmul.mubr.bf16.gmra.mrb[0].mxu0 %v3464
        %v5959 = vpop.f32.mrb[0].mxu0
        %v5960 = vadd.f32 %v5919, %v5959
        %v5961 = vpop.f32.mrb[0].mxu0
        %v5962 = vadd.f32 %v5921, %v5961
        %v5963 = vpop.f32.mrb[0].mxu0
        %v5964 = vpop.f32.mrb[0].mxu0
        %5965 = vdwg.mxu0
        %5966 = vmatprep.subr.bf16.mxu0 %v2873
        %5967 = vmatpush1.bf16.msra.mxu0 %v2872
        %5968 = vmatprep.subr.bf16.mxu0 %v2881
        %5969 = vmatpush1.bf16.msra.mxu0 %v2880
        %5970 = vmatprep.subr.bf16.mxu0 %v2889
        %5971 = vmatpush1.bf16.msra.mxu0 %v2888
        %5972 = vmatprep.subr.bf16.mxu0 %v2897
        %5973 = vmatpush1.bf16.msra.mxu0 %v2896
        %5974 = vmatprep.subr.bf16.mxu0 %v2905
        %5975 = vmatpush1.bf16.msra.mxu0 %v2904
        %5976 = vmatprep.subr.bf16.mxu0 %v2913
        %5977 = vmatpush1.bf16.msra.mxu0 %v2912
        %5978 = vmatprep.subr.bf16.mxu0 %v2921
        %5979 = vmatpush1.bf16.msra.mxu0 %v2920
        %5980 = vmatprep.subr.bf16.mxu0 %v2929
        %5981 = vmatpush1.bf16.msra.mxu0 %v2928
        %5982 = vmatprep.subr.bf16.mxu0 %v2937
        %5983 = vmatpush1.bf16.msra.mxu0 %v2936
        %5984 = vmatprep.subr.bf16.mxu0 %v2945
        %5985 = vmatpush1.bf16.msra.mxu0 %v2944
        %5986 = vmatprep.subr.bf16.mxu0 %v2953
        %5987 = vmatpush1.bf16.msra.mxu0 %v2952
        %5988 = vmatprep.subr.bf16.mxu0 %v2961
        %5989 = vmatpush1.bf16.msra.mxu0 %v2960
        %5990 = vmatprep.subr.bf16.mxu0 %v2969
        %5991 = vmatpush1.bf16.msra.mxu0 %v2968
        %5992 = vmatprep.subr.bf16.mxu0 %v2977
        %5993 = vmatpush1.bf16.msra.mxu0 %v2976
        %5994 = vmatprep.subr.bf16.mxu0 %v2985
        %5995 = vmatpush1.bf16.msra.mxu0 %v2984
        %5996 = vmatprep.subr.bf16.mxu0 %v2993
        %5997 = vmatpush1.bf16.msra.mxu0 %v2992
        %5998 = vmatprep.mubr.bf16.mxu0 %v3467
        %5999 = vmatmul.mubr.bf16.gmra.mrb[0].mxu0 %v3466
        %v6000 = vpop.f32.mrb[0].mxu0
        %v6001 = vadd.f32 %v5960, %v6000
        %v6002 = vpop.f32.mrb[0].mxu0
        %v6003 = vadd.f32 %v5962, %v6002
        %v6004 = vpop.f32.mrb[0].mxu0
        %v6005 = vpop.f32.mrb[0].mxu0
        %6006 = vdwg.mxu0
        %6007 = vmatprep.subr.bf16.mxu0 %v3001
        %6008 = vmatpush1.bf16.msra.mxu0 %v3000
        %6009 = vmatprep.subr.bf16.mxu0 %v3009
        %6010 = vmatpush1.bf16.msra.mxu0 %v3008
        %6011 = vmatprep.subr.bf16.mxu0 %v3017
        %6012 = vmatpush1.bf16.msra.mxu0 %v3016
        %6013 = vmatprep.subr.bf16.mxu0 %v3025
        %6014 = vmatpush1.bf16.msra.mxu0 %v3024
        %6015 = vmatprep.subr.bf16.mxu0 %v3033
        %6016 = vmatpush1.bf16.msra.mxu0 %v3032
        %6017 = vmatprep.subr.bf16.mxu0 %v3041
        %6018 = vmatpush1.bf16.msra.mxu0 %v3040
        %6019 = vmatprep.subr.bf16.mxu0 %v3049
        %6020 = vmatpush1.bf16.msra.mxu0 %v3048
        %6021 = vmatprep.subr.bf16.mxu0 %v3057
        %6022 = vmatpush1.bf16.msra.mxu0 %v3056
        %6023 = vmatprep.subr.bf16.mxu0 %v3065
        %6024 = vmatpush1.bf16.msra.mxu0 %v3064
        %6025 = vmatprep.subr.bf16.mxu0 %v3073
        %6026 = vmatpush1.bf16.msra.mxu0 %v3072
        %6027 = vmatprep.subr.bf16.mxu0 %v3081
        %6028 = vmatpush1.bf16.msra.mxu0 %v3080
        %6029 = vmatprep.subr.bf16.mxu0 %v3089
        %6030 = vmatpush1.bf16.msra.mxu0 %v3088
        %6031 = vmatprep.subr.bf16.mxu0 %v3097
        %6032 = vmatpush1.bf16.msra.mxu0 %v3096
        %6033 = vmatprep.subr.bf16.mxu0 %v3105
        %6034 = vmatpush1.bf16.msra.mxu0 %v3104
        %6035 = vmatprep.subr.bf16.mxu0 %v3113
        %6036 = vmatpush1.bf16.msra.mxu0 %v3112
        %6037 = vmatprep.subr.bf16.mxu0 %v3121
        %6038 = vmatpush1.bf16.msra.mxu0 %v3120
        %6039 = vmatprep.mubr.bf16.mxu0 %v3469
        %6040 = vmatmul.mubr.bf16.gmra.mrb[0].mxu0 %v3468
        %v6041 = vpop.f32.mrb[0].mxu0
        %v6042 = vadd.f32 %v6001, %v6041
        %v6043 = vpop.f32.mrb[0].mxu0
        %v6044 = vadd.f32 %v6003, %v6043
        %v6045 = vpop.f32.mrb[0].mxu0
        %v6046 = vpop.f32.mrb[0].mxu0
        %6047 = vdwg.mxu0
        %6048 = vmatprep.subr.bf16.mxu0 %v3129
        %6049 = vmatpush1.bf16.msra.mxu0 %v3128
        %6050 = vmatprep.subr.bf16.mxu0 %v3137
        %6051 = vmatpush1.bf16.msra.mxu0 %v3136
        %6052 = vmatprep.subr.bf16.mxu0 %v3145
        %6053 = vmatpush1.bf16.msra.mxu0 %v3144
        %6054 = vmatprep.subr.bf16.mxu0 %v3153
        %6055 = vmatpush1.bf16.msra.mxu0 %v3152
        %6056 = vmatprep.subr.bf16.mxu0 %v3161
        %6057 = vmatpush1.bf16.msra.mxu0 %v3160
        %6058 = vmatprep.subr.bf16.mxu0 %v3169
        %6059 = vmatpush1.bf16.msra.mxu0 %v3168
        %6060 = vmatprep.subr.bf16.mxu0 %v3177
        %6061 = vmatpush1.bf16.msra.mxu0 %v3176
        %6062 = vmatprep.subr.bf16.mxu0 %v3185
        %6063 = vmatpush1.bf16.msra.mxu0 %v3184
        %6064 = vmatprep.subr.bf16.mxu0 %v3193
        %6065 = vmatpush1.bf16.msra.mxu0 %v3192
        %6066 = vmatprep.subr.bf16.mxu0 %v3201
        %6067 = vmatpush1.bf16.msra.mxu0 %v3200
        %6068 = vmatprep.subr.bf16.mxu0 %v3209
        %6069 = vmatpush1.bf16.msra.mxu0 %v3208
        %6070 = vmatprep.subr.bf16.mxu0 %v3217
        %6071 = vmatpush1.bf16.msra.mxu0 %v3216
        %6072 = vmatprep.subr.bf16.mxu0 %v3225
        %6073 = vmatpush1.bf16.msra.mxu0 %v3224
        %6074 = vmatprep.subr.bf16.mxu0 %v3233
        %6075 = vmatpush1.bf16.msra.mxu0 %v3232
        %6076 = vmatprep.subr.bf16.mxu0 %v3241
        %6077 = vmatpush1.bf16.msra.mxu0 %v3240
        %6078 = vmatprep.subr.bf16.mxu0 %v3249
        %6079 = vmatpush1.bf16.msra.mxu0 %v3248
        %6080 = vmatprep.mubr.bf16.mxu0 %v3471
        %6081 = vmatmul.mubr.bf16.gmra.mrb[0].mxu0 %v3470
        %v6082 = vpop.f32.mrb[0].mxu0
        %v6083 = vadd.f32 %v6042, %v6082
        %v6084 = vpop.f32.mrb[0].mxu0
        %v6085 = vadd.f32 %v6044, %v6084
        %v6086 = vpop.f32.mrb[0].mxu0
        %v6087 = vpop.f32.mrb[0].mxu0
        %6088 = vdwg.mxu0
        %6089 = vmatprep.subr.bf16.mxu0 %v3257
        %6090 = vmatpush1.bf16.msra.mxu0 %v3256
        %6091 = vmatprep.subr.bf16.mxu0 %v3265
        %6092 = vmatpush1.bf16.msra.mxu0 %v3264
        %6093 = vmatprep.subr.bf16.mxu0 %v3273
        %6094 = vmatpush1.bf16.msra.mxu0 %v3272
        %6095 = vmatprep.subr.bf16.mxu0 %v3281
        %6096 = vmatpush1.bf16.msra.mxu0 %v3280
        %6097 = vmatprep.subr.bf16.mxu0 %v3289
        %6098 = vmatpush1.bf16.msra.mxu0 %v3288
        %6099 = vmatprep.subr.bf16.mxu0 %v3297
        %6100 = vmatpush1.bf16.msra.mxu0 %v3296
        %6101 = vmatprep.subr.bf16.mxu0 %v3305
        %6102 = vmatpush1.bf16.msra.mxu0 %v3304
        %6103 = vmatprep.subr.bf16.mxu0 %v3313
        %6104 = vmatpush1.bf16.msra.mxu0 %v3312
        %6105 = vmatprep.subr.bf16.mxu0 %v3321
        %6106 = vmatpush1.bf16.msra.mxu0 %v3320
        %6107 = vmatprep.subr.bf16.mxu0 %v3329
        %6108 = vmatpush1.bf16.msra.mxu0 %v3328
        %6109 = vmatprep.subr.bf16.mxu0 %v3337
        %6110 = vmatpush1.bf16.msra.mxu0 %v3336
        %6111 = vmatprep.subr.bf16.mxu0 %v3345
        %6112 = vmatpush1.bf16.msra.mxu0 %v3344
        %6113 = vmatprep.subr.bf16.mxu0 %v3353
        %6114 = vmatpush1.bf16.msra.mxu0 %v3352
        %6115 = vmatprep.subr.bf16.mxu0 %v3361
        %6116 = vmatpush1.bf16.msra.mxu0 %v3360
        %6117 = vmatprep.subr.bf16.mxu0 %v3369
        %6118 = vmatpush1.bf16.msra.mxu0 %v3368
        %6119 = vmatprep.subr.bf16.mxu0 %v3377
        %6120 = vmatpush1.bf16.msra.mxu0 %v3376
        %6121 = vmatprep.mubr.bf16.mxu0 %v3473
        %6122 = vmatmul.mubr.bf16.gmra.mrb[0].mxu0 %v3472
        %v6123 = vpop.f32.mrb[0].mxu0
        %v6124 = vadd.f32 %v6083, %v6123
        %v6125 = vpop.f32.mrb[0].mxu0
        %v6126 = vadd.f32 %v6085, %v6125
        %v6127 = vpop.f32.mrb[0].mxu0
        %v6128 = vpop.f32.mrb[0].mxu0
        %6129 = vdwg.mxu0
        %v6130 = vrot.slane %v4156, 4
        %v6131 = vadd.f32 %v4156, %v6130
        %v6132 = vrot.slane %v6131, 2
        %v6133 = vadd.f32 %v6131, %v6132
        %v6134 = vrot.slane %v6133, 1
        %v6135 = vadd.f32 %v6133, %v6134
        %v6136 = vrot.slane %v4158, 4
        %v6137 = vadd.f32 %v4158, %v6136
        %v6138 = vrot.slane %v6137, 2
        %v6139 = vadd.f32 %v6137, %v6138
        %v6140 = vrot.slane %v6139, 1
        %v6141 = vadd.f32 %v6139, %v6140
        %v6142 = vrot.slane %v4812, 4
        %v6143 = vadd.f32 %v4812, %v6142
        %v6144 = vrot.slane %v6143, 2
        %v6145 = vadd.f32 %v6143, %v6144
        %v6146 = vrot.slane %v6145, 1
        %v6147 = vadd.f32 %v6145, %v6146
        %v6148 = vrot.slane %v4814, 4
        %v6149 = vadd.f32 %v4814, %v6148
        %v6150 = vrot.slane %v6149, 2
        %v6151 = vadd.f32 %v6149, %v6150
        %v6152 = vrot.slane %v6151, 1
        %v6153 = vadd.f32 %v6151, %v6152
        %v6154 = vrot.slane %v5468, 4
        %v6155 = vadd.f32 %v5468, %v6154
        %v6156 = vrot.slane %v6155, 2
        %v6157 = vadd.f32 %v6155, %v6156
        %v6158 = vrot.slane %v6157, 1
        %v6159 = vadd.f32 %v6157, %v6158
        %v6160 = vrot.slane %v5470, 4
        %v6161 = vadd.f32 %v5470, %v6160
        %v6162 = vrot.slane %v6161, 2
        %v6163 = vadd.f32 %v6161, %v6162
        %v6164 = vrot.slane %v6163, 1
        %v6165 = vadd.f32 %v6163, %v6164
        %v6166 = vrot.slane %v6124, 4
        %v6167 = vadd.f32 %v6124, %v6166
        %v6168 = vrot.slane %v6167, 2
        %v6169 = vadd.f32 %v6167, %v6168
        %v6170 = vrot.slane %v6169, 1
        %v6171 = vadd.f32 %v6169, %v6170
        %v6172 = vrot.slane %v6126, 4
        %v6173 = vadd.f32 %v6126, %v6172
        %v6174 = vrot.slane %v6173, 2
        %v6175 = vadd.f32 %v6173, %v6174
        %v6176 = vrot.slane %v6175, 1
        %v6177 = vadd.f32 %v6175, %v6176
        %v6178 = vrcp.pop 8.0
        %v6179 = vmul.f32 %v6135, %v6178
        %v6180 = vmul.f32 %v6141, %v6178
        %v6181 = vmul.f32 %v6147, %v6178
        %v6182 = vmul.f32 %v6153, %v6178
        %v6183 = vmul.f32 %v6159, %v6178
        %v6184 = vmul.f32 %v6165, %v6178
        %v6185 = vmul.f32 %v6171, %v6178
        %v6186 = vmul.f32 %v6177, %v6178
        %v6187 = vsub.f32 %v4156, %v6179
        %v6188 = vsub.f32 %v4158, %v6180
        %v6189 = vsub.f32 %v4812, %v6181
        %v6190 = vsub.f32 %v4814, %v6182
        %v6191 = vsub.f32 %v5468, %v6183
        %v6192 = vsub.f32 %v5470, %v6184
        %v6193 = vsub.f32 %v6124, %v6185
        %v6194 = vsub.f32 %v6126, %v6186
        %v6195 = vmul.f32 %v6187, %v6187
        %v6196 = vmul.f32 %v6188, %v6188
        %v6197 = vmul.f32 %v6189, %v6189
        %v6198 = vmul.f32 %v6190, %v6190
        %v6199 = vmul.f32 %v6191, %v6191
        %v6200 = vmul.f32 %v6192, %v6192
        %v6201 = vmul.f32 %v6193, %v6193
        %v6202 = vmul.f32 %v6194, %v6194
        %v6203 = vrot.slane %v6195, 4
        %v6204 = vadd.f32 %v6195, %v6203
        %v6205 = vrot.slane %v6204, 2
        %v6206 = vadd.f32 %v6204, %v6205
        %v6207 = vrot.slane %v6206, 1
        %v6208 = vadd.f32 %v6206, %v6207
        %v6209 = vrot.slane %v6196, 4
        %v6210 = vadd.f32 %v6196, %v6209
        %v6211 = vrot.slane %v6210, 2
        %v6212 = vadd.f32 %v6210, %v6211
        %v6213 = vrot.slane %v6212, 1
        %v6214 = vadd.f32 %v6212, %v6213
        %v6215 = vrot.slane %v6197, 4
        %v6216 = vadd.f32 %v6197, %v6215
        %v6217 = vrot.slane %v6216, 2
        %v6218 = vadd.f32 %v6216, %v6217
        %v6219 = vrot.slane %v6218, 1
        %v6220 = vadd.f32 %v6218, %v6219
        %v6221 = vrot.slane %v6198, 4
        %v6222 = vadd.f32 %v6198, %v6221
        %v6223 = vrot.slane %v6222, 2
        %v6224 = vadd.f32 %v6222, %v6223
        %v6225 = vrot.slane %v6224, 1
        %v6226 = vadd.f32 %v6224, %v6225
        %v6227 = vrot.slane %v6199, 4
        %v6228 = vadd.f32 %v6199, %v6227
        %v6229 = vrot.slane %v6228, 2
        %v6230 = vadd.f32 %v6228, %v6229
        %v6231 = vrot.slane %v6230, 1
        %v6232 = vadd.f32 %v6230, %v6231
        %v6233 = vrot.slane %v6200, 4
        %v6234 = vadd.f32 %v6200, %v6233
        %v6235 = vrot.slane %v6234, 2
        %v6236 = vadd.f32 %v6234, %v6235
        %v6237 = vrot.slane %v6236, 1
        %v6238 = vadd.f32 %v6236, %v6237
        %v6239 = vrot.slane %v6201, 4
        %v6240 = vadd.f32 %v6201, %v6239
        %v6241 = vrot.slane %v6240, 2
        %v6242 = vadd.f32 %v6240, %v6241
        %v6243 = vrot.slane %v6242, 1
        %v6244 = vadd.f32 %v6242, %v6243
        %v6245 = vrot.slane %v6202, 4
        %v6246 = vadd.f32 %v6202, %v6245
        %v6247 = vrot.slane %v6246, 2
        %v6248 = vadd.f32 %v6246, %v6247
        %v6249 = vrot.slane %v6248, 1
        %v6250 = vadd.f32 %v6248, %v6249
        %v6251 = vmul.f32 %v6208, %v6178
        %v6252 = vmul.f32 %v6214, %v6178
        %v6253 = vmul.f32 %v6220, %v6178
        %v6254 = vmul.f32 %v6226, %v6178
        %v6255 = vmul.f32 %v6232, %v6178
        %v6256 = vmul.f32 %v6238, %v6178
        %v6257 = vmul.f32 %v6244, %v6178
        %v6258 = vmul.f32 %v6250, %v6178
        %v6259 = vadd.f32 %v6251, 1e-05
        %v6260 = vadd.f32 %v6252, 1e-05
        %v6261 = vadd.f32 %v6253, 1e-05
        %v6262 = vadd.f32 %v6254, 1e-05
        %v6263 = vadd.f32 %v6255, 1e-05
        %v6264 = vadd.f32 %v6256, 1e-05
        %v6265 = vadd.f32 %v6257, 1e-05
        %v6266 = vadd.f32 %v6258, 1e-05
        %v6267 = vrsqrt.pop %v6259
        %v6268 = vrsqrt.pop %v6260
        %v6269 = vrsqrt.pop %v6261
        %v6270 = vrsqrt.pop %v6262
        %v6271 = vrsqrt.pop %v6263
        %v6272 = vrsqrt.pop %v6264
        %v6273 = vrsqrt.pop %v6265
        %v6274 = vrsqrt.pop %v6266
        %v6275 = vmul.f32 %v6187, %v6267
        %v6276 = vmul.f32 %v6188, %v6268
        %v6277 = vmul.f32 %v6189, %v6269
        %v6278 = vmul.f32 %v6190, %v6270
        %v6279 = vmul.f32 %v6191, %v6271
        %v6280 = vmul.f32 %v6192, %v6272
        %v6281 = vmul.f32 %v6193, %v6273
        %v6282 = vmul.f32 %v6194, %v6274
        %v6283 = vld [vmem:[%s258] sm:$0xff]
        %v6285 = vlaneseq
        %v6286 = vshrl.u32 %v6285, 7
        %v6287 = vsub.s32 0, %v6286
        %v6288 = vrot.slane %v6283, %v6287
        %v6289 = vlaneseq
        %v6290 = vshrl.u32 %v6289, 7
        %v6291 = vsub.s32 1, %v6290
        %v6292 = vrot.slane %v6283, %v6291
        %v6293 = vlaneseq
        %v6294 = vshrl.u32 %v6293, 7
        %v6295 = vsub.s32 2, %v6294
        %v6296 = vrot.slane %v6283, %v6295
        %v6297 = vlaneseq
        %v6298 = vshrl.u32 %v6297, 7
        %v6299 = vsub.s32 3, %v6298
        %v6300 = vrot.slane %v6283, %v6299
        %v6301 = vlaneseq
        %v6302 = vshrl.u32 %v6301, 7
        %v6303 = vsub.s32 4, %v6302
        %v6304 = vrot.slane %v6283, %v6303
        %v6305 = vlaneseq
        %v6306 = vshrl.u32 %v6305, 7
        %v6307 = vsub.s32 5, %v6306
        %v6308 = vrot.slane %v6283, %v6307
        %v6309 = vlaneseq
        %v6310 = vshrl.u32 %v6309, 7
        %v6311 = vsub.s32 6, %v6310
        %v6312 = vrot.slane %v6283, %v6311
        %v6313 = vlaneseq
        %v6314 = vshrl.u32 %v6313, 7
        %v6315 = vsub.s32 7, %v6314
        %v6316 = vrot.slane %v6283, %v6315
        %v6325 = vmul.f32 %v6275, %v6288
        %v6326 = vmul.f32 %v6276, %v6292
        %v6327 = vmul.f32 %v6277, %v6296
        %v6328 = vmul.f32 %v6278, %v6300
        %v6329 = vmul.f32 %v6279, %v6304
        %v6330 = vmul.f32 %v6280, %v6308
        %v6331 = vmul.f32 %v6281, %v6312
        %v6332 = vmul.f32 %v6282, %v6316
        %v6333 = vld [vmem:[%s267] sm:$0xff]
        %v6335 = vlaneseq
        %v6336 = vshrl.u32 %v6335, 7
        %v6337 = vsub.s32 0, %v6336
        %v6338 = vrot.slane %v6333, %v6337
        %v6339 = vlaneseq
        %v6340 = vshrl.u32 %v6339, 7
        %v6341 = vsub.s32 1, %v6340
        %v6342 = vrot.slane %v6333, %v6341
        %v6343 = vlaneseq
        %v6344 = vshrl.u32 %v6343, 7
        %v6345 = vsub.s32 2, %v6344
        %v6346 = vrot.slane %v6333, %v6345
        %v6347 = vlaneseq
        %v6348 = vshrl.u32 %v6347, 7
        %v6349 = vsub.s32 3, %v6348
        %v6350 = vrot.slane %v6333, %v6349
        %v6351 = vlaneseq
        %v6352 = vshrl.u32 %v6351, 7
        %v6353 = vsub.s32 4, %v6352
        %v6354 = vrot.slane %v6333, %v6353
        %v6355 = vlaneseq
        %v6356 = vshrl.u32 %v6355, 7
        %v6357 = vsub.s32 5, %v6356
        %v6358 = vrot.slane %v6333, %v6357
        %v6359 = vlaneseq
        %v6360 = vshrl.u32 %v6359, 7
        %v6361 = vsub.s32 6, %v6360
        %v6362 = vrot.slane %v6333, %v6361
        %v6363 = vlaneseq
        %v6364 = vshrl.u32 %v6363, 7
        %v6365 = vsub.s32 7, %v6364
        %v6366 = vrot.slane %v6333, %v6365
        %v6375 = vadd.f32 %v6325, %v6338
        %v6376 = vadd.f32 %v6326, %v6342
        %v6377 = vadd.f32 %v6327, %v6346
        %v6378 = vadd.f32 %v6328, %v6350
        %v6379 = vadd.f32 %v6329, %v6354
        %v6380 = vadd.f32 %v6330, %v6358
        %v6381 = vadd.f32 %v6331, %v6362
        %v6382 = vadd.f32 %v6332, %v6366
        %v6383 = vmax.f32 %v6375, 0.0
        %v6384 = vmax.f32 %v6376, 0.0
        %v6385 = vmax.f32 %v6377, 0.0
        %v6386 = vmax.f32 %v6378, 0.0
        %v6387 = vmax.f32 %v6379, 0.0
        %v6388 = vmax.f32 %v6380, 0.0
        %v6389 = vmax.f32 %v6381, 0.0
        %v6390 = vmax.f32 %v6382, 0.0
        %v6391 = vpack.c.bf16 %v6383, %v6383
        %v6392 = vpack.c.bf16 %v6384, %v6384
        %v6393 = vpack.c.bf16 %v6385, %v6385
        %v6394 = vpack.c.bf16 %v6386, %v6386
        %v6395 = vpack.c.bf16 %v6387, %v6387
        %v6396 = vpack.c.bf16 %v6388, %v6388
        %v6397 = vpack.c.bf16 %v6389, %v6389
        %v6398 = vpack.c.bf16 %v6390, %v6390
        %v6407 = vunpack.c.l.b16 %v6391
        %v6408 = vunpack.c.l.b16 %v6392
        %v6409 = vunpack.c.l.b16 %v6393
        %v6410 = vunpack.c.l.b16 %v6394
        %v6411 = vunpack.c.l.b16 %v6395
        %v6412 = vunpack.c.l.b16 %v6396
        %v6413 = vunpack.c.l.b16 %v6397
        %v6414 = vunpack.c.l.b16 %v6398
        %v6415 = vpack.c.b16 %v6408, %v6407
        %v6416 = vpack.c.b16 %v6410, %v6409
        %v6417 = vpack.c.b16 %v6412, %v6411
        %v6418 = vpack.c.b16 %v6414, %v6413
        %6423 = vst [vmem:[%s301] sm:$0xff] %v6415
        %6424 = vst [vmem:[%s301 + $0x8] sm:$0xff] %v6416
        %6425 = vst [vmem:[%s301 + $0x10] sm:$0xff] %v6417
        %6426 = vst [vmem:[%s301 + $0x18] sm:$0xff] %v6418
        %s6427 = sand.u32 %s132, 1
        %s6428 = scalar_lea.sflag [#allocation4], %s6427
        %s6429 = sand.u32 %s132, 1
        %s6430 = smul.addr %s6429, 32
        %s6431 = scalar_lea.vmem [#allocation10], %s6430
        // Predicated region
        $region53: #{tpu_custom_call.1} parent=35 // pred_check
          %p6432 = pneg %p142
        $region54: #{tpu_custom_call.1} parent=35 // pred_check_branch
          %6434 = sbr.rel (%p6432) target = $region56
        $region55: #{tpu_custom_call.1} parent=35 // pred_region
          %s6435 = smul.u32 8, %s25
          %s6437 = ssub.s32 512, 512
          %6438 = vsyncadd %s6428, %s6437
          %s6439 = smul.addr %s6435, 64
          %s6440 = scalar_lea.hbm %s4, %s6439
          %s6442 = sshll.u32 %s6431, 4
          %s6443 = int_to_ptr.vmem [resolvable:$true] %s6442
          %6445 = dma.vmem_to_hbm [thread:$0]  %s6443, 512, %s6440, %s6428
        $region56: #{tpu_custom_call.1} parent=35 // pred_fallthru
          _
      $region36: #{tpu_custom_call.1} parent=5 // pred_fallthru
        _
      %p6446 = scmp.le.s32.totalorder 2, %s20
      // Predicated region
      $region57: #{tpu_custom_call.1} parent=5 // pred_check
        %p6447 = pneg %p6446
      $region58: #{tpu_custom_call.1} parent=5 // pred_check_branch
        %6449 = sbr.rel (%p6447) target = $region60
      $region59: #{tpu_custom_call.1} parent=5 // pred_region
        %s6450 = ssub.s32 %s20, 2
        // Predicated region
        $region61: #{tpu_custom_call.1} parent=59 // pred_check
          %p6451 = pneg %p148
        $region62: #{tpu_custom_call.1} parent=59 // pred_check_branch
          %6453 = sbr.rel (%p6451) target = $region64
        $region63: #{tpu_custom_call.1} parent=59 // pred_region
          %s6454 = sand.u32 %s133, 1
          %s6455 = scalar_lea.sflag [#allocation4], %s6454
          %s6456 = sand.u32 %s133, 1
          %s6457 = smul.addr %s6456, 32
          %s6458 = scalar_lea.vmem [#allocation10], %s6457
          %6459 = dma.done %s6455, 512
        $region64: #{tpu_custom_call.1} parent=59 // pred_fallthru
          _
      $region60: #{tpu_custom_call.1} parent=5 // pred_fallthru
        _
    $region6: #{tpu_custom_call.1} parent=1 // loop_footer
      %s24 = sadd.s32 1, %s20
    $region7: #{tpu_custom_call.1} parent=1 // loop_footer_branch
      %19 = sbr.rel target = $region3
    $region8: #{tpu_custom_call.1} parent=1 // loop_exit
      _
    %6460 = vsyncpa [#allocation3], 1
    %s6461 = scalar_lea.sflag [#allocation3], 1
    %6462 = vsyncpa %s6461, 1
    %6463 = vsyncpa [#allocation6], 1
    %s6464 = scalar_lea.sflag [#allocation6], 1
    %6465 = vsyncpa %s6464, 1
    %6466 = vsyncpa [#allocation9], 1
    %s6467 = scalar_lea.sflag [#allocation9], 1
    %6468 = vsyncpa %s6467, 1
    %6469 = vsyncpa [#allocation4], 1
    %s6470 = scalar_lea.sflag [#allocation4], 1
    %6471 = vsyncpa %s6470, 1

</llo_original>
